<compile_context>
chip_gen: v6e
topology: v6e:2x2x1
jax: 0.10.0
libtpu: 0.0.40
codegen_flags: <defaults>
</compile_context>

<pallas_src>
import functools

import jax
import jax.numpy as jnp
from jax.experimental import pallas as pl
from jax.experimental.pallas import tpu as pltpu

NUM_MODES = 3        # three EfficientnetBlocks
STEM_OUT = 32        # EfficientNet-B0 _conv_stem.out_channels
HEAD_OUT = 1280      # EfficientNet-B0 _fc.in_features
FUTURE_FRAMES = 50   # required by preds.view(B, 1, 50, 2)
NUM_PREDS = 2 * FUTURE_FRAMES        # 100
NUM_TARGETS = 1 + NUM_PREDS          # 101
BN_EPS = 1e-3
BF16_SUBLANE = 16                    # bf16 sublane packing (2 rows / sublane)
COMPUTE_DTYPE = jnp.bfloat16         # MXU operand dtype (f32 accumulation)

STEM_N = NUM_MODES * STEM_OUT        # 96  (3 stems batched along N)
HEAD_N = NUM_MODES * HEAD_OUT        # 3840 (block-diagonal head)
FC_N_PAD = 128                       # fc N 101 -> 128 (lane-dense output)


def _round_up(x, m):
    return (x + m - 1) // m * m


# ------------------------------ Pallas kernel -------------------------------

def _lyft_fused_kernel(patches_ref, stem_w_ref, stem_b_ref,
                       head_w_ref, head_b_ref, fc_w_ref, fc_b_ref,
                       out_ref, acc_ref, *, s_total, ts):
    """One (batch, spatial-tile) grid step of the whole LyftModel forward.

    patches: (ts, Kp)        im2col tile of the shared input, bf16
    stem_w : (Kp, 96)        3 blocks' stem weights, BN folded, bf16
    stem_b : (1, 96)         folded BN0 bias, f32
    head_w : (96, 3840)      block-diagonal head 1x1 weights, BN folded, bf16
    head_b : (1, 3840)       folded BN1 bias, f32
    fc_w   : (3, 1280, 128)  per-block fc weights, N padded 101 -> 128, bf16
    fc_b   : (3, 1, 128)     per-block fc bias (zero-padded), f32
    out    : (3, 128)        per-batch output slab (traj cols 0..99, conf 100)
    acc    : (1, 3840)       f32 global-average-pool accumulator (scratch)
    """
    s_idx = pl.program_id(1)

    @pl.when(s_idx == 0)
    def _():
        acc_ref[...] = jnp.zeros_like(acc_ref)

    # _conv_stem (3x3/s2 as matmul over im2col) + _bn0 + swish, 3 nets on N.
    h = jnp.dot(patches_ref[...], stem_w_ref[...],
                preferred_element_type=jnp.float32)
    h = h + stem_b_ref[...]
    h = h * jax.nn.sigmoid(h)

    # _conv_head (1x1, block-diagonal across the 3 nets) + _bn1 + swish.
    g = jnp.dot(h.astype(COMPUTE_DTYPE), head_w_ref[...],
                preferred_element_type=jnp.float32)
    g = g + head_b_ref[...]
    g = g * jax.nn.sigmoid(g)

    # Zero padded spatial rows before pooling (emitted at trace time only if
    # the last spatial tile is ragged; shapes are static).
    if s_total % ts != 0:
        rows = jax.lax.broadcasted_iota(jnp.int32, (ts, 1), 0) + s_idx * ts
        g = jnp.where(rows < s_total, g, 0.0)

    # Global-average-pool partial sum (exact f32 accumulation).
    acc_ref[...] += jnp.sum(g, axis=0, keepdims=True)

    # _fc + swapped split + softmax over modes: once per batch element.
    @pl.when(s_idx == pl.num_programs(1) - 1)
    def _():
        pooled = acc_ref[...] * (1.0 / s_total)           # exact f32 mean
        outs = []
        for blk in range(NUM_MODES):                      # lane-aligned slices
            pb = pooled[:, blk * HEAD_OUT:(blk + 1) * HEAD_OUT]
            outs.append(jnp.dot(pb.astype(COMPUTE_DTYPE), fc_w_ref[blk],
                                preferred_element_type=jnp.float32)
                        + fc_b_ref[blk])                  # (1, 128)
        o = jnp.concatenate(outs, axis=0)                 # (3, 128)

        # Softmax over the 3 modes for the trajectory part (cols 0..99);
        # col 100 keeps the raw confidence scalar (LyftModel swap quirk).
        m = jnp.max(o, axis=0, keepdims=True)
        e = jnp.exp(o - m)
        soft = e / jnp.sum(e, axis=0, keepdims=True)
        cols = jax.lax.broadcasted_iota(jnp.int32, o.shape, 1)
        out_ref[...] = jnp.where(cols < NUM_PREDS, soft, o)


# ------------------------------- glue (JAX) ---------------------------------

def im2col_3x3_s2_p1(x_nhwc):
    """3x3/stride-2/pad-1 patches; feature order = (kh, kw, c_in)."""
    B, H, W, C = x_nhwc.shape
    k, s, p = 3, 2, 1
    xp = jnp.pad(x_nhwc, ((0, 0), (p, p), (p, p), (0, 0)))
    Ho = (H + 2 * p - k) // s + 1
    Wo = (W + 2 * p - k) // s + 1
    cols = []
    for di in range(k):
        for dj in range(k):
            cols.append(xp[:, di:di + s * Ho:s, dj:dj + s * Wo:s, :])
    patches = jnp.concatenate(cols, axis=-1)              # (B, Ho, Wo, 9*C)
    return patches.reshape(B, Ho * Wo, k * k * C), (Ho, Wo)


def prepare_lyft_params(params_list, compute_dtype=COMPUTE_DTYPE):
    """One-time prep: fold BN into weights, batch the 3 blocks, minimal pads."""
    assert len(params_list) == NUM_MODES
    k_raw = int(params_list[0]["stem_w"].reshape(-1, STEM_OUT).shape[0])
    # Only pad K to the bf16 sublane-pack multiple (45 -> 48), not to 128:
    # K=45 is already a single MXU pass, so a 128-pad only inflates HBM reads.
    k_pad = _round_up(k_raw, BF16_SUBLANE)

    stem_w_cols, stem_b_cols, head_b_cols = [], [], []
    head_w = jnp.zeros((STEM_N, HEAD_N), jnp.float32)
    fc_w_list, fc_b_list = [], []
    for i, p in enumerate(params_list):
        s_scale = p["stem_gamma"] / jnp.sqrt(p["stem_var"] + BN_EPS)
        stem_w_cols.append(p["stem_w"].reshape(k_raw, STEM_OUT) * s_scale[None, :])
        stem_b_cols.append(p["stem_beta"] - p["stem_mean"] * s_scale)

        h_scale = p["head_gamma"] / jnp.sqrt(p["head_var"] + BN_EPS)
        head_w = head_w.at[i * STEM_OUT:(i + 1) * STEM_OUT,
                           i * HEAD_OUT:(i + 1) * HEAD_OUT].set(
                               p["head_w"] * h_scale[None, :])
        head_b_cols.append(p["head_beta"] - p["head_mean"] * h_scale)

        fc_w_list.append(jnp.pad(p["fc_w"],
                                 ((0, 0), (0, FC_N_PAD - NUM_TARGETS))))
        fc_b_list.append(jnp.pad(p["fc_b"],
                                 (0, FC_N_PAD - NUM_TARGETS))[None, :])

    stem_w = jnp.pad(jnp.concatenate(stem_w_cols, axis=1),
                     ((0, k_pad - k_raw), (0, 0)))         # (k_pad, 96)
    return {
        "k_raw": k_raw,
        "k_pad": k_pad,
        "stem_w": stem_w.astype(compute_dtype),
        "stem_b": jnp.concatenate(stem_b_cols)[None, :].astype(jnp.float32),
        "head_w": head_w.astype(compute_dtype),
        "head_b": jnp.concatenate(head_b_cols)[None, :].astype(jnp.float32),
        "fc_w": jnp.stack(fc_w_list).astype(compute_dtype),   # (3, 1280, 128)
        "fc_b": jnp.stack(fc_b_list).astype(jnp.float32),     # (3, 1, 128)
    }


def lyft_forward(x_nchw, prep, *, spatial_tile=512, vmem_limit_bytes=None):
    """LyftModel.forward — one fused, gridded pallas_call for all 3 blocks.

    spatial_tile: im2col rows per grid step.  ~512 fits v7x's 64 MiB VMEM;
    on v6e/v5e (128 MiB) 1024-2048 works with a raised vmem limit.
    """
    B = x_nchw.shape[0]
    x = jnp.transpose(x_nchw, (0, 2, 3, 1))               # NCHW -> NHWC

    # Shared im2col (identical input to all 3 blocks), minimal K pad.
    patches, (Ho, Wo) = im2col_3x3_s2_p1(x)               # (B, S, 9*C)
    S = Ho * Wo
    kp, k_raw = prep["k_pad"], prep["k_raw"]

    ts = min(spatial_tile, _round_up(S, BF16_SUBLANE))    # 16-row multiple
    s_pad = _round_up(S, ts)
    n_sp = s_pad // ts
    patches = jnp.pad(patches, ((0, 0), (0, s_pad - S), (0, kp - k_raw)))
    patches = patches.astype(COMPUTE_DTYPE)

    # Raise the scoped-VMEM cap only when large tiles need it (defaults:
    # 16 MiB v5e / 32 MiB v6e; never exceed v7x's 64 MiB physical VMEM).
    if vmem_limit_bytes is None:
        est = (2 * ts * kp * 2                            # 2x patch buffers
               + 2 * (kp * STEM_N + STEM_N * HEAD_N
                      + NUM_MODES * HEAD_OUT * FC_N_PAD) * 2   # resident wts
               + ts * STEM_N * 4 + ts * HEAD_N * 6)       # h, g (+bf16 copy)
        if est > 14 * 1024 * 1024:
            vmem_limit_bytes = min(2 * est, 60 * 1024 * 1024)

    kernel = functools.partial(_lyft_fused_kernel, s_total=S, ts=ts)
    out = pl.pallas_call(
        kernel,
        grid_spec=pltpu.PrefetchScalarGridSpec(
            num_scalar_prefetch=0,
            grid=(B, n_sp),
            in_specs=[
                pl.BlockSpec((None, ts, kp), lambda b, s: (b, s, 0)),
                pl.BlockSpec((kp, STEM_N), lambda b, s: (0, 0)),
                pl.BlockSpec((1, STEM_N), lambda b, s: (0, 0)),
                pl.BlockSpec((STEM_N, HEAD_N), lambda b, s: (0, 0)),
                pl.BlockSpec((1, HEAD_N), lambda b, s: (0, 0)),
                pl.BlockSpec((NUM_MODES, HEAD_OUT, FC_N_PAD),
                             lambda b, s: (0, 0, 0)),
                pl.BlockSpec((NUM_MODES, 1, FC_N_PAD), lambda b, s: (0, 0, 0)),
            ],
            out_specs=pl.BlockSpec((None, NUM_MODES, FC_N_PAD),
                                   lambda b, s: (b, 0, 0)),
            scratch_shapes=[pltpu.VMEM((1, HEAD_N), jnp.float32)],
        ),
        out_shape=jax.ShapeDtypeStruct((B, NUM_MODES, FC_N_PAD), jnp.float32),
        compiler_params=pltpu.CompilerParams(
            dimension_semantics=("parallel", "arbitrary"),
            vmem_limit_bytes=vmem_limit_bytes),
    )(patches, prep["stem_w"], prep["stem_b"],
      prep["head_w"], prep["head_b"], prep["fc_w"], prep["fc_b"])

    # LyftModel swap quirk: conf_i, pred_i = self.eff_i(x) -> the returned
    # "preds" are the per-mode confidence scalars and the returned
    # "confidences" are the softmax-over-modes trajectories.
    preds = out[:, :, NUM_PREDS]                                   # (B, 3)
    confidences = out[:, :, :NUM_PREDS].reshape(
        B, NUM_MODES, FUTURE_FRAMES, 2)                            # (B, 3, 50, 2)
    return preds, confidences


# ---------------------------- deterministic init -----------------------------

def init_block_params(key, c_in):
    ks = jax.random.split(key, 8)
    return {
        "stem_w": 0.1 * jax.random.normal(ks[0], (3, 3, c_in, STEM_OUT), jnp.float32),
        "stem_gamma": 1.0 + 0.1 * jax.random.normal(ks[1], (STEM_OUT,), jnp.float32),
        "stem_beta": 0.1 * jax.random.normal(ks[2], (STEM_OUT,), jnp.float32),
        "stem_mean": jnp.zeros((STEM_OUT,), jnp.float32),
        "stem_var": jnp.ones((STEM_OUT,), jnp.float32),
        "head_w": 0.1 * jax.random.normal(ks[3], (STEM_OUT, HEAD_OUT), jnp.float32),
        "head_gamma": 1.0 + 0.1 * jax.random.normal(ks[4], (HEAD_OUT,), jnp.float32),
        "head_beta": 0.1 * jax.random.normal(ks[5], (HEAD_OUT,), jnp.float32),
        "head_mean": jnp.zeros((HEAD_OUT,), jnp.float32),
        "head_var": jnp.ones((HEAD_OUT,), jnp.float32),
        "fc_w": 0.05 * jax.random.normal(ks[6], (HEAD_OUT, NUM_TARGETS), jnp.float32),
        "fc_b": 0.01 * jax.random.normal(ks[7], (NUM_TARGETS,), jnp.float32),
    }


if __name__ == "__main__":
    cfg = {"model_params": {"model_architecture": "efficientnet-b0",
                            "history_num_frames": 0,
                            "future_num_frames": FUTURE_FRAMES}}
    num_in_channels = 3 + (cfg["model_params"]["history_num_frames"] + 1) * 2  # 5

    key = jax.random.PRNGKey(0)
    kx, k1, k2, k3 = jax.random.split(key, 4)
    x = jax.random.normal(kx, (2, num_in_channels, 16, 16), jnp.float32)
    params = [init_block_params(k, num_in_channels) for k in (k1, k2, k3)]

    prep = prepare_lyft_params(params)        # one-time BN fold / batch / pad
    fwd = jax.jit(lambda inp: lyft_forward(inp, prep))
    preds, confidences = fwd(x)
    jax.block_until_ready((preds, confidences))

    assert preds.shape == (2, NUM_MODES), preds.shape
    assert confidences.shape == (2, NUM_MODES, FUTURE_FRAMES, 2), confidences.shape
    assert jnp.allclose(jnp.sum(confidences, axis=1), 1.0, atol=1e-5)
    print("KERNEL_OK")
</pallas_src>

<mosaic_0001>
module attributes {stable_mosaic.version = 11 : i64} {
  func.func @_lyft_fused_kernel(%arg0: i32, %arg1: i32, %arg2: memref<1x64x48xbf16, #tpu.memory_space<vmem>>, %arg3: memref<48x96xbf16, #tpu.memory_space<vmem>>, %arg4: memref<1x96xf32, #tpu.memory_space<vmem>>, %arg5: memref<96x3840xbf16, #tpu.memory_space<vmem>>, %arg6: memref<1x3840xf32, #tpu.memory_space<vmem>>, %arg7: memref<3x1280x128xbf16, #tpu.memory_space<vmem>>, %arg8: memref<3x1x128xf32, #tpu.memory_space<vmem>>, %arg9: memref<1x3x128xf32, #tpu.memory_space<vmem>>, %arg10: memref<1x3840xf32, #tpu.memory_space<vmem>>) attributes {dimension_semantics = [#tpu.dimension_semantics<parallel>, #tpu.dimension_semantics<arbitrary>], iteration_bounds = array<i64: 2, 1>, scalar_prefetch = 0 : i64, scratch_operands = 1 : i64, tpu.core_type = #tpu.core_type<tc>, window_params = [{transform_indices = @transform_0, window_bounds = array<i64: 1, 64, 48>}, {pipeline_mode = #tpu.pipeline_mode<synchronous>, transform_indices = @transform_1, window_bounds = array<i64: 48, 96>}, {pipeline_mode = #tpu.pipeline_mode<synchronous>, transform_indices = @transform_2, window_bounds = array<i64: 1, 96>}, {pipeline_mode = #tpu.pipeline_mode<synchronous>, transform_indices = @transform_3, window_bounds = array<i64: 96, 3840>}, {pipeline_mode = #tpu.pipeline_mode<synchronous>, transform_indices = @transform_4, window_bounds = array<i64: 1, 3840>}, {pipeline_mode = #tpu.pipeline_mode<synchronous>, transform_indices = @transform_5, window_bounds = array<i64: 3, 1280, 128>}, {pipeline_mode = #tpu.pipeline_mode<synchronous>, transform_indices = @transform_6, window_bounds = array<i64: 3, 1, 128>}, {transform_indices = @transform_7, window_bounds = array<i64: 1, 3, 128>}]} {
    %c0_i32 = arith.constant 0 : i32
    %0 = arith.cmpi eq, %arg1, %c0_i32 : i32
    %1 = arith.extui %0 : i1 to i32
    %c0_i32_0 = arith.constant 0 : i32
    %2 = arith.cmpi ne, %1, %c0_i32_0 : i32
    scf.if %2 {
      %cst_21 = arith.constant 0.000000e+00 : f32
      %36 = vector.broadcast %cst_21 : f32 to vector<1x3840xf32>
      %c0_22 = arith.constant 0 : index
      %c0_23 = arith.constant 0 : index
      %37 = vector.load %arg10[%c0_22, %c0_23] : memref<1x3840xf32, #tpu.memory_space<vmem>>, vector<1x3840xf32>
      tpu.vector_store %arg10[%c0_22, %c0_23], %36 {strides = array<i32>} : memref<1x3840xf32, #tpu.memory_space<vmem>>, vector<1x3840xf32>,
    } else {
    }
    %c0 = arith.constant 0 : index
    %c0_1 = arith.constant 0 : index
    %c0_2 = arith.constant 0 : index
    %3 = vector.load %arg2[%c0, %c0_1, %c0_2] : memref<1x64x48xbf16, #tpu.memory_space<vmem>>, vector<1x64x48xbf16>
    %4 = vector.shape_cast %3 : vector<1x64x48xbf16> to vector<64x48xbf16>
    %c0_3 = arith.constant 0 : index
    %c0_4 = arith.constant 0 : index
    %5 = vector.load %arg3[%c0_3, %c0_4] : memref<48x96xbf16, #tpu.memory_space<vmem>>, vector<48x96xbf16>
    %cst = arith.constant dense<0.000000e+00> : vector<64x96xf32>
    %6 = tpu.matmul %4, %5, %cst {dimension_numbers = #tpu.dot_dimension_numbers<[1], [0], [0], [1], [0, 0, 1, 1], [], []>} : vector<64x48xbf16>, vector<48x96xbf16>, vector<64x96xf32> -> vector<64x96xf32>
    %c0_5 = arith.constant 0 : index
    %c0_6 = arith.constant 0 : index
    %7 = vector.load %arg4[%c0_5, %c0_6] : memref<1x96xf32, #tpu.memory_space<vmem>>, vector<1x96xf32>
    %8 = vector.broadcast %7 : vector<1x96xf32> to vector<64x96xf32>
    %9 = arith.addf %6, %8 : vector<64x96xf32>
    %10 = arith.negf %9 : vector<64x96xf32>
    %11 = math.exp %10 : vector<64x96xf32>
    %cst_7 = arith.constant 1.000000e+00 : f32
    %12 = vector.broadcast %cst_7 : f32 to vector<64x96xf32>
    %13 = arith.addf %12, %11 : vector<64x96xf32>
    %14 = arith.divf %12, %13 : vector<64x96xf32>
    %15 = arith.mulf %9, %14 : vector<64x96xf32>
    %16 = arith.truncf %15 : vector<64x96xf32> to vector<64x96xbf16>
    %c0_8 = arith.constant 0 : index
    %c0_9 = arith.constant 0 : index
    %17 = vector.load %arg5[%c0_8, %c0_9] : memref<96x3840xbf16, #tpu.memory_space<vmem>>, vector<96x3840xbf16>
    %cst_10 = arith.constant dense<0.000000e+00> : vector<64x3840xf32>
    %18 = tpu.matmul %16, %17, %cst_10 {dimension_numbers = #tpu.dot_dimension_numbers<[1], [0], [0], [1], [0, 0, 1, 1], [], []>} : vector<64x96xbf16>, vector<96x3840xbf16>, vector<64x3840xf32> -> vector<64x3840xf32>
    %c0_11 = arith.constant 0 : index
    %c0_12 = arith.constant 0 : index
    %19 = vector.load %arg6[%c0_11, %c0_12] : memref<1x3840xf32, #tpu.memory_space<vmem>>, vector<1x3840xf32>
    %20 = vector.broadcast %19 : vector<1x3840xf32> to vector<64x3840xf32>
    %21 = arith.addf %18, %20 : vector<64x3840xf32>
    %22 = arith.negf %21 : vector<64x3840xf32>
    %23 = math.exp %22 : vector<64x3840xf32>
    %cst_13 = arith.constant 1.000000e+00 : f32
    %24 = vector.broadcast %cst_13 : f32 to vector<64x3840xf32>
    %25 = arith.addf %24, %23 : vector<64x3840xf32>
    %26 = arith.divf %24, %25 : vector<64x3840xf32>
    %27 = arith.mulf %21, %26 : vector<64x3840xf32>
    %c0_14 = arith.constant 0 : index
    %c0_15 = arith.constant 0 : index
    %28 = vector.load %arg10[%c0_14, %c0_15] : memref<1x3840xf32, #tpu.memory_space<vmem>>, vector<1x3840xf32>
    %cst_16 = arith.constant dense<0.000000e+00> : vector<3840xf32>
    %29 = vector.multi_reduction <add>, %27, %cst_16 [0] : vector<64x3840xf32> to vector<3840xf32>
    %30 = vector.shape_cast %29 : vector<3840xf32> to vector<1x3840xf32>
    %31 = arith.addf %28, %30 : vector<1x3840xf32>
    %c0_17 = arith.constant 0 : index
    %c0_18 = arith.constant 0 : index
    %32 = vector.load %arg10[%c0_17, %c0_18] : memref<1x3840xf32, #tpu.memory_space<vmem>>, vector<1x3840xf32>
    tpu.vector_store %arg10[%c0_17, %c0_18], %31 {strides = array<i32>} : memref<1x3840xf32, #tpu.memory_space<vmem>>, vector<1x3840xf32>,
    %c0_i32_19 = arith.constant 0 : i32
    %33 = arith.cmpi eq, %arg1, %c0_i32_19 : i32
    %34 = arith.extui %33 : i1 to i32
    %c0_i32_20 = arith.constant 0 : i32
    %35 = arith.cmpi ne, %34, %c0_i32_20 : i32
    scf.if %35 {
      %c0_21 = arith.constant 0 : index
      %c0_22 = arith.constant 0 : index
      %36 = vector.load %arg10[%c0_21, %c0_22] : memref<1x3840xf32, #tpu.memory_space<vmem>>, vector<1x3840xf32>
      %cst_23 = arith.constant 1.562500e-02 : f32
      %37 = vector.broadcast %cst_23 : f32 to vector<1x3840xf32>
      %38 = arith.mulf %36, %37 : vector<1x3840xf32>
      %39 = vector.extract_strided_slice %38 {offsets = [0, 0], sizes = [1, 1280], strides = [1, 1]} : vector<1x3840xf32> to vector<1x1280xf32>
      %40 = arith.truncf %39 : vector<1x1280xf32> to vector<1x1280xbf16>
      %c0_24 = arith.constant 0 : index
      %c0_25 = arith.constant 0 : index
      %c0_26 = arith.constant 0 : index
      %41 = vector.load %arg7[%c0_24, %c0_25, %c0_26] : memref<3x1280x128xbf16, #tpu.memory_space<vmem>>, vector<1x1280x128xbf16>
      %42 = vector.shape_cast %41 : vector<1x1280x128xbf16> to vector<1280x128xbf16>
      %cst_27 = arith.constant dense<0.000000e+00> : vector<1x128xf32>
      %43 = tpu.matmul %40, %42, %cst_27 {dimension_numbers = #tpu.dot_dimension_numbers<[1], [0], [0], [1], [0, 0, 1, 1], [], []>} : vector<1x1280xbf16>, vector<1280x128xbf16>, vector<1x128xf32> -> vector<1x128xf32>
      %c0_28 = arith.constant 0 : index
      %c0_29 = arith.constant 0 : index
      %c0_30 = arith.constant 0 : index
      %44 = vector.load %arg8[%c0_28, %c0_29, %c0_30] : memref<3x1x128xf32, #tpu.memory_space<vmem>>, vector<1x1x128xf32>
      %45 = vector.shape_cast %44 : vector<1x1x128xf32> to vector<1x128xf32>
      %46 = arith.addf %43, %45 : vector<1x128xf32>
      %47 = vector.extract_strided_slice %38 {offsets = [0, 1280], sizes = [1, 1280], strides = [1, 1]} : vector<1x3840xf32> to vector<1x1280xf32>
      %48 = arith.truncf %47 : vector<1x1280xf32> to vector<1x1280xbf16>
      %c1 = arith.constant 1 : index
      %c0_31 = arith.constant 0 : index
      %c0_32 = arith.constant 0 : index
      %49 = vector.load %arg7[%c1, %c0_31, %c0_32] : memref<3x1280x128xbf16, #tpu.memory_space<vmem>>, vector<1x1280x128xbf16>
      %50 = vector.shape_cast %49 : vector<1x1280x128xbf16> to vector<1280x128xbf16>
      %cst_33 = arith.constant dense<0.000000e+00> : vector<1x128xf32>
      %51 = tpu.matmul %48, %50, %cst_33 {dimension_numbers = #tpu.dot_dimension_numbers<[1], [0], [0], [1], [0, 0, 1, 1], [], []>} : vector<1x1280xbf16>, vector<1280x128xbf16>, vector<1x128xf32> -> vector<1x128xf32>
      %c1_34 = arith.constant 1 : index
      %c0_35 = arith.constant 0 : index
      %c0_36 = arith.constant 0 : index
      %52 = vector.load %arg8[%c1_34, %c0_35, %c0_36] : memref<3x1x128xf32, #tpu.memory_space<vmem>>, vector<1x1x128xf32>
      %53 = vector.shape_cast %52 : vector<1x1x128xf32> to vector<1x128xf32>
      %54 = arith.addf %51, %53 : vector<1x128xf32>
      %55 = vector.extract_strided_slice %38 {offsets = [0, 2560], sizes = [1, 1280], strides = [1, 1]} : vector<1x3840xf32> to vector<1x1280xf32>
      %56 = arith.truncf %55 : vector<1x1280xf32> to vector<1x1280xbf16>
      %c2 = arith.constant 2 : index
      %c0_37 = arith.constant 0 : index
      %c0_38 = arith.constant 0 : index
      %57 = vector.load %arg7[%c2, %c0_37, %c0_38] : memref<3x1280x128xbf16, #tpu.memory_space<vmem>>, vector<1x1280x128xbf16>
      %58 = vector.shape_cast %57 : vector<1x1280x128xbf16> to vector<1280x128xbf16>
      %cst_39 = arith.constant dense<0.000000e+00> : vector<1x128xf32>
      %59 = tpu.matmul %56, %58, %cst_39 {dimension_numbers = #tpu.dot_dimension_numbers<[1], [0], [0], [1], [0, 0, 1, 1], [], []>} : vector<1x1280xbf16>, vector<1280x128xbf16>, vector<1x128xf32> -> vector<1x128xf32>
      %c2_40 = arith.constant 2 : index
      %c0_41 = arith.constant 0 : index
      %c0_42 = arith.constant 0 : index
      %60 = vector.load %arg8[%c2_40, %c0_41, %c0_42] : memref<3x1x128xf32, #tpu.memory_space<vmem>>, vector<1x1x128xf32>
      %61 = vector.shape_cast %60 : vector<1x1x128xf32> to vector<1x128xf32>
      %62 = arith.addf %59, %61 : vector<1x128xf32>
      %63 = tpu.concatenate %46, %54, %62 in 0 : vector<1x128xf32>, vector<1x128xf32>, vector<1x128xf32> -> vector<3x128xf32>
      %cst_43 = arith.constant dense<0xFF800000> : vector<128xf32>
      %64 = vector.multi_reduction <maximumf>, %63, %cst_43 [0] : vector<3x128xf32> to vector<128xf32>
      %65 = vector.shape_cast %64 : vector<128xf32> to vector<1x128xf32>
      %66 = vector.broadcast %65 : vector<1x128xf32> to vector<3x128xf32>
      %67 = arith.subf %63, %66 : vector<3x128xf32>
      %68 = math.exp %67 : vector<3x128xf32>
      %cst_44 = arith.constant dense<0.000000e+00> : vector<128xf32>
      %69 = vector.multi_reduction <add>, %68, %cst_44 [0] : vector<3x128xf32> to vector<128xf32>
      %70 = vector.shape_cast %69 : vector<128xf32> to vector<1x128xf32>
      %71 = vector.broadcast %70 : vector<1x128xf32> to vector<3x128xf32>
      %72 = arith.divf %68, %71 : vector<3x128xf32>
      %73 = tpu.iota {dimensions = array<i32: 1>} : vector<3x128xi32>
      %c100_i32 = arith.constant 100 : i32
      %74 = vector.broadcast %c100_i32 : i32 to vector<3x128xi32>
      %75 = arith.cmpi slt, %73, %74 : vector<3x128xi32>
      %76 = arith.select %75, %72, %63 : vector<3x128xi1>, vector<3x128xf32>
      %c0_45 = arith.constant 0 : index
      %c0_46 = arith.constant 0 : index
      %c0_47 = arith.constant 0 : index
      %77 = vector.load %arg9[%c0_45, %c0_46, %c0_47] : memref<1x3x128xf32, #tpu.memory_space<vmem>>, vector<1x3x128xf32>
      %78 = vector.shape_cast %77 : vector<1x3x128xf32> to vector<3x128xf32>
      %79 = vector.shape_cast %76 : vector<3x128xf32> to vector<1x3x128xf32>
      tpu.vector_store %arg9[%c0_45, %c0_46, %c0_47], %79 {strides = array<i32>} : memref<1x3x128xf32, #tpu.memory_space<vmem>>, vector<1x3x128xf32>,
    } else {
    }
    return
  }
  func.func @transform_0(%arg0: i32, %arg1: i32) -> (i32, i32, i32) {
    %c0_i32 = arith.constant 0 : i32
    %c0_i32_0 = arith.constant 0 : i32
    return %arg0, %arg1, %c0_i32 : i32, i32, i32
  }
  func.func @transform_1(%arg0: i32, %arg1: i32) -> (i32, i32) {
    %c0_i32 = arith.constant 0 : i32
    %c0_i32_0 = arith.constant 0 : i32
    %c0_i32_1 = arith.constant 0 : i32
    return %c0_i32, %c0_i32_0 : i32, i32
  }
  func.func @transform_2(%arg0: i32, %arg1: i32) -> (i32, i32) {
    %c0_i32 = arith.constant 0 : i32
    %c0_i32_0 = arith.constant 0 : i32
    %c0_i32_1 = arith.constant 0 : i32
    return %c0_i32, %c0_i32_0 : i32, i32
  }
  func.func @transform_3(%arg0: i32, %arg1: i32) -> (i32, i32) {
    %c0_i32 = arith.constant 0 : i32
    %c0_i32_0 = arith.constant 0 : i32
    %c0_i32_1 = arith.constant 0 : i32
    return %c0_i32, %c0_i32_0 : i32, i32
  }
  func.func @transform_4(%arg0: i32, %arg1: i32) -> (i32, i32) {
    %c0_i32 = arith.constant 0 : i32
    %c0_i32_0 = arith.constant 0 : i32
    %c0_i32_1 = arith.constant 0 : i32
    return %c0_i32, %c0_i32_0 : i32, i32
  }
  func.func @transform_5(%arg0: i32, %arg1: i32) -> (i32, i32, i32) {
    %c0_i32 = arith.constant 0 : i32
    %c0_i32_0 = arith.constant 0 : i32
    %c0_i32_1 = arith.constant 0 : i32
    %c0_i32_2 = arith.constant 0 : i32
    return %c0_i32, %c0_i32_0, %c0_i32_1 : i32, i32, i32
  }
  func.func @transform_6(%arg0: i32, %arg1: i32) -> (i32, i32, i32) {
    %c0_i32 = arith.constant 0 : i32
    %c0_i32_0 = arith.constant 0 : i32
    %c0_i32_1 = arith.constant 0 : i32
    %c0_i32_2 = arith.constant 0 : i32
    return %c0_i32, %c0_i32_0, %c0_i32_1 : i32, i32, i32
  }
  func.func @transform_7(%arg0: i32, %arg1: i32) -> (i32, i32, i32) {
    %c0_i32 = arith.constant 0 : i32
    %c0_i32_0 = arith.constant 0 : i32
    %c0_i32_1 = arith.constant 0 : i32
    return %arg0, %c0_i32, %c0_i32_0 : i32, i32, i32
  }
}

</mosaic_0001>

<llo_original>
// kernel: _lambda_.1
$region0: #{_lambda_.1}
  #allocation0 [shape = 'u32[]', space=smem, size = 0x4, offset = 0x4, fixed_abs, tag = 'smem constant byte address 0x4 - core index']
  #allocation1 [shape = 'u32[144,128]{1,0:T(1,128)}', space=vmem, size = 0x12000, scoped, tag = 'internal scratch']
  #allocation2 [shape = 'f32[1,3840]{1,0:T(1,128)}', space=vmem, size = 0x3c00, scoped, tag = 'scratch operand']
  %s0 = inlined_call_operand.vmem [shape: bf16[2,64,48], index: 0, kind: input, shape index: {}]
  %s1 = inlined_call_operand.vmem [shape: bf16[48,96], index: 1, kind: input, shape index: {}]
  %s2 = inlined_call_operand.vmem [shape: f32[1,96], index: 2, kind: input, shape index: {}]
  %s3 = inlined_call_operand.hbm [shape: bf16[96,3840], index: 3, kind: input, shape index: {}]
  %s4 = inlined_call_operand.vmem [shape: f32[1,3840], index: 4, kind: input, shape index: {}]
  %s5 = inlined_call_operand.vmem [shape: bf16[3,1280,128], index: 5, kind: input, shape index: {}]
  %s6 = inlined_call_operand.vmem [shape: f32[3,1,128], index: 6, kind: input, shape index: {}]
  %s7 = inlined_call_operand.vmem [shape: f32[2,3,128], index: 7, kind: output, shape index: {}]
  %s8 = sld [smem:[#allocation0]]
  $region73: #{_lambda_.1} parent=0
    _
  %s10 = ssub.s32 1, %s8
  %s11 = scalar_select 0, %s10, %s8
  $region1: #{_lambda_.1} parent=0
    #allocation3 [shape = 'u8[737280]{0}', space=vmem, size = 0xb4000, scoped, tag = 'input window, operand 3, single buffered']
    #allocation4 [shape = 's32[2]{0}', space=sflag, size = 0x8, scoped, tag = 'scoped memory for _lambda_.1']
    %12 = vsyncpa [#allocation4], 0
    loop: start=0, step=1, limit=4
    $region2: #{_lambda_.1} parent=1 // loop_pre_header
      _
    $region3: #{_lambda_.1} parent=1 // loop_header
      %s14 = sphi 0, %s18
      %p15 = scmp.ge.s32.totalorder %s14, 4
      %s21 = sphi 0, %s33
      %s22 = sphi 0, %s29
      %s23 = sphi 0, %s21
      %s24 = sphi 0, %s22
      %s25 = sphi 0, %s23
      %s26 = sphi 0, %s24
      %s38 = sphi 0, %s40
      %s41 = sphi 0, %s38
      %s42 = sphi 0, %s41
      %s58 = sphi 0, %s42
      %s62 = sphi 0, %s62
      %s64 = sphi 0, %s62
      %s65 = sphi 0, %s64
      %s79 = sphi 0, %s65
      %s83 = sphi 0, %s83
      %s85 = sphi 0, %s83
      %s86 = sphi 0, %s85
      %s100 = sphi 0, %s86
      %s104 = sphi 0, %s104
      %s106 = sphi 0, %s104
      %s107 = sphi 0, %s106
      %s121 = sphi 0, %s107
      %s125 = sphi 0, %s125
      %s127 = sphi 0, %s125
      %s128 = sphi 0, %s127
      %s142 = sphi 0, %s128
      %s146 = sphi 0, %s146
      %s148 = sphi 0, %s146
      %s149 = sphi 0, %s148
      %s163 = sphi 0, %s149
      %s167 = sphi 0, %s167
      %s169 = sphi 0, %s167
      %s170 = sphi 0, %s169
      %s184 = sphi 0, %s170
      %s190 = sphi 0, %s192
      %s193 = sphi 0, %s190
      %s194 = sphi 0, %s193
      %s210 = sphi 0, %s194
    $region4: #{_lambda_.1} parent=1 // loop_header_branch
      %17 = sbr.rel (%p15) target = $region8
    $region5: #{_lambda_.1} parent=1 // loop_body
      %s19 = ssub.s32 %s14, 1
      %s20 = ssub.s32 %s14, 2
      %s27 = sadd.s32 1, %s22
      %p28 = scmp.ge.s32.totalorder %s27, 1
      %s29 = scalar_select %p28, 0, %s27
      %s30 = sadd.s32 1, %s21
      %s31 = scalar_select %p28, %s30, %s21
      %p32 = scmp.ge.s32.totalorder %s31, 2
      %s33 = scalar_select %p32, 0, %s31
      %s34 = ssub.s32 %s21, %s33
      %s35 = ssub.s32 %s22, %s29
      %s36 = sor.u32 %s34, %s35
      %p37 = scmp.eq.s32.totalorder %s36, 0
      %s39 = sadd.s32 %s38, 1
      %s40 = scalar_select %p37, %s38, %s39
      %p43 = pneg %p37
      %p44 = scmp.eq.s32.totalorder %s14, 1
      %p45 = por %p43, %p44
      %p46 = scmp.ne.s32.totalorder %s38, %s41
      %p47 = scmp.eq.s32.totalorder %s14, 0
      %p48 = por %p46, %p47
      %p49 = scmp.ne.s32.totalorder %s38, %s41
      %p50 = scmp.eq.s32.totalorder %s19, 1
      %p51 = por %p49, %p50
      %p52 = scmp.ne.s32.totalorder %s41, %s42
      %p53 = scmp.eq.s32.totalorder %s19, 0
      %p54 = por %p52, %p53
      %p55 = scmp.ne.s32.totalorder %s41, %s42
      %p56 = scmp.eq.s32.totalorder %s20, 1
      %p57 = por %p55, %p56
      %p59 = scmp.ne.s32.totalorder %s42, %s58
      %p60 = scmp.eq.s32.totalorder %s20, 0
      %p61 = por %p59, %p60
      %s63 = sadd.s32 %s62, 1
      %p66 = scmp.eq.s32.totalorder %s14, 1
      %p67 = scmp.ne.s32.totalorder %s62, %s64
      %p68 = scmp.eq.s32.totalorder %s14, 0
      %p69 = por %p67, %p68
      %p70 = scmp.ne.s32.totalorder %s62, %s64
      %p71 = scmp.eq.s32.totalorder %s19, 1
      %p72 = por %p70, %p71
      %p73 = scmp.ne.s32.totalorder %s64, %s65
      %p74 = scmp.eq.s32.totalorder %s19, 0
      %p75 = por %p73, %p74
      %p76 = scmp.ne.s32.totalorder %s64, %s65
      %p77 = scmp.eq.s32.totalorder %s20, 1
      %p78 = por %p76, %p77
      %p80 = scmp.ne.s32.totalorder %s65, %s79
      %p81 = scmp.eq.s32.totalorder %s20, 0
      %p82 = por %p80, %p81
      %s84 = sadd.s32 %s83, 1
      %p87 = scmp.eq.s32.totalorder %s14, 1
      %p88 = scmp.ne.s32.totalorder %s83, %s85
      %p89 = scmp.eq.s32.totalorder %s14, 0
      %p90 = por %p88, %p89
      %p91 = scmp.ne.s32.totalorder %s83, %s85
      %p92 = scmp.eq.s32.totalorder %s19, 1
      %p93 = por %p91, %p92
      %p94 = scmp.ne.s32.totalorder %s85, %s86
      %p95 = scmp.eq.s32.totalorder %s19, 0
      %p96 = por %p94, %p95
      %p97 = scmp.ne.s32.totalorder %s85, %s86
      %p98 = scmp.eq.s32.totalorder %s20, 1
      %p99 = por %p97, %p98
      %p101 = scmp.ne.s32.totalorder %s86, %s100
      %p102 = scmp.eq.s32.totalorder %s20, 0
      %p103 = por %p101, %p102
      %s105 = sadd.s32 %s104, 1
      %p108 = scmp.eq.s32.totalorder %s14, 1
      %p109 = scmp.ne.s32.totalorder %s104, %s106
      %p110 = scmp.eq.s32.totalorder %s14, 0
      %p111 = por %p109, %p110
      %p112 = scmp.ne.s32.totalorder %s104, %s106
      %p113 = scmp.eq.s32.totalorder %s19, 1
      %p114 = por %p112, %p113
      %p115 = scmp.ne.s32.totalorder %s106, %s107
      %p116 = scmp.eq.s32.totalorder %s19, 0
      %p117 = por %p115, %p116
      %p118 = scmp.ne.s32.totalorder %s106, %s107
      %p119 = scmp.eq.s32.totalorder %s20, 1
      %p120 = por %p118, %p119
      %p122 = scmp.ne.s32.totalorder %s107, %s121
      %p123 = scmp.eq.s32.totalorder %s20, 0
      %p124 = por %p122, %p123
      %s126 = sadd.s32 %s125, 1
      %p129 = scmp.eq.s32.totalorder %s14, 1
      %p130 = scmp.ne.s32.totalorder %s125, %s127
      %p131 = scmp.eq.s32.totalorder %s14, 0
      %p132 = por %p130, %p131
      %p133 = scmp.ne.s32.totalorder %s125, %s127
      %p134 = scmp.eq.s32.totalorder %s19, 1
      %p135 = por %p133, %p134
      %p136 = scmp.ne.s32.totalorder %s127, %s128
      %p137 = scmp.eq.s32.totalorder %s19, 0
      %p138 = por %p136, %p137
      %p139 = scmp.ne.s32.totalorder %s127, %s128
      %p140 = scmp.eq.s32.totalorder %s20, 1
      %p141 = por %p139, %p140
      %p143 = scmp.ne.s32.totalorder %s128, %s142
      %p144 = scmp.eq.s32.totalorder %s20, 0
      %p145 = por %p143, %p144
      %s147 = sadd.s32 %s146, 1
      %p150 = scmp.eq.s32.totalorder %s14, 1
      %p151 = scmp.ne.s32.totalorder %s146, %s148
      %p152 = scmp.eq.s32.totalorder %s14, 0
      %p153 = por %p151, %p152
      %p154 = scmp.ne.s32.totalorder %s146, %s148
      %p155 = scmp.eq.s32.totalorder %s19, 1
      %p156 = por %p154, %p155
      %p157 = scmp.ne.s32.totalorder %s148, %s149
      %p158 = scmp.eq.s32.totalorder %s19, 0
      %p159 = por %p157, %p158
      %p160 = scmp.ne.s32.totalorder %s148, %s149
      %p161 = scmp.eq.s32.totalorder %s20, 1
      %p162 = por %p160, %p161
      %p164 = scmp.ne.s32.totalorder %s149, %s163
      %p165 = scmp.eq.s32.totalorder %s20, 0
      %p166 = por %p164, %p165
      %s168 = sadd.s32 %s167, 1
      %p171 = scmp.eq.s32.totalorder %s14, 1
      %p172 = scmp.ne.s32.totalorder %s167, %s169
      %p173 = scmp.eq.s32.totalorder %s14, 0
      %p174 = por %p172, %p173
      %p175 = scmp.ne.s32.totalorder %s167, %s169
      %p176 = scmp.eq.s32.totalorder %s19, 1
      %p177 = por %p175, %p176
      %p178 = scmp.ne.s32.totalorder %s169, %s170
      %p179 = scmp.eq.s32.totalorder %s19, 0
      %p180 = por %p178, %p179
      %p181 = scmp.ne.s32.totalorder %s169, %s170
      %p182 = scmp.eq.s32.totalorder %s20, 1
      %p183 = por %p181, %p182
      %p185 = scmp.ne.s32.totalorder %s170, %s184
      %p186 = scmp.eq.s32.totalorder %s20, 0
      %p187 = por %p185, %p186
      %s188 = ssub.s32 %s21, %s33
      %p189 = scmp.eq.s32.totalorder %s188, 0
      %s191 = sadd.s32 %s190, 1
      %s192 = scalar_select %p189, %s190, %s191
      %p195 = pneg %p189
      %p196 = scmp.eq.s32.totalorder %s14, 1
      %p197 = por %p195, %p196
      %p198 = scmp.ne.s32.totalorder %s190, %s193
      %p199 = scmp.eq.s32.totalorder %s14, 0
      %p200 = por %p198, %p199
      %p201 = scmp.ne.s32.totalorder %s190, %s193
      %p202 = scmp.eq.s32.totalorder %s19, 1
      %p203 = por %p201, %p202
      %p204 = scmp.ne.s32.totalorder %s193, %s194
      %p205 = scmp.eq.s32.totalorder %s19, 0
      %p206 = por %p204, %p205
      %p207 = scmp.ne.s32.totalorder %s193, %s194
      %p208 = scmp.eq.s32.totalorder %s20, 1
      %p209 = por %p207, %p208
      %p211 = scmp.ne.s32.totalorder %s194, %s210
      %p212 = scmp.eq.s32.totalorder %s20, 0
      %p213 = por %p211, %p212
      %p214 = scmp.le.s32.totalorder 1, %s14
      %p215 = scmp.lt.s32.totalorder %s14, 3
      %p216 = pnand %p214, %p215
      %p217 = pneg %p216
      // Predicated region
      $region9: #{_lambda_.1} parent=5 // pred_check
        _
      $region10: #{_lambda_.1} parent=5 // pred_check_branch
        %219 = sbr.rel (%p216) target = $region12
      $region11: #{_lambda_.1} parent=5 // pred_region
        %s220 = ssub.s32 %s14, 1
        // Predicated region
        $region13: #{_lambda_.1} parent=11 // pred_check
          %p221 = pneg %p75
        $region14: #{_lambda_.1} parent=11 // pred_check_branch
          %223 = sbr.rel (%p221) target = $region16
        $region15: #{_lambda_.1} parent=11 // pred_region
          _
        $region16: #{_lambda_.1} parent=11 // pred_fallthru
          _
        // Predicated region
        $region17: #{_lambda_.1} parent=11 // pred_check
          %p224 = pneg %p96
        $region18: #{_lambda_.1} parent=11 // pred_check_branch
          %226 = sbr.rel (%p224) target = $region20
        $region19: #{_lambda_.1} parent=11 // pred_region
          _
        $region20: #{_lambda_.1} parent=11 // pred_fallthru
          _
        // Predicated region
        $region21: #{_lambda_.1} parent=11 // pred_check
          %p227 = pneg %p117
        $region22: #{_lambda_.1} parent=11 // pred_check_branch
          %229 = sbr.rel (%p227) target = $region24
        $region23: #{_lambda_.1} parent=11 // pred_region
          %s231 = ssub.s32 23040, 23040
          %232 = vsyncadd [#allocation4], %s231
          %s233 = sshll.u32 [#allocation3], 4
          %s234 = int_to_ptr.vmem [resolvable:$true] %s233
          %239 = dma.hbm_to_vmem [thread:$0]  %s3, 23040, %s234, [#allocation4], 1920, 1920, 120
        $region24: #{_lambda_.1} parent=11 // pred_fallthru
          _
        // Predicated region
        $region25: #{_lambda_.1} parent=11 // pred_check
          %p240 = pneg %p138
        $region26: #{_lambda_.1} parent=11 // pred_check_branch
          %242 = sbr.rel (%p240) target = $region28
        $region27: #{_lambda_.1} parent=11 // pred_region
          _
        $region28: #{_lambda_.1} parent=11 // pred_fallthru
          _
        // Predicated region
        $region29: #{_lambda_.1} parent=11 // pred_check
          %p243 = pneg %p159
        $region30: #{_lambda_.1} parent=11 // pred_check_branch
          %245 = sbr.rel (%p243) target = $region32
        $region31: #{_lambda_.1} parent=11 // pred_region
          _
        $region32: #{_lambda_.1} parent=11 // pred_fallthru
          _
        // Predicated region
        $region33: #{_lambda_.1} parent=11 // pred_check
          %p246 = pneg %p180
        $region34: #{_lambda_.1} parent=11 // pred_check_branch
          %248 = sbr.rel (%p246) target = $region36
        $region35: #{_lambda_.1} parent=11 // pred_region
          _
        $region36: #{_lambda_.1} parent=11 // pred_fallthru
          _
      $region12: #{_lambda_.1} parent=5 // pred_fallthru
        _
      %p249 = scmp.lt.s32.totalorder %s14, 2
      // Predicated region
      $region37: #{_lambda_.1} parent=5 // pred_check
        %p250 = pneg %p249
      $region38: #{_lambda_.1} parent=5 // pred_check_branch
        %252 = sbr.rel (%p250) target = $region40
      $region39: #{_lambda_.1} parent=5 // pred_region
        // Predicated region
        $region41: #{_lambda_.1} parent=39 // pred_check
          %p253 = pneg %p48
        $region42: #{_lambda_.1} parent=39 // pred_check_branch
          %255 = sbr.rel (%p253) target = $region44
        $region43: #{_lambda_.1} parent=39 // pred_region
          %s256 = smul.u32 8, %s22
          %p257 = scmp.lt.s32.totalorder %s21, 1
          %s258 = scalar_select %p257, %s21, 1
          %p259 = scmp.lt.s32.totalorder %s256, 7
          %s260 = scalar_select %p259, %s256, 7
          %s261 = smul.addr %s258, 8
          %s262 = sadd.s32 %s260, %s261
          %s263 = smul.addr %s262, 4
          %s264 = scalar_lea.vmem %s0, %s263
          %s265 = smul.u32 8, %s22
        $region44: #{_lambda_.1} parent=39 // pred_fallthru
          _
      $region40: #{_lambda_.1} parent=5 // pred_fallthru
        _
      %p266 = scmp.le.s32.totalorder 1, %s14
      %p267 = scmp.lt.s32.totalorder %s14, 3
      %p268 = pnand %p266, %p267
      %p269 = pneg %p268
      // Predicated region
      $region45: #{_lambda_.1} parent=5 // pred_check
        _
      $region46: #{_lambda_.1} parent=5 // pred_check_branch
        %271 = sbr.rel (%p268) target = $region48
      $region47: #{_lambda_.1} parent=5 // pred_region
        %s272 = ssub.s32 %s14, 1
        // Predicated region
        $region49: #{_lambda_.1} parent=47 // pred_check
          %p273 = pneg %p117
        $region50: #{_lambda_.1} parent=47 // pred_check_branch
          %275 = sbr.rel (%p273) target = $region52
        $region51: #{_lambda_.1} parent=47 // pred_region
          %276 = dma.done [#allocation4], 23040
        $region52: #{_lambda_.1} parent=47 // pred_fallthru
          _
        %s277 = smul.u32 8, %s24
        %p278 = scmp.lt.s32.totalorder %s23, 1
        %s279 = scalar_select %p278, %s23, 1
        %p280 = scmp.lt.s32.totalorder %s277, 7
        %s281 = scalar_select %p280, %s277, 7
        %s282 = smul.addr %s279, 8
        %s283 = sadd.s32 %s281, %s282
        %s284 = smul.addr %s283, 4
        %s285 = scalar_lea.vmem %s0, %s284
        %p286 = pneg %p54
        %p287 = pneg %p51
        %p288 = pneg %p75
        %p289 = pneg %p72
        %p290 = pneg %p96
        %p291 = pneg %p93
        %p292 = pneg %p117
        %p293 = pneg %p114
        %p294 = pneg %p138
        %p295 = pneg %p135
        %p296 = pneg %p159
        %p297 = pneg %p156
        %p298 = pneg %p180
        %p299 = pneg %p177
        %p300 = pneg %p206
        %p301 = pneg %p203
        %p302 = scmp.lt.s32.totalorder %s23, 1
        %s303 = scalar_select %p302, %s23, 1
        %s304 = smul.addr %s303, 4
        %s305 = scalar_lea.vmem %s7, %s304
        %s306 = smul.u32 8, %s24
        %p307 = scmp.lt.s32.totalorder %s23, 1
        %s308 = scalar_select %p307, %s23, 1
        %p309 = scmp.lt.s32.totalorder %s306, 7
        %s310 = scalar_select %p309, %s306, 7
        %s311 = smul.addr %s308, 8
        %s312 = sadd.s32 %s310, %s311
        %s313 = smul.addr %s312, 4
        %s314 = scalar_lea.vmem %s0, %s313
        %s315 = smul.u32 8, %s24
        %p316 = scmp.lt.s32.totalorder %s23, 1
        %s317 = scalar_select %p316, %s23, 1
        %s318 = smul.addr %s317, 4
        %s319 = scalar_lea.vmem %s7, %s318
        %p321 = scmp.eq.s32.totalorder %s24, 0
        // Predicated region
        $region53: #{_lambda_.1} parent=47 // pred_check
          %p322 = pneg %p321
        $region54: #{_lambda_.1} parent=47 // pred_check_branch
          %324 = sbr.rel (%p322) target = $region56
        $region55: #{_lambda_.1} parent=47 // pred_region
          %325 = vst [vmem:[#allocation2] sm:$0xff] 0.0
          %326 = vst [vmem:[#allocation2 + $0x8] sm:$0xff] 0.0
          %327 = vst [vmem:[#allocation2 + $0x10] sm:$0xff] 0.0
          %v328 = vlaneseq
          %vm329 = vcmp.ge.s32.totalorder %v328, 0
          %vm330 = vcmp.lt.s32.totalorder %v328, 768
          %vm331 = vmand %vm329, %vm330
          %332 = vst.msk [vmem:[#allocation2 + $0x18] sm:$0x3f] %vm331, 0.0
        $region56: #{_lambda_.1} parent=47 // pred_fallthru
          _
        %v333 = vld [vmem:[%s314] sm:$0xf]
        %v334 = vld [vmem:[%s314 + $0x4] sm:$0xf]
        %v335 = vld [vmem:[%s314 + $0x8] sm:$0xf]
        %v336 = vld [vmem:[%s314 + $0xc] sm:$0xf]
        %v337 = vld [vmem:[%s314 + $0x10] sm:$0xf]
        %v338 = vld [vmem:[%s314 + $0x14] sm:$0xf]
        %v339 = vld [vmem:[%s314 + $0x18] sm:$0xf]
        %v340 = vld [vmem:[%s314 + $0x1c] sm:$0xf]
        %v341 = vld [vmem:[%s1] sm:$0xf]
        %v342 = vld [vmem:[%s1 + $0x4] sm:$0xf]
        %v343 = vld [vmem:[%s1 + $0x8] sm:$0xf]
        %v344 = vld [vmem:[%s1 + $0xc] sm:$0xf]
        %v345 = vld [vmem:[%s1 + $0x10] sm:$0xf]
        %v346 = vld [vmem:[%s1 + $0x14] sm:$0xf]
        %v347 = vld [vmem:[%s2] sm:$0x1]
        %v349 = vlaneseq
        %v350 = vshrl.u32 %v349, 7
        %v351 = vsub.s32 0, %v350
        %v352 = vrot.slane %v347, %v351
        %v362 = vunpack.c.l.b16 %v333
        %v363 = vunpack.c.l.b16 %v334
        %v364 = vunpack.c.l.b16 %v335
        %v365 = vunpack.c.l.b16 %v336
        %v366 = vunpack.c.l.b16 %v337
        %v367 = vunpack.c.l.b16 %v338
        %v368 = vunpack.c.l.b16 %v339
        %v369 = vunpack.c.l.b16 %v340
        %v370 = vpack.c.b16 %v363, %v362
        %v371 = vpack.c.b16 %v365, %v364
        %v372 = vpack.c.b16 %v367, %v366
        %v373 = vpack.c.b16 %v369, %v368
        %v380 = vunpack.c.l.b16 %v341
        %v381 = vunpack.c.l.b16 %v342
        %v382 = vunpack.c.l.b16 %v343
        %v383 = vunpack.c.l.b16 %v344
        %v384 = vunpack.c.l.b16 %v345
        %v385 = vunpack.c.l.b16 %v346
        %v386 = vpack.c.b16 %v381, %v380
        %v387 = vpack.c.b16 %v383, %v382
        %v388 = vpack.c.b16 %v385, %v384
        %vm392 = vcmask 392192
        %v394 = vsel %vm392, %v370, 0
        %v397 = vsel %vm392, %v371, 0
        %v400 = vsel %vm392, %v372, 0
        %v403 = vsel %vm392, %v373, 0
        %405 = vmatprep.subr.bf16.mxu0 0
        %406 = vmatpush1.bf16.msra.mxu0 0
        %407 = vmatprep.subr.bf16.mxu0 0
        %408 = vmatpush1.bf16.msra.mxu0 0
        %409 = vmatprep.subr.bf16.mxu0 0
        %410 = vmatpush1.bf16.msra.mxu0 0
        %411 = vmatprep.subr.bf16.mxu0 0
        %412 = vmatpush1.bf16.msra.mxu0 0
        %413 = vmatprep.subr.bf16.mxu0 0
        %414 = vmatpush1.bf16.msra.mxu0 0
        %415 = vmatprep.subr.bf16.mxu0 0
        %416 = vmatpush1.bf16.msra.mxu0 %v388
        %417 = vmatprep.subr.bf16.mxu0 0
        %418 = vmatpush1.bf16.msra.mxu0 %v387
        %419 = vmatprep.subr.bf16.mxu0 0
        %420 = vmatpush1.bf16.msra.mxu0 %v386
        %421 = vmatprep.subr.bf16.mxu0 0
        %422 = vmatpush2.bf16.msra.mxu0 0
        %423 = vmatprep.subr.bf16.mxu0 0
        %424 = vmatpush2.bf16.msra.mxu0 0
        %425 = vmatprep.subr.bf16.mxu0 0
        %426 = vmatpush2.bf16.msra.mxu0 0
        %427 = vmatprep.subr.bf16.mxu0 0
        %428 = vmatpush2.bf16.msra.mxu0 0
        %429 = vmatprep.subr.bf16.mxu0 0
        %430 = vmatpush2.bf16.msra.mxu0 0
        %431 = vmatprep.subr.bf16.mxu0 0
        %432 = vmatpush2.bf16.msra.mxu0 0
        %433 = vmatprep.subr.bf16.mxu0 0
        %434 = vmatpush2.bf16.msra.mxu0 0
        %435 = vmatprep.subr.bf16.mxu0 0
        %436 = vmatpush2.bf16.msra.mxu0 0
        %437 = vmatprep.mubr.bf16.mxu0 0
        %438 = vmatmul.mubr.bf16.gmra.mxu0 %v394
        %v439 = vpop.f32.mrf.mxu0
        %v440 = vadd.f32 %v352, %v439
        %v441 = vpop.f32.mrf.mxu0
        %v442 = vpop.f32.mrf.mxu0
        %v443 = vadd.f32 %v352, %v442
        %v444 = vpop.f32.mrf.mxu0
        %445 = vmatprep.mubr.bf16.mxu0 0
        %446 = vmatmul.mubr.bf16.gmra.mxu0 %v397
        %v447 = vpop.f32.mrf.mxu0
        %v448 = vadd.f32 %v352, %v447
        %v449 = vpop.f32.mrf.mxu0
        %v450 = vpop.f32.mrf.mxu0
        %v451 = vadd.f32 %v352, %v450
        %v452 = vpop.f32.mrf.mxu0
        %453 = vmatprep.mubr.bf16.mxu0 0
        %454 = vmatmul.mubr.bf16.gmra.mxu0 %v400
        %v455 = vpop.f32.mrf.mxu0
        %v456 = vadd.f32 %v352, %v455
        %v457 = vpop.f32.mrf.mxu0
        %v458 = vpop.f32.mrf.mxu0
        %v459 = vadd.f32 %v352, %v458
        %v460 = vpop.f32.mrf.mxu0
        %461 = vmatprep.mubr.bf16.mxu0 0
        %462 = vmatmul.mubr.bf16.gmra.mxu0 %v403
        %v463 = vpop.f32.mrf.mxu0
        %v464 = vadd.f32 %v352, %v463
        %v465 = vpop.f32.mrf.mxu0
        %v466 = vpop.f32.mrf.mxu0
        %v467 = vadd.f32 %v352, %v466
        %v468 = vpop.f32.mrf.mxu0
        %469 = vdwg.mxu0
        %v470 = vxor.u32 %v440, 2147483648
        %v471 = vxor.u32 %v443, 2147483648
        %v472 = vxor.u32 %v448, 2147483648
        %v473 = vxor.u32 %v451, 2147483648
        %v474 = vxor.u32 %v456, 2147483648
        %v475 = vxor.u32 %v459, 2147483648
        %v476 = vxor.u32 %v464, 2147483648
        %v477 = vxor.u32 %v467, 2147483648
        %v478 = vmul.f32 %v470, 1.442695
        %v479 = vpow.pop %v478
        %v480 = vmul.f32 %v471, 1.442695
        %v481 = vpow.pop %v480
        %v482 = vmul.f32 %v472, 1.442695
        %v483 = vpow.pop %v482
        %v484 = vmul.f32 %v473, 1.442695
        %v485 = vpow.pop %v484
        %v486 = vmul.f32 %v474, 1.442695
        %v487 = vpow.pop %v486
        %v488 = vmul.f32 %v475, 1.442695
        %v489 = vpow.pop %v488
        %v490 = vmul.f32 %v476, 1.442695
        %v491 = vpow.pop %v490
        %v492 = vmul.f32 %v477, 1.442695
        %v493 = vpow.pop %v492
        %v494 = vadd.f32 %v479, 1.0
        %v495 = vadd.f32 %v481, 1.0
        %v496 = vadd.f32 %v483, 1.0
        %v497 = vadd.f32 %v485, 1.0
        %v498 = vadd.f32 %v487, 1.0
        %v499 = vadd.f32 %v489, 1.0
        %v500 = vadd.f32 %v491, 1.0
        %v501 = vadd.f32 %v493, 1.0
        %v502 = vrcp.pop %v494
        %v503 = vmul.f32 1.0, %v502
        %v504 = vrcp.pop %v495
        %v505 = vmul.f32 1.0, %v504
        %v506 = vrcp.pop %v496
        %v507 = vmul.f32 1.0, %v506
        %v508 = vrcp.pop %v497
        %v509 = vmul.f32 1.0, %v508
        %v510 = vrcp.pop %v498
        %v511 = vmul.f32 1.0, %v510
        %v512 = vrcp.pop %v499
        %v513 = vmul.f32 1.0, %v512
        %v514 = vrcp.pop %v500
        %v515 = vmul.f32 1.0, %v514
        %v516 = vrcp.pop %v501
        %v517 = vmul.f32 1.0, %v516
        %v518 = vmul.f32 %v440, %v503
        %v519 = vmul.f32 %v443, %v505
        %v520 = vmul.f32 %v448, %v507
        %v521 = vmul.f32 %v451, %v509
        %v522 = vmul.f32 %v456, %v511
        %v523 = vmul.f32 %v459, %v513
        %v524 = vmul.f32 %v464, %v515
        %v525 = vmul.f32 %v467, %v517
        %v526 = vpack.c.bf16 %v519, %v518
        %v527 = vpack.c.bf16 %v521, %v520
        %v528 = vpack.c.bf16 %v523, %v522
        %v529 = vpack.c.bf16 %v525, %v524
        %v530 = vld [vmem:[#allocation3] sm:$0xff]
        %v531 = vld [vmem:[#allocation3 + $0x8] sm:$0xff]
        %v532 = vld [vmem:[#allocation3 + $0x10] sm:$0xff]
        %v533 = vld [vmem:[#allocation3 + $0x18] sm:$0xff]
        %v534 = vld [vmem:[#allocation3 + $0x20] sm:$0xff]
        %v535 = vld [vmem:[#allocation3 + $0x28] sm:$0xff]
        %v536 = vld [vmem:[#allocation3 + $0x30] sm:$0xff]
        %v537 = vld [vmem:[#allocation3 + $0x38] sm:$0xff]
        %v538 = vld [vmem:[#allocation3 + $0x40] sm:$0xff]
        %v539 = vld [vmem:[#allocation3 + $0x48] sm:$0xff]
        %v540 = vld [vmem:[#allocation3 + $0x50] sm:$0xff]
        %v541 = vld [vmem:[#allocation3 + $0x58] sm:$0xff]
        %v542 = vld [vmem:[#allocation3 + $0x60] sm:$0xff]
        %v543 = vld [vmem:[#allocation3 + $0x68] sm:$0xff]
        %v544 = vld [vmem:[#allocation3 + $0x70] sm:$0xff]
        %v545 = vld [vmem:[#allocation3 + $0x78] sm:$0xff]
        %v546 = vld [vmem:[#allocation3 + $0x80] sm:$0xff]
        %v547 = vld [vmem:[#allocation3 + $0x88] sm:$0xff]
        %v548 = vld [vmem:[#allocation3 + $0x90] sm:$0xff]
        %v549 = vld [vmem:[#allocation3 + $0x98] sm:$0xff]
        %v550 = vld [vmem:[#allocation3 + $0xa0] sm:$0xff]
        %v551 = vld [vmem:[#allocation3 + $0xa8] sm:$0xff]
        %v552 = vld [vmem:[#allocation3 + $0xb0] sm:$0xff]
        %v553 = vld [vmem:[#allocation3 + $0xb8] sm:$0xff]
        %v554 = vld [vmem:[#allocation3 + $0xc0] sm:$0xff]
        %v555 = vld [vmem:[#allocation3 + $0xc8] sm:$0xff]
        %v556 = vld [vmem:[#allocation3 + $0xd0] sm:$0xff]
        %v557 = vld [vmem:[#allocation3 + $0xd8] sm:$0xff]
        %v558 = vld [vmem:[#allocation3 + $0xe0] sm:$0xff]
        %v559 = vld [vmem:[#allocation3 + $0xe8] sm:$0xff]
        %v560 = vld [vmem:[#allocation3 + $0xf0] sm:$0xff]
        %v561 = vld [vmem:[#allocation3 + $0xf8] sm:$0xff]
        %v562 = vld [vmem:[#allocation3 + $0x100] sm:$0xff]
        %v563 = vld [vmem:[#allocation3 + $0x108] sm:$0xff]
        %v564 = vld [vmem:[#allocation3 + $0x110] sm:$0xff]
        %v565 = vld [vmem:[#allocation3 + $0x118] sm:$0xff]
        %v566 = vld [vmem:[#allocation3 + $0x120] sm:$0xff]
        %v567 = vld [vmem:[#allocation3 + $0x128] sm:$0xff]
        %v568 = vld [vmem:[#allocation3 + $0x130] sm:$0xff]
        %v569 = vld [vmem:[#allocation3 + $0x138] sm:$0xff]
        %v570 = vld [vmem:[#allocation3 + $0x140] sm:$0xff]
        %v571 = vld [vmem:[#allocation3 + $0x148] sm:$0xff]
        %v572 = vld [vmem:[#allocation3 + $0x150] sm:$0xff]
        %v573 = vld [vmem:[#allocation3 + $0x158] sm:$0xff]
        %v574 = vld [vmem:[#allocation3 + $0x160] sm:$0xff]
        %v575 = vld [vmem:[#allocation3 + $0x168] sm:$0xff]
        %v576 = vld [vmem:[#allocation3 + $0x170] sm:$0xff]
        %v577 = vld [vmem:[#allocation3 + $0x178] sm:$0xff]
        %v578 = vld [vmem:[#allocation3 + $0x180] sm:$0xff]
        %v579 = vld [vmem:[#allocation3 + $0x188] sm:$0xff]
        %v580 = vld [vmem:[#allocation3 + $0x190] sm:$0xff]
        %v581 = vld [vmem:[#allocation3 + $0x198] sm:$0xff]
        %v582 = vld [vmem:[#allocation3 + $0x1a0] sm:$0xff]
        %v583 = vld [vmem:[#allocation3 + $0x1a8] sm:$0xff]
        %v584 = vld [vmem:[#allocation3 + $0x1b0] sm:$0xff]
        %v585 = vld [vmem:[#allocation3 + $0x1b8] sm:$0xff]
        %v586 = vld [vmem:[#allocation3 + $0x1c0] sm:$0xff]
        %v587 = vld [vmem:[#allocation3 + $0x1c8] sm:$0xff]
        %v588 = vld [vmem:[#allocation3 + $0x1d0] sm:$0xff]
        %v589 = vld [vmem:[#allocation3 + $0x1d8] sm:$0xff]
        %v590 = vld [vmem:[#allocation3 + $0x1e0] sm:$0xff]
        %v591 = vld [vmem:[#allocation3 + $0x1e8] sm:$0xff]
        %v592 = vld [vmem:[#allocation3 + $0x1f0] sm:$0xff]
        %v593 = vld [vmem:[#allocation3 + $0x1f8] sm:$0xff]
        %v594 = vld [vmem:[#allocation3 + $0x200] sm:$0xff]
        %v595 = vld [vmem:[#allocation3 + $0x208] sm:$0xff]
        %v596 = vld [vmem:[#allocation3 + $0x210] sm:$0xff]
        %v597 = vld [vmem:[#allocation3 + $0x218] sm:$0xff]
        %v598 = vld [vmem:[#allocation3 + $0x220] sm:$0xff]
        %v599 = vld [vmem:[#allocation3 + $0x228] sm:$0xff]
        %v600 = vld [vmem:[#allocation3 + $0x230] sm:$0xff]
        %v601 = vld [vmem:[#allocation3 + $0x238] sm:$0xff]
        %v602 = vld [vmem:[#allocation3 + $0x240] sm:$0xff]
        %v603 = vld [vmem:[#allocation3 + $0x248] sm:$0xff]
        %v604 = vld [vmem:[#allocation3 + $0x250] sm:$0xff]
        %v605 = vld [vmem:[#allocation3 + $0x258] sm:$0xff]
        %v606 = vld [vmem:[#allocation3 + $0x260] sm:$0xff]
        %v607 = vld [vmem:[#allocation3 + $0x268] sm:$0xff]
        %v608 = vld [vmem:[#allocation3 + $0x270] sm:$0xff]
        %v609 = vld [vmem:[#allocation3 + $0x278] sm:$0xff]
        %v610 = vld [vmem:[#allocation3 + $0x280] sm:$0xff]
        %v611 = vld [vmem:[#allocation3 + $0x288] sm:$0xff]
        %v612 = vld [vmem:[#allocation3 + $0x290] sm:$0xff]
        %v613 = vld [vmem:[#allocation3 + $0x298] sm:$0xff]
        %v614 = vld [vmem:[#allocation3 + $0x2a0] sm:$0xff]
        %v615 = vld [vmem:[#allocation3 + $0x2a8] sm:$0xff]
        %v616 = vld [vmem:[#allocation3 + $0x2b0] sm:$0xff]
        %v617 = vld [vmem:[#allocation3 + $0x2b8] sm:$0xff]
        %v618 = vld [vmem:[#allocation3 + $0x2c0] sm:$0xff]
        %v619 = vld [vmem:[#allocation3 + $0x2c8] sm:$0xff]
        %v620 = vld [vmem:[#allocation3 + $0x2d0] sm:$0xff]
        %v621 = vld [vmem:[#allocation3 + $0x2d8] sm:$0xff]
        %v622 = vld [vmem:[#allocation3 + $0x2e0] sm:$0xff]
        %v623 = vld [vmem:[#allocation3 + $0x2e8] sm:$0xff]
        %v624 = vld [vmem:[#allocation3 + $0x2f0] sm:$0xff]
        %v625 = vld [vmem:[#allocation3 + $0x2f8] sm:$0xff]
        %v626 = vld [vmem:[#allocation3 + $0x300] sm:$0xff]
        %v627 = vld [vmem:[#allocation3 + $0x308] sm:$0xff]
        %v628 = vld [vmem:[#allocation3 + $0x310] sm:$0xff]
        %v629 = vld [vmem:[#allocation3 + $0x318] sm:$0xff]
        %v630 = vld [vmem:[#allocation3 + $0x320] sm:$0xff]
        %v631 = vld [vmem:[#allocation3 + $0x328] sm:$0xff]
        %v632 = vld [vmem:[#allocation3 + $0x330] sm:$0xff]
        %v633 = vld [vmem:[#allocation3 + $0x338] sm:$0xff]
        %v634 = vld [vmem:[#allocation3 + $0x340] sm:$0xff]
        %v635 = vld [vmem:[#allocation3 + $0x348] sm:$0xff]
        %v636 = vld [vmem:[#allocation3 + $0x350] sm:$0xff]
        %v637 = vld [vmem:[#allocation3 + $0x358] sm:$0xff]
        %v638 = vld [vmem:[#allocation3 + $0x360] sm:$0xff]
        %v639 = vld [vmem:[#allocation3 + $0x368] sm:$0xff]
        %v640 = vld [vmem:[#allocation3 + $0x370] sm:$0xff]
        %v641 = vld [vmem:[#allocation3 + $0x378] sm:$0xff]
        %v642 = vld [vmem:[#allocation3 + $0x380] sm:$0xff]
        %v643 = vld [vmem:[#allocation3 + $0x388] sm:$0xff]
        %v644 = vld [vmem:[#allocation3 + $0x390] sm:$0xff]
        %v645 = vld [vmem:[#allocation3 + $0x398] sm:$0xff]
        %v646 = vld [vmem:[#allocation3 + $0x3a0] sm:$0xff]
        %v647 = vld [vmem:[#allocation3 + $0x3a8] sm:$0xff]
        %v648 = vld [vmem:[#allocation3 + $0x3b0] sm:$0xff]
        %v649 = vld [vmem:[#allocation3 + $0x3b8] sm:$0xff]
        %v650 = vld [vmem:[#allocation3 + $0x3c0] sm:$0xff]
        %v651 = vld [vmem:[#allocation3 + $0x3c8] sm:$0xff]
        %v652 = vld [vmem:[#allocation3 + $0x3d0] sm:$0xff]
        %v653 = vld [vmem:[#allocation3 + $0x3d8] sm:$0xff]
        %v654 = vld [vmem:[#allocation3 + $0x3e0] sm:$0xff]
        %v655 = vld [vmem:[#allocation3 + $0x3e8] sm:$0xff]
        %v656 = vld [vmem:[#allocation3 + $0x3f0] sm:$0xff]
        %v657 = vld [vmem:[#allocation3 + $0x3f8] sm:$0xff]
        %v658 = vld [vmem:[#allocation3 + $0x400] sm:$0xff]
        %v659 = vld [vmem:[#allocation3 + $0x408] sm:$0xff]
        %v660 = vld [vmem:[#allocation3 + $0x410] sm:$0xff]
        %v661 = vld [vmem:[#allocation3 + $0x418] sm:$0xff]
        %v662 = vld [vmem:[#allocation3 + $0x420] sm:$0xff]
        %v663 = vld [vmem:[#allocation3 + $0x428] sm:$0xff]
        %v664 = vld [vmem:[#allocation3 + $0x430] sm:$0xff]
        %v665 = vld [vmem:[#allocation3 + $0x438] sm:$0xff]
        %v666 = vld [vmem:[#allocation3 + $0x440] sm:$0xff]
        %v667 = vld [vmem:[#allocation3 + $0x448] sm:$0xff]
        %v668 = vld [vmem:[#allocation3 + $0x450] sm:$0xff]
        %v669 = vld [vmem:[#allocation3 + $0x458] sm:$0xff]
        %v670 = vld [vmem:[#allocation3 + $0x460] sm:$0xff]
        %v671 = vld [vmem:[#allocation3 + $0x468] sm:$0xff]
        %v672 = vld [vmem:[#allocation3 + $0x470] sm:$0xff]
        %v673 = vld [vmem:[#allocation3 + $0x478] sm:$0xff]
        %v674 = vld [vmem:[#allocation3 + $0x480] sm:$0xff]
        %v675 = vld [vmem:[#allocation3 + $0x488] sm:$0xff]
        %v676 = vld [vmem:[#allocation3 + $0x490] sm:$0xff]
        %v677 = vld [vmem:[#allocation3 + $0x498] sm:$0xff]
        %v678 = vld [vmem:[#allocation3 + $0x4a0] sm:$0xff]
        %v679 = vld [vmem:[#allocation3 + $0x4a8] sm:$0xff]
        %v680 = vld [vmem:[#allocation3 + $0x4b0] sm:$0xff]
        %v681 = vld [vmem:[#allocation3 + $0x4b8] sm:$0xff]
        %v682 = vld [vmem:[#allocation3 + $0x4c0] sm:$0xff]
        %v683 = vld [vmem:[#allocation3 + $0x4c8] sm:$0xff]
        %v684 = vld [vmem:[#allocation3 + $0x4d0] sm:$0xff]
        %v685 = vld [vmem:[#allocation3 + $0x4d8] sm:$0xff]
        %v686 = vld [vmem:[#allocation3 + $0x4e0] sm:$0xff]
        %v687 = vld [vmem:[#allocation3 + $0x4e8] sm:$0xff]
        %v688 = vld [vmem:[#allocation3 + $0x4f0] sm:$0xff]
        %v689 = vld [vmem:[#allocation3 + $0x4f8] sm:$0xff]
        %v690 = vld [vmem:[#allocation3 + $0x500] sm:$0xff]
        %v691 = vld [vmem:[#allocation3 + $0x508] sm:$0xff]
        %v692 = vld [vmem:[#allocation3 + $0x510] sm:$0xff]
        %v693 = vld [vmem:[#allocation3 + $0x518] sm:$0xff]
        %v694 = vld [vmem:[#allocation3 + $0x520] sm:$0xff]
        %v695 = vld [vmem:[#allocation3 + $0x528] sm:$0xff]
        %v696 = vld [vmem:[#allocation3 + $0x530] sm:$0xff]
        %v697 = vld [vmem:[#allocation3 + $0x538] sm:$0xff]
        %v698 = vld [vmem:[#allocation3 + $0x540] sm:$0xff]
        %v699 = vld [vmem:[#allocation3 + $0x548] sm:$0xff]
        %v700 = vld [vmem:[#allocation3 + $0x550] sm:$0xff]
        %v701 = vld [vmem:[#allocation3 + $0x558] sm:$0xff]
        %v702 = vld [vmem:[#allocation3 + $0x560] sm:$0xff]
        %v703 = vld [vmem:[#allocation3 + $0x568] sm:$0xff]
        %v704 = vld [vmem:[#allocation3 + $0x570] sm:$0xff]
        %v705 = vld [vmem:[#allocation3 + $0x578] sm:$0xff]
        %v706 = vld [vmem:[#allocation3 + $0x580] sm:$0xff]
        %v707 = vld [vmem:[#allocation3 + $0x588] sm:$0xff]
        %v708 = vld [vmem:[#allocation3 + $0x590] sm:$0xff]
        %v709 = vld [vmem:[#allocation3 + $0x598] sm:$0xff]
        %v710 = vld [vmem:[%s4] sm:$0xff]
        %v711 = vld [vmem:[%s4 + $0x8] sm:$0xff]
        %v712 = vld [vmem:[%s4 + $0x10] sm:$0xff]
        %v713 = vld [vmem:[%s4 + $0x18] sm:$0x3f]
        %v718 = vlaneseq
        %v719 = vshrl.u32 %v718, 7
        %v720 = vsub.s32 0, %v719
        %v721 = vrot.slane %v710, %v720
        %v722 = vlaneseq
        %v723 = vshrl.u32 %v722, 7
        %v724 = vsub.s32 1, %v723
        %v725 = vrot.slane %v710, %v724
        %v726 = vlaneseq
        %v727 = vshrl.u32 %v726, 7
        %v728 = vsub.s32 2, %v727
        %v729 = vrot.slane %v710, %v728
        %v730 = vlaneseq
        %v731 = vshrl.u32 %v730, 7
        %v732 = vsub.s32 3, %v731
        %v733 = vrot.slane %v710, %v732
        %v734 = vlaneseq
        %v735 = vshrl.u32 %v734, 7
        %v736 = vsub.s32 4, %v735
        %v737 = vrot.slane %v710, %v736
        %v738 = vlaneseq
        %v739 = vshrl.u32 %v738, 7
        %v740 = vsub.s32 5, %v739
        %v741 = vrot.slane %v710, %v740
        %v742 = vlaneseq
        %v743 = vshrl.u32 %v742, 7
        %v744 = vsub.s32 6, %v743
        %v745 = vrot.slane %v710, %v744
        %v746 = vlaneseq
        %v747 = vshrl.u32 %v746, 7
        %v748 = vsub.s32 7, %v747
        %v749 = vrot.slane %v710, %v748
        %v750 = vlaneseq
        %v751 = vshrl.u32 %v750, 7
        %v752 = vsub.s32 0, %v751
        %v753 = vrot.slane %v711, %v752
        %v754 = vlaneseq
        %v755 = vshrl.u32 %v754, 7
        %v756 = vsub.s32 1, %v755
        %v757 = vrot.slane %v711, %v756
        %v758 = vlaneseq
        %v759 = vshrl.u32 %v758, 7
        %v760 = vsub.s32 2, %v759
        %v761 = vrot.slane %v711, %v760
        %v762 = vlaneseq
        %v763 = vshrl.u32 %v762, 7
        %v764 = vsub.s32 3, %v763
        %v765 = vrot.slane %v711, %v764
        %v766 = vlaneseq
        %v767 = vshrl.u32 %v766, 7
        %v768 = vsub.s32 4, %v767
        %v769 = vrot.slane %v711, %v768
        %v770 = vlaneseq
        %v771 = vshrl.u32 %v770, 7
        %v772 = vsub.s32 5, %v771
        %v773 = vrot.slane %v711, %v772
        %v774 = vlaneseq
        %v775 = vshrl.u32 %v774, 7
        %v776 = vsub.s32 6, %v775
        %v777 = vrot.slane %v711, %v776
        %v778 = vlaneseq
        %v779 = vshrl.u32 %v778, 7
        %v780 = vsub.s32 7, %v779
        %v781 = vrot.slane %v711, %v780
        %v782 = vlaneseq
        %v783 = vshrl.u32 %v782, 7
        %v784 = vsub.s32 0, %v783
        %v785 = vrot.slane %v712, %v784
        %v786 = vlaneseq
        %v787 = vshrl.u32 %v786, 7
        %v788 = vsub.s32 1, %v787
        %v789 = vrot.slane %v712, %v788
        %v790 = vlaneseq
        %v791 = vshrl.u32 %v790, 7
        %v792 = vsub.s32 2, %v791
        %v793 = vrot.slane %v712, %v792
        %v794 = vlaneseq
        %v795 = vshrl.u32 %v794, 7
        %v796 = vsub.s32 3, %v795
        %v797 = vrot.slane %v712, %v796
        %v798 = vlaneseq
        %v799 = vshrl.u32 %v798, 7
        %v800 = vsub.s32 4, %v799
        %v801 = vrot.slane %v712, %v800
        %v802 = vlaneseq
        %v803 = vshrl.u32 %v802, 7
        %v804 = vsub.s32 5, %v803
        %v805 = vrot.slane %v712, %v804
        %v806 = vlaneseq
        %v807 = vshrl.u32 %v806, 7
        %v808 = vsub.s32 6, %v807
        %v809 = vrot.slane %v712, %v808
        %v810 = vlaneseq
        %v811 = vshrl.u32 %v810, 7
        %v812 = vsub.s32 7, %v811
        %v813 = vrot.slane %v712, %v812
        %v814 = vlaneseq
        %v815 = vshrl.u32 %v814, 7
        %v816 = vsub.s32 0, %v815
        %v817 = vrot.slane %v713, %v816
        %v818 = vlaneseq
        %v819 = vshrl.u32 %v818, 7
        %v820 = vsub.s32 1, %v819
        %v821 = vrot.slane %v713, %v820
        %v822 = vlaneseq
        %v823 = vshrl.u32 %v822, 7
        %v824 = vsub.s32 2, %v823
        %v825 = vrot.slane %v713, %v824
        %v826 = vlaneseq
        %v827 = vshrl.u32 %v826, 7
        %v828 = vsub.s32 3, %v827
        %v829 = vrot.slane %v713, %v828
        %v830 = vlaneseq
        %v831 = vshrl.u32 %v830, 7
        %v832 = vsub.s32 4, %v831
        %v833 = vrot.slane %v713, %v832
        %v834 = vlaneseq
        %v835 = vshrl.u32 %v834, 7
        %v836 = vsub.s32 5, %v835
        %v837 = vrot.slane %v713, %v836
        %v1048 = vunpack.c.l.b16 %v530
        %v1049 = vunpack.c.h.b16 %v530
        %v1050 = vunpack.c.l.b16 %v531
        %v1051 = vunpack.c.h.b16 %v531
        %v1052 = vunpack.c.l.b16 %v532
        %v1053 = vunpack.c.h.b16 %v532
        %v1054 = vunpack.c.l.b16 %v533
        %v1055 = vunpack.c.h.b16 %v533
        %v1056 = vunpack.c.l.b16 %v534
        %v1057 = vunpack.c.h.b16 %v534
        %v1058 = vunpack.c.l.b16 %v535
        %v1059 = vunpack.c.h.b16 %v535
        %v1060 = vunpack.c.l.b16 %v536
        %v1061 = vunpack.c.h.b16 %v536
        %v1062 = vunpack.c.l.b16 %v537
        %v1063 = vunpack.c.h.b16 %v537
        %v1064 = vunpack.c.l.b16 %v538
        %v1065 = vunpack.c.h.b16 %v538
        %v1066 = vunpack.c.l.b16 %v539
        %v1067 = vunpack.c.h.b16 %v539
        %v1068 = vunpack.c.l.b16 %v540
        %v1069 = vunpack.c.h.b16 %v540
        %v1070 = vunpack.c.l.b16 %v541
        %v1071 = vunpack.c.h.b16 %v541
        %v1072 = vunpack.c.l.b16 %v542
        %v1073 = vunpack.c.h.b16 %v542
        %v1074 = vunpack.c.l.b16 %v543
        %v1075 = vunpack.c.h.b16 %v543
        %v1076 = vunpack.c.l.b16 %v544
        %v1077 = vunpack.c.h.b16 %v544
        %v1078 = vunpack.c.l.b16 %v545
        %v1079 = vunpack.c.h.b16 %v545
        %v1080 = vunpack.c.l.b16 %v546
        %v1081 = vunpack.c.h.b16 %v546
        %v1082 = vunpack.c.l.b16 %v547
        %v1083 = vunpack.c.h.b16 %v547
        %v1084 = vunpack.c.l.b16 %v548
        %v1085 = vunpack.c.h.b16 %v548
        %v1086 = vunpack.c.l.b16 %v549
        %v1087 = vunpack.c.h.b16 %v549
        %v1088 = vunpack.c.l.b16 %v550
        %v1089 = vunpack.c.h.b16 %v550
        %v1090 = vunpack.c.l.b16 %v551
        %v1091 = vunpack.c.h.b16 %v551
        %v1092 = vunpack.c.l.b16 %v552
        %v1093 = vunpack.c.h.b16 %v552
        %v1094 = vunpack.c.l.b16 %v553
        %v1095 = vunpack.c.h.b16 %v553
        %v1096 = vunpack.c.l.b16 %v554
        %v1097 = vunpack.c.h.b16 %v554
        %v1098 = vunpack.c.l.b16 %v555
        %v1099 = vunpack.c.h.b16 %v555
        %v1100 = vunpack.c.l.b16 %v556
        %v1101 = vunpack.c.h.b16 %v556
        %v1102 = vunpack.c.l.b16 %v557
        %v1103 = vunpack.c.h.b16 %v557
        %v1104 = vunpack.c.l.b16 %v558
        %v1105 = vunpack.c.h.b16 %v558
        %v1106 = vunpack.c.l.b16 %v559
        %v1107 = vunpack.c.h.b16 %v559
        %v1108 = vunpack.c.l.b16 %v560
        %v1109 = vunpack.c.h.b16 %v560
        %v1110 = vunpack.c.l.b16 %v561
        %v1111 = vunpack.c.h.b16 %v561
        %v1112 = vunpack.c.l.b16 %v562
        %v1113 = vunpack.c.h.b16 %v562
        %v1114 = vunpack.c.l.b16 %v563
        %v1115 = vunpack.c.h.b16 %v563
        %v1116 = vunpack.c.l.b16 %v564
        %v1117 = vunpack.c.h.b16 %v564
        %v1118 = vunpack.c.l.b16 %v565
        %v1119 = vunpack.c.h.b16 %v565
        %v1120 = vunpack.c.l.b16 %v566
        %v1121 = vunpack.c.h.b16 %v566
        %v1122 = vunpack.c.l.b16 %v567
        %v1123 = vunpack.c.h.b16 %v567
        %v1124 = vunpack.c.l.b16 %v568
        %v1125 = vunpack.c.h.b16 %v568
        %v1126 = vunpack.c.l.b16 %v569
        %v1127 = vunpack.c.h.b16 %v569
        %v1128 = vunpack.c.l.b16 %v570
        %v1129 = vunpack.c.h.b16 %v570
        %v1130 = vunpack.c.l.b16 %v571
        %v1131 = vunpack.c.h.b16 %v571
        %v1132 = vunpack.c.l.b16 %v572
        %v1133 = vunpack.c.h.b16 %v572
        %v1134 = vunpack.c.l.b16 %v573
        %v1135 = vunpack.c.h.b16 %v573
        %v1136 = vunpack.c.l.b16 %v574
        %v1137 = vunpack.c.h.b16 %v574
        %v1138 = vunpack.c.l.b16 %v575
        %v1139 = vunpack.c.h.b16 %v575
        %v1140 = vunpack.c.l.b16 %v576
        %v1141 = vunpack.c.h.b16 %v576
        %v1142 = vunpack.c.l.b16 %v577
        %v1143 = vunpack.c.h.b16 %v577
        %v1144 = vunpack.c.l.b16 %v578
        %v1145 = vunpack.c.h.b16 %v578
        %v1146 = vunpack.c.l.b16 %v579
        %v1147 = vunpack.c.h.b16 %v579
        %v1148 = vunpack.c.l.b16 %v580
        %v1149 = vunpack.c.h.b16 %v580
        %v1150 = vunpack.c.l.b16 %v581
        %v1151 = vunpack.c.h.b16 %v581
        %v1152 = vunpack.c.l.b16 %v582
        %v1153 = vunpack.c.h.b16 %v582
        %v1154 = vunpack.c.l.b16 %v583
        %v1155 = vunpack.c.h.b16 %v583
        %v1156 = vunpack.c.l.b16 %v584
        %v1157 = vunpack.c.h.b16 %v584
        %v1158 = vunpack.c.l.b16 %v585
        %v1159 = vunpack.c.h.b16 %v585
        %v1160 = vunpack.c.l.b16 %v586
        %v1161 = vunpack.c.h.b16 %v586
        %v1162 = vunpack.c.l.b16 %v587
        %v1163 = vunpack.c.h.b16 %v587
        %v1164 = vunpack.c.l.b16 %v588
        %v1165 = vunpack.c.h.b16 %v588
        %v1166 = vunpack.c.l.b16 %v589
        %v1167 = vunpack.c.h.b16 %v589
        %v1168 = vunpack.c.l.b16 %v590
        %v1169 = vunpack.c.h.b16 %v590
        %v1170 = vunpack.c.l.b16 %v591
        %v1171 = vunpack.c.h.b16 %v591
        %v1172 = vunpack.c.l.b16 %v592
        %v1173 = vunpack.c.h.b16 %v592
        %v1174 = vunpack.c.l.b16 %v593
        %v1175 = vunpack.c.h.b16 %v593
        %v1176 = vunpack.c.l.b16 %v594
        %v1177 = vunpack.c.h.b16 %v594
        %v1178 = vunpack.c.l.b16 %v595
        %v1179 = vunpack.c.h.b16 %v595
        %v1180 = vunpack.c.l.b16 %v596
        %v1181 = vunpack.c.h.b16 %v596
        %v1182 = vunpack.c.l.b16 %v597
        %v1183 = vunpack.c.h.b16 %v597
        %v1184 = vunpack.c.l.b16 %v598
        %v1185 = vunpack.c.h.b16 %v598
        %v1186 = vunpack.c.l.b16 %v599
        %v1187 = vunpack.c.h.b16 %v599
        %v1188 = vunpack.c.l.b16 %v600
        %v1189 = vunpack.c.h.b16 %v600
        %v1190 = vunpack.c.l.b16 %v601
        %v1191 = vunpack.c.h.b16 %v601
        %v1192 = vunpack.c.l.b16 %v602
        %v1193 = vunpack.c.h.b16 %v602
        %v1194 = vunpack.c.l.b16 %v603
        %v1195 = vunpack.c.h.b16 %v603
        %v1196 = vunpack.c.l.b16 %v604
        %v1197 = vunpack.c.h.b16 %v604
        %v1198 = vunpack.c.l.b16 %v605
        %v1199 = vunpack.c.h.b16 %v605
        %v1200 = vunpack.c.l.b16 %v606
        %v1201 = vunpack.c.h.b16 %v606
        %v1202 = vunpack.c.l.b16 %v607
        %v1203 = vunpack.c.h.b16 %v607
        %v1204 = vunpack.c.l.b16 %v608
        %v1205 = vunpack.c.h.b16 %v608
        %v1206 = vunpack.c.l.b16 %v609
        %v1207 = vunpack.c.h.b16 %v609
        %v1208 = vunpack.c.l.b16 %v610
        %v1209 = vunpack.c.h.b16 %v610
        %v1210 = vunpack.c.l.b16 %v611
        %v1211 = vunpack.c.h.b16 %v611
        %v1212 = vunpack.c.l.b16 %v612
        %v1213 = vunpack.c.h.b16 %v612
        %v1214 = vunpack.c.l.b16 %v613
        %v1215 = vunpack.c.h.b16 %v613
        %v1216 = vunpack.c.l.b16 %v614
        %v1217 = vunpack.c.h.b16 %v614
        %v1218 = vunpack.c.l.b16 %v615
        %v1219 = vunpack.c.h.b16 %v615
        %v1220 = vunpack.c.l.b16 %v616
        %v1221 = vunpack.c.h.b16 %v616
        %v1222 = vunpack.c.l.b16 %v617
        %v1223 = vunpack.c.h.b16 %v617
        %v1224 = vunpack.c.l.b16 %v618
        %v1225 = vunpack.c.h.b16 %v618
        %v1226 = vunpack.c.l.b16 %v619
        %v1227 = vunpack.c.h.b16 %v619
        %v1228 = vunpack.c.l.b16 %v620
        %v1229 = vunpack.c.h.b16 %v620
        %v1230 = vunpack.c.l.b16 %v621
        %v1231 = vunpack.c.h.b16 %v621
        %v1232 = vunpack.c.l.b16 %v622
        %v1233 = vunpack.c.h.b16 %v622
        %v1234 = vunpack.c.l.b16 %v623
        %v1235 = vunpack.c.h.b16 %v623
        %v1236 = vunpack.c.l.b16 %v624
        %v1237 = vunpack.c.h.b16 %v624
        %v1238 = vunpack.c.l.b16 %v625
        %v1239 = vunpack.c.h.b16 %v625
        %v1240 = vunpack.c.l.b16 %v626
        %v1241 = vunpack.c.h.b16 %v626
        %v1242 = vunpack.c.l.b16 %v627
        %v1243 = vunpack.c.h.b16 %v627
        %v1244 = vunpack.c.l.b16 %v628
        %v1245 = vunpack.c.h.b16 %v628
        %v1246 = vunpack.c.l.b16 %v629
        %v1247 = vunpack.c.h.b16 %v629
        %v1248 = vunpack.c.l.b16 %v630
        %v1249 = vunpack.c.h.b16 %v630
        %v1250 = vunpack.c.l.b16 %v631
        %v1251 = vunpack.c.h.b16 %v631
        %v1252 = vunpack.c.l.b16 %v632
        %v1253 = vunpack.c.h.b16 %v632
        %v1254 = vunpack.c.l.b16 %v633
        %v1255 = vunpack.c.h.b16 %v633
        %v1256 = vunpack.c.l.b16 %v634
        %v1257 = vunpack.c.h.b16 %v634
        %v1258 = vunpack.c.l.b16 %v635
        %v1259 = vunpack.c.h.b16 %v635
        %v1260 = vunpack.c.l.b16 %v636
        %v1261 = vunpack.c.h.b16 %v636
        %v1262 = vunpack.c.l.b16 %v637
        %v1263 = vunpack.c.h.b16 %v637
        %v1264 = vunpack.c.l.b16 %v638
        %v1265 = vunpack.c.h.b16 %v638
        %v1266 = vunpack.c.l.b16 %v639
        %v1267 = vunpack.c.h.b16 %v639
        %v1268 = vunpack.c.l.b16 %v640
        %v1269 = vunpack.c.h.b16 %v640
        %v1270 = vunpack.c.l.b16 %v641
        %v1271 = vunpack.c.h.b16 %v641
        %v1272 = vunpack.c.l.b16 %v642
        %v1273 = vunpack.c.h.b16 %v642
        %v1274 = vunpack.c.l.b16 %v643
        %v1275 = vunpack.c.h.b16 %v643
        %v1276 = vunpack.c.l.b16 %v644
        %v1277 = vunpack.c.h.b16 %v644
        %v1278 = vunpack.c.l.b16 %v645
        %v1279 = vunpack.c.h.b16 %v645
        %v1280 = vunpack.c.l.b16 %v646
        %v1281 = vunpack.c.h.b16 %v646
        %v1282 = vunpack.c.l.b16 %v647
        %v1283 = vunpack.c.h.b16 %v647
        %v1284 = vunpack.c.l.b16 %v648
        %v1285 = vunpack.c.h.b16 %v648
        %v1286 = vunpack.c.l.b16 %v649
        %v1287 = vunpack.c.h.b16 %v649
        %v1288 = vunpack.c.l.b16 %v650
        %v1289 = vunpack.c.h.b16 %v650
        %v1290 = vunpack.c.l.b16 %v651
        %v1291 = vunpack.c.h.b16 %v651
        %v1292 = vunpack.c.l.b16 %v652
        %v1293 = vunpack.c.h.b16 %v652
        %v1294 = vunpack.c.l.b16 %v653
        %v1295 = vunpack.c.h.b16 %v653
        %v1296 = vunpack.c.l.b16 %v654
        %v1297 = vunpack.c.h.b16 %v654
        %v1298 = vunpack.c.l.b16 %v655
        %v1299 = vunpack.c.h.b16 %v655
        %v1300 = vunpack.c.l.b16 %v656
        %v1301 = vunpack.c.h.b16 %v656
        %v1302 = vunpack.c.l.b16 %v657
        %v1303 = vunpack.c.h.b16 %v657
        %v1304 = vunpack.c.l.b16 %v658
        %v1305 = vunpack.c.h.b16 %v658
        %v1306 = vunpack.c.l.b16 %v659
        %v1307 = vunpack.c.h.b16 %v659
        %v1308 = vunpack.c.l.b16 %v660
        %v1309 = vunpack.c.h.b16 %v660
        %v1310 = vunpack.c.l.b16 %v661
        %v1311 = vunpack.c.h.b16 %v661
        %v1312 = vunpack.c.l.b16 %v662
        %v1313 = vunpack.c.h.b16 %v662
        %v1314 = vunpack.c.l.b16 %v663
        %v1315 = vunpack.c.h.b16 %v663
        %v1316 = vunpack.c.l.b16 %v664
        %v1317 = vunpack.c.h.b16 %v664
        %v1318 = vunpack.c.l.b16 %v665
        %v1319 = vunpack.c.h.b16 %v665
        %v1320 = vunpack.c.l.b16 %v666
        %v1321 = vunpack.c.h.b16 %v666
        %v1322 = vunpack.c.l.b16 %v667
        %v1323 = vunpack.c.h.b16 %v667
        %v1324 = vunpack.c.l.b16 %v668
        %v1325 = vunpack.c.h.b16 %v668
        %v1326 = vunpack.c.l.b16 %v669
        %v1327 = vunpack.c.h.b16 %v669
        %v1328 = vunpack.c.l.b16 %v670
        %v1329 = vunpack.c.h.b16 %v670
        %v1330 = vunpack.c.l.b16 %v671
        %v1331 = vunpack.c.h.b16 %v671
        %v1332 = vunpack.c.l.b16 %v672
        %v1333 = vunpack.c.h.b16 %v672
        %v1334 = vunpack.c.l.b16 %v673
        %v1335 = vunpack.c.h.b16 %v673
        %v1336 = vunpack.c.l.b16 %v674
        %v1337 = vunpack.c.h.b16 %v674
        %v1338 = vunpack.c.l.b16 %v675
        %v1339 = vunpack.c.h.b16 %v675
        %v1340 = vunpack.c.l.b16 %v676
        %v1341 = vunpack.c.h.b16 %v676
        %v1342 = vunpack.c.l.b16 %v677
        %v1343 = vunpack.c.h.b16 %v677
        %v1344 = vunpack.c.l.b16 %v678
        %v1345 = vunpack.c.h.b16 %v678
        %v1346 = vunpack.c.l.b16 %v679
        %v1347 = vunpack.c.h.b16 %v679
        %v1348 = vunpack.c.l.b16 %v680
        %v1349 = vunpack.c.h.b16 %v680
        %v1350 = vunpack.c.l.b16 %v681
        %v1351 = vunpack.c.h.b16 %v681
        %v1352 = vunpack.c.l.b16 %v682
        %v1353 = vunpack.c.h.b16 %v682
        %v1354 = vunpack.c.l.b16 %v683
        %v1355 = vunpack.c.h.b16 %v683
        %v1356 = vunpack.c.l.b16 %v684
        %v1357 = vunpack.c.h.b16 %v684
        %v1358 = vunpack.c.l.b16 %v685
        %v1359 = vunpack.c.h.b16 %v685
        %v1360 = vunpack.c.l.b16 %v686
        %v1361 = vunpack.c.h.b16 %v686
        %v1362 = vunpack.c.l.b16 %v687
        %v1363 = vunpack.c.h.b16 %v687
        %v1364 = vunpack.c.l.b16 %v688
        %v1365 = vunpack.c.h.b16 %v688
        %v1366 = vunpack.c.l.b16 %v689
        %v1367 = vunpack.c.h.b16 %v689
        %v1368 = vunpack.c.l.b16 %v690
        %v1369 = vunpack.c.h.b16 %v690
        %v1370 = vunpack.c.l.b16 %v691
        %v1371 = vunpack.c.h.b16 %v691
        %v1372 = vunpack.c.l.b16 %v692
        %v1373 = vunpack.c.h.b16 %v692
        %v1374 = vunpack.c.l.b16 %v693
        %v1375 = vunpack.c.h.b16 %v693
        %v1376 = vunpack.c.l.b16 %v694
        %v1377 = vunpack.c.h.b16 %v694
        %v1378 = vunpack.c.l.b16 %v695
        %v1379 = vunpack.c.h.b16 %v695
        %v1380 = vunpack.c.l.b16 %v696
        %v1381 = vunpack.c.h.b16 %v696
        %v1382 = vunpack.c.l.b16 %v697
        %v1383 = vunpack.c.h.b16 %v697
        %v1384 = vunpack.c.l.b16 %v698
        %v1385 = vunpack.c.h.b16 %v698
        %v1386 = vunpack.c.l.b16 %v699
        %v1387 = vunpack.c.h.b16 %v699
        %v1388 = vunpack.c.l.b16 %v700
        %v1389 = vunpack.c.h.b16 %v700
        %v1390 = vunpack.c.l.b16 %v701
        %v1391 = vunpack.c.h.b16 %v701
        %v1392 = vunpack.c.l.b16 %v702
        %v1393 = vunpack.c.h.b16 %v702
        %v1394 = vunpack.c.l.b16 %v703
        %v1395 = vunpack.c.h.b16 %v703
        %v1396 = vunpack.c.l.b16 %v704
        %v1397 = vunpack.c.h.b16 %v704
        %v1398 = vunpack.c.l.b16 %v705
        %v1399 = vunpack.c.h.b16 %v705
        %v1400 = vunpack.c.l.b16 %v706
        %v1401 = vunpack.c.h.b16 %v706
        %v1402 = vunpack.c.l.b16 %v707
        %v1403 = vunpack.c.h.b16 %v707
        %v1404 = vunpack.c.l.b16 %v708
        %v1405 = vunpack.c.h.b16 %v708
        %v1406 = vunpack.c.l.b16 %v709
        %v1407 = vunpack.c.h.b16 %v709
        %v1408 = vpack.c.b16 %v1078, %v1048
        %v1409 = vpack.c.b16 %v1079, %v1049
        %v1410 = vpack.c.b16 %v1080, %v1050
        %v1411 = vpack.c.b16 %v1081, %v1051
        %v1412 = vpack.c.b16 %v1082, %v1052
        %v1413 = vpack.c.b16 %v1083, %v1053
        %v1414 = vpack.c.b16 %v1084, %v1054
        %v1415 = vpack.c.b16 %v1085, %v1055
        %v1416 = vpack.c.b16 %v1086, %v1056
        %v1417 = vpack.c.b16 %v1087, %v1057
        %v1418 = vpack.c.b16 %v1088, %v1058
        %v1419 = vpack.c.b16 %v1089, %v1059
        %v1420 = vpack.c.b16 %v1090, %v1060
        %v1421 = vpack.c.b16 %v1091, %v1061
        %v1422 = vpack.c.b16 %v1092, %v1062
        %v1423 = vpack.c.b16 %v1093, %v1063
        %v1424 = vpack.c.b16 %v1094, %v1064
        %v1425 = vpack.c.b16 %v1095, %v1065
        %v1426 = vpack.c.b16 %v1096, %v1066
        %v1427 = vpack.c.b16 %v1097, %v1067
        %v1428 = vpack.c.b16 %v1098, %v1068
        %v1429 = vpack.c.b16 %v1099, %v1069
        %v1430 = vpack.c.b16 %v1100, %v1070
        %v1431 = vpack.c.b16 %v1101, %v1071
        %v1432 = vpack.c.b16 %v1102, %v1072
        %v1433 = vpack.c.b16 %v1103, %v1073
        %v1434 = vpack.c.b16 %v1104, %v1074
        %v1435 = vpack.c.b16 %v1105, %v1075
        %v1436 = vpack.c.b16 %v1106, %v1076
        %v1437 = vpack.c.b16 %v1107, %v1077
        %v1438 = vpack.c.b16 %v1138, %v1108
        %v1439 = vpack.c.b16 %v1139, %v1109
        %v1440 = vpack.c.b16 %v1140, %v1110
        %v1441 = vpack.c.b16 %v1141, %v1111
        %v1442 = vpack.c.b16 %v1142, %v1112
        %v1443 = vpack.c.b16 %v1143, %v1113
        %v1444 = vpack.c.b16 %v1144, %v1114
        %v1445 = vpack.c.b16 %v1145, %v1115
        %v1446 = vpack.c.b16 %v1146, %v1116
        %v1447 = vpack.c.b16 %v1147, %v1117
        %v1448 = vpack.c.b16 %v1148, %v1118
        %v1449 = vpack.c.b16 %v1149, %v1119
        %v1450 = vpack.c.b16 %v1150, %v1120
        %v1451 = vpack.c.b16 %v1151, %v1121
        %v1452 = vpack.c.b16 %v1152, %v1122
        %v1453 = vpack.c.b16 %v1153, %v1123
        %v1454 = vpack.c.b16 %v1154, %v1124
        %v1455 = vpack.c.b16 %v1155, %v1125
        %v1456 = vpack.c.b16 %v1156, %v1126
        %v1457 = vpack.c.b16 %v1157, %v1127
        %v1458 = vpack.c.b16 %v1158, %v1128
        %v1459 = vpack.c.b16 %v1159, %v1129
        %v1460 = vpack.c.b16 %v1160, %v1130
        %v1461 = vpack.c.b16 %v1161, %v1131
        %v1462 = vpack.c.b16 %v1162, %v1132
        %v1463 = vpack.c.b16 %v1163, %v1133
        %v1464 = vpack.c.b16 %v1164, %v1134
        %v1465 = vpack.c.b16 %v1165, %v1135
        %v1466 = vpack.c.b16 %v1166, %v1136
        %v1467 = vpack.c.b16 %v1167, %v1137
        %v1468 = vpack.c.b16 %v1198, %v1168
        %v1469 = vpack.c.b16 %v1199, %v1169
        %v1470 = vpack.c.b16 %v1200, %v1170
        %v1471 = vpack.c.b16 %v1201, %v1171
        %v1472 = vpack.c.b16 %v1202, %v1172
        %v1473 = vpack.c.b16 %v1203, %v1173
        %v1474 = vpack.c.b16 %v1204, %v1174
        %v1475 = vpack.c.b16 %v1205, %v1175
        %v1476 = vpack.c.b16 %v1206, %v1176
        %v1477 = vpack.c.b16 %v1207, %v1177
        %v1478 = vpack.c.b16 %v1208, %v1178
        %v1479 = vpack.c.b16 %v1209, %v1179
        %v1480 = vpack.c.b16 %v1210, %v1180
        %v1481 = vpack.c.b16 %v1211, %v1181
        %v1482 = vpack.c.b16 %v1212, %v1182
        %v1483 = vpack.c.b16 %v1213, %v1183
        %v1484 = vpack.c.b16 %v1214, %v1184
        %v1485 = vpack.c.b16 %v1215, %v1185
        %v1486 = vpack.c.b16 %v1216, %v1186
        %v1487 = vpack.c.b16 %v1217, %v1187
        %v1488 = vpack.c.b16 %v1218, %v1188
        %v1489 = vpack.c.b16 %v1219, %v1189
        %v1490 = vpack.c.b16 %v1220, %v1190
        %v1491 = vpack.c.b16 %v1221, %v1191
        %v1492 = vpack.c.b16 %v1222, %v1192
        %v1493 = vpack.c.b16 %v1223, %v1193
        %v1494 = vpack.c.b16 %v1224, %v1194
        %v1495 = vpack.c.b16 %v1225, %v1195
        %v1496 = vpack.c.b16 %v1226, %v1196
        %v1497 = vpack.c.b16 %v1227, %v1197
        %v1498 = vpack.c.b16 %v1258, %v1228
        %v1499 = vpack.c.b16 %v1259, %v1229
        %v1500 = vpack.c.b16 %v1260, %v1230
        %v1501 = vpack.c.b16 %v1261, %v1231
        %v1502 = vpack.c.b16 %v1262, %v1232
        %v1503 = vpack.c.b16 %v1263, %v1233
        %v1504 = vpack.c.b16 %v1264, %v1234
        %v1505 = vpack.c.b16 %v1265, %v1235
        %v1506 = vpack.c.b16 %v1266, %v1236
        %v1507 = vpack.c.b16 %v1267, %v1237
        %v1508 = vpack.c.b16 %v1268, %v1238
        %v1509 = vpack.c.b16 %v1269, %v1239
        %v1510 = vpack.c.b16 %v1270, %v1240
        %v1511 = vpack.c.b16 %v1271, %v1241
        %v1512 = vpack.c.b16 %v1272, %v1242
        %v1513 = vpack.c.b16 %v1273, %v1243
        %v1514 = vpack.c.b16 %v1274, %v1244
        %v1515 = vpack.c.b16 %v1275, %v1245
        %v1516 = vpack.c.b16 %v1276, %v1246
        %v1517 = vpack.c.b16 %v1277, %v1247
        %v1518 = vpack.c.b16 %v1278, %v1248
        %v1519 = vpack.c.b16 %v1279, %v1249
        %v1520 = vpack.c.b16 %v1280, %v1250
        %v1521 = vpack.c.b16 %v1281, %v1251
        %v1522 = vpack.c.b16 %v1282, %v1252
        %v1523 = vpack.c.b16 %v1283, %v1253
        %v1524 = vpack.c.b16 %v1284, %v1254
        %v1525 = vpack.c.b16 %v1285, %v1255
        %v1526 = vpack.c.b16 %v1286, %v1256
        %v1527 = vpack.c.b16 %v1287, %v1257
        %v1528 = vpack.c.b16 %v1318, %v1288
        %v1529 = vpack.c.b16 %v1319, %v1289
        %v1530 = vpack.c.b16 %v1320, %v1290
        %v1531 = vpack.c.b16 %v1321, %v1291
        %v1532 = vpack.c.b16 %v1322, %v1292
        %v1533 = vpack.c.b16 %v1323, %v1293
        %v1534 = vpack.c.b16 %v1324, %v1294
        %v1535 = vpack.c.b16 %v1325, %v1295
        %v1536 = vpack.c.b16 %v1326, %v1296
        %v1537 = vpack.c.b16 %v1327, %v1297
        %v1538 = vpack.c.b16 %v1328, %v1298
        %v1539 = vpack.c.b16 %v1329, %v1299
        %v1540 = vpack.c.b16 %v1330, %v1300
        %v1541 = vpack.c.b16 %v1331, %v1301
        %v1542 = vpack.c.b16 %v1332, %v1302
        %v1543 = vpack.c.b16 %v1333, %v1303
        %v1544 = vpack.c.b16 %v1334, %v1304
        %v1545 = vpack.c.b16 %v1335, %v1305
        %v1546 = vpack.c.b16 %v1336, %v1306
        %v1547 = vpack.c.b16 %v1337, %v1307
        %v1548 = vpack.c.b16 %v1338, %v1308
        %v1549 = vpack.c.b16 %v1339, %v1309
        %v1550 = vpack.c.b16 %v1340, %v1310
        %v1551 = vpack.c.b16 %v1341, %v1311
        %v1552 = vpack.c.b16 %v1342, %v1312
        %v1553 = vpack.c.b16 %v1343, %v1313
        %v1554 = vpack.c.b16 %v1344, %v1314
        %v1555 = vpack.c.b16 %v1345, %v1315
        %v1556 = vpack.c.b16 %v1346, %v1316
        %v1557 = vpack.c.b16 %v1347, %v1317
        %v1558 = vpack.c.b16 %v1378, %v1348
        %v1559 = vpack.c.b16 %v1379, %v1349
        %v1560 = vpack.c.b16 %v1380, %v1350
        %v1561 = vpack.c.b16 %v1381, %v1351
        %v1562 = vpack.c.b16 %v1382, %v1352
        %v1563 = vpack.c.b16 %v1383, %v1353
        %v1564 = vpack.c.b16 %v1384, %v1354
        %v1565 = vpack.c.b16 %v1385, %v1355
        %v1566 = vpack.c.b16 %v1386, %v1356
        %v1567 = vpack.c.b16 %v1387, %v1357
        %v1568 = vpack.c.b16 %v1388, %v1358
        %v1569 = vpack.c.b16 %v1389, %v1359
        %v1570 = vpack.c.b16 %v1390, %v1360
        %v1571 = vpack.c.b16 %v1391, %v1361
        %v1572 = vpack.c.b16 %v1392, %v1362
        %v1573 = vpack.c.b16 %v1393, %v1363
        %v1574 = vpack.c.b16 %v1394, %v1364
        %v1575 = vpack.c.b16 %v1395, %v1365
        %v1576 = vpack.c.b16 %v1396, %v1366
        %v1577 = vpack.c.b16 %v1397, %v1367
        %v1578 = vpack.c.b16 %v1398, %v1368
        %v1579 = vpack.c.b16 %v1399, %v1369
        %v1580 = vpack.c.b16 %v1400, %v1370
        %v1581 = vpack.c.b16 %v1401, %v1371
        %v1582 = vpack.c.b16 %v1402, %v1372
        %v1583 = vpack.c.b16 %v1403, %v1373
        %v1584 = vpack.c.b16 %v1404, %v1374
        %v1585 = vpack.c.b16 %v1405, %v1375
        %v1586 = vpack.c.b16 %v1406, %v1376
        %v1587 = vpack.c.b16 %v1407, %v1377
        %vm1768 = vcmask 785408
        %v1770 = vsel %vm1768, %v526, 0
        %v1773 = vsel %vm1768, %v527, 0
        %v1776 = vsel %vm1768, %v528, 0
        %v1779 = vsel %vm1768, %v529, 0
        %1781 = vmatprep.subr.bf16.mxu0 0
        %1782 = vmatpush1.bf16.msra.mxu0 0
        %1783 = vmatprep.subr.bf16.mxu0 0
        %1784 = vmatpush1.bf16.msra.mxu0 0
        %1785 = vmatprep.subr.bf16.mxu0 %v1559
        %1786 = vmatpush1.bf16.msra.mxu0 %v1558
        %1787 = vmatprep.subr.bf16.mxu0 %v1529
        %1788 = vmatpush1.bf16.msra.mxu0 %v1528
        %1789 = vmatprep.subr.bf16.mxu0 %v1499
        %1790 = vmatpush1.bf16.msra.mxu0 %v1498
        %1791 = vmatprep.subr.bf16.mxu0 %v1469
        %1792 = vmatpush1.bf16.msra.mxu0 %v1468
        %1793 = vmatprep.subr.bf16.mxu0 %v1439
        %1794 = vmatpush1.bf16.msra.mxu0 %v1438
        %1795 = vmatprep.subr.bf16.mxu0 %v1409
        %1796 = vmatpush1.bf16.msra.mxu0 %v1408
        %1797 = vmatprep.subr.bf16.mxu0 0
        %1798 = vmatpush2.bf16.msra.mxu0 0
        %1799 = vmatprep.subr.bf16.mxu0 0
        %1800 = vmatpush2.bf16.msra.mxu0 0
        %1801 = vmatprep.subr.bf16.mxu0 0
        %1802 = vmatpush2.bf16.msra.mxu0 0
        %1803 = vmatprep.subr.bf16.mxu0 0
        %1804 = vmatpush2.bf16.msra.mxu0 0
        %1805 = vmatprep.subr.bf16.mxu0 0
        %1806 = vmatpush2.bf16.msra.mxu0 0
        %1807 = vmatprep.subr.bf16.mxu0 0
        %1808 = vmatpush2.bf16.msra.mxu0 0
        %1809 = vmatprep.subr.bf16.mxu0 0
        %1810 = vmatpush2.bf16.msra.mxu0 0
        %1811 = vmatprep.subr.bf16.mxu0 0
        %1812 = vmatpush2.bf16.msra.mxu0 0
        %1813 = vmatprep.mubr.bf16.mxu0 0
        %1814 = vmatmul.mubr.bf16.gmra.mxu0 %v1770
        %v1815 = vpop.f32.mrf.mxu0
        %v1816 = vadd.f32 %v721, %v1815
        %v1817 = vpop.f32.mrf.mxu0
        %v1818 = vadd.f32 %v725, %v1817
        %v1819 = vpop.f32.mrf.mxu0
        %v1820 = vadd.f32 %v721, %v1819
        %v1821 = vpop.f32.mrf.mxu0
        %v1822 = vadd.f32 %v725, %v1821
        %1823 = vmatprep.mubr.bf16.mxu0 0
        %1824 = vmatmul.mubr.bf16.gmra.mxu0 %v1773
        %v1825 = vpop.f32.mrf.mxu0
        %v1826 = vadd.f32 %v721, %v1825
        %v1827 = vpop.f32.mrf.mxu0
        %v1828 = vadd.f32 %v725, %v1827
        %v1829 = vpop.f32.mrf.mxu0
        %v1830 = vadd.f32 %v721, %v1829
        %v1831 = vpop.f32.mrf.mxu0
        %v1832 = vadd.f32 %v725, %v1831
        %1833 = vmatprep.mubr.bf16.mxu0 0
        %1834 = vmatmul.mubr.bf16.gmra.mxu0 %v1776
        %v1835 = vpop.f32.mrf.mxu0
        %v1836 = vadd.f32 %v721, %v1835
        %v1837 = vpop.f32.mrf.mxu0
        %v1838 = vadd.f32 %v725, %v1837
        %v1839 = vpop.f32.mrf.mxu0
        %v1840 = vadd.f32 %v721, %v1839
        %v1841 = vpop.f32.mrf.mxu0
        %v1842 = vadd.f32 %v725, %v1841
        %1843 = vmatprep.mubr.bf16.mxu0 0
        %1844 = vmatmul.mubr.bf16.gmra.mxu0 %v1779
        %v1845 = vpop.f32.mrf.mxu0
        %v1846 = vadd.f32 %v721, %v1845
        %v1847 = vpop.f32.mrf.mxu0
        %v1848 = vadd.f32 %v725, %v1847
        %v1849 = vpop.f32.mrf.mxu0
        %v1850 = vadd.f32 %v721, %v1849
        %v1851 = vpop.f32.mrf.mxu0
        %v1852 = vadd.f32 %v725, %v1851
        %1853 = vdwg.mxu0
        %1854 = vmatprep.subr.bf16.mxu0 0
        %1855 = vmatpush1.bf16.msra.mxu0 0
        %1856 = vmatprep.subr.bf16.mxu0 0
        %1857 = vmatpush1.bf16.msra.mxu0 0
        %1858 = vmatprep.subr.bf16.mxu0 %v1561
        %1859 = vmatpush1.bf16.msra.mxu0 %v1560
        %1860 = vmatprep.subr.bf16.mxu0 %v1531
        %1861 = vmatpush1.bf16.msra.mxu0 %v1530
        %1862 = vmatprep.subr.bf16.mxu0 %v1501
        %1863 = vmatpush1.bf16.msra.mxu0 %v1500
        %1864 = vmatprep.subr.bf16.mxu0 %v1471
        %1865 = vmatpush1.bf16.msra.mxu0 %v1470
        %1866 = vmatprep.subr.bf16.mxu0 %v1441
        %1867 = vmatpush1.bf16.msra.mxu0 %v1440
        %1868 = vmatprep.subr.bf16.mxu0 %v1411
        %1869 = vmatpush1.bf16.msra.mxu0 %v1410
        %1870 = vmatprep.subr.bf16.mxu0 0
        %1871 = vmatpush2.bf16.msra.mxu0 0
        %1872 = vmatprep.subr.bf16.mxu0 0
        %1873 = vmatpush2.bf16.msra.mxu0 0
        %1874 = vmatprep.subr.bf16.mxu0 0
        %1875 = vmatpush2.bf16.msra.mxu0 0
        %1876 = vmatprep.subr.bf16.mxu0 0
        %1877 = vmatpush2.bf16.msra.mxu0 0
        %1878 = vmatprep.subr.bf16.mxu0 0
        %1879 = vmatpush2.bf16.msra.mxu0 0
        %1880 = vmatprep.subr.bf16.mxu0 0
        %1881 = vmatpush2.bf16.msra.mxu0 0
        %1882 = vmatprep.subr.bf16.mxu0 0
        %1883 = vmatpush2.bf16.msra.mxu0 0
        %1884 = vmatprep.subr.bf16.mxu0 0
        %1885 = vmatpush2.bf16.msra.mxu0 0
        %1886 = vmatprep.mubr.bf16.mxu0 0
        %1887 = vmatmul.mubr.bf16.gmra.mxu0 %v1770
        %v1888 = vpop.f32.mrf.mxu0
        %v1889 = vadd.f32 %v729, %v1888
        %v1890 = vpop.f32.mrf.mxu0
        %v1891 = vadd.f32 %v733, %v1890
        %v1892 = vpop.f32.mrf.mxu0
        %v1893 = vadd.f32 %v729, %v1892
        %v1894 = vpop.f32.mrf.mxu0
        %v1895 = vadd.f32 %v733, %v1894
        %1896 = vmatprep.mubr.bf16.mxu0 0
        %1897 = vmatmul.mubr.bf16.gmra.mxu0 %v1773
        %v1898 = vpop.f32.mrf.mxu0
        %v1899 = vadd.f32 %v729, %v1898
        %v1900 = vpop.f32.mrf.mxu0
        %v1901 = vadd.f32 %v733, %v1900
        %v1902 = vpop.f32.mrf.mxu0
        %v1903 = vadd.f32 %v729, %v1902
        %v1904 = vpop.f32.mrf.mxu0
        %v1905 = vadd.f32 %v733, %v1904
        %1906 = vmatprep.mubr.bf16.mxu0 0
        %1907 = vmatmul.mubr.bf16.gmra.mxu0 %v1776
        %v1908 = vpop.f32.mrf.mxu0
        %v1909 = vadd.f32 %v729, %v1908
        %v1910 = vpop.f32.mrf.mxu0
        %v1911 = vadd.f32 %v733, %v1910
        %v1912 = vpop.f32.mrf.mxu0
        %v1913 = vadd.f32 %v729, %v1912
        %v1914 = vpop.f32.mrf.mxu0
        %v1915 = vadd.f32 %v733, %v1914
        %1916 = vmatprep.mubr.bf16.mxu0 0
        %1917 = vmatmul.mubr.bf16.gmra.mxu0 %v1779
        %v1918 = vpop.f32.mrf.mxu0
        %v1919 = vadd.f32 %v729, %v1918
        %v1920 = vpop.f32.mrf.mxu0
        %v1921 = vadd.f32 %v733, %v1920
        %v1922 = vpop.f32.mrf.mxu0
        %v1923 = vadd.f32 %v729, %v1922
        %v1924 = vpop.f32.mrf.mxu0
        %v1925 = vadd.f32 %v733, %v1924
        %1926 = vdwg.mxu0
        %1927 = vmatprep.subr.bf16.mxu0 0
        %1928 = vmatpush1.bf16.msra.mxu0 0
        %1929 = vmatprep.subr.bf16.mxu0 0
        %1930 = vmatpush1.bf16.msra.mxu0 0
        %1931 = vmatprep.subr.bf16.mxu0 %v1563
        %1932 = vmatpush1.bf16.msra.mxu0 %v1562
        %1933 = vmatprep.subr.bf16.mxu0 %v1533
        %1934 = vmatpush1.bf16.msra.mxu0 %v1532
        %1935 = vmatprep.subr.bf16.mxu0 %v1503
        %1936 = vmatpush1.bf16.msra.mxu0 %v1502
        %1937 = vmatprep.subr.bf16.mxu0 %v1473
        %1938 = vmatpush1.bf16.msra.mxu0 %v1472
        %1939 = vmatprep.subr.bf16.mxu0 %v1443
        %1940 = vmatpush1.bf16.msra.mxu0 %v1442
        %1941 = vmatprep.subr.bf16.mxu0 %v1413
        %1942 = vmatpush1.bf16.msra.mxu0 %v1412
        %1943 = vmatprep.subr.bf16.mxu0 0
        %1944 = vmatpush2.bf16.msra.mxu0 0
        %1945 = vmatprep.subr.bf16.mxu0 0
        %1946 = vmatpush2.bf16.msra.mxu0 0
        %1947 = vmatprep.subr.bf16.mxu0 0
        %1948 = vmatpush2.bf16.msra.mxu0 0
        %1949 = vmatprep.subr.bf16.mxu0 0
        %1950 = vmatpush2.bf16.msra.mxu0 0
        %1951 = vmatprep.subr.bf16.mxu0 0
        %1952 = vmatpush2.bf16.msra.mxu0 0
        %1953 = vmatprep.subr.bf16.mxu0 0
        %1954 = vmatpush2.bf16.msra.mxu0 0
        %1955 = vmatprep.subr.bf16.mxu0 0
        %1956 = vmatpush2.bf16.msra.mxu0 0
        %1957 = vmatprep.subr.bf16.mxu0 0
        %1958 = vmatpush2.bf16.msra.mxu0 0
        %1959 = vmatprep.mubr.bf16.mxu0 0
        %1960 = vmatmul.mubr.bf16.gmra.mxu0 %v1770
        %v1961 = vpop.f32.mrf.mxu0
        %v1962 = vadd.f32 %v737, %v1961
        %v1963 = vpop.f32.mrf.mxu0
        %v1964 = vadd.f32 %v741, %v1963
        %v1965 = vpop.f32.mrf.mxu0
        %v1966 = vadd.f32 %v737, %v1965
        %v1967 = vpop.f32.mrf.mxu0
        %v1968 = vadd.f32 %v741, %v1967
        %1969 = vmatprep.mubr.bf16.mxu0 0
        %1970 = vmatmul.mubr.bf16.gmra.mxu0 %v1773
        %v1971 = vpop.f32.mrf.mxu0
        %v1972 = vadd.f32 %v737, %v1971
        %v1973 = vpop.f32.mrf.mxu0
        %v1974 = vadd.f32 %v741, %v1973
        %v1975 = vpop.f32.mrf.mxu0
        %v1976 = vadd.f32 %v737, %v1975
        %v1977 = vpop.f32.mrf.mxu0
        %v1978 = vadd.f32 %v741, %v1977
        %1979 = vmatprep.mubr.bf16.mxu0 0
        %1980 = vmatmul.mubr.bf16.gmra.mxu0 %v1776
        %v1981 = vpop.f32.mrf.mxu0
        %v1982 = vadd.f32 %v737, %v1981
        %v1983 = vpop.f32.mrf.mxu0
        %v1984 = vadd.f32 %v741, %v1983
        %v1985 = vpop.f32.mrf.mxu0
        %v1986 = vadd.f32 %v737, %v1985
        %v1987 = vpop.f32.mrf.mxu0
        %v1988 = vadd.f32 %v741, %v1987
        %1989 = vmatprep.mubr.bf16.mxu0 0
        %1990 = vmatmul.mubr.bf16.gmra.mxu0 %v1779
        %v1991 = vpop.f32.mrf.mxu0
        %v1992 = vadd.f32 %v737, %v1991
        %v1993 = vpop.f32.mrf.mxu0
        %v1994 = vadd.f32 %v741, %v1993
        %v1995 = vpop.f32.mrf.mxu0
        %v1996 = vadd.f32 %v737, %v1995
        %v1997 = vpop.f32.mrf.mxu0
        %v1998 = vadd.f32 %v741, %v1997
        %1999 = vdwg.mxu0
        %2000 = vmatprep.subr.bf16.mxu0 0
        %2001 = vmatpush1.bf16.msra.mxu0 0
        %2002 = vmatprep.subr.bf16.mxu0 0
        %2003 = vmatpush1.bf16.msra.mxu0 0
        %2004 = vmatprep.subr.bf16.mxu0 %v1565
        %2005 = vmatpush1.bf16.msra.mxu0 %v1564
        %2006 = vmatprep.subr.bf16.mxu0 %v1535
        %2007 = vmatpush1.bf16.msra.mxu0 %v1534
        %2008 = vmatprep.subr.bf16.mxu0 %v1505
        %2009 = vmatpush1.bf16.msra.mxu0 %v1504
        %2010 = vmatprep.subr.bf16.mxu0 %v1475
        %2011 = vmatpush1.bf16.msra.mxu0 %v1474
        %2012 = vmatprep.subr.bf16.mxu0 %v1445
        %2013 = vmatpush1.bf16.msra.mxu0 %v1444
        %2014 = vmatprep.subr.bf16.mxu0 %v1415
        %2015 = vmatpush1.bf16.msra.mxu0 %v1414
        %2016 = vmatprep.subr.bf16.mxu0 0
        %2017 = vmatpush2.bf16.msra.mxu0 0
        %2018 = vmatprep.subr.bf16.mxu0 0
        %2019 = vmatpush2.bf16.msra.mxu0 0
        %2020 = vmatprep.subr.bf16.mxu0 0
        %2021 = vmatpush2.bf16.msra.mxu0 0
        %2022 = vmatprep.subr.bf16.mxu0 0
        %2023 = vmatpush2.bf16.msra.mxu0 0
        %2024 = vmatprep.subr.bf16.mxu0 0
        %2025 = vmatpush2.bf16.msra.mxu0 0
        %2026 = vmatprep.subr.bf16.mxu0 0
        %2027 = vmatpush2.bf16.msra.mxu0 0
        %2028 = vmatprep.subr.bf16.mxu0 0
        %2029 = vmatpush2.bf16.msra.mxu0 0
        %2030 = vmatprep.subr.bf16.mxu0 0
        %2031 = vmatpush2.bf16.msra.mxu0 0
        %2032 = vmatprep.mubr.bf16.mxu0 0
        %2033 = vmatmul.mubr.bf16.gmra.mxu0 %v1770
        %v2034 = vpop.f32.mrf.mxu0
        %v2035 = vadd.f32 %v745, %v2034
        %v2036 = vpop.f32.mrf.mxu0
        %v2037 = vadd.f32 %v749, %v2036
        %v2038 = vpop.f32.mrf.mxu0
        %v2039 = vadd.f32 %v745, %v2038
        %v2040 = vpop.f32.mrf.mxu0
        %v2041 = vadd.f32 %v749, %v2040
        %2042 = vmatprep.mubr.bf16.mxu0 0
        %2043 = vmatmul.mubr.bf16.gmra.mxu0 %v1773
        %v2044 = vpop.f32.mrf.mxu0
        %v2045 = vadd.f32 %v745, %v2044
        %v2046 = vpop.f32.mrf.mxu0
        %v2047 = vadd.f32 %v749, %v2046
        %v2048 = vpop.f32.mrf.mxu0
        %v2049 = vadd.f32 %v745, %v2048
        %v2050 = vpop.f32.mrf.mxu0
        %v2051 = vadd.f32 %v749, %v2050
        %2052 = vmatprep.mubr.bf16.mxu0 0
        %2053 = vmatmul.mubr.bf16.gmra.mxu0 %v1776
        %v2054 = vpop.f32.mrf.mxu0
        %v2055 = vadd.f32 %v745, %v2054
        %v2056 = vpop.f32.mrf.mxu0
        %v2057 = vadd.f32 %v749, %v2056
        %v2058 = vpop.f32.mrf.mxu0
        %v2059 = vadd.f32 %v745, %v2058
        %v2060 = vpop.f32.mrf.mxu0
        %v2061 = vadd.f32 %v749, %v2060
        %2062 = vmatprep.mubr.bf16.mxu0 0
        %2063 = vmatmul.mubr.bf16.gmra.mxu0 %v1779
        %v2064 = vpop.f32.mrf.mxu0
        %v2065 = vadd.f32 %v745, %v2064
        %v2066 = vpop.f32.mrf.mxu0
        %v2067 = vadd.f32 %v749, %v2066
        %v2068 = vpop.f32.mrf.mxu0
        %v2069 = vadd.f32 %v745, %v2068
        %v2070 = vpop.f32.mrf.mxu0
        %v2071 = vadd.f32 %v749, %v2070
        %2072 = vdwg.mxu0
        %2073 = vmatprep.subr.bf16.mxu0 0
        %2074 = vmatpush1.bf16.msra.mxu0 0
        %2075 = vmatprep.subr.bf16.mxu0 0
        %2076 = vmatpush1.bf16.msra.mxu0 0
        %2077 = vmatprep.subr.bf16.mxu0 %v1567
        %2078 = vmatpush1.bf16.msra.mxu0 %v1566
        %2079 = vmatprep.subr.bf16.mxu0 %v1537
        %2080 = vmatpush1.bf16.msra.mxu0 %v1536
        %2081 = vmatprep.subr.bf16.mxu0 %v1507
        %2082 = vmatpush1.bf16.msra.mxu0 %v1506
        %2083 = vmatprep.subr.bf16.mxu0 %v1477
        %2084 = vmatpush1.bf16.msra.mxu0 %v1476
        %2085 = vmatprep.subr.bf16.mxu0 %v1447
        %2086 = vmatpush1.bf16.msra.mxu0 %v1446
        %2087 = vmatprep.subr.bf16.mxu0 %v1417
        %2088 = vmatpush1.bf16.msra.mxu0 %v1416
        %2089 = vmatprep.subr.bf16.mxu0 0
        %2090 = vmatpush2.bf16.msra.mxu0 0
        %2091 = vmatprep.subr.bf16.mxu0 0
        %2092 = vmatpush2.bf16.msra.mxu0 0
        %2093 = vmatprep.subr.bf16.mxu0 0
        %2094 = vmatpush2.bf16.msra.mxu0 0
        %2095 = vmatprep.subr.bf16.mxu0 0
        %2096 = vmatpush2.bf16.msra.mxu0 0
        %2097 = vmatprep.subr.bf16.mxu0 0
        %2098 = vmatpush2.bf16.msra.mxu0 0
        %2099 = vmatprep.subr.bf16.mxu0 0
        %2100 = vmatpush2.bf16.msra.mxu0 0
        %2101 = vmatprep.subr.bf16.mxu0 0
        %2102 = vmatpush2.bf16.msra.mxu0 0
        %2103 = vmatprep.subr.bf16.mxu0 0
        %2104 = vmatpush2.bf16.msra.mxu0 0
        %2105 = vmatprep.mubr.bf16.mxu0 0
        %2106 = vmatmul.mubr.bf16.gmra.mxu0 %v1770
        %v2107 = vpop.f32.mrf.mxu0
        %v2108 = vadd.f32 %v753, %v2107
        %v2109 = vpop.f32.mrf.mxu0
        %v2110 = vadd.f32 %v757, %v2109
        %v2111 = vpop.f32.mrf.mxu0
        %v2112 = vadd.f32 %v753, %v2111
        %v2113 = vpop.f32.mrf.mxu0
        %v2114 = vadd.f32 %v757, %v2113
        %2115 = vmatprep.mubr.bf16.mxu0 0
        %2116 = vmatmul.mubr.bf16.gmra.mxu0 %v1773
        %v2117 = vpop.f32.mrf.mxu0
        %v2118 = vadd.f32 %v753, %v2117
        %v2119 = vpop.f32.mrf.mxu0
        %v2120 = vadd.f32 %v757, %v2119
        %v2121 = vpop.f32.mrf.mxu0
        %v2122 = vadd.f32 %v753, %v2121
        %v2123 = vpop.f32.mrf.mxu0
        %v2124 = vadd.f32 %v757, %v2123
        %2125 = vmatprep.mubr.bf16.mxu0 0
        %2126 = vmatmul.mubr.bf16.gmra.mxu0 %v1776
        %v2127 = vpop.f32.mrf.mxu0
        %v2128 = vadd.f32 %v753, %v2127
        %v2129 = vpop.f32.mrf.mxu0
        %v2130 = vadd.f32 %v757, %v2129
        %v2131 = vpop.f32.mrf.mxu0
        %v2132 = vadd.f32 %v753, %v2131
        %v2133 = vpop.f32.mrf.mxu0
        %v2134 = vadd.f32 %v757, %v2133
        %2135 = vmatprep.mubr.bf16.mxu0 0
        %2136 = vmatmul.mubr.bf16.gmra.mxu0 %v1779
        %v2137 = vpop.f32.mrf.mxu0
        %v2138 = vadd.f32 %v753, %v2137
        %v2139 = vpop.f32.mrf.mxu0
        %v2140 = vadd.f32 %v757, %v2139
        %v2141 = vpop.f32.mrf.mxu0
        %v2142 = vadd.f32 %v753, %v2141
        %v2143 = vpop.f32.mrf.mxu0
        %v2144 = vadd.f32 %v757, %v2143
        %2145 = vdwg.mxu0
        %2146 = vmatprep.subr.bf16.mxu0 0
        %2147 = vmatpush1.bf16.msra.mxu0 0
        %2148 = vmatprep.subr.bf16.mxu0 0
        %2149 = vmatpush1.bf16.msra.mxu0 0
        %2150 = vmatprep.subr.bf16.mxu0 %v1569
        %2151 = vmatpush1.bf16.msra.mxu0 %v1568
        %2152 = vmatprep.subr.bf16.mxu0 %v1539
        %2153 = vmatpush1.bf16.msra.mxu0 %v1538
        %2154 = vmatprep.subr.bf16.mxu0 %v1509
        %2155 = vmatpush1.bf16.msra.mxu0 %v1508
        %2156 = vmatprep.subr.bf16.mxu0 %v1479
        %2157 = vmatpush1.bf16.msra.mxu0 %v1478
        %2158 = vmatprep.subr.bf16.mxu0 %v1449
        %2159 = vmatpush1.bf16.msra.mxu0 %v1448
        %2160 = vmatprep.subr.bf16.mxu0 %v1419
        %2161 = vmatpush1.bf16.msra.mxu0 %v1418
        %2162 = vmatprep.subr.bf16.mxu0 0
        %2163 = vmatpush2.bf16.msra.mxu0 0
        %2164 = vmatprep.subr.bf16.mxu0 0
        %2165 = vmatpush2.bf16.msra.mxu0 0
        %2166 = vmatprep.subr.bf16.mxu0 0
        %2167 = vmatpush2.bf16.msra.mxu0 0
        %2168 = vmatprep.subr.bf16.mxu0 0
        %2169 = vmatpush2.bf16.msra.mxu0 0
        %2170 = vmatprep.subr.bf16.mxu0 0
        %2171 = vmatpush2.bf16.msra.mxu0 0
        %2172 = vmatprep.subr.bf16.mxu0 0
        %2173 = vmatpush2.bf16.msra.mxu0 0
        %2174 = vmatprep.subr.bf16.mxu0 0
        %2175 = vmatpush2.bf16.msra.mxu0 0
        %2176 = vmatprep.subr.bf16.mxu0 0
        %2177 = vmatpush2.bf16.msra.mxu0 0
        %2178 = vmatprep.mubr.bf16.mxu0 0
        %2179 = vmatmul.mubr.bf16.gmra.mxu0 %v1770
        %v2180 = vpop.f32.mrf.mxu0
        %v2181 = vadd.f32 %v761, %v2180
        %v2182 = vpop.f32.mrf.mxu0
        %v2183 = vadd.f32 %v765, %v2182
        %v2184 = vpop.f32.mrf.mxu0
        %v2185 = vadd.f32 %v761, %v2184
        %v2186 = vpop.f32.mrf.mxu0
        %v2187 = vadd.f32 %v765, %v2186
        %2188 = vmatprep.mubr.bf16.mxu0 0
        %2189 = vmatmul.mubr.bf16.gmra.mxu0 %v1773
        %v2190 = vpop.f32.mrf.mxu0
        %v2191 = vadd.f32 %v761, %v2190
        %v2192 = vpop.f32.mrf.mxu0
        %v2193 = vadd.f32 %v765, %v2192
        %v2194 = vpop.f32.mrf.mxu0
        %v2195 = vadd.f32 %v761, %v2194
        %v2196 = vpop.f32.mrf.mxu0
        %v2197 = vadd.f32 %v765, %v2196
        %2198 = vmatprep.mubr.bf16.mxu0 0
        %2199 = vmatmul.mubr.bf16.gmra.mxu0 %v1776
        %v2200 = vpop.f32.mrf.mxu0
        %v2201 = vadd.f32 %v761, %v2200
        %v2202 = vpop.f32.mrf.mxu0
        %v2203 = vadd.f32 %v765, %v2202
        %v2204 = vpop.f32.mrf.mxu0
        %v2205 = vadd.f32 %v761, %v2204
        %v2206 = vpop.f32.mrf.mxu0
        %v2207 = vadd.f32 %v765, %v2206
        %2208 = vmatprep.mubr.bf16.mxu0 0
        %2209 = vmatmul.mubr.bf16.gmra.mxu0 %v1779
        %v2210 = vpop.f32.mrf.mxu0
        %v2211 = vadd.f32 %v761, %v2210
        %v2212 = vpop.f32.mrf.mxu0
        %v2213 = vadd.f32 %v765, %v2212
        %v2214 = vpop.f32.mrf.mxu0
        %v2215 = vadd.f32 %v761, %v2214
        %v2216 = vpop.f32.mrf.mxu0
        %v2217 = vadd.f32 %v765, %v2216
        %2218 = vdwg.mxu0
        %2219 = vmatprep.subr.bf16.mxu0 0
        %2220 = vmatpush1.bf16.msra.mxu0 0
        %2221 = vmatprep.subr.bf16.mxu0 0
        %2222 = vmatpush1.bf16.msra.mxu0 0
        %2223 = vmatprep.subr.bf16.mxu0 %v1571
        %2224 = vmatpush1.bf16.msra.mxu0 %v1570
        %2225 = vmatprep.subr.bf16.mxu0 %v1541
        %2226 = vmatpush1.bf16.msra.mxu0 %v1540
        %2227 = vmatprep.subr.bf16.mxu0 %v1511
        %2228 = vmatpush1.bf16.msra.mxu0 %v1510
        %2229 = vmatprep.subr.bf16.mxu0 %v1481
        %2230 = vmatpush1.bf16.msra.mxu0 %v1480
        %2231 = vmatprep.subr.bf16.mxu0 %v1451
        %2232 = vmatpush1.bf16.msra.mxu0 %v1450
        %2233 = vmatprep.subr.bf16.mxu0 %v1421
        %2234 = vmatpush1.bf16.msra.mxu0 %v1420
        %2235 = vmatprep.subr.bf16.mxu0 0
        %2236 = vmatpush2.bf16.msra.mxu0 0
        %2237 = vmatprep.subr.bf16.mxu0 0
        %2238 = vmatpush2.bf16.msra.mxu0 0
        %2239 = vmatprep.subr.bf16.mxu0 0
        %2240 = vmatpush2.bf16.msra.mxu0 0
        %2241 = vmatprep.subr.bf16.mxu0 0
        %2242 = vmatpush2.bf16.msra.mxu0 0
        %2243 = vmatprep.subr.bf16.mxu0 0
        %2244 = vmatpush2.bf16.msra.mxu0 0
        %2245 = vmatprep.subr.bf16.mxu0 0
        %2246 = vmatpush2.bf16.msra.mxu0 0
        %2247 = vmatprep.subr.bf16.mxu0 0
        %2248 = vmatpush2.bf16.msra.mxu0 0
        %2249 = vmatprep.subr.bf16.mxu0 0
        %2250 = vmatpush2.bf16.msra.mxu0 0
        %2251 = vmatprep.mubr.bf16.mxu0 0
        %2252 = vmatmul.mubr.bf16.gmra.mxu0 %v1770
        %v2253 = vpop.f32.mrf.mxu0
        %v2254 = vadd.f32 %v769, %v2253
        %v2255 = vpop.f32.mrf.mxu0
        %v2256 = vadd.f32 %v773, %v2255
        %v2257 = vpop.f32.mrf.mxu0
        %v2258 = vadd.f32 %v769, %v2257
        %v2259 = vpop.f32.mrf.mxu0
        %v2260 = vadd.f32 %v773, %v2259
        %2261 = vmatprep.mubr.bf16.mxu0 0
        %2262 = vmatmul.mubr.bf16.gmra.mxu0 %v1773
        %v2263 = vpop.f32.mrf.mxu0
        %v2264 = vadd.f32 %v769, %v2263
        %v2265 = vpop.f32.mrf.mxu0
        %v2266 = vadd.f32 %v773, %v2265
        %v2267 = vpop.f32.mrf.mxu0
        %v2268 = vadd.f32 %v769, %v2267
        %v2269 = vpop.f32.mrf.mxu0
        %v2270 = vadd.f32 %v773, %v2269
        %2271 = vmatprep.mubr.bf16.mxu0 0
        %2272 = vmatmul.mubr.bf16.gmra.mxu0 %v1776
        %v2273 = vpop.f32.mrf.mxu0
        %v2274 = vadd.f32 %v769, %v2273
        %v2275 = vpop.f32.mrf.mxu0
        %v2276 = vadd.f32 %v773, %v2275
        %v2277 = vpop.f32.mrf.mxu0
        %v2278 = vadd.f32 %v769, %v2277
        %v2279 = vpop.f32.mrf.mxu0
        %v2280 = vadd.f32 %v773, %v2279
        %2281 = vmatprep.mubr.bf16.mxu0 0
        %2282 = vmatmul.mubr.bf16.gmra.mxu0 %v1779
        %v2283 = vpop.f32.mrf.mxu0
        %v2284 = vadd.f32 %v769, %v2283
        %v2285 = vpop.f32.mrf.mxu0
        %v2286 = vadd.f32 %v773, %v2285
        %v2287 = vpop.f32.mrf.mxu0
        %v2288 = vadd.f32 %v769, %v2287
        %v2289 = vpop.f32.mrf.mxu0
        %v2290 = vadd.f32 %v773, %v2289
        %2291 = vdwg.mxu0
        %2292 = vmatprep.subr.bf16.mxu0 0
        %2293 = vmatpush1.bf16.msra.mxu0 0
        %2294 = vmatprep.subr.bf16.mxu0 0
        %2295 = vmatpush1.bf16.msra.mxu0 0
        %2296 = vmatprep.subr.bf16.mxu0 %v1573
        %2297 = vmatpush1.bf16.msra.mxu0 %v1572
        %2298 = vmatprep.subr.bf16.mxu0 %v1543
        %2299 = vmatpush1.bf16.msra.mxu0 %v1542
        %2300 = vmatprep.subr.bf16.mxu0 %v1513
        %2301 = vmatpush1.bf16.msra.mxu0 %v1512
        %2302 = vmatprep.subr.bf16.mxu0 %v1483
        %2303 = vmatpush1.bf16.msra.mxu0 %v1482
        %2304 = vmatprep.subr.bf16.mxu0 %v1453
        %2305 = vmatpush1.bf16.msra.mxu0 %v1452
        %2306 = vmatprep.subr.bf16.mxu0 %v1423
        %2307 = vmatpush1.bf16.msra.mxu0 %v1422
        %2308 = vmatprep.subr.bf16.mxu0 0
        %2309 = vmatpush2.bf16.msra.mxu0 0
        %2310 = vmatprep.subr.bf16.mxu0 0
        %2311 = vmatpush2.bf16.msra.mxu0 0
        %2312 = vmatprep.subr.bf16.mxu0 0
        %2313 = vmatpush2.bf16.msra.mxu0 0
        %2314 = vmatprep.subr.bf16.mxu0 0
        %2315 = vmatpush2.bf16.msra.mxu0 0
        %2316 = vmatprep.subr.bf16.mxu0 0
        %2317 = vmatpush2.bf16.msra.mxu0 0
        %2318 = vmatprep.subr.bf16.mxu0 0
        %2319 = vmatpush2.bf16.msra.mxu0 0
        %2320 = vmatprep.subr.bf16.mxu0 0
        %2321 = vmatpush2.bf16.msra.mxu0 0
        %2322 = vmatprep.subr.bf16.mxu0 0
        %2323 = vmatpush2.bf16.msra.mxu0 0
        %2324 = vmatprep.mubr.bf16.mxu0 0
        %2325 = vmatmul.mubr.bf16.gmra.mxu0 %v1770
        %v2326 = vpop.f32.mrf.mxu0
        %v2327 = vadd.f32 %v777, %v2326
        %v2328 = vpop.f32.mrf.mxu0
        %v2329 = vadd.f32 %v781, %v2328
        %v2330 = vpop.f32.mrf.mxu0
        %v2331 = vadd.f32 %v777, %v2330
        %v2332 = vpop.f32.mrf.mxu0
        %v2333 = vadd.f32 %v781, %v2332
        %2334 = vmatprep.mubr.bf16.mxu0 0
        %2335 = vmatmul.mubr.bf16.gmra.mxu0 %v1773
        %v2336 = vpop.f32.mrf.mxu0
        %v2337 = vadd.f32 %v777, %v2336
        %v2338 = vpop.f32.mrf.mxu0
        %v2339 = vadd.f32 %v781, %v2338
        %v2340 = vpop.f32.mrf.mxu0
        %v2341 = vadd.f32 %v777, %v2340
        %v2342 = vpop.f32.mrf.mxu0
        %v2343 = vadd.f32 %v781, %v2342
        %2344 = vmatprep.mubr.bf16.mxu0 0
        %2345 = vmatmul.mubr.bf16.gmra.mxu0 %v1776
        %v2346 = vpop.f32.mrf.mxu0
        %v2347 = vadd.f32 %v777, %v2346
        %v2348 = vpop.f32.mrf.mxu0
        %v2349 = vadd.f32 %v781, %v2348
        %v2350 = vpop.f32.mrf.mxu0
        %v2351 = vadd.f32 %v777, %v2350
        %v2352 = vpop.f32.mrf.mxu0
        %v2353 = vadd.f32 %v781, %v2352
        %2354 = vmatprep.mubr.bf16.mxu0 0
        %2355 = vmatmul.mubr.bf16.gmra.mxu0 %v1779
        %v2356 = vpop.f32.mrf.mxu0
        %v2357 = vadd.f32 %v777, %v2356
        %v2358 = vpop.f32.mrf.mxu0
        %v2359 = vadd.f32 %v781, %v2358
        %v2360 = vpop.f32.mrf.mxu0
        %v2361 = vadd.f32 %v777, %v2360
        %v2362 = vpop.f32.mrf.mxu0
        %v2363 = vadd.f32 %v781, %v2362
        %2364 = vdwg.mxu0
        %2365 = vmatprep.subr.bf16.mxu0 0
        %2366 = vmatpush1.bf16.msra.mxu0 0
        %2367 = vmatprep.subr.bf16.mxu0 0
        %2368 = vmatpush1.bf16.msra.mxu0 0
        %2369 = vmatprep.subr.bf16.mxu0 %v1575
        %2370 = vmatpush1.bf16.msra.mxu0 %v1574
        %2371 = vmatprep.subr.bf16.mxu0 %v1545
        %2372 = vmatpush1.bf16.msra.mxu0 %v1544
        %2373 = vmatprep.subr.bf16.mxu0 %v1515
        %2374 = vmatpush1.bf16.msra.mxu0 %v1514
        %2375 = vmatprep.subr.bf16.mxu0 %v1485
        %2376 = vmatpush1.bf16.msra.mxu0 %v1484
        %2377 = vmatprep.subr.bf16.mxu0 %v1455
        %2378 = vmatpush1.bf16.msra.mxu0 %v1454
        %2379 = vmatprep.subr.bf16.mxu0 %v1425
        %2380 = vmatpush1.bf16.msra.mxu0 %v1424
        %2381 = vmatprep.subr.bf16.mxu0 0
        %2382 = vmatpush2.bf16.msra.mxu0 0
        %2383 = vmatprep.subr.bf16.mxu0 0
        %2384 = vmatpush2.bf16.msra.mxu0 0
        %2385 = vmatprep.subr.bf16.mxu0 0
        %2386 = vmatpush2.bf16.msra.mxu0 0
        %2387 = vmatprep.subr.bf16.mxu0 0
        %2388 = vmatpush2.bf16.msra.mxu0 0
        %2389 = vmatprep.subr.bf16.mxu0 0
        %2390 = vmatpush2.bf16.msra.mxu0 0
        %2391 = vmatprep.subr.bf16.mxu0 0
        %2392 = vmatpush2.bf16.msra.mxu0 0
        %2393 = vmatprep.subr.bf16.mxu0 0
        %2394 = vmatpush2.bf16.msra.mxu0 0
        %2395 = vmatprep.subr.bf16.mxu0 0
        %2396 = vmatpush2.bf16.msra.mxu0 0
        %2397 = vmatprep.mubr.bf16.mxu0 0
        %2398 = vmatmul.mubr.bf16.gmra.mxu0 %v1770
        %v2399 = vpop.f32.mrf.mxu0
        %v2400 = vadd.f32 %v785, %v2399
        %v2401 = vpop.f32.mrf.mxu0
        %v2402 = vadd.f32 %v789, %v2401
        %v2403 = vpop.f32.mrf.mxu0
        %v2404 = vadd.f32 %v785, %v2403
        %v2405 = vpop.f32.mrf.mxu0
        %v2406 = vadd.f32 %v789, %v2405
        %2407 = vmatprep.mubr.bf16.mxu0 0
        %2408 = vmatmul.mubr.bf16.gmra.mxu0 %v1773
        %v2409 = vpop.f32.mrf.mxu0
        %v2410 = vadd.f32 %v785, %v2409
        %v2411 = vpop.f32.mrf.mxu0
        %v2412 = vadd.f32 %v789, %v2411
        %v2413 = vpop.f32.mrf.mxu0
        %v2414 = vadd.f32 %v785, %v2413
        %v2415 = vpop.f32.mrf.mxu0
        %v2416 = vadd.f32 %v789, %v2415
        %2417 = vmatprep.mubr.bf16.mxu0 0
        %2418 = vmatmul.mubr.bf16.gmra.mxu0 %v1776
        %v2419 = vpop.f32.mrf.mxu0
        %v2420 = vadd.f32 %v785, %v2419
        %v2421 = vpop.f32.mrf.mxu0
        %v2422 = vadd.f32 %v789, %v2421
        %v2423 = vpop.f32.mrf.mxu0
        %v2424 = vadd.f32 %v785, %v2423
        %v2425 = vpop.f32.mrf.mxu0
        %v2426 = vadd.f32 %v789, %v2425
        %2427 = vmatprep.mubr.bf16.mxu0 0
        %2428 = vmatmul.mubr.bf16.gmra.mxu0 %v1779
        %v2429 = vpop.f32.mrf.mxu0
        %v2430 = vadd.f32 %v785, %v2429
        %v2431 = vpop.f32.mrf.mxu0
        %v2432 = vadd.f32 %v789, %v2431
        %v2433 = vpop.f32.mrf.mxu0
        %v2434 = vadd.f32 %v785, %v2433
        %v2435 = vpop.f32.mrf.mxu0
        %v2436 = vadd.f32 %v789, %v2435
        %2437 = vdwg.mxu0
        %2438 = vmatprep.subr.bf16.mxu0 0
        %2439 = vmatpush1.bf16.msra.mxu0 0
        %2440 = vmatprep.subr.bf16.mxu0 0
        %2441 = vmatpush1.bf16.msra.mxu0 0
        %2442 = vmatprep.subr.bf16.mxu0 %v1577
        %2443 = vmatpush1.bf16.msra.mxu0 %v1576
        %2444 = vmatprep.subr.bf16.mxu0 %v1547
        %2445 = vmatpush1.bf16.msra.mxu0 %v1546
        %2446 = vmatprep.subr.bf16.mxu0 %v1517
        %2447 = vmatpush1.bf16.msra.mxu0 %v1516
        %2448 = vmatprep.subr.bf16.mxu0 %v1487
        %2449 = vmatpush1.bf16.msra.mxu0 %v1486
        %2450 = vmatprep.subr.bf16.mxu0 %v1457
        %2451 = vmatpush1.bf16.msra.mxu0 %v1456
        %2452 = vmatprep.subr.bf16.mxu0 %v1427
        %2453 = vmatpush1.bf16.msra.mxu0 %v1426
        %2454 = vmatprep.subr.bf16.mxu0 0
        %2455 = vmatpush2.bf16.msra.mxu0 0
        %2456 = vmatprep.subr.bf16.mxu0 0
        %2457 = vmatpush2.bf16.msra.mxu0 0
        %2458 = vmatprep.subr.bf16.mxu0 0
        %2459 = vmatpush2.bf16.msra.mxu0 0
        %2460 = vmatprep.subr.bf16.mxu0 0
        %2461 = vmatpush2.bf16.msra.mxu0 0
        %2462 = vmatprep.subr.bf16.mxu0 0
        %2463 = vmatpush2.bf16.msra.mxu0 0
        %2464 = vmatprep.subr.bf16.mxu0 0
        %2465 = vmatpush2.bf16.msra.mxu0 0
        %2466 = vmatprep.subr.bf16.mxu0 0
        %2467 = vmatpush2.bf16.msra.mxu0 0
        %2468 = vmatprep.subr.bf16.mxu0 0
        %2469 = vmatpush2.bf16.msra.mxu0 0
        %2470 = vmatprep.mubr.bf16.mxu0 0
        %2471 = vmatmul.mubr.bf16.gmra.mxu0 %v1770
        %v2472 = vpop.f32.mrf.mxu0
        %v2473 = vadd.f32 %v793, %v2472
        %v2474 = vpop.f32.mrf.mxu0
        %v2475 = vadd.f32 %v797, %v2474
        %v2476 = vpop.f32.mrf.mxu0
        %v2477 = vadd.f32 %v793, %v2476
        %v2478 = vpop.f32.mrf.mxu0
        %v2479 = vadd.f32 %v797, %v2478
        %2480 = vmatprep.mubr.bf16.mxu0 0
        %2481 = vmatmul.mubr.bf16.gmra.mxu0 %v1773
        %v2482 = vpop.f32.mrf.mxu0
        %v2483 = vadd.f32 %v793, %v2482
        %v2484 = vpop.f32.mrf.mxu0
        %v2485 = vadd.f32 %v797, %v2484
        %v2486 = vpop.f32.mrf.mxu0
        %v2487 = vadd.f32 %v793, %v2486
        %v2488 = vpop.f32.mrf.mxu0
        %v2489 = vadd.f32 %v797, %v2488
        %2490 = vmatprep.mubr.bf16.mxu0 0
        %2491 = vmatmul.mubr.bf16.gmra.mxu0 %v1776
        %v2492 = vpop.f32.mrf.mxu0
        %v2493 = vadd.f32 %v793, %v2492
        %v2494 = vpop.f32.mrf.mxu0
        %v2495 = vadd.f32 %v797, %v2494
        %v2496 = vpop.f32.mrf.mxu0
        %v2497 = vadd.f32 %v793, %v2496
        %v2498 = vpop.f32.mrf.mxu0
        %v2499 = vadd.f32 %v797, %v2498
        %2500 = vmatprep.mubr.bf16.mxu0 0
        %2501 = vmatmul.mubr.bf16.gmra.mxu0 %v1779
        %v2502 = vpop.f32.mrf.mxu0
        %v2503 = vadd.f32 %v793, %v2502
        %v2504 = vpop.f32.mrf.mxu0
        %v2505 = vadd.f32 %v797, %v2504
        %v2506 = vpop.f32.mrf.mxu0
        %v2507 = vadd.f32 %v793, %v2506
        %v2508 = vpop.f32.mrf.mxu0
        %v2509 = vadd.f32 %v797, %v2508
        %2510 = vdwg.mxu0
        %2511 = vmatprep.subr.bf16.mxu0 0
        %2512 = vmatpush1.bf16.msra.mxu0 0
        %2513 = vmatprep.subr.bf16.mxu0 0
        %2514 = vmatpush1.bf16.msra.mxu0 0
        %2515 = vmatprep.subr.bf16.mxu0 %v1579
        %2516 = vmatpush1.bf16.msra.mxu0 %v1578
        %2517 = vmatprep.subr.bf16.mxu0 %v1549
        %2518 = vmatpush1.bf16.msra.mxu0 %v1548
        %2519 = vmatprep.subr.bf16.mxu0 %v1519
        %2520 = vmatpush1.bf16.msra.mxu0 %v1518
        %2521 = vmatprep.subr.bf16.mxu0 %v1489
        %2522 = vmatpush1.bf16.msra.mxu0 %v1488
        %2523 = vmatprep.subr.bf16.mxu0 %v1459
        %2524 = vmatpush1.bf16.msra.mxu0 %v1458
        %2525 = vmatprep.subr.bf16.mxu0 %v1429
        %2526 = vmatpush1.bf16.msra.mxu0 %v1428
        %2527 = vmatprep.subr.bf16.mxu0 0
        %2528 = vmatpush2.bf16.msra.mxu0 0
        %2529 = vmatprep.subr.bf16.mxu0 0
        %2530 = vmatpush2.bf16.msra.mxu0 0
        %2531 = vmatprep.subr.bf16.mxu0 0
        %2532 = vmatpush2.bf16.msra.mxu0 0
        %2533 = vmatprep.subr.bf16.mxu0 0
        %2534 = vmatpush2.bf16.msra.mxu0 0
        %2535 = vmatprep.subr.bf16.mxu0 0
        %2536 = vmatpush2.bf16.msra.mxu0 0
        %2537 = vmatprep.subr.bf16.mxu0 0
        %2538 = vmatpush2.bf16.msra.mxu0 0
        %2539 = vmatprep.subr.bf16.mxu0 0
        %2540 = vmatpush2.bf16.msra.mxu0 0
        %2541 = vmatprep.subr.bf16.mxu0 0
        %2542 = vmatpush2.bf16.msra.mxu0 0
        %2543 = vmatprep.mubr.bf16.mxu0 0
        %2544 = vmatmul.mubr.bf16.gmra.mxu0 %v1770
        %v2545 = vpop.f32.mrf.mxu0
        %v2546 = vadd.f32 %v801, %v2545
        %v2547 = vpop.f32.mrf.mxu0
        %v2548 = vadd.f32 %v805, %v2547
        %v2549 = vpop.f32.mrf.mxu0
        %v2550 = vadd.f32 %v801, %v2549
        %v2551 = vpop.f32.mrf.mxu0
        %v2552 = vadd.f32 %v805, %v2551
        %2553 = vmatprep.mubr.bf16.mxu0 0
        %2554 = vmatmul.mubr.bf16.gmra.mxu0 %v1773
        %v2555 = vpop.f32.mrf.mxu0
        %v2556 = vadd.f32 %v801, %v2555
        %v2557 = vpop.f32.mrf.mxu0
        %v2558 = vadd.f32 %v805, %v2557
        %v2559 = vpop.f32.mrf.mxu0
        %v2560 = vadd.f32 %v801, %v2559
        %v2561 = vpop.f32.mrf.mxu0
        %v2562 = vadd.f32 %v805, %v2561
        %2563 = vmatprep.mubr.bf16.mxu0 0
        %2564 = vmatmul.mubr.bf16.gmra.mxu0 %v1776
        %v2565 = vpop.f32.mrf.mxu0
        %v2566 = vadd.f32 %v801, %v2565
        %v2567 = vpop.f32.mrf.mxu0
        %v2568 = vadd.f32 %v805, %v2567
        %v2569 = vpop.f32.mrf.mxu0
        %v2570 = vadd.f32 %v801, %v2569
        %v2571 = vpop.f32.mrf.mxu0
        %v2572 = vadd.f32 %v805, %v2571
        %2573 = vmatprep.mubr.bf16.mxu0 0
        %2574 = vmatmul.mubr.bf16.gmra.mxu0 %v1779
        %v2575 = vpop.f32.mrf.mxu0
        %v2576 = vadd.f32 %v801, %v2575
        %v2577 = vpop.f32.mrf.mxu0
        %v2578 = vadd.f32 %v805, %v2577
        %v2579 = vpop.f32.mrf.mxu0
        %v2580 = vadd.f32 %v801, %v2579
        %v2581 = vpop.f32.mrf.mxu0
        %v2582 = vadd.f32 %v805, %v2581
        %2583 = vdwg.mxu0
        %2584 = vmatprep.subr.bf16.mxu0 0
        %2585 = vmatpush1.bf16.msra.mxu0 0
        %2586 = vmatprep.subr.bf16.mxu0 0
        %2587 = vmatpush1.bf16.msra.mxu0 0
        %2588 = vmatprep.subr.bf16.mxu0 %v1581
        %2589 = vmatpush1.bf16.msra.mxu0 %v1580
        %2590 = vmatprep.subr.bf16.mxu0 %v1551
        %2591 = vmatpush1.bf16.msra.mxu0 %v1550
        %2592 = vmatprep.subr.bf16.mxu0 %v1521
        %2593 = vmatpush1.bf16.msra.mxu0 %v1520
        %2594 = vmatprep.subr.bf16.mxu0 %v1491
        %2595 = vmatpush1.bf16.msra.mxu0 %v1490
        %2596 = vmatprep.subr.bf16.mxu0 %v1461
        %2597 = vmatpush1.bf16.msra.mxu0 %v1460
        %2598 = vmatprep.subr.bf16.mxu0 %v1431
        %2599 = vmatpush1.bf16.msra.mxu0 %v1430
        %2600 = vmatprep.subr.bf16.mxu0 0
        %2601 = vmatpush2.bf16.msra.mxu0 0
        %2602 = vmatprep.subr.bf16.mxu0 0
        %2603 = vmatpush2.bf16.msra.mxu0 0
        %2604 = vmatprep.subr.bf16.mxu0 0
        %2605 = vmatpush2.bf16.msra.mxu0 0
        %2606 = vmatprep.subr.bf16.mxu0 0
        %2607 = vmatpush2.bf16.msra.mxu0 0
        %2608 = vmatprep.subr.bf16.mxu0 0
        %2609 = vmatpush2.bf16.msra.mxu0 0
        %2610 = vmatprep.subr.bf16.mxu0 0
        %2611 = vmatpush2.bf16.msra.mxu0 0
        %2612 = vmatprep.subr.bf16.mxu0 0
        %2613 = vmatpush2.bf16.msra.mxu0 0
        %2614 = vmatprep.subr.bf16.mxu0 0
        %2615 = vmatpush2.bf16.msra.mxu0 0
        %2616 = vmatprep.mubr.bf16.mxu0 0
        %2617 = vmatmul.mubr.bf16.gmra.mxu0 %v1770
        %v2618 = vpop.f32.mrf.mxu0
        %v2619 = vadd.f32 %v809, %v2618
        %v2620 = vpop.f32.mrf.mxu0
        %v2621 = vadd.f32 %v813, %v2620
        %v2622 = vpop.f32.mrf.mxu0
        %v2623 = vadd.f32 %v809, %v2622
        %v2624 = vpop.f32.mrf.mxu0
        %v2625 = vadd.f32 %v813, %v2624
        %2626 = vmatprep.mubr.bf16.mxu0 0
        %2627 = vmatmul.mubr.bf16.gmra.mxu0 %v1773
        %v2628 = vpop.f32.mrf.mxu0
        %v2629 = vadd.f32 %v809, %v2628
        %v2630 = vpop.f32.mrf.mxu0
        %v2631 = vadd.f32 %v813, %v2630
        %v2632 = vpop.f32.mrf.mxu0
        %v2633 = vadd.f32 %v809, %v2632
        %v2634 = vpop.f32.mrf.mxu0
        %v2635 = vadd.f32 %v813, %v2634
        %2636 = vmatprep.mubr.bf16.mxu0 0
        %2637 = vmatmul.mubr.bf16.gmra.mxu0 %v1776
        %v2638 = vpop.f32.mrf.mxu0
        %v2639 = vadd.f32 %v809, %v2638
        %v2640 = vpop.f32.mrf.mxu0
        %v2641 = vadd.f32 %v813, %v2640
        %v2642 = vpop.f32.mrf.mxu0
        %v2643 = vadd.f32 %v809, %v2642
        %v2644 = vpop.f32.mrf.mxu0
        %v2645 = vadd.f32 %v813, %v2644
        %2646 = vmatprep.mubr.bf16.mxu0 0
        %2647 = vmatmul.mubr.bf16.gmra.mxu0 %v1779
        %v2648 = vpop.f32.mrf.mxu0
        %v2649 = vadd.f32 %v809, %v2648
        %v2650 = vpop.f32.mrf.mxu0
        %v2651 = vadd.f32 %v813, %v2650
        %v2652 = vpop.f32.mrf.mxu0
        %v2653 = vadd.f32 %v809, %v2652
        %v2654 = vpop.f32.mrf.mxu0
        %v2655 = vadd.f32 %v813, %v2654
        %2656 = vdwg.mxu0
        %2657 = vmatprep.subr.bf16.mxu0 0
        %2658 = vmatpush1.bf16.msra.mxu0 0
        %2659 = vmatprep.subr.bf16.mxu0 0
        %2660 = vmatpush1.bf16.msra.mxu0 0
        %2661 = vmatprep.subr.bf16.mxu0 %v1583
        %2662 = vmatpush1.bf16.msra.mxu0 %v1582
        %2663 = vmatprep.subr.bf16.mxu0 %v1553
        %2664 = vmatpush1.bf16.msra.mxu0 %v1552
        %2665 = vmatprep.subr.bf16.mxu0 %v1523
        %2666 = vmatpush1.bf16.msra.mxu0 %v1522
        %2667 = vmatprep.subr.bf16.mxu0 %v1493
        %2668 = vmatpush1.bf16.msra.mxu0 %v1492
        %2669 = vmatprep.subr.bf16.mxu0 %v1463
        %2670 = vmatpush1.bf16.msra.mxu0 %v1462
        %2671 = vmatprep.subr.bf16.mxu0 %v1433
        %2672 = vmatpush1.bf16.msra.mxu0 %v1432
        %2673 = vmatprep.subr.bf16.mxu0 0
        %2674 = vmatpush2.bf16.msra.mxu0 0
        %2675 = vmatprep.subr.bf16.mxu0 0
        %2676 = vmatpush2.bf16.msra.mxu0 0
        %2677 = vmatprep.subr.bf16.mxu0 0
        %2678 = vmatpush2.bf16.msra.mxu0 0
        %2679 = vmatprep.subr.bf16.mxu0 0
        %2680 = vmatpush2.bf16.msra.mxu0 0
        %2681 = vmatprep.subr.bf16.mxu0 0
        %2682 = vmatpush2.bf16.msra.mxu0 0
        %2683 = vmatprep.subr.bf16.mxu0 0
        %2684 = vmatpush2.bf16.msra.mxu0 0
        %2685 = vmatprep.subr.bf16.mxu0 0
        %2686 = vmatpush2.bf16.msra.mxu0 0
        %2687 = vmatprep.subr.bf16.mxu0 0
        %2688 = vmatpush2.bf16.msra.mxu0 0
        %2689 = vmatprep.mubr.bf16.mxu0 0
        %2690 = vmatmul.mubr.bf16.gmra.mxu0 %v1770
        %v2691 = vpop.f32.mrf.mxu0
        %v2692 = vadd.f32 %v817, %v2691
        %v2693 = vpop.f32.mrf.mxu0
        %v2694 = vadd.f32 %v821, %v2693
        %v2695 = vpop.f32.mrf.mxu0
        %v2696 = vadd.f32 %v817, %v2695
        %v2697 = vpop.f32.mrf.mxu0
        %v2698 = vadd.f32 %v821, %v2697
        %2699 = vmatprep.mubr.bf16.mxu0 0
        %2700 = vmatmul.mubr.bf16.gmra.mxu0 %v1773
        %v2701 = vpop.f32.mrf.mxu0
        %v2702 = vadd.f32 %v817, %v2701
        %v2703 = vpop.f32.mrf.mxu0
        %v2704 = vadd.f32 %v821, %v2703
        %v2705 = vpop.f32.mrf.mxu0
        %v2706 = vadd.f32 %v817, %v2705
        %v2707 = vpop.f32.mrf.mxu0
        %v2708 = vadd.f32 %v821, %v2707
        %2709 = vmatprep.mubr.bf16.mxu0 0
        %2710 = vmatmul.mubr.bf16.gmra.mxu0 %v1776
        %v2711 = vpop.f32.mrf.mxu0
        %v2712 = vadd.f32 %v817, %v2711
        %v2713 = vpop.f32.mrf.mxu0
        %v2714 = vadd.f32 %v821, %v2713
        %v2715 = vpop.f32.mrf.mxu0
        %v2716 = vadd.f32 %v817, %v2715
        %v2717 = vpop.f32.mrf.mxu0
        %v2718 = vadd.f32 %v821, %v2717
        %2719 = vmatprep.mubr.bf16.mxu0 0
        %2720 = vmatmul.mubr.bf16.gmra.mxu0 %v1779
        %v2721 = vpop.f32.mrf.mxu0
        %v2722 = vadd.f32 %v817, %v2721
        %v2723 = vpop.f32.mrf.mxu0
        %v2724 = vadd.f32 %v821, %v2723
        %v2725 = vpop.f32.mrf.mxu0
        %v2726 = vadd.f32 %v817, %v2725
        %v2727 = vpop.f32.mrf.mxu0
        %v2728 = vadd.f32 %v821, %v2727
        %2729 = vdwg.mxu0
        %2730 = vmatprep.subr.bf16.mxu0 0
        %2731 = vmatpush1.bf16.msra.mxu0 0
        %2732 = vmatprep.subr.bf16.mxu0 0
        %2733 = vmatpush1.bf16.msra.mxu0 0
        %2734 = vmatprep.subr.bf16.mxu0 %v1585
        %2735 = vmatpush1.bf16.msra.mxu0 %v1584
        %2736 = vmatprep.subr.bf16.mxu0 %v1555
        %2737 = vmatpush1.bf16.msra.mxu0 %v1554
        %2738 = vmatprep.subr.bf16.mxu0 %v1525
        %2739 = vmatpush1.bf16.msra.mxu0 %v1524
        %2740 = vmatprep.subr.bf16.mxu0 %v1495
        %2741 = vmatpush1.bf16.msra.mxu0 %v1494
        %2742 = vmatprep.subr.bf16.mxu0 %v1465
        %2743 = vmatpush1.bf16.msra.mxu0 %v1464
        %2744 = vmatprep.subr.bf16.mxu0 %v1435
        %2745 = vmatpush1.bf16.msra.mxu0 %v1434
        %2746 = vmatprep.subr.bf16.mxu0 0
        %2747 = vmatpush2.bf16.msra.mxu0 0
        %2748 = vmatprep.subr.bf16.mxu0 0
        %2749 = vmatpush2.bf16.msra.mxu0 0
        %2750 = vmatprep.subr.bf16.mxu0 0
        %2751 = vmatpush2.bf16.msra.mxu0 0
        %2752 = vmatprep.subr.bf16.mxu0 0
        %2753 = vmatpush2.bf16.msra.mxu0 0
        %2754 = vmatprep.subr.bf16.mxu0 0
        %2755 = vmatpush2.bf16.msra.mxu0 0
        %2756 = vmatprep.subr.bf16.mxu0 0
        %2757 = vmatpush2.bf16.msra.mxu0 0
        %2758 = vmatprep.subr.bf16.mxu0 0
        %2759 = vmatpush2.bf16.msra.mxu0 0
        %2760 = vmatprep.subr.bf16.mxu0 0
        %2761 = vmatpush2.bf16.msra.mxu0 0
        %2762 = vmatprep.mubr.bf16.mxu0 0
        %2763 = vmatmul.mubr.bf16.gmra.mxu0 %v1770
        %v2764 = vpop.f32.mrf.mxu0
        %v2765 = vadd.f32 %v825, %v2764
        %v2766 = vpop.f32.mrf.mxu0
        %v2767 = vadd.f32 %v829, %v2766
        %v2768 = vpop.f32.mrf.mxu0
        %v2769 = vadd.f32 %v825, %v2768
        %v2770 = vpop.f32.mrf.mxu0
        %v2771 = vadd.f32 %v829, %v2770
        %2772 = vmatprep.mubr.bf16.mxu0 0
        %2773 = vmatmul.mubr.bf16.gmra.mxu0 %v1773
        %v2774 = vpop.f32.mrf.mxu0
        %v2775 = vadd.f32 %v825, %v2774
        %v2776 = vpop.f32.mrf.mxu0
        %v2777 = vadd.f32 %v829, %v2776
        %v2778 = vpop.f32.mrf.mxu0
        %v2779 = vadd.f32 %v825, %v2778
        %v2780 = vpop.f32.mrf.mxu0
        %v2781 = vadd.f32 %v829, %v2780
        %2782 = vmatprep.mubr.bf16.mxu0 0
        %2783 = vmatmul.mubr.bf16.gmra.mxu0 %v1776
        %v2784 = vpop.f32.mrf.mxu0
        %v2785 = vadd.f32 %v825, %v2784
        %v2786 = vpop.f32.mrf.mxu0
        %v2787 = vadd.f32 %v829, %v2786
        %v2788 = vpop.f32.mrf.mxu0
        %v2789 = vadd.f32 %v825, %v2788
        %v2790 = vpop.f32.mrf.mxu0
        %v2791 = vadd.f32 %v829, %v2790
        %2792 = vmatprep.mubr.bf16.mxu0 0
        %2793 = vmatmul.mubr.bf16.gmra.mxu0 %v1779
        %v2794 = vpop.f32.mrf.mxu0
        %v2795 = vadd.f32 %v825, %v2794
        %v2796 = vpop.f32.mrf.mxu0
        %v2797 = vadd.f32 %v829, %v2796
        %v2798 = vpop.f32.mrf.mxu0
        %v2799 = vadd.f32 %v825, %v2798
        %v2800 = vpop.f32.mrf.mxu0
        %v2801 = vadd.f32 %v829, %v2800
        %2802 = vdwg.mxu0
        %2803 = vmatprep.subr.bf16.mxu0 0
        %2804 = vmatpush1.bf16.msra.mxu0 0
        %2805 = vmatprep.subr.bf16.mxu0 0
        %2806 = vmatpush1.bf16.msra.mxu0 0
        %2807 = vmatprep.subr.bf16.mxu0 %v1587
        %2808 = vmatpush1.bf16.msra.mxu0 %v1586
        %2809 = vmatprep.subr.bf16.mxu0 %v1557
        %2810 = vmatpush1.bf16.msra.mxu0 %v1556
        %2811 = vmatprep.subr.bf16.mxu0 %v1527
        %2812 = vmatpush1.bf16.msra.mxu0 %v1526
        %2813 = vmatprep.subr.bf16.mxu0 %v1497
        %2814 = vmatpush1.bf16.msra.mxu0 %v1496
        %2815 = vmatprep.subr.bf16.mxu0 %v1467
        %2816 = vmatpush1.bf16.msra.mxu0 %v1466
        %2817 = vmatprep.subr.bf16.mxu0 %v1437
        %2818 = vmatpush1.bf16.msra.mxu0 %v1436
        %2819 = vmatprep.subr.bf16.mxu0 0
        %2820 = vmatpush2.bf16.msra.mxu0 0
        %2821 = vmatprep.subr.bf16.mxu0 0
        %2822 = vmatpush2.bf16.msra.mxu0 0
        %2823 = vmatprep.subr.bf16.mxu0 0
        %2824 = vmatpush2.bf16.msra.mxu0 0
        %2825 = vmatprep.subr.bf16.mxu0 0
        %2826 = vmatpush2.bf16.msra.mxu0 0
        %2827 = vmatprep.subr.bf16.mxu0 0
        %2828 = vmatpush2.bf16.msra.mxu0 0
        %2829 = vmatprep.subr.bf16.mxu0 0
        %2830 = vmatpush2.bf16.msra.mxu0 0
        %2831 = vmatprep.subr.bf16.mxu0 0
        %2832 = vmatpush2.bf16.msra.mxu0 0
        %2833 = vmatprep.subr.bf16.mxu0 0
        %2834 = vmatpush2.bf16.msra.mxu0 0
        %2835 = vmatprep.mubr.bf16.mxu0 0
        %2836 = vmatmul.mubr.bf16.gmra.mxu0 %v1770
        %v2837 = vpop.f32.mrf.mxu0
        %v2838 = vadd.f32 %v833, %v2837
        %v2839 = vpop.f32.mrf.mxu0
        %v2840 = vadd.f32 %v837, %v2839
        %v2841 = vpop.f32.mrf.mxu0
        %v2842 = vadd.f32 %v833, %v2841
        %v2843 = vpop.f32.mrf.mxu0
        %v2844 = vadd.f32 %v837, %v2843
        %2845 = vmatprep.mubr.bf16.mxu0 0
        %2846 = vmatmul.mubr.bf16.gmra.mxu0 %v1773
        %v2847 = vpop.f32.mrf.mxu0
        %v2848 = vadd.f32 %v833, %v2847
        %v2849 = vpop.f32.mrf.mxu0
        %v2850 = vadd.f32 %v837, %v2849
        %v2851 = vpop.f32.mrf.mxu0
        %v2852 = vadd.f32 %v833, %v2851
        %v2853 = vpop.f32.mrf.mxu0
        %v2854 = vadd.f32 %v837, %v2853
        %2855 = vmatprep.mubr.bf16.mxu0 0
        %2856 = vmatmul.mubr.bf16.gmra.mxu0 %v1776
        %v2857 = vpop.f32.mrf.mxu0
        %v2858 = vadd.f32 %v833, %v2857
        %v2859 = vpop.f32.mrf.mxu0
        %v2860 = vadd.f32 %v837, %v2859
        %v2861 = vpop.f32.mrf.mxu0
        %v2862 = vadd.f32 %v833, %v2861
        %v2863 = vpop.f32.mrf.mxu0
        %v2864 = vadd.f32 %v837, %v2863
        %2865 = vmatprep.mubr.bf16.mxu0 0
        %2866 = vmatmul.mubr.bf16.gmra.mxu0 %v1779
        %v2867 = vpop.f32.mrf.mxu0
        %v2868 = vadd.f32 %v833, %v2867
        %v2869 = vpop.f32.mrf.mxu0
        %v2870 = vadd.f32 %v837, %v2869
        %v2871 = vpop.f32.mrf.mxu0
        %v2872 = vadd.f32 %v833, %v2871
        %v2873 = vpop.f32.mrf.mxu0
        %v2874 = vadd.f32 %v837, %v2873
        %2875 = vdwg.mxu0
        %v2876 = vxor.u32 %v1816, 2147483648
        %v2877 = vxor.u32 %v1818, 2147483648
        %v2878 = vxor.u32 %v1889, 2147483648
        %v2879 = vxor.u32 %v1891, 2147483648
        %v2880 = vxor.u32 %v1962, 2147483648
        %v2881 = vxor.u32 %v1964, 2147483648
        %v2882 = vxor.u32 %v2035, 2147483648
        %v2883 = vxor.u32 %v2037, 2147483648
        %v2884 = vxor.u32 %v2108, 2147483648
        %v2885 = vxor.u32 %v2110, 2147483648
        %v2886 = vxor.u32 %v2181, 2147483648
        %v2887 = vxor.u32 %v2183, 2147483648
        %v2888 = vxor.u32 %v2254, 2147483648
        %v2889 = vxor.u32 %v2256, 2147483648
        %v2890 = vxor.u32 %v2327, 2147483648
        %v2891 = vxor.u32 %v2329, 2147483648
        %v2892 = vxor.u32 %v2400, 2147483648
        %v2893 = vxor.u32 %v2402, 2147483648
        %v2894 = vxor.u32 %v2473, 2147483648
        %v2895 = vxor.u32 %v2475, 2147483648
        %v2896 = vxor.u32 %v2546, 2147483648
        %v2897 = vxor.u32 %v2548, 2147483648
        %v2898 = vxor.u32 %v2619, 2147483648
        %v2899 = vxor.u32 %v2621, 2147483648
        %v2900 = vxor.u32 %v2692, 2147483648
        %v2901 = vxor.u32 %v2694, 2147483648
        %v2902 = vxor.u32 %v2765, 2147483648
        %v2903 = vxor.u32 %v2767, 2147483648
        %v2904 = vxor.u32 %v2838, 2147483648
        %v2905 = vxor.u32 %v2840, 2147483648
        %v2906 = vxor.u32 %v1820, 2147483648
        %v2907 = vxor.u32 %v1822, 2147483648
        %v2908 = vxor.u32 %v1893, 2147483648
        %v2909 = vxor.u32 %v1895, 2147483648
        %v2910 = vxor.u32 %v1966, 2147483648
        %v2911 = vxor.u32 %v1968, 2147483648
        %v2912 = vxor.u32 %v2039, 2147483648
        %v2913 = vxor.u32 %v2041, 2147483648
        %v2914 = vxor.u32 %v2112, 2147483648
        %v2915 = vxor.u32 %v2114, 2147483648
        %v2916 = vxor.u32 %v2185, 2147483648
        %v2917 = vxor.u32 %v2187, 2147483648
        %v2918 = vxor.u32 %v2258, 2147483648
        %v2919 = vxor.u32 %v2260, 2147483648
        %v2920 = vxor.u32 %v2331, 2147483648
        %v2921 = vxor.u32 %v2333, 2147483648
        %v2922 = vxor.u32 %v2404, 2147483648
        %v2923 = vxor.u32 %v2406, 2147483648
        %v2924 = vxor.u32 %v2477, 2147483648
        %v2925 = vxor.u32 %v2479, 2147483648
        %v2926 = vxor.u32 %v2550, 2147483648
        %v2927 = vxor.u32 %v2552, 2147483648
        %v2928 = vxor.u32 %v2623, 2147483648
        %v2929 = vxor.u32 %v2625, 2147483648
        %v2930 = vxor.u32 %v2696, 2147483648
        %v2931 = vxor.u32 %v2698, 2147483648
        %v2932 = vxor.u32 %v2769, 2147483648
        %v2933 = vxor.u32 %v2771, 2147483648
        %v2934 = vxor.u32 %v2842, 2147483648
        %v2935 = vxor.u32 %v2844, 2147483648
        %v2936 = vxor.u32 %v1826, 2147483648
        %v2937 = vxor.u32 %v1828, 2147483648
        %v2938 = vxor.u32 %v1899, 2147483648
        %v2939 = vxor.u32 %v1901, 2147483648
        %v2940 = vxor.u32 %v1972, 2147483648
        %v2941 = vxor.u32 %v1974, 2147483648
        %v2942 = vxor.u32 %v2045, 2147483648
        %v2943 = vxor.u32 %v2047, 2147483648
        %v2944 = vxor.u32 %v2118, 2147483648
        %v2945 = vxor.u32 %v2120, 2147483648
        %v2946 = vxor.u32 %v2191, 2147483648
        %v2947 = vxor.u32 %v2193, 2147483648
        %v2948 = vxor.u32 %v2264, 2147483648
        %v2949 = vxor.u32 %v2266, 2147483648
        %v2950 = vxor.u32 %v2337, 2147483648
        %v2951 = vxor.u32 %v2339, 2147483648
        %v2952 = vxor.u32 %v2410, 2147483648
        %v2953 = vxor.u32 %v2412, 2147483648
        %v2954 = vxor.u32 %v2483, 2147483648
        %v2955 = vxor.u32 %v2485, 2147483648
        %v2956 = vxor.u32 %v2556, 2147483648
        %v2957 = vxor.u32 %v2558, 2147483648
        %v2958 = vxor.u32 %v2629, 2147483648
        %v2959 = vxor.u32 %v2631, 2147483648
        %v2960 = vxor.u32 %v2702, 2147483648
        %v2961 = vxor.u32 %v2704, 2147483648
        %v2962 = vxor.u32 %v2775, 2147483648
        %v2963 = vxor.u32 %v2777, 2147483648
        %v2964 = vxor.u32 %v2848, 2147483648
        %v2965 = vxor.u32 %v2850, 2147483648
        %v2966 = vxor.u32 %v1830, 2147483648
        %v2967 = vxor.u32 %v1832, 2147483648
        %v2968 = vxor.u32 %v1903, 2147483648
        %v2969 = vxor.u32 %v1905, 2147483648
        %v2970 = vxor.u32 %v1976, 2147483648
        %v2971 = vxor.u32 %v1978, 2147483648
        %v2972 = vxor.u32 %v2049, 2147483648
        %v2973 = vxor.u32 %v2051, 2147483648
        %v2974 = vxor.u32 %v2122, 2147483648
        %v2975 = vxor.u32 %v2124, 2147483648
        %v2976 = vxor.u32 %v2195, 2147483648
        %v2977 = vxor.u32 %v2197, 2147483648
        %v2978 = vxor.u32 %v2268, 2147483648
        %v2979 = vxor.u32 %v2270, 2147483648
        %v2980 = vxor.u32 %v2341, 2147483648
        %v2981 = vxor.u32 %v2343, 2147483648
        %v2982 = vxor.u32 %v2414, 2147483648
        %v2983 = vxor.u32 %v2416, 2147483648
        %v2984 = vxor.u32 %v2487, 2147483648
        %v2985 = vxor.u32 %v2489, 2147483648
        %v2986 = vxor.u32 %v2560, 2147483648
        %v2987 = vxor.u32 %v2562, 2147483648
        %v2988 = vxor.u32 %v2633, 2147483648
        %v2989 = vxor.u32 %v2635, 2147483648
        %v2990 = vxor.u32 %v2706, 2147483648
        %v2991 = vxor.u32 %v2708, 2147483648
        %v2992 = vxor.u32 %v2779, 2147483648
        %v2993 = vxor.u32 %v2781, 2147483648
        %v2994 = vxor.u32 %v2852, 2147483648
        %v2995 = vxor.u32 %v2854, 2147483648
        %v2996 = vxor.u32 %v1836, 2147483648
        %v2997 = vxor.u32 %v1838, 2147483648
        %v2998 = vxor.u32 %v1909, 2147483648
        %v2999 = vxor.u32 %v1911, 2147483648
        %v3000 = vxor.u32 %v1982, 2147483648
        %v3001 = vxor.u32 %v1984, 2147483648
        %v3002 = vxor.u32 %v2055, 2147483648
        %v3003 = vxor.u32 %v2057, 2147483648
        %v3004 = vxor.u32 %v2128, 2147483648
        %v3005 = vxor.u32 %v2130, 2147483648
        %v3006 = vxor.u32 %v2201, 2147483648
        %v3007 = vxor.u32 %v2203, 2147483648
        %v3008 = vxor.u32 %v2274, 2147483648
        %v3009 = vxor.u32 %v2276, 2147483648
        %v3010 = vxor.u32 %v2347, 2147483648
        %v3011 = vxor.u32 %v2349, 2147483648
        %v3012 = vxor.u32 %v2420, 2147483648
        %v3013 = vxor.u32 %v2422, 2147483648
        %v3014 = vxor.u32 %v2493, 2147483648
        %v3015 = vxor.u32 %v2495, 2147483648
        %v3016 = vxor.u32 %v2566, 2147483648
        %v3017 = vxor.u32 %v2568, 2147483648
        %v3018 = vxor.u32 %v2639, 2147483648
        %v3019 = vxor.u32 %v2641, 2147483648
        %v3020 = vxor.u32 %v2712, 2147483648
        %v3021 = vxor.u32 %v2714, 2147483648
        %v3022 = vxor.u32 %v2785, 2147483648
        %v3023 = vxor.u32 %v2787, 2147483648
        %v3024 = vxor.u32 %v2858, 2147483648
        %v3025 = vxor.u32 %v2860, 2147483648
        %v3026 = vxor.u32 %v1840, 2147483648
        %v3027 = vxor.u32 %v1842, 2147483648
        %v3028 = vxor.u32 %v1913, 2147483648
        %v3029 = vxor.u32 %v1915, 2147483648
        %v3030 = vxor.u32 %v1986, 2147483648
        %v3031 = vxor.u32 %v1988, 2147483648
        %v3032 = vxor.u32 %v2059, 2147483648
        %v3033 = vxor.u32 %v2061, 2147483648
        %v3034 = vxor.u32 %v2132, 2147483648
        %v3035 = vxor.u32 %v2134, 2147483648
        %v3036 = vxor.u32 %v2205, 2147483648
        %v3037 = vxor.u32 %v2207, 2147483648
        %v3038 = vxor.u32 %v2278, 2147483648
        %v3039 = vxor.u32 %v2280, 2147483648
        %v3040 = vxor.u32 %v2351, 2147483648
        %v3041 = vxor.u32 %v2353, 2147483648
        %v3042 = vxor.u32 %v2424, 2147483648
        %v3043 = vxor.u32 %v2426, 2147483648
        %v3044 = vxor.u32 %v2497, 2147483648
        %v3045 = vxor.u32 %v2499, 2147483648
        %v3046 = vxor.u32 %v2570, 2147483648
        %v3047 = vxor.u32 %v2572, 2147483648
        %v3048 = vxor.u32 %v2643, 2147483648
        %v3049 = vxor.u32 %v2645, 2147483648
        %v3050 = vxor.u32 %v2716, 2147483648
        %v3051 = vxor.u32 %v2718, 2147483648
        %v3052 = vxor.u32 %v2789, 2147483648
        %v3053 = vxor.u32 %v2791, 2147483648
        %v3054 = vxor.u32 %v2862, 2147483648
        %v3055 = vxor.u32 %v2864, 2147483648
        %v3056 = vxor.u32 %v1846, 2147483648
        %v3057 = vxor.u32 %v1848, 2147483648
        %v3058 = vxor.u32 %v1919, 2147483648
        %v3059 = vxor.u32 %v1921, 2147483648
        %v3060 = vxor.u32 %v1992, 2147483648
        %v3061 = vxor.u32 %v1994, 2147483648
        %v3062 = vxor.u32 %v2065, 2147483648
        %v3063 = vxor.u32 %v2067, 2147483648
        %v3064 = vxor.u32 %v2138, 2147483648
        %v3065 = vxor.u32 %v2140, 2147483648
        %v3066 = vxor.u32 %v2211, 2147483648
        %v3067 = vxor.u32 %v2213, 2147483648
        %v3068 = vxor.u32 %v2284, 2147483648
        %v3069 = vxor.u32 %v2286, 2147483648
        %v3070 = vxor.u32 %v2357, 2147483648
        %v3071 = vxor.u32 %v2359, 2147483648
        %v3072 = vxor.u32 %v2430, 2147483648
        %v3073 = vxor.u32 %v2432, 2147483648
        %v3074 = vxor.u32 %v2503, 2147483648
        %v3075 = vxor.u32 %v2505, 2147483648
        %v3076 = vxor.u32 %v2576, 2147483648
        %v3077 = vxor.u32 %v2578, 2147483648
        %v3078 = vxor.u32 %v2649, 2147483648
        %v3079 = vxor.u32 %v2651, 2147483648
        %v3080 = vxor.u32 %v2722, 2147483648
        %v3081 = vxor.u32 %v2724, 2147483648
        %v3082 = vxor.u32 %v2795, 2147483648
        %v3083 = vxor.u32 %v2797, 2147483648
        %v3084 = vxor.u32 %v2868, 2147483648
        %v3085 = vxor.u32 %v2870, 2147483648
        %v3086 = vxor.u32 %v1850, 2147483648
        %v3087 = vxor.u32 %v1852, 2147483648
        %v3088 = vxor.u32 %v1923, 2147483648
        %v3089 = vxor.u32 %v1925, 2147483648
        %v3090 = vxor.u32 %v1996, 2147483648
        %v3091 = vxor.u32 %v1998, 2147483648
        %v3092 = vxor.u32 %v2069, 2147483648
        %v3093 = vxor.u32 %v2071, 2147483648
        %v3094 = vxor.u32 %v2142, 2147483648
        %v3095 = vxor.u32 %v2144, 2147483648
        %v3096 = vxor.u32 %v2215, 2147483648
        %v3097 = vxor.u32 %v2217, 2147483648
        %v3098 = vxor.u32 %v2288, 2147483648
        %v3099 = vxor.u32 %v2290, 2147483648
        %v3100 = vxor.u32 %v2361, 2147483648
        %v3101 = vxor.u32 %v2363, 2147483648
        %v3102 = vxor.u32 %v2434, 2147483648
        %v3103 = vxor.u32 %v2436, 2147483648
        %v3104 = vxor.u32 %v2507, 2147483648
        %v3105 = vxor.u32 %v2509, 2147483648
        %v3106 = vxor.u32 %v2580, 2147483648
        %v3107 = vxor.u32 %v2582, 2147483648
        %v3108 = vxor.u32 %v2653, 2147483648
        %v3109 = vxor.u32 %v2655, 2147483648
        %v3110 = vxor.u32 %v2726, 2147483648
        %v3111 = vxor.u32 %v2728, 2147483648
        %v3112 = vxor.u32 %v2799, 2147483648
        %v3113 = vxor.u32 %v2801, 2147483648
        %v3114 = vxor.u32 %v2872, 2147483648
        %v3115 = vxor.u32 %v2874, 2147483648
        %v3116 = vmul.f32 %v2876, 1.442695
        %v3117 = vpow.pop %v3116
        %v3118 = vmul.f32 %v2877, 1.442695
        %v3119 = vpow.pop %v3118
        %v3120 = vmul.f32 %v2878, 1.442695
        %v3121 = vpow.pop %v3120
        %v3122 = vmul.f32 %v2879, 1.442695
        %v3123 = vpow.pop %v3122
        %v3124 = vmul.f32 %v2880, 1.442695
        %v3125 = vpow.pop %v3124
        %v3126 = vmul.f32 %v2881, 1.442695
        %v3127 = vpow.pop %v3126
        %v3128 = vmul.f32 %v2882, 1.442695
        %v3129 = vpow.pop %v3128
        %v3130 = vmul.f32 %v2883, 1.442695
        %v3131 = vpow.pop %v3130
        %v3132 = vmul.f32 %v2884, 1.442695
        %v3133 = vpow.pop %v3132
        %v3134 = vmul.f32 %v2885, 1.442695
        %v3135 = vpow.pop %v3134
        %v3136 = vmul.f32 %v2886, 1.442695
        %v3137 = vpow.pop %v3136
        %v3138 = vmul.f32 %v2887, 1.442695
        %v3139 = vpow.pop %v3138
        %v3140 = vmul.f32 %v2888, 1.442695
        %v3141 = vpow.pop %v3140
        %v3142 = vmul.f32 %v2889, 1.442695
        %v3143 = vpow.pop %v3142
        %v3144 = vmul.f32 %v2890, 1.442695
        %v3145 = vpow.pop %v3144
        %v3146 = vmul.f32 %v2891, 1.442695
        %v3147 = vpow.pop %v3146
        %v3148 = vmul.f32 %v2892, 1.442695
        %v3149 = vpow.pop %v3148
        %v3150 = vmul.f32 %v2893, 1.442695
        %v3151 = vpow.pop %v3150
        %v3152 = vmul.f32 %v2894, 1.442695
        %v3153 = vpow.pop %v3152
        %v3154 = vmul.f32 %v2895, 1.442695
        %v3155 = vpow.pop %v3154
        %v3156 = vmul.f32 %v2896, 1.442695
        %v3157 = vpow.pop %v3156
        %v3158 = vmul.f32 %v2897, 1.442695
        %v3159 = vpow.pop %v3158
        %v3160 = vmul.f32 %v2898, 1.442695
        %v3161 = vpow.pop %v3160
        %v3162 = vmul.f32 %v2899, 1.442695
        %v3163 = vpow.pop %v3162
        %v3164 = vmul.f32 %v2900, 1.442695
        %v3165 = vpow.pop %v3164
        %v3166 = vmul.f32 %v2901, 1.442695
        %v3167 = vpow.pop %v3166
        %v3168 = vmul.f32 %v2902, 1.442695
        %v3169 = vpow.pop %v3168
        %v3170 = vmul.f32 %v2903, 1.442695
        %v3171 = vpow.pop %v3170
        %v3172 = vmul.f32 %v2904, 1.442695
        %v3173 = vpow.pop %v3172
        %v3174 = vmul.f32 %v2905, 1.442695
        %v3175 = vpow.pop %v3174
        %v3176 = vmul.f32 %v2906, 1.442695
        %v3177 = vpow.pop %v3176
        %v3178 = vmul.f32 %v2907, 1.442695
        %v3179 = vpow.pop %v3178
        %v3180 = vmul.f32 %v2908, 1.442695
        %v3181 = vpow.pop %v3180
        %v3182 = vmul.f32 %v2909, 1.442695
        %v3183 = vpow.pop %v3182
        %v3184 = vmul.f32 %v2910, 1.442695
        %v3185 = vpow.pop %v3184
        %v3186 = vmul.f32 %v2911, 1.442695
        %v3187 = vpow.pop %v3186
        %v3188 = vmul.f32 %v2912, 1.442695
        %v3189 = vpow.pop %v3188
        %v3190 = vmul.f32 %v2913, 1.442695
        %v3191 = vpow.pop %v3190
        %v3192 = vmul.f32 %v2914, 1.442695
        %v3193 = vpow.pop %v3192
        %v3194 = vmul.f32 %v2915, 1.442695
        %v3195 = vpow.pop %v3194
        %v3196 = vmul.f32 %v2916, 1.442695
        %v3197 = vpow.pop %v3196
        %v3198 = vmul.f32 %v2917, 1.442695
        %v3199 = vpow.pop %v3198
        %v3200 = vmul.f32 %v2918, 1.442695
        %v3201 = vpow.pop %v3200
        %v3202 = vmul.f32 %v2919, 1.442695
        %v3203 = vpow.pop %v3202
        %v3204 = vmul.f32 %v2920, 1.442695
        %v3205 = vpow.pop %v3204
        %v3206 = vmul.f32 %v2921, 1.442695
        %v3207 = vpow.pop %v3206
        %v3208 = vmul.f32 %v2922, 1.442695
        %v3209 = vpow.pop %v3208
        %v3210 = vmul.f32 %v2923, 1.442695
        %v3211 = vpow.pop %v3210
        %v3212 = vmul.f32 %v2924, 1.442695
        %v3213 = vpow.pop %v3212
        %v3214 = vmul.f32 %v2925, 1.442695
        %v3215 = vpow.pop %v3214
        %v3216 = vmul.f32 %v2926, 1.442695
        %v3217 = vpow.pop %v3216
        %v3218 = vmul.f32 %v2927, 1.442695
        %v3219 = vpow.pop %v3218
        %v3220 = vmul.f32 %v2928, 1.442695
        %v3221 = vpow.pop %v3220
        %v3222 = vmul.f32 %v2929, 1.442695
        %v3223 = vpow.pop %v3222
        %v3224 = vmul.f32 %v2930, 1.442695
        %v3225 = vpow.pop %v3224
        %v3226 = vmul.f32 %v2931, 1.442695
        %v3227 = vpow.pop %v3226
        %v3228 = vmul.f32 %v2932, 1.442695
        %v3229 = vpow.pop %v3228
        %v3230 = vmul.f32 %v2933, 1.442695
        %v3231 = vpow.pop %v3230
        %v3232 = vmul.f32 %v2934, 1.442695
        %v3233 = vpow.pop %v3232
        %v3234 = vmul.f32 %v2935, 1.442695
        %v3235 = vpow.pop %v3234
        %v3236 = vmul.f32 %v2936, 1.442695
        %v3237 = vpow.pop %v3236
        %v3238 = vmul.f32 %v2937, 1.442695
        %v3239 = vpow.pop %v3238
        %v3240 = vmul.f32 %v2938, 1.442695
        %v3241 = vpow.pop %v3240
        %v3242 = vmul.f32 %v2939, 1.442695
        %v3243 = vpow.pop %v3242
        %v3244 = vmul.f32 %v2940, 1.442695
        %v3245 = vpow.pop %v3244
        %v3246 = vmul.f32 %v2941, 1.442695
        %v3247 = vpow.pop %v3246
        %v3248 = vmul.f32 %v2942, 1.442695
        %v3249 = vpow.pop %v3248
        %v3250 = vmul.f32 %v2943, 1.442695
        %v3251 = vpow.pop %v3250
        %v3252 = vmul.f32 %v2944, 1.442695
        %v3253 = vpow.pop %v3252
        %v3254 = vmul.f32 %v2945, 1.442695
        %v3255 = vpow.pop %v3254
        %v3256 = vmul.f32 %v2946, 1.442695
        %v3257 = vpow.pop %v3256
        %v3258 = vmul.f32 %v2947, 1.442695
        %v3259 = vpow.pop %v3258
        %v3260 = vmul.f32 %v2948, 1.442695
        %v3261 = vpow.pop %v3260
        %v3262 = vmul.f32 %v2949, 1.442695
        %v3263 = vpow.pop %v3262
        %v3264 = vmul.f32 %v2950, 1.442695
        %v3265 = vpow.pop %v3264
        %v3266 = vmul.f32 %v2951, 1.442695
        %v3267 = vpow.pop %v3266
        %v3268 = vmul.f32 %v2952, 1.442695
        %v3269 = vpow.pop %v3268
        %v3270 = vmul.f32 %v2953, 1.442695
        %v3271 = vpow.pop %v3270
        %v3272 = vmul.f32 %v2954, 1.442695
        %v3273 = vpow.pop %v3272
        %v3274 = vmul.f32 %v2955, 1.442695
        %v3275 = vpow.pop %v3274
        %v3276 = vmul.f32 %v2956, 1.442695
        %v3277 = vpow.pop %v3276
        %v3278 = vmul.f32 %v2957, 1.442695
        %v3279 = vpow.pop %v3278
        %v3280 = vmul.f32 %v2958, 1.442695
        %v3281 = vpow.pop %v3280
        %v3282 = vmul.f32 %v2959, 1.442695
        %v3283 = vpow.pop %v3282
        %v3284 = vmul.f32 %v2960, 1.442695
        %v3285 = vpow.pop %v3284
        %v3286 = vmul.f32 %v2961, 1.442695
        %v3287 = vpow.pop %v3286
        %v3288 = vmul.f32 %v2962, 1.442695
        %v3289 = vpow.pop %v3288
        %v3290 = vmul.f32 %v2963, 1.442695
        %v3291 = vpow.pop %v3290
        %v3292 = vmul.f32 %v2964, 1.442695
        %v3293 = vpow.pop %v3292
        %v3294 = vmul.f32 %v2965, 1.442695
        %v3295 = vpow.pop %v3294
        %v3296 = vmul.f32 %v2966, 1.442695
        %v3297 = vpow.pop %v3296
        %v3298 = vmul.f32 %v2967, 1.442695
        %v3299 = vpow.pop %v3298
        %v3300 = vmul.f32 %v2968, 1.442695
        %v3301 = vpow.pop %v3300
        %v3302 = vmul.f32 %v2969, 1.442695
        %v3303 = vpow.pop %v3302
        %v3304 = vmul.f32 %v2970, 1.442695
        %v3305 = vpow.pop %v3304
        %v3306 = vmul.f32 %v2971, 1.442695
        %v3307 = vpow.pop %v3306
        %v3308 = vmul.f32 %v2972, 1.442695
        %v3309 = vpow.pop %v3308
        %v3310 = vmul.f32 %v2973, 1.442695
        %v3311 = vpow.pop %v3310
        %v3312 = vmul.f32 %v2974, 1.442695
        %v3313 = vpow.pop %v3312
        %v3314 = vmul.f32 %v2975, 1.442695
        %v3315 = vpow.pop %v3314
        %v3316 = vmul.f32 %v2976, 1.442695
        %v3317 = vpow.pop %v3316
        %v3318 = vmul.f32 %v2977, 1.442695
        %v3319 = vpow.pop %v3318
        %v3320 = vmul.f32 %v2978, 1.442695
        %v3321 = vpow.pop %v3320
        %v3322 = vmul.f32 %v2979, 1.442695
        %v3323 = vpow.pop %v3322
        %v3324 = vmul.f32 %v2980, 1.442695
        %v3325 = vpow.pop %v3324
        %v3326 = vmul.f32 %v2981, 1.442695
        %v3327 = vpow.pop %v3326
        %v3328 = vmul.f32 %v2982, 1.442695
        %v3329 = vpow.pop %v3328
        %v3330 = vmul.f32 %v2983, 1.442695
        %v3331 = vpow.pop %v3330
        %v3332 = vmul.f32 %v2984, 1.442695
        %v3333 = vpow.pop %v3332
        %v3334 = vmul.f32 %v2985, 1.442695
        %v3335 = vpow.pop %v3334
        %v3336 = vmul.f32 %v2986, 1.442695
        %v3337 = vpow.pop %v3336
        %v3338 = vmul.f32 %v2987, 1.442695
        %v3339 = vpow.pop %v3338
        %v3340 = vmul.f32 %v2988, 1.442695
        %v3341 = vpow.pop %v3340
        %v3342 = vmul.f32 %v2989, 1.442695
        %v3343 = vpow.pop %v3342
        %v3344 = vmul.f32 %v2990, 1.442695
        %v3345 = vpow.pop %v3344
        %v3346 = vmul.f32 %v2991, 1.442695
        %v3347 = vpow.pop %v3346
        %v3348 = vmul.f32 %v2992, 1.442695
        %v3349 = vpow.pop %v3348
        %v3350 = vmul.f32 %v2993, 1.442695
        %v3351 = vpow.pop %v3350
        %v3352 = vmul.f32 %v2994, 1.442695
        %v3353 = vpow.pop %v3352
        %v3354 = vmul.f32 %v2995, 1.442695
        %v3355 = vpow.pop %v3354
        %v3356 = vmul.f32 %v2996, 1.442695
        %v3357 = vpow.pop %v3356
        %v3358 = vmul.f32 %v2997, 1.442695
        %v3359 = vpow.pop %v3358
        %v3360 = vmul.f32 %v2998, 1.442695
        %v3361 = vpow.pop %v3360
        %v3362 = vmul.f32 %v2999, 1.442695
        %v3363 = vpow.pop %v3362
        %v3364 = vmul.f32 %v3000, 1.442695
        %v3365 = vpow.pop %v3364
        %v3366 = vmul.f32 %v3001, 1.442695
        %v3367 = vpow.pop %v3366
        %v3368 = vmul.f32 %v3002, 1.442695
        %v3369 = vpow.pop %v3368
        %v3370 = vmul.f32 %v3003, 1.442695
        %v3371 = vpow.pop %v3370
        %v3372 = vmul.f32 %v3004, 1.442695
        %v3373 = vpow.pop %v3372
        %v3374 = vmul.f32 %v3005, 1.442695
        %v3375 = vpow.pop %v3374
        %v3376 = vmul.f32 %v3006, 1.442695
        %v3377 = vpow.pop %v3376
        %v3378 = vmul.f32 %v3007, 1.442695
        %v3379 = vpow.pop %v3378
        %v3380 = vmul.f32 %v3008, 1.442695
        %v3381 = vpow.pop %v3380
        %v3382 = vmul.f32 %v3009, 1.442695
        %v3383 = vpow.pop %v3382
        %v3384 = vmul.f32 %v3010, 1.442695
        %v3385 = vpow.pop %v3384
        %v3386 = vmul.f32 %v3011, 1.442695
        %v3387 = vpow.pop %v3386
        %v3388 = vmul.f32 %v3012, 1.442695
        %v3389 = vpow.pop %v3388
        %v3390 = vmul.f32 %v3013, 1.442695
        %v3391 = vpow.pop %v3390
        %v3392 = vmul.f32 %v3014, 1.442695
        %v3393 = vpow.pop %v3392
        %v3394 = vmul.f32 %v3015, 1.442695
        %v3395 = vpow.pop %v3394
        %v3396 = vmul.f32 %v3016, 1.442695
        %v3397 = vpow.pop %v3396
        %v3398 = vmul.f32 %v3017, 1.442695
        %v3399 = vpow.pop %v3398
        %v3400 = vmul.f32 %v3018, 1.442695
        %v3401 = vpow.pop %v3400
        %v3402 = vmul.f32 %v3019, 1.442695
        %v3403 = vpow.pop %v3402
        %v3404 = vmul.f32 %v3020, 1.442695
        %v3405 = vpow.pop %v3404
        %v3406 = vmul.f32 %v3021, 1.442695
        %v3407 = vpow.pop %v3406
        %v3408 = vmul.f32 %v3022, 1.442695
        %v3409 = vpow.pop %v3408
        %v3410 = vmul.f32 %v3023, 1.442695
        %v3411 = vpow.pop %v3410
        %v3412 = vmul.f32 %v3024, 1.442695
        %v3413 = vpow.pop %v3412
        %v3414 = vmul.f32 %v3025, 1.442695
        %v3415 = vpow.pop %v3414
        %v3416 = vmul.f32 %v3026, 1.442695
        %v3417 = vpow.pop %v3416
        %v3418 = vmul.f32 %v3027, 1.442695
        %v3419 = vpow.pop %v3418
        %v3420 = vmul.f32 %v3028, 1.442695
        %v3421 = vpow.pop %v3420
        %v3422 = vmul.f32 %v3029, 1.442695
        %v3423 = vpow.pop %v3422
        %v3424 = vmul.f32 %v3030, 1.442695
        %v3425 = vpow.pop %v3424
        %v3426 = vmul.f32 %v3031, 1.442695
        %v3427 = vpow.pop %v3426
        %v3428 = vmul.f32 %v3032, 1.442695
        %v3429 = vpow.pop %v3428
        %v3430 = vmul.f32 %v3033, 1.442695
        %v3431 = vpow.pop %v3430
        %v3432 = vmul.f32 %v3034, 1.442695
        %v3433 = vpow.pop %v3432
        %v3434 = vmul.f32 %v3035, 1.442695
        %v3435 = vpow.pop %v3434
        %v3436 = vmul.f32 %v3036, 1.442695
        %v3437 = vpow.pop %v3436
        %v3438 = vmul.f32 %v3037, 1.442695
        %v3439 = vpow.pop %v3438
        %v3440 = vmul.f32 %v3038, 1.442695
        %v3441 = vpow.pop %v3440
        %v3442 = vmul.f32 %v3039, 1.442695
        %v3443 = vpow.pop %v3442
        %v3444 = vmul.f32 %v3040, 1.442695
        %v3445 = vpow.pop %v3444
        %v3446 = vmul.f32 %v3041, 1.442695
        %v3447 = vpow.pop %v3446
        %v3448 = vmul.f32 %v3042, 1.442695
        %v3449 = vpow.pop %v3448
        %v3450 = vmul.f32 %v3043, 1.442695
        %v3451 = vpow.pop %v3450
        %v3452 = vmul.f32 %v3044, 1.442695
        %v3453 = vpow.pop %v3452
        %v3454 = vmul.f32 %v3045, 1.442695
        %v3455 = vpow.pop %v3454
        %v3456 = vmul.f32 %v3046, 1.442695
        %v3457 = vpow.pop %v3456
        %v3458 = vmul.f32 %v3047, 1.442695
        %v3459 = vpow.pop %v3458
        %v3460 = vmul.f32 %v3048, 1.442695
        %v3461 = vpow.pop %v3460
        %v3462 = vmul.f32 %v3049, 1.442695
        %v3463 = vpow.pop %v3462
        %v3464 = vmul.f32 %v3050, 1.442695
        %v3465 = vpow.pop %v3464
        %v3466 = vmul.f32 %v3051, 1.442695
        %v3467 = vpow.pop %v3466
        %v3468 = vmul.f32 %v3052, 1.442695
        %v3469 = vpow.pop %v3468
        %v3470 = vmul.f32 %v3053, 1.442695
        %v3471 = vpow.pop %v3470
        %v3472 = vmul.f32 %v3054, 1.442695
        %v3473 = vpow.pop %v3472
        %v3474 = vmul.f32 %v3055, 1.442695
        %v3475 = vpow.pop %v3474
        %v3476 = vmul.f32 %v3056, 1.442695
        %v3477 = vpow.pop %v3476
        %v3478 = vmul.f32 %v3057, 1.442695
        %v3479 = vpow.pop %v3478
        %v3480 = vmul.f32 %v3058, 1.442695
        %v3481 = vpow.pop %v3480
        %v3482 = vmul.f32 %v3059, 1.442695
        %v3483 = vpow.pop %v3482
        %v3484 = vmul.f32 %v3060, 1.442695
        %v3485 = vpow.pop %v3484
        %v3486 = vmul.f32 %v3061, 1.442695
        %v3487 = vpow.pop %v3486
        %v3488 = vmul.f32 %v3062, 1.442695
        %v3489 = vpow.pop %v3488
        %v3490 = vmul.f32 %v3063, 1.442695
        %v3491 = vpow.pop %v3490
        %v3492 = vmul.f32 %v3064, 1.442695
        %v3493 = vpow.pop %v3492
        %v3494 = vmul.f32 %v3065, 1.442695
        %v3495 = vpow.pop %v3494
        %v3496 = vmul.f32 %v3066, 1.442695
        %v3497 = vpow.pop %v3496
        %v3498 = vmul.f32 %v3067, 1.442695
        %v3499 = vpow.pop %v3498
        %v3500 = vmul.f32 %v3068, 1.442695
        %v3501 = vpow.pop %v3500
        %v3502 = vmul.f32 %v3069, 1.442695
        %v3503 = vpow.pop %v3502
        %v3504 = vmul.f32 %v3070, 1.442695
        %v3505 = vpow.pop %v3504
        %v3506 = vmul.f32 %v3071, 1.442695
        %v3507 = vpow.pop %v3506
        %v3508 = vmul.f32 %v3072, 1.442695
        %v3509 = vpow.pop %v3508
        %v3510 = vmul.f32 %v3073, 1.442695
        %v3511 = vpow.pop %v3510
        %v3512 = vmul.f32 %v3074, 1.442695
        %v3513 = vpow.pop %v3512
        %v3514 = vmul.f32 %v3075, 1.442695
        %v3515 = vpow.pop %v3514
        %v3516 = vmul.f32 %v3076, 1.442695
        %v3517 = vpow.pop %v3516
        %v3518 = vmul.f32 %v3077, 1.442695
        %v3519 = vpow.pop %v3518
        %v3520 = vmul.f32 %v3078, 1.442695
        %v3521 = vpow.pop %v3520
        %v3522 = vmul.f32 %v3079, 1.442695
        %v3523 = vpow.pop %v3522
        %v3524 = vmul.f32 %v3080, 1.442695
        %v3525 = vpow.pop %v3524
        %v3526 = vmul.f32 %v3081, 1.442695
        %v3527 = vpow.pop %v3526
        %v3528 = vmul.f32 %v3082, 1.442695
        %v3529 = vpow.pop %v3528
        %v3530 = vmul.f32 %v3083, 1.442695
        %v3531 = vpow.pop %v3530
        %v3532 = vmul.f32 %v3084, 1.442695
        %v3533 = vpow.pop %v3532
        %v3534 = vmul.f32 %v3085, 1.442695
        %v3535 = vpow.pop %v3534
        %v3536 = vmul.f32 %v3086, 1.442695
        %v3537 = vpow.pop %v3536
        %v3538 = vmul.f32 %v3087, 1.442695
        %v3539 = vpow.pop %v3538
        %v3540 = vmul.f32 %v3088, 1.442695
        %v3541 = vpow.pop %v3540
        %v3542 = vmul.f32 %v3089, 1.442695
        %v3543 = vpow.pop %v3542
        %v3544 = vmul.f32 %v3090, 1.442695
        %v3545 = vpow.pop %v3544
        %v3546 = vmul.f32 %v3091, 1.442695
        %v3547 = vpow.pop %v3546
        %v3548 = vmul.f32 %v3092, 1.442695
        %v3549 = vpow.pop %v3548
        %v3550 = vmul.f32 %v3093, 1.442695
        %v3551 = vpow.pop %v3550
        %v3552 = vmul.f32 %v3094, 1.442695
        %v3553 = vpow.pop %v3552
        %v3554 = vmul.f32 %v3095, 1.442695
        %v3555 = vpow.pop %v3554
        %v3556 = vmul.f32 %v3096, 1.442695
        %v3557 = vpow.pop %v3556
        %v3558 = vmul.f32 %v3097, 1.442695
        %v3559 = vpow.pop %v3558
        %v3560 = vmul.f32 %v3098, 1.442695
        %v3561 = vpow.pop %v3560
        %v3562 = vmul.f32 %v3099, 1.442695
        %v3563 = vpow.pop %v3562
        %v3564 = vmul.f32 %v3100, 1.442695
        %v3565 = vpow.pop %v3564
        %v3566 = vmul.f32 %v3101, 1.442695
        %v3567 = vpow.pop %v3566
        %v3568 = vmul.f32 %v3102, 1.442695
        %v3569 = vpow.pop %v3568
        %v3570 = vmul.f32 %v3103, 1.442695
        %v3571 = vpow.pop %v3570
        %v3572 = vmul.f32 %v3104, 1.442695
        %v3573 = vpow.pop %v3572
        %v3574 = vmul.f32 %v3105, 1.442695
        %v3575 = vpow.pop %v3574
        %v3576 = vmul.f32 %v3106, 1.442695
        %v3577 = vpow.pop %v3576
        %v3578 = vmul.f32 %v3107, 1.442695
        %v3579 = vpow.pop %v3578
        %v3580 = vmul.f32 %v3108, 1.442695
        %v3581 = vpow.pop %v3580
        %v3582 = vmul.f32 %v3109, 1.442695
        %v3583 = vpow.pop %v3582
        %v3584 = vmul.f32 %v3110, 1.442695
        %v3585 = vpow.pop %v3584
        %v3586 = vmul.f32 %v3111, 1.442695
        %v3587 = vpow.pop %v3586
        %v3588 = vmul.f32 %v3112, 1.442695
        %v3589 = vpow.pop %v3588
        %v3590 = vmul.f32 %v3113, 1.442695
        %v3591 = vpow.pop %v3590
        %v3592 = vmul.f32 %v3114, 1.442695
        %v3593 = vpow.pop %v3592
        %v3594 = vmul.f32 %v3115, 1.442695
        %v3595 = vpow.pop %v3594
        %v3596 = vadd.f32 %v3117, 1.0
        %v3597 = vadd.f32 %v3119, 1.0
        %v3598 = vadd.f32 %v3121, 1.0
        %v3599 = vadd.f32 %v3123, 1.0
        %v3600 = vadd.f32 %v3125, 1.0
        %v3601 = vadd.f32 %v3127, 1.0
        %v3602 = vadd.f32 %v3129, 1.0
        %v3603 = vadd.f32 %v3131, 1.0
        %v3604 = vadd.f32 %v3133, 1.0
        %v3605 = vadd.f32 %v3135, 1.0
        %v3606 = vadd.f32 %v3137, 1.0
        %v3607 = vadd.f32 %v3139, 1.0
        %v3608 = vadd.f32 %v3141, 1.0
        %v3609 = vadd.f32 %v3143, 1.0
        %v3610 = vadd.f32 %v3145, 1.0
        %v3611 = vadd.f32 %v3147, 1.0
        %v3612 = vadd.f32 %v3149, 1.0
        %v3613 = vadd.f32 %v3151, 1.0
        %v3614 = vadd.f32 %v3153, 1.0
        %v3615 = vadd.f32 %v3155, 1.0
        %v3616 = vadd.f32 %v3157, 1.0
        %v3617 = vadd.f32 %v3159, 1.0
        %v3618 = vadd.f32 %v3161, 1.0
        %v3619 = vadd.f32 %v3163, 1.0
        %v3620 = vadd.f32 %v3165, 1.0
        %v3621 = vadd.f32 %v3167, 1.0
        %v3622 = vadd.f32 %v3169, 1.0
        %v3623 = vadd.f32 %v3171, 1.0
        %v3624 = vadd.f32 %v3173, 1.0
        %v3625 = vadd.f32 %v3175, 1.0
        %v3626 = vadd.f32 %v3177, 1.0
        %v3627 = vadd.f32 %v3179, 1.0
        %v3628 = vadd.f32 %v3181, 1.0
        %v3629 = vadd.f32 %v3183, 1.0
        %v3630 = vadd.f32 %v3185, 1.0
        %v3631 = vadd.f32 %v3187, 1.0
        %v3632 = vadd.f32 %v3189, 1.0
        %v3633 = vadd.f32 %v3191, 1.0
        %v3634 = vadd.f32 %v3193, 1.0
        %v3635 = vadd.f32 %v3195, 1.0
        %v3636 = vadd.f32 %v3197, 1.0
        %v3637 = vadd.f32 %v3199, 1.0
        %v3638 = vadd.f32 %v3201, 1.0
        %v3639 = vadd.f32 %v3203, 1.0
        %v3640 = vadd.f32 %v3205, 1.0
        %v3641 = vadd.f32 %v3207, 1.0
        %v3642 = vadd.f32 %v3209, 1.0
        %v3643 = vadd.f32 %v3211, 1.0
        %v3644 = vadd.f32 %v3213, 1.0
        %v3645 = vadd.f32 %v3215, 1.0
        %v3646 = vadd.f32 %v3217, 1.0
        %v3647 = vadd.f32 %v3219, 1.0
        %v3648 = vadd.f32 %v3221, 1.0
        %v3649 = vadd.f32 %v3223, 1.0
        %v3650 = vadd.f32 %v3225, 1.0
        %v3651 = vadd.f32 %v3227, 1.0
        %v3652 = vadd.f32 %v3229, 1.0
        %v3653 = vadd.f32 %v3231, 1.0
        %v3654 = vadd.f32 %v3233, 1.0
        %v3655 = vadd.f32 %v3235, 1.0
        %v3656 = vadd.f32 %v3237, 1.0
        %v3657 = vadd.f32 %v3239, 1.0
        %v3658 = vadd.f32 %v3241, 1.0
        %v3659 = vadd.f32 %v3243, 1.0
        %v3660 = vadd.f32 %v3245, 1.0
        %v3661 = vadd.f32 %v3247, 1.0
        %v3662 = vadd.f32 %v3249, 1.0
        %v3663 = vadd.f32 %v3251, 1.0
        %v3664 = vadd.f32 %v3253, 1.0
        %v3665 = vadd.f32 %v3255, 1.0
        %v3666 = vadd.f32 %v3257, 1.0
        %v3667 = vadd.f32 %v3259, 1.0
        %v3668 = vadd.f32 %v3261, 1.0
        %v3669 = vadd.f32 %v3263, 1.0
        %v3670 = vadd.f32 %v3265, 1.0
        %v3671 = vadd.f32 %v3267, 1.0
        %v3672 = vadd.f32 %v3269, 1.0
        %v3673 = vadd.f32 %v3271, 1.0
        %v3674 = vadd.f32 %v3273, 1.0
        %v3675 = vadd.f32 %v3275, 1.0
        %v3676 = vadd.f32 %v3277, 1.0
        %v3677 = vadd.f32 %v3279, 1.0
        %v3678 = vadd.f32 %v3281, 1.0
        %v3679 = vadd.f32 %v3283, 1.0
        %v3680 = vadd.f32 %v3285, 1.0
        %v3681 = vadd.f32 %v3287, 1.0
        %v3682 = vadd.f32 %v3289, 1.0
        %v3683 = vadd.f32 %v3291, 1.0
        %v3684 = vadd.f32 %v3293, 1.0
        %v3685 = vadd.f32 %v3295, 1.0
        %v3686 = vadd.f32 %v3297, 1.0
        %v3687 = vadd.f32 %v3299, 1.0
        %v3688 = vadd.f32 %v3301, 1.0
        %v3689 = vadd.f32 %v3303, 1.0
        %v3690 = vadd.f32 %v3305, 1.0
        %v3691 = vadd.f32 %v3307, 1.0
        %v3692 = vadd.f32 %v3309, 1.0
        %v3693 = vadd.f32 %v3311, 1.0
        %v3694 = vadd.f32 %v3313, 1.0
        %v3695 = vadd.f32 %v3315, 1.0
        %v3696 = vadd.f32 %v3317, 1.0
        %v3697 = vadd.f32 %v3319, 1.0
        %v3698 = vadd.f32 %v3321, 1.0
        %v3699 = vadd.f32 %v3323, 1.0
        %v3700 = vadd.f32 %v3325, 1.0
        %v3701 = vadd.f32 %v3327, 1.0
        %v3702 = vadd.f32 %v3329, 1.0
        %v3703 = vadd.f32 %v3331, 1.0
        %v3704 = vadd.f32 %v3333, 1.0
        %v3705 = vadd.f32 %v3335, 1.0
        %v3706 = vadd.f32 %v3337, 1.0
        %v3707 = vadd.f32 %v3339, 1.0
        %v3708 = vadd.f32 %v3341, 1.0
        %v3709 = vadd.f32 %v3343, 1.0
        %v3710 = vadd.f32 %v3345, 1.0
        %v3711 = vadd.f32 %v3347, 1.0
        %v3712 = vadd.f32 %v3349, 1.0
        %v3713 = vadd.f32 %v3351, 1.0
        %v3714 = vadd.f32 %v3353, 1.0
        %v3715 = vadd.f32 %v3355, 1.0
        %v3716 = vadd.f32 %v3357, 1.0
        %v3717 = vadd.f32 %v3359, 1.0
        %v3718 = vadd.f32 %v3361, 1.0
        %v3719 = vadd.f32 %v3363, 1.0
        %v3720 = vadd.f32 %v3365, 1.0
        %v3721 = vadd.f32 %v3367, 1.0
        %v3722 = vadd.f32 %v3369, 1.0
        %v3723 = vadd.f32 %v3371, 1.0
        %v3724 = vadd.f32 %v3373, 1.0
        %v3725 = vadd.f32 %v3375, 1.0
        %v3726 = vadd.f32 %v3377, 1.0
        %v3727 = vadd.f32 %v3379, 1.0
        %v3728 = vadd.f32 %v3381, 1.0
        %v3729 = vadd.f32 %v3383, 1.0
        %v3730 = vadd.f32 %v3385, 1.0
        %v3731 = vadd.f32 %v3387, 1.0
        %v3732 = vadd.f32 %v3389, 1.0
        %v3733 = vadd.f32 %v3391, 1.0
        %v3734 = vadd.f32 %v3393, 1.0
        %v3735 = vadd.f32 %v3395, 1.0
        %v3736 = vadd.f32 %v3397, 1.0
        %v3737 = vadd.f32 %v3399, 1.0
        %v3738 = vadd.f32 %v3401, 1.0
        %v3739 = vadd.f32 %v3403, 1.0
        %v3740 = vadd.f32 %v3405, 1.0
        %v3741 = vadd.f32 %v3407, 1.0
        %v3742 = vadd.f32 %v3409, 1.0
        %v3743 = vadd.f32 %v3411, 1.0
        %v3744 = vadd.f32 %v3413, 1.0
        %v3745 = vadd.f32 %v3415, 1.0
        %v3746 = vadd.f32 %v3417, 1.0
        %v3747 = vadd.f32 %v3419, 1.0
        %v3748 = vadd.f32 %v3421, 1.0
        %v3749 = vadd.f32 %v3423, 1.0
        %v3750 = vadd.f32 %v3425, 1.0
        %v3751 = vadd.f32 %v3427, 1.0
        %v3752 = vadd.f32 %v3429, 1.0
        %v3753 = vadd.f32 %v3431, 1.0
        %v3754 = vadd.f32 %v3433, 1.0
        %v3755 = vadd.f32 %v3435, 1.0
        %v3756 = vadd.f32 %v3437, 1.0
        %v3757 = vadd.f32 %v3439, 1.0
        %v3758 = vadd.f32 %v3441, 1.0
        %v3759 = vadd.f32 %v3443, 1.0
        %v3760 = vadd.f32 %v3445, 1.0
        %v3761 = vadd.f32 %v3447, 1.0
        %v3762 = vadd.f32 %v3449, 1.0
        %v3763 = vadd.f32 %v3451, 1.0
        %v3764 = vadd.f32 %v3453, 1.0
        %v3765 = vadd.f32 %v3455, 1.0
        %v3766 = vadd.f32 %v3457, 1.0
        %v3767 = vadd.f32 %v3459, 1.0
        %v3768 = vadd.f32 %v3461, 1.0
        %v3769 = vadd.f32 %v3463, 1.0
        %v3770 = vadd.f32 %v3465, 1.0
        %v3771 = vadd.f32 %v3467, 1.0
        %v3772 = vadd.f32 %v3469, 1.0
        %v3773 = vadd.f32 %v3471, 1.0
        %v3774 = vadd.f32 %v3473, 1.0
        %v3775 = vadd.f32 %v3475, 1.0
        %v3776 = vadd.f32 %v3477, 1.0
        %v3777 = vadd.f32 %v3479, 1.0
        %v3778 = vadd.f32 %v3481, 1.0
        %v3779 = vadd.f32 %v3483, 1.0
        %v3780 = vadd.f32 %v3485, 1.0
        %v3781 = vadd.f32 %v3487, 1.0
        %v3782 = vadd.f32 %v3489, 1.0
        %v3783 = vadd.f32 %v3491, 1.0
        %v3784 = vadd.f32 %v3493, 1.0
        %v3785 = vadd.f32 %v3495, 1.0
        %v3786 = vadd.f32 %v3497, 1.0
        %v3787 = vadd.f32 %v3499, 1.0
        %v3788 = vadd.f32 %v3501, 1.0
        %v3789 = vadd.f32 %v3503, 1.0
        %v3790 = vadd.f32 %v3505, 1.0
        %v3791 = vadd.f32 %v3507, 1.0
        %v3792 = vadd.f32 %v3509, 1.0
        %v3793 = vadd.f32 %v3511, 1.0
        %v3794 = vadd.f32 %v3513, 1.0
        %v3795 = vadd.f32 %v3515, 1.0
        %v3796 = vadd.f32 %v3517, 1.0
        %v3797 = vadd.f32 %v3519, 1.0
        %v3798 = vadd.f32 %v3521, 1.0
        %v3799 = vadd.f32 %v3523, 1.0
        %v3800 = vadd.f32 %v3525, 1.0
        %v3801 = vadd.f32 %v3527, 1.0
        %v3802 = vadd.f32 %v3529, 1.0
        %v3803 = vadd.f32 %v3531, 1.0
        %v3804 = vadd.f32 %v3533, 1.0
        %v3805 = vadd.f32 %v3535, 1.0
        %v3806 = vadd.f32 %v3537, 1.0
        %v3807 = vadd.f32 %v3539, 1.0
        %v3808 = vadd.f32 %v3541, 1.0
        %v3809 = vadd.f32 %v3543, 1.0
        %v3810 = vadd.f32 %v3545, 1.0
        %v3811 = vadd.f32 %v3547, 1.0
        %v3812 = vadd.f32 %v3549, 1.0
        %v3813 = vadd.f32 %v3551, 1.0
        %v3814 = vadd.f32 %v3553, 1.0
        %v3815 = vadd.f32 %v3555, 1.0
        %v3816 = vadd.f32 %v3557, 1.0
        %v3817 = vadd.f32 %v3559, 1.0
        %v3818 = vadd.f32 %v3561, 1.0
        %v3819 = vadd.f32 %v3563, 1.0
        %v3820 = vadd.f32 %v3565, 1.0
        %v3821 = vadd.f32 %v3567, 1.0
        %v3822 = vadd.f32 %v3569, 1.0
        %v3823 = vadd.f32 %v3571, 1.0
        %v3824 = vadd.f32 %v3573, 1.0
        %v3825 = vadd.f32 %v3575, 1.0
        %v3826 = vadd.f32 %v3577, 1.0
        %v3827 = vadd.f32 %v3579, 1.0
        %v3828 = vadd.f32 %v3581, 1.0
        %v3829 = vadd.f32 %v3583, 1.0
        %v3830 = vadd.f32 %v3585, 1.0
        %v3831 = vadd.f32 %v3587, 1.0
        %v3832 = vadd.f32 %v3589, 1.0
        %v3833 = vadd.f32 %v3591, 1.0
        %v3834 = vadd.f32 %v3593, 1.0
        %v3835 = vadd.f32 %v3595, 1.0
        %v3836 = vrcp.pop %v3596
        %v3837 = vmul.f32 1.0, %v3836
        %v3838 = vrcp.pop %v3597
        %v3839 = vmul.f32 1.0, %v3838
        %v3840 = vrcp.pop %v3598
        %v3841 = vmul.f32 1.0, %v3840
        %v3842 = vrcp.pop %v3599
        %v3843 = vmul.f32 1.0, %v3842
        %v3844 = vrcp.pop %v3600
        %v3845 = vmul.f32 1.0, %v3844
        %v3846 = vrcp.pop %v3601
        %v3847 = vmul.f32 1.0, %v3846
        %v3848 = vrcp.pop %v3602
        %v3849 = vmul.f32 1.0, %v3848
        %v3850 = vrcp.pop %v3603
        %v3851 = vmul.f32 1.0, %v3850
        %v3852 = vrcp.pop %v3604
        %v3853 = vmul.f32 1.0, %v3852
        %v3854 = vrcp.pop %v3605
        %v3855 = vmul.f32 1.0, %v3854
        %v3856 = vrcp.pop %v3606
        %v3857 = vmul.f32 1.0, %v3856
        %v3858 = vrcp.pop %v3607
        %v3859 = vmul.f32 1.0, %v3858
        %v3860 = vrcp.pop %v3608
        %v3861 = vmul.f32 1.0, %v3860
        %v3862 = vrcp.pop %v3609
        %v3863 = vmul.f32 1.0, %v3862
        %v3864 = vrcp.pop %v3610
        %v3865 = vmul.f32 1.0, %v3864
        %v3866 = vrcp.pop %v3611
        %v3867 = vmul.f32 1.0, %v3866
        %v3868 = vrcp.pop %v3612
        %v3869 = vmul.f32 1.0, %v3868
        %v3870 = vrcp.pop %v3613
        %v3871 = vmul.f32 1.0, %v3870
        %v3872 = vrcp.pop %v3614
        %v3873 = vmul.f32 1.0, %v3872
        %v3874 = vrcp.pop %v3615
        %v3875 = vmul.f32 1.0, %v3874
        %v3876 = vrcp.pop %v3616
        %v3877 = vmul.f32 1.0, %v3876
        %v3878 = vrcp.pop %v3617
        %v3879 = vmul.f32 1.0, %v3878
        %v3880 = vrcp.pop %v3618
        %v3881 = vmul.f32 1.0, %v3880
        %v3882 = vrcp.pop %v3619
        %v3883 = vmul.f32 1.0, %v3882
        %v3884 = vrcp.pop %v3620
        %v3885 = vmul.f32 1.0, %v3884
        %v3886 = vrcp.pop %v3621
        %v3887 = vmul.f32 1.0, %v3886
        %v3888 = vrcp.pop %v3622
        %v3889 = vmul.f32 1.0, %v3888
        %v3890 = vrcp.pop %v3623
        %v3891 = vmul.f32 1.0, %v3890
        %v3892 = vrcp.pop %v3624
        %v3893 = vmul.f32 1.0, %v3892
        %v3894 = vrcp.pop %v3625
        %v3895 = vmul.f32 1.0, %v3894
        %v3896 = vrcp.pop %v3626
        %v3897 = vmul.f32 1.0, %v3896
        %v3898 = vrcp.pop %v3627
        %v3899 = vmul.f32 1.0, %v3898
        %v3900 = vrcp.pop %v3628
        %v3901 = vmul.f32 1.0, %v3900
        %v3902 = vrcp.pop %v3629
        %v3903 = vmul.f32 1.0, %v3902
        %v3904 = vrcp.pop %v3630
        %v3905 = vmul.f32 1.0, %v3904
        %v3906 = vrcp.pop %v3631
        %v3907 = vmul.f32 1.0, %v3906
        %v3908 = vrcp.pop %v3632
        %v3909 = vmul.f32 1.0, %v3908
        %v3910 = vrcp.pop %v3633
        %v3911 = vmul.f32 1.0, %v3910
        %v3912 = vrcp.pop %v3634
        %v3913 = vmul.f32 1.0, %v3912
        %v3914 = vrcp.pop %v3635
        %v3915 = vmul.f32 1.0, %v3914
        %v3916 = vrcp.pop %v3636
        %v3917 = vmul.f32 1.0, %v3916
        %v3918 = vrcp.pop %v3637
        %v3919 = vmul.f32 1.0, %v3918
        %v3920 = vrcp.pop %v3638
        %v3921 = vmul.f32 1.0, %v3920
        %v3922 = vrcp.pop %v3639
        %v3923 = vmul.f32 1.0, %v3922
        %v3924 = vrcp.pop %v3640
        %v3925 = vmul.f32 1.0, %v3924
        %v3926 = vrcp.pop %v3641
        %v3927 = vmul.f32 1.0, %v3926
        %v3928 = vrcp.pop %v3642
        %v3929 = vmul.f32 1.0, %v3928
        %v3930 = vrcp.pop %v3643
        %v3931 = vmul.f32 1.0, %v3930
        %v3932 = vrcp.pop %v3644
        %v3933 = vmul.f32 1.0, %v3932
        %v3934 = vrcp.pop %v3645
        %v3935 = vmul.f32 1.0, %v3934
        %v3936 = vrcp.pop %v3646
        %v3937 = vmul.f32 1.0, %v3936
        %v3938 = vrcp.pop %v3647
        %v3939 = vmul.f32 1.0, %v3938
        %v3940 = vrcp.pop %v3648
        %v3941 = vmul.f32 1.0, %v3940
        %v3942 = vrcp.pop %v3649
        %v3943 = vmul.f32 1.0, %v3942
        %v3944 = vrcp.pop %v3650
        %v3945 = vmul.f32 1.0, %v3944
        %v3946 = vrcp.pop %v3651
        %v3947 = vmul.f32 1.0, %v3946
        %v3948 = vrcp.pop %v3652
        %v3949 = vmul.f32 1.0, %v3948
        %v3950 = vrcp.pop %v3653
        %v3951 = vmul.f32 1.0, %v3950
        %v3952 = vrcp.pop %v3654
        %v3953 = vmul.f32 1.0, %v3952
        %v3954 = vrcp.pop %v3655
        %v3955 = vmul.f32 1.0, %v3954
        %v3956 = vrcp.pop %v3656
        %v3957 = vmul.f32 1.0, %v3956
        %v3958 = vrcp.pop %v3657
        %v3959 = vmul.f32 1.0, %v3958
        %v3960 = vrcp.pop %v3658
        %v3961 = vmul.f32 1.0, %v3960
        %v3962 = vrcp.pop %v3659
        %v3963 = vmul.f32 1.0, %v3962
        %v3964 = vrcp.pop %v3660
        %v3965 = vmul.f32 1.0, %v3964
        %v3966 = vrcp.pop %v3661
        %v3967 = vmul.f32 1.0, %v3966
        %v3968 = vrcp.pop %v3662
        %v3969 = vmul.f32 1.0, %v3968
        %v3970 = vrcp.pop %v3663
        %v3971 = vmul.f32 1.0, %v3970
        %v3972 = vrcp.pop %v3664
        %v3973 = vmul.f32 1.0, %v3972
        %v3974 = vrcp.pop %v3665
        %v3975 = vmul.f32 1.0, %v3974
        %v3976 = vrcp.pop %v3666
        %v3977 = vmul.f32 1.0, %v3976
        %v3978 = vrcp.pop %v3667
        %v3979 = vmul.f32 1.0, %v3978
        %v3980 = vrcp.pop %v3668
        %v3981 = vmul.f32 1.0, %v3980
        %v3982 = vrcp.pop %v3669
        %v3983 = vmul.f32 1.0, %v3982
        %v3984 = vrcp.pop %v3670
        %v3985 = vmul.f32 1.0, %v3984
        %v3986 = vrcp.pop %v3671
        %v3987 = vmul.f32 1.0, %v3986
        %v3988 = vrcp.pop %v3672
        %v3989 = vmul.f32 1.0, %v3988
        %v3990 = vrcp.pop %v3673
        %v3991 = vmul.f32 1.0, %v3990
        %v3992 = vrcp.pop %v3674
        %v3993 = vmul.f32 1.0, %v3992
        %v3994 = vrcp.pop %v3675
        %v3995 = vmul.f32 1.0, %v3994
        %v3996 = vrcp.pop %v3676
        %v3997 = vmul.f32 1.0, %v3996
        %v3998 = vrcp.pop %v3677
        %v3999 = vmul.f32 1.0, %v3998
        %v4000 = vrcp.pop %v3678
        %v4001 = vmul.f32 1.0, %v4000
        %v4002 = vrcp.pop %v3679
        %v4003 = vmul.f32 1.0, %v4002
        %v4004 = vrcp.pop %v3680
        %v4005 = vmul.f32 1.0, %v4004
        %v4006 = vrcp.pop %v3681
        %v4007 = vmul.f32 1.0, %v4006
        %v4008 = vrcp.pop %v3682
        %v4009 = vmul.f32 1.0, %v4008
        %v4010 = vrcp.pop %v3683
        %v4011 = vmul.f32 1.0, %v4010
        %v4012 = vrcp.pop %v3684
        %v4013 = vmul.f32 1.0, %v4012
        %v4014 = vrcp.pop %v3685
        %v4015 = vmul.f32 1.0, %v4014
        %v4016 = vrcp.pop %v3686
        %v4017 = vmul.f32 1.0, %v4016
        %v4018 = vrcp.pop %v3687
        %v4019 = vmul.f32 1.0, %v4018
        %v4020 = vrcp.pop %v3688
        %v4021 = vmul.f32 1.0, %v4020
        %v4022 = vrcp.pop %v3689
        %v4023 = vmul.f32 1.0, %v4022
        %v4024 = vrcp.pop %v3690
        %v4025 = vmul.f32 1.0, %v4024
        %v4026 = vrcp.pop %v3691
        %v4027 = vmul.f32 1.0, %v4026
        %v4028 = vrcp.pop %v3692
        %v4029 = vmul.f32 1.0, %v4028
        %v4030 = vrcp.pop %v3693
        %v4031 = vmul.f32 1.0, %v4030
        %v4032 = vrcp.pop %v3694
        %v4033 = vmul.f32 1.0, %v4032
        %v4034 = vrcp.pop %v3695
        %v4035 = vmul.f32 1.0, %v4034
        %v4036 = vrcp.pop %v3696
        %v4037 = vmul.f32 1.0, %v4036
        %v4038 = vrcp.pop %v3697
        %v4039 = vmul.f32 1.0, %v4038
        %v4040 = vrcp.pop %v3698
        %v4041 = vmul.f32 1.0, %v4040
        %v4042 = vrcp.pop %v3699
        %v4043 = vmul.f32 1.0, %v4042
        %v4044 = vrcp.pop %v3700
        %v4045 = vmul.f32 1.0, %v4044
        %v4046 = vrcp.pop %v3701
        %v4047 = vmul.f32 1.0, %v4046
        %v4048 = vrcp.pop %v3702
        %v4049 = vmul.f32 1.0, %v4048
        %v4050 = vrcp.pop %v3703
        %v4051 = vmul.f32 1.0, %v4050
        %v4052 = vrcp.pop %v3704
        %v4053 = vmul.f32 1.0, %v4052
        %v4054 = vrcp.pop %v3705
        %v4055 = vmul.f32 1.0, %v4054
        %v4056 = vrcp.pop %v3706
        %v4057 = vmul.f32 1.0, %v4056
        %v4058 = vrcp.pop %v3707
        %v4059 = vmul.f32 1.0, %v4058
        %v4060 = vrcp.pop %v3708
        %v4061 = vmul.f32 1.0, %v4060
        %v4062 = vrcp.pop %v3709
        %v4063 = vmul.f32 1.0, %v4062
        %v4064 = vrcp.pop %v3710
        %v4065 = vmul.f32 1.0, %v4064
        %v4066 = vrcp.pop %v3711
        %v4067 = vmul.f32 1.0, %v4066
        %v4068 = vrcp.pop %v3712
        %v4069 = vmul.f32 1.0, %v4068
        %v4070 = vrcp.pop %v3713
        %v4071 = vmul.f32 1.0, %v4070
        %v4072 = vrcp.pop %v3714
        %v4073 = vmul.f32 1.0, %v4072
        %v4074 = vrcp.pop %v3715
        %v4075 = vmul.f32 1.0, %v4074
        %v4076 = vrcp.pop %v3716
        %v4077 = vmul.f32 1.0, %v4076
        %v4078 = vrcp.pop %v3717
        %v4079 = vmul.f32 1.0, %v4078
        %v4080 = vrcp.pop %v3718
        %v4081 = vmul.f32 1.0, %v4080
        %v4082 = vrcp.pop %v3719
        %v4083 = vmul.f32 1.0, %v4082
        %v4084 = vrcp.pop %v3720
        %v4085 = vmul.f32 1.0, %v4084
        %v4086 = vrcp.pop %v3721
        %v4087 = vmul.f32 1.0, %v4086
        %v4088 = vrcp.pop %v3722
        %v4089 = vmul.f32 1.0, %v4088
        %v4090 = vrcp.pop %v3723
        %v4091 = vmul.f32 1.0, %v4090
        %v4092 = vrcp.pop %v3724
        %v4093 = vmul.f32 1.0, %v4092
        %v4094 = vrcp.pop %v3725
        %v4095 = vmul.f32 1.0, %v4094
        %v4096 = vrcp.pop %v3726
        %v4097 = vmul.f32 1.0, %v4096
        %v4098 = vrcp.pop %v3727
        %v4099 = vmul.f32 1.0, %v4098
        %v4100 = vrcp.pop %v3728
        %v4101 = vmul.f32 1.0, %v4100
        %v4102 = vrcp.pop %v3729
        %v4103 = vmul.f32 1.0, %v4102
        %v4104 = vrcp.pop %v3730
        %v4105 = vmul.f32 1.0, %v4104
        %v4106 = vrcp.pop %v3731
        %v4107 = vmul.f32 1.0, %v4106
        %v4108 = vrcp.pop %v3732
        %v4109 = vmul.f32 1.0, %v4108
        %v4110 = vrcp.pop %v3733
        %v4111 = vmul.f32 1.0, %v4110
        %v4112 = vrcp.pop %v3734
        %v4113 = vmul.f32 1.0, %v4112
        %v4114 = vrcp.pop %v3735
        %v4115 = vmul.f32 1.0, %v4114
        %v4116 = vrcp.pop %v3736
        %v4117 = vmul.f32 1.0, %v4116
        %v4118 = vrcp.pop %v3737
        %v4119 = vmul.f32 1.0, %v4118
        %v4120 = vrcp.pop %v3738
        %v4121 = vmul.f32 1.0, %v4120
        %v4122 = vrcp.pop %v3739
        %v4123 = vmul.f32 1.0, %v4122
        %v4124 = vrcp.pop %v3740
        %v4125 = vmul.f32 1.0, %v4124
        %v4126 = vrcp.pop %v3741
        %v4127 = vmul.f32 1.0, %v4126
        %v4128 = vrcp.pop %v3742
        %v4129 = vmul.f32 1.0, %v4128
        %v4130 = vrcp.pop %v3743
        %v4131 = vmul.f32 1.0, %v4130
        %v4132 = vrcp.pop %v3744
        %v4133 = vmul.f32 1.0, %v4132
        %v4134 = vrcp.pop %v3745
        %v4135 = vmul.f32 1.0, %v4134
        %v4136 = vrcp.pop %v3746
        %v4137 = vmul.f32 1.0, %v4136
        %v4138 = vrcp.pop %v3747
        %v4139 = vmul.f32 1.0, %v4138
        %v4140 = vrcp.pop %v3748
        %v4141 = vmul.f32 1.0, %v4140
        %v4142 = vrcp.pop %v3749
        %v4143 = vmul.f32 1.0, %v4142
        %v4144 = vrcp.pop %v3750
        %v4145 = vmul.f32 1.0, %v4144
        %v4146 = vrcp.pop %v3751
        %v4147 = vmul.f32 1.0, %v4146
        %v4148 = vrcp.pop %v3752
        %v4149 = vmul.f32 1.0, %v4148
        %v4150 = vrcp.pop %v3753
        %v4151 = vmul.f32 1.0, %v4150
        %v4152 = vrcp.pop %v3754
        %v4153 = vmul.f32 1.0, %v4152
        %v4154 = vrcp.pop %v3755
        %v4155 = vmul.f32 1.0, %v4154
        %v4156 = vrcp.pop %v3756
        %v4157 = vmul.f32 1.0, %v4156
        %v4158 = vrcp.pop %v3757
        %v4159 = vmul.f32 1.0, %v4158
        %v4160 = vrcp.pop %v3758
        %v4161 = vmul.f32 1.0, %v4160
        %v4162 = vrcp.pop %v3759
        %v4163 = vmul.f32 1.0, %v4162
        %v4164 = vrcp.pop %v3760
        %v4165 = vmul.f32 1.0, %v4164
        %v4166 = vrcp.pop %v3761
        %v4167 = vmul.f32 1.0, %v4166
        %v4168 = vrcp.pop %v3762
        %v4169 = vmul.f32 1.0, %v4168
        %v4170 = vrcp.pop %v3763
        %v4171 = vmul.f32 1.0, %v4170
        %v4172 = vrcp.pop %v3764
        %v4173 = vmul.f32 1.0, %v4172
        %v4174 = vrcp.pop %v3765
        %v4175 = vmul.f32 1.0, %v4174
        %v4176 = vrcp.pop %v3766
        %v4177 = vmul.f32 1.0, %v4176
        %v4178 = vrcp.pop %v3767
        %v4179 = vmul.f32 1.0, %v4178
        %v4180 = vrcp.pop %v3768
        %v4181 = vmul.f32 1.0, %v4180
        %v4182 = vrcp.pop %v3769
        %v4183 = vmul.f32 1.0, %v4182
        %v4184 = vrcp.pop %v3770
        %v4185 = vmul.f32 1.0, %v4184
        %v4186 = vrcp.pop %v3771
        %v4187 = vmul.f32 1.0, %v4186
        %v4188 = vrcp.pop %v3772
        %v4189 = vmul.f32 1.0, %v4188
        %v4190 = vrcp.pop %v3773
        %v4191 = vmul.f32 1.0, %v4190
        %v4192 = vrcp.pop %v3774
        %v4193 = vmul.f32 1.0, %v4192
        %v4194 = vrcp.pop %v3775
        %v4195 = vmul.f32 1.0, %v4194
        %v4196 = vrcp.pop %v3776
        %v4197 = vmul.f32 1.0, %v4196
        %v4198 = vrcp.pop %v3777
        %v4199 = vmul.f32 1.0, %v4198
        %v4200 = vrcp.pop %v3778
        %v4201 = vmul.f32 1.0, %v4200
        %v4202 = vrcp.pop %v3779
        %v4203 = vmul.f32 1.0, %v4202
        %v4204 = vrcp.pop %v3780
        %v4205 = vmul.f32 1.0, %v4204
        %v4206 = vrcp.pop %v3781
        %v4207 = vmul.f32 1.0, %v4206
        %v4208 = vrcp.pop %v3782
        %v4209 = vmul.f32 1.0, %v4208
        %v4210 = vrcp.pop %v3783
        %v4211 = vmul.f32 1.0, %v4210
        %v4212 = vrcp.pop %v3784
        %v4213 = vmul.f32 1.0, %v4212
        %v4214 = vrcp.pop %v3785
        %v4215 = vmul.f32 1.0, %v4214
        %v4216 = vrcp.pop %v3786
        %v4217 = vmul.f32 1.0, %v4216
        %v4218 = vrcp.pop %v3787
        %v4219 = vmul.f32 1.0, %v4218
        %v4220 = vrcp.pop %v3788
        %v4221 = vmul.f32 1.0, %v4220
        %v4222 = vrcp.pop %v3789
        %v4223 = vmul.f32 1.0, %v4222
        %v4224 = vrcp.pop %v3790
        %v4225 = vmul.f32 1.0, %v4224
        %v4226 = vrcp.pop %v3791
        %v4227 = vmul.f32 1.0, %v4226
        %v4228 = vrcp.pop %v3792
        %v4229 = vmul.f32 1.0, %v4228
        %v4230 = vrcp.pop %v3793
        %v4231 = vmul.f32 1.0, %v4230
        %v4232 = vrcp.pop %v3794
        %v4233 = vmul.f32 1.0, %v4232
        %v4234 = vrcp.pop %v3795
        %v4235 = vmul.f32 1.0, %v4234
        %v4236 = vrcp.pop %v3796
        %v4237 = vmul.f32 1.0, %v4236
        %v4238 = vrcp.pop %v3797
        %v4239 = vmul.f32 1.0, %v4238
        %v4240 = vrcp.pop %v3798
        %v4241 = vmul.f32 1.0, %v4240
        %v4242 = vrcp.pop %v3799
        %v4243 = vmul.f32 1.0, %v4242
        %v4244 = vrcp.pop %v3800
        %v4245 = vmul.f32 1.0, %v4244
        %v4246 = vrcp.pop %v3801
        %v4247 = vmul.f32 1.0, %v4246
        %v4248 = vrcp.pop %v3802
        %v4249 = vmul.f32 1.0, %v4248
        %v4250 = vrcp.pop %v3803
        %v4251 = vmul.f32 1.0, %v4250
        %v4252 = vrcp.pop %v3804
        %v4253 = vmul.f32 1.0, %v4252
        %v4254 = vrcp.pop %v3805
        %v4255 = vmul.f32 1.0, %v4254
        %v4256 = vrcp.pop %v3806
        %v4257 = vmul.f32 1.0, %v4256
        %v4258 = vrcp.pop %v3807
        %v4259 = vmul.f32 1.0, %v4258
        %v4260 = vrcp.pop %v3808
        %v4261 = vmul.f32 1.0, %v4260
        %v4262 = vrcp.pop %v3809
        %v4263 = vmul.f32 1.0, %v4262
        %v4264 = vrcp.pop %v3810
        %v4265 = vmul.f32 1.0, %v4264
        %v4266 = vrcp.pop %v3811
        %v4267 = vmul.f32 1.0, %v4266
        %v4268 = vrcp.pop %v3812
        %v4269 = vmul.f32 1.0, %v4268
        %v4270 = vrcp.pop %v3813
        %v4271 = vmul.f32 1.0, %v4270
        %v4272 = vrcp.pop %v3814
        %v4273 = vmul.f32 1.0, %v4272
        %v4274 = vrcp.pop %v3815
        %v4275 = vmul.f32 1.0, %v4274
        %v4276 = vrcp.pop %v3816
        %v4277 = vmul.f32 1.0, %v4276
        %v4278 = vrcp.pop %v3817
        %v4279 = vmul.f32 1.0, %v4278
        %v4280 = vrcp.pop %v3818
        %v4281 = vmul.f32 1.0, %v4280
        %v4282 = vrcp.pop %v3819
        %v4283 = vmul.f32 1.0, %v4282
        %v4284 = vrcp.pop %v3820
        %v4285 = vmul.f32 1.0, %v4284
        %v4286 = vrcp.pop %v3821
        %v4287 = vmul.f32 1.0, %v4286
        %v4288 = vrcp.pop %v3822
        %v4289 = vmul.f32 1.0, %v4288
        %v4290 = vrcp.pop %v3823
        %v4291 = vmul.f32 1.0, %v4290
        %v4292 = vrcp.pop %v3824
        %v4293 = vmul.f32 1.0, %v4292
        %v4294 = vrcp.pop %v3825
        %v4295 = vmul.f32 1.0, %v4294
        %v4296 = vrcp.pop %v3826
        %v4297 = vmul.f32 1.0, %v4296
        %v4298 = vrcp.pop %v3827
        %v4299 = vmul.f32 1.0, %v4298
        %v4300 = vrcp.pop %v3828
        %v4301 = vmul.f32 1.0, %v4300
        %v4302 = vrcp.pop %v3829
        %v4303 = vmul.f32 1.0, %v4302
        %v4304 = vrcp.pop %v3830
        %v4305 = vmul.f32 1.0, %v4304
        %v4306 = vrcp.pop %v3831
        %v4307 = vmul.f32 1.0, %v4306
        %v4308 = vrcp.pop %v3832
        %v4309 = vmul.f32 1.0, %v4308
        %v4310 = vrcp.pop %v3833
        %v4311 = vmul.f32 1.0, %v4310
        %v4312 = vrcp.pop %v3834
        %v4313 = vmul.f32 1.0, %v4312
        %v4314 = vrcp.pop %v3835
        %v4315 = vmul.f32 1.0, %v4314
        %v4316 = vmul.f32 %v1816, %v3837
        %v4317 = vmul.f32 %v1818, %v3839
        %v4318 = vmul.f32 %v1889, %v3841
        %v4319 = vmul.f32 %v1891, %v3843
        %v4320 = vmul.f32 %v1962, %v3845
        %v4321 = vmul.f32 %v1964, %v3847
        %v4322 = vmul.f32 %v2035, %v3849
        %v4323 = vmul.f32 %v2037, %v3851
        %v4324 = vmul.f32 %v2108, %v3853
        %v4325 = vmul.f32 %v2110, %v3855
        %v4326 = vmul.f32 %v2181, %v3857
        %v4327 = vmul.f32 %v2183, %v3859
        %v4328 = vmul.f32 %v2254, %v3861
        %v4329 = vmul.f32 %v2256, %v3863
        %v4330 = vmul.f32 %v2327, %v3865
        %v4331 = vmul.f32 %v2329, %v3867
        %v4332 = vmul.f32 %v2400, %v3869
        %v4333 = vmul.f32 %v2402, %v3871
        %v4334 = vmul.f32 %v2473, %v3873
        %v4335 = vmul.f32 %v2475, %v3875
        %v4336 = vmul.f32 %v2546, %v3877
        %v4337 = vmul.f32 %v2548, %v3879
        %v4338 = vmul.f32 %v2619, %v3881
        %v4339 = vmul.f32 %v2621, %v3883
        %v4340 = vmul.f32 %v2692, %v3885
        %v4341 = vmul.f32 %v2694, %v3887
        %v4342 = vmul.f32 %v2765, %v3889
        %v4343 = vmul.f32 %v2767, %v3891
        %v4344 = vmul.f32 %v2838, %v3893
        %v4345 = vmul.f32 %v2840, %v3895
        %v4346 = vmul.f32 %v1820, %v3897
        %v4347 = vmul.f32 %v1822, %v3899
        %v4348 = vmul.f32 %v1893, %v3901
        %v4349 = vmul.f32 %v1895, %v3903
        %v4350 = vmul.f32 %v1966, %v3905
        %v4351 = vmul.f32 %v1968, %v3907
        %v4352 = vmul.f32 %v2039, %v3909
        %v4353 = vmul.f32 %v2041, %v3911
        %v4354 = vmul.f32 %v2112, %v3913
        %v4355 = vmul.f32 %v2114, %v3915
        %v4356 = vmul.f32 %v2185, %v3917
        %v4357 = vmul.f32 %v2187, %v3919
        %v4358 = vmul.f32 %v2258, %v3921
        %v4359 = vmul.f32 %v2260, %v3923
        %v4360 = vmul.f32 %v2331, %v3925
        %v4361 = vmul.f32 %v2333, %v3927
        %v4362 = vmul.f32 %v2404, %v3929
        %v4363 = vmul.f32 %v2406, %v3931
        %v4364 = vmul.f32 %v2477, %v3933
        %v4365 = vmul.f32 %v2479, %v3935
        %v4366 = vmul.f32 %v2550, %v3937
        %v4367 = vmul.f32 %v2552, %v3939
        %v4368 = vmul.f32 %v2623, %v3941
        %v4369 = vmul.f32 %v2625, %v3943
        %v4370 = vmul.f32 %v2696, %v3945
        %v4371 = vmul.f32 %v2698, %v3947
        %v4372 = vmul.f32 %v2769, %v3949
        %v4373 = vmul.f32 %v2771, %v3951
        %v4374 = vmul.f32 %v2842, %v3953
        %v4375 = vmul.f32 %v2844, %v3955
        %v4376 = vmul.f32 %v1826, %v3957
        %v4377 = vmul.f32 %v1828, %v3959
        %v4378 = vmul.f32 %v1899, %v3961
        %v4379 = vmul.f32 %v1901, %v3963
        %v4380 = vmul.f32 %v1972, %v3965
        %v4381 = vmul.f32 %v1974, %v3967
        %v4382 = vmul.f32 %v2045, %v3969
        %v4383 = vmul.f32 %v2047, %v3971
        %v4384 = vmul.f32 %v2118, %v3973
        %v4385 = vmul.f32 %v2120, %v3975
        %v4386 = vmul.f32 %v2191, %v3977
        %v4387 = vmul.f32 %v2193, %v3979
        %v4388 = vmul.f32 %v2264, %v3981
        %v4389 = vmul.f32 %v2266, %v3983
        %v4390 = vmul.f32 %v2337, %v3985
        %v4391 = vmul.f32 %v2339, %v3987
        %v4392 = vmul.f32 %v2410, %v3989
        %v4393 = vmul.f32 %v2412, %v3991
        %v4394 = vmul.f32 %v2483, %v3993
        %v4395 = vmul.f32 %v2485, %v3995
        %v4396 = vmul.f32 %v2556, %v3997
        %v4397 = vmul.f32 %v2558, %v3999
        %v4398 = vmul.f32 %v2629, %v4001
        %v4399 = vmul.f32 %v2631, %v4003
        %v4400 = vmul.f32 %v2702, %v4005
        %v4401 = vmul.f32 %v2704, %v4007
        %v4402 = vmul.f32 %v2775, %v4009
        %v4403 = vmul.f32 %v2777, %v4011
        %v4404 = vmul.f32 %v2848, %v4013
        %v4405 = vmul.f32 %v2850, %v4015
        %v4406 = vmul.f32 %v1830, %v4017
        %v4407 = vmul.f32 %v1832, %v4019
        %v4408 = vmul.f32 %v1903, %v4021
        %v4409 = vmul.f32 %v1905, %v4023
        %v4410 = vmul.f32 %v1976, %v4025
        %v4411 = vmul.f32 %v1978, %v4027
        %v4412 = vmul.f32 %v2049, %v4029
        %v4413 = vmul.f32 %v2051, %v4031
        %v4414 = vmul.f32 %v2122, %v4033
        %v4415 = vmul.f32 %v2124, %v4035
        %v4416 = vmul.f32 %v2195, %v4037
        %v4417 = vmul.f32 %v2197, %v4039
        %v4418 = vmul.f32 %v2268, %v4041
        %v4419 = vmul.f32 %v2270, %v4043
        %v4420 = vmul.f32 %v2341, %v4045
        %v4421 = vmul.f32 %v2343, %v4047
        %v4422 = vmul.f32 %v2414, %v4049
        %v4423 = vmul.f32 %v2416, %v4051
        %v4424 = vmul.f32 %v2487, %v4053
        %v4425 = vmul.f32 %v2489, %v4055
        %v4426 = vmul.f32 %v2560, %v4057
        %v4427 = vmul.f32 %v2562, %v4059
        %v4428 = vmul.f32 %v2633, %v4061
        %v4429 = vmul.f32 %v2635, %v4063
        %v4430 = vmul.f32 %v2706, %v4065
        %v4431 = vmul.f32 %v2708, %v4067
        %v4432 = vmul.f32 %v2779, %v4069
        %v4433 = vmul.f32 %v2781, %v4071
        %v4434 = vmul.f32 %v2852, %v4073
        %v4435 = vmul.f32 %v2854, %v4075
        %v4436 = vmul.f32 %v1836, %v4077
        %v4437 = vmul.f32 %v1838, %v4079
        %v4438 = vmul.f32 %v1909, %v4081
        %v4439 = vmul.f32 %v1911, %v4083
        %v4440 = vmul.f32 %v1982, %v4085
        %v4441 = vmul.f32 %v1984, %v4087
        %v4442 = vmul.f32 %v2055, %v4089
        %v4443 = vmul.f32 %v2057, %v4091
        %v4444 = vmul.f32 %v2128, %v4093
        %v4445 = vmul.f32 %v2130, %v4095
        %v4446 = vmul.f32 %v2201, %v4097
        %v4447 = vmul.f32 %v2203, %v4099
        %v4448 = vmul.f32 %v2274, %v4101
        %v4449 = vmul.f32 %v2276, %v4103
        %v4450 = vmul.f32 %v2347, %v4105
        %v4451 = vmul.f32 %v2349, %v4107
        %v4452 = vmul.f32 %v2420, %v4109
        %v4453 = vmul.f32 %v2422, %v4111
        %v4454 = vmul.f32 %v2493, %v4113
        %v4455 = vmul.f32 %v2495, %v4115
        %v4456 = vmul.f32 %v2566, %v4117
        %v4457 = vmul.f32 %v2568, %v4119
        %v4458 = vmul.f32 %v2639, %v4121
        %v4459 = vmul.f32 %v2641, %v4123
        %v4460 = vmul.f32 %v2712, %v4125
        %v4461 = vmul.f32 %v2714, %v4127
        %v4462 = vmul.f32 %v2785, %v4129
        %v4463 = vmul.f32 %v2787, %v4131
        %v4464 = vmul.f32 %v2858, %v4133
        %v4465 = vmul.f32 %v2860, %v4135
        %v4466 = vmul.f32 %v1840, %v4137
        %v4467 = vmul.f32 %v1842, %v4139
        %v4468 = vmul.f32 %v1913, %v4141
        %v4469 = vmul.f32 %v1915, %v4143
        %v4470 = vmul.f32 %v1986, %v4145
        %v4471 = vmul.f32 %v1988, %v4147
        %v4472 = vmul.f32 %v2059, %v4149
        %v4473 = vmul.f32 %v2061, %v4151
        %v4474 = vmul.f32 %v2132, %v4153
        %v4475 = vmul.f32 %v2134, %v4155
        %v4476 = vmul.f32 %v2205, %v4157
        %v4477 = vmul.f32 %v2207, %v4159
        %v4478 = vmul.f32 %v2278, %v4161
        %v4479 = vmul.f32 %v2280, %v4163
        %v4480 = vmul.f32 %v2351, %v4165
        %v4481 = vmul.f32 %v2353, %v4167
        %v4482 = vmul.f32 %v2424, %v4169
        %v4483 = vmul.f32 %v2426, %v4171
        %v4484 = vmul.f32 %v2497, %v4173
        %v4485 = vmul.f32 %v2499, %v4175
        %v4486 = vmul.f32 %v2570, %v4177
        %v4487 = vmul.f32 %v2572, %v4179
        %v4488 = vmul.f32 %v2643, %v4181
        %v4489 = vmul.f32 %v2645, %v4183
        %v4490 = vmul.f32 %v2716, %v4185
        %v4491 = vmul.f32 %v2718, %v4187
        %v4492 = vmul.f32 %v2789, %v4189
        %v4493 = vmul.f32 %v2791, %v4191
        %v4494 = vmul.f32 %v2862, %v4193
        %v4495 = vmul.f32 %v2864, %v4195
        %v4496 = vmul.f32 %v1846, %v4197
        %v4497 = vmul.f32 %v1848, %v4199
        %v4498 = vmul.f32 %v1919, %v4201
        %v4499 = vmul.f32 %v1921, %v4203
        %v4500 = vmul.f32 %v1992, %v4205
        %v4501 = vmul.f32 %v1994, %v4207
        %v4502 = vmul.f32 %v2065, %v4209
        %v4503 = vmul.f32 %v2067, %v4211
        %v4504 = vmul.f32 %v2138, %v4213
        %v4505 = vmul.f32 %v2140, %v4215
        %v4506 = vmul.f32 %v2211, %v4217
        %v4507 = vmul.f32 %v2213, %v4219
        %v4508 = vmul.f32 %v2284, %v4221
        %v4509 = vmul.f32 %v2286, %v4223
        %v4510 = vmul.f32 %v2357, %v4225
        %v4511 = vmul.f32 %v2359, %v4227
        %v4512 = vmul.f32 %v2430, %v4229
        %v4513 = vmul.f32 %v2432, %v4231
        %v4514 = vmul.f32 %v2503, %v4233
        %v4515 = vmul.f32 %v2505, %v4235
        %v4516 = vmul.f32 %v2576, %v4237
        %v4517 = vmul.f32 %v2578, %v4239
        %v4518 = vmul.f32 %v2649, %v4241
        %v4519 = vmul.f32 %v2651, %v4243
        %v4520 = vmul.f32 %v2722, %v4245
        %v4521 = vmul.f32 %v2724, %v4247
        %v4522 = vmul.f32 %v2795, %v4249
        %v4523 = vmul.f32 %v2797, %v4251
        %v4524 = vmul.f32 %v2868, %v4253
        %v4525 = vmul.f32 %v2870, %v4255
        %v4526 = vmul.f32 %v1850, %v4257
        %v4527 = vmul.f32 %v1852, %v4259
        %v4528 = vmul.f32 %v1923, %v4261
        %v4529 = vmul.f32 %v1925, %v4263
        %v4530 = vmul.f32 %v1996, %v4265
        %v4531 = vmul.f32 %v1998, %v4267
        %v4532 = vmul.f32 %v2069, %v4269
        %v4533 = vmul.f32 %v2071, %v4271
        %v4534 = vmul.f32 %v2142, %v4273
        %v4535 = vmul.f32 %v2144, %v4275
        %v4536 = vmul.f32 %v2215, %v4277
        %v4537 = vmul.f32 %v2217, %v4279
        %v4538 = vmul.f32 %v2288, %v4281
        %v4539 = vmul.f32 %v2290, %v4283
        %v4540 = vmul.f32 %v2361, %v4285
        %v4541 = vmul.f32 %v2363, %v4287
        %v4542 = vmul.f32 %v2434, %v4289
        %v4543 = vmul.f32 %v2436, %v4291
        %v4544 = vmul.f32 %v2507, %v4293
        %v4545 = vmul.f32 %v2509, %v4295
        %v4546 = vmul.f32 %v2580, %v4297
        %v4547 = vmul.f32 %v2582, %v4299
        %v4548 = vmul.f32 %v2653, %v4301
        %v4549 = vmul.f32 %v2655, %v4303
        %v4550 = vmul.f32 %v2726, %v4305
        %v4551 = vmul.f32 %v2728, %v4307
        %v4552 = vmul.f32 %v2799, %v4309
        %v4553 = vmul.f32 %v2801, %v4311
        %v4554 = vmul.f32 %v2872, %v4313
        %v4555 = vmul.f32 %v2874, %v4315
        %v4556 = vld [vmem:[#allocation2] sm:$0xff]
        %v4557 = vld [vmem:[#allocation2 + $0x8] sm:$0xff]
        %v4558 = vld [vmem:[#allocation2 + $0x10] sm:$0xff]
        %v4559 = vld [vmem:[#allocation2 + $0x18] sm:$0x3f]
        %v4560 = vadd.f32 %v4316, %v4346
        %v4561 = vadd.f32 %v4560, %v4376
        %v4562 = vadd.f32 %v4561, %v4406
        %v4563 = vadd.f32 %v4562, %v4436
        %v4564 = vadd.f32 %v4563, %v4466
        %v4565 = vadd.f32 %v4564, %v4496
        %v4566 = vadd.f32 %v4565, %v4526
        %v4567 = vrot.slane %v4566, 4
        %v4568 = vadd.f32 %v4566, %v4567
        %v4569 = vrot.slane %v4568, 2
        %v4570 = vadd.f32 %v4568, %v4569
        %v4571 = vrot.slane %v4570, 1
        %v4572 = vadd.f32 %v4570, %v4571
        %v4573 = vadd.f32 %v4317, %v4347
        %v4574 = vadd.f32 %v4573, %v4377
        %v4575 = vadd.f32 %v4574, %v4407
        %v4576 = vadd.f32 %v4575, %v4437
        %v4577 = vadd.f32 %v4576, %v4467
        %v4578 = vadd.f32 %v4577, %v4497
        %v4579 = vadd.f32 %v4578, %v4527
        %v4580 = vrot.slane %v4579, 4
        %v4581 = vadd.f32 %v4579, %v4580
        %v4582 = vrot.slane %v4581, 2
        %v4583 = vadd.f32 %v4581, %v4582
        %v4584 = vrot.slane %v4583, 1
        %v4585 = vadd.f32 %v4583, %v4584
        %v4586 = vadd.f32 %v4318, %v4348
        %v4587 = vadd.f32 %v4586, %v4378
        %v4588 = vadd.f32 %v4587, %v4408
        %v4589 = vadd.f32 %v4588, %v4438
        %v4590 = vadd.f32 %v4589, %v4468
        %v4591 = vadd.f32 %v4590, %v4498
        %v4592 = vadd.f32 %v4591, %v4528
        %v4593 = vrot.slane %v4592, 4
        %v4594 = vadd.f32 %v4592, %v4593
        %v4595 = vrot.slane %v4594, 2
        %v4596 = vadd.f32 %v4594, %v4595
        %v4597 = vrot.slane %v4596, 1
        %v4598 = vadd.f32 %v4596, %v4597
        %v4599 = vadd.f32 %v4319, %v4349
        %v4600 = vadd.f32 %v4599, %v4379
        %v4601 = vadd.f32 %v4600, %v4409
        %v4602 = vadd.f32 %v4601, %v4439
        %v4603 = vadd.f32 %v4602, %v4469
        %v4604 = vadd.f32 %v4603, %v4499
        %v4605 = vadd.f32 %v4604, %v4529
        %v4606 = vrot.slane %v4605, 4
        %v4607 = vadd.f32 %v4605, %v4606
        %v4608 = vrot.slane %v4607, 2
        %v4609 = vadd.f32 %v4607, %v4608
        %v4610 = vrot.slane %v4609, 1
        %v4611 = vadd.f32 %v4609, %v4610
        %v4612 = vadd.f32 %v4320, %v4350
        %v4613 = vadd.f32 %v4612, %v4380
        %v4614 = vadd.f32 %v4613, %v4410
        %v4615 = vadd.f32 %v4614, %v4440
        %v4616 = vadd.f32 %v4615, %v4470
        %v4617 = vadd.f32 %v4616, %v4500
        %v4618 = vadd.f32 %v4617, %v4530
        %v4619 = vrot.slane %v4618, 4
        %v4620 = vadd.f32 %v4618, %v4619
        %v4621 = vrot.slane %v4620, 2
        %v4622 = vadd.f32 %v4620, %v4621
        %v4623 = vrot.slane %v4622, 1
        %v4624 = vadd.f32 %v4622, %v4623
        %v4625 = vadd.f32 %v4321, %v4351
        %v4626 = vadd.f32 %v4625, %v4381
        %v4627 = vadd.f32 %v4626, %v4411
        %v4628 = vadd.f32 %v4627, %v4441
        %v4629 = vadd.f32 %v4628, %v4471
        %v4630 = vadd.f32 %v4629, %v4501
        %v4631 = vadd.f32 %v4630, %v4531
        %v4632 = vrot.slane %v4631, 4
        %v4633 = vadd.f32 %v4631, %v4632
        %v4634 = vrot.slane %v4633, 2
        %v4635 = vadd.f32 %v4633, %v4634
        %v4636 = vrot.slane %v4635, 1
        %v4637 = vadd.f32 %v4635, %v4636
        %v4638 = vadd.f32 %v4322, %v4352
        %v4639 = vadd.f32 %v4638, %v4382
        %v4640 = vadd.f32 %v4639, %v4412
        %v4641 = vadd.f32 %v4640, %v4442
        %v4642 = vadd.f32 %v4641, %v4472
        %v4643 = vadd.f32 %v4642, %v4502
        %v4644 = vadd.f32 %v4643, %v4532
        %v4645 = vrot.slane %v4644, 4
        %v4646 = vadd.f32 %v4644, %v4645
        %v4647 = vrot.slane %v4646, 2
        %v4648 = vadd.f32 %v4646, %v4647
        %v4649 = vrot.slane %v4648, 1
        %v4650 = vadd.f32 %v4648, %v4649
        %v4651 = vadd.f32 %v4323, %v4353
        %v4652 = vadd.f32 %v4651, %v4383
        %v4653 = vadd.f32 %v4652, %v4413
        %v4654 = vadd.f32 %v4653, %v4443
        %v4655 = vadd.f32 %v4654, %v4473
        %v4656 = vadd.f32 %v4655, %v4503
        %v4657 = vadd.f32 %v4656, %v4533
        %v4658 = vrot.slane %v4657, 4
        %v4659 = vadd.f32 %v4657, %v4658
        %v4660 = vrot.slane %v4659, 2
        %v4661 = vadd.f32 %v4659, %v4660
        %v4662 = vrot.slane %v4661, 1
        %v4663 = vadd.f32 %v4661, %v4662
        %v4664 = vadd.f32 %v4324, %v4354
        %v4665 = vadd.f32 %v4664, %v4384
        %v4666 = vadd.f32 %v4665, %v4414
        %v4667 = vadd.f32 %v4666, %v4444
        %v4668 = vadd.f32 %v4667, %v4474
        %v4669 = vadd.f32 %v4668, %v4504
        %v4670 = vadd.f32 %v4669, %v4534
        %v4671 = vrot.slane %v4670, 4
        %v4672 = vadd.f32 %v4670, %v4671
        %v4673 = vrot.slane %v4672, 2
        %v4674 = vadd.f32 %v4672, %v4673
        %v4675 = vrot.slane %v4674, 1
        %v4676 = vadd.f32 %v4674, %v4675
        %v4677 = vadd.f32 %v4325, %v4355
        %v4678 = vadd.f32 %v4677, %v4385
        %v4679 = vadd.f32 %v4678, %v4415
        %v4680 = vadd.f32 %v4679, %v4445
        %v4681 = vadd.f32 %v4680, %v4475
        %v4682 = vadd.f32 %v4681, %v4505
        %v4683 = vadd.f32 %v4682, %v4535
        %v4684 = vrot.slane %v4683, 4
        %v4685 = vadd.f32 %v4683, %v4684
        %v4686 = vrot.slane %v4685, 2
        %v4687 = vadd.f32 %v4685, %v4686
        %v4688 = vrot.slane %v4687, 1
        %v4689 = vadd.f32 %v4687, %v4688
        %v4690 = vadd.f32 %v4326, %v4356
        %v4691 = vadd.f32 %v4690, %v4386
        %v4692 = vadd.f32 %v4691, %v4416
        %v4693 = vadd.f32 %v4692, %v4446
        %v4694 = vadd.f32 %v4693, %v4476
        %v4695 = vadd.f32 %v4694, %v4506
        %v4696 = vadd.f32 %v4695, %v4536
        %v4697 = vrot.slane %v4696, 4
        %v4698 = vadd.f32 %v4696, %v4697
        %v4699 = vrot.slane %v4698, 2
        %v4700 = vadd.f32 %v4698, %v4699
        %v4701 = vrot.slane %v4700, 1
        %v4702 = vadd.f32 %v4700, %v4701
        %v4703 = vadd.f32 %v4327, %v4357
        %v4704 = vadd.f32 %v4703, %v4387
        %v4705 = vadd.f32 %v4704, %v4417
        %v4706 = vadd.f32 %v4705, %v4447
        %v4707 = vadd.f32 %v4706, %v4477
        %v4708 = vadd.f32 %v4707, %v4507
        %v4709 = vadd.f32 %v4708, %v4537
        %v4710 = vrot.slane %v4709, 4
        %v4711 = vadd.f32 %v4709, %v4710
        %v4712 = vrot.slane %v4711, 2
        %v4713 = vadd.f32 %v4711, %v4712
        %v4714 = vrot.slane %v4713, 1
        %v4715 = vadd.f32 %v4713, %v4714
        %v4716 = vadd.f32 %v4328, %v4358
        %v4717 = vadd.f32 %v4716, %v4388
        %v4718 = vadd.f32 %v4717, %v4418
        %v4719 = vadd.f32 %v4718, %v4448
        %v4720 = vadd.f32 %v4719, %v4478
        %v4721 = vadd.f32 %v4720, %v4508
        %v4722 = vadd.f32 %v4721, %v4538
        %v4723 = vrot.slane %v4722, 4
        %v4724 = vadd.f32 %v4722, %v4723
        %v4725 = vrot.slane %v4724, 2
        %v4726 = vadd.f32 %v4724, %v4725
        %v4727 = vrot.slane %v4726, 1
        %v4728 = vadd.f32 %v4726, %v4727
        %v4729 = vadd.f32 %v4329, %v4359
        %v4730 = vadd.f32 %v4729, %v4389
        %v4731 = vadd.f32 %v4730, %v4419
        %v4732 = vadd.f32 %v4731, %v4449
        %v4733 = vadd.f32 %v4732, %v4479
        %v4734 = vadd.f32 %v4733, %v4509
        %v4735 = vadd.f32 %v4734, %v4539
        %v4736 = vrot.slane %v4735, 4
        %v4737 = vadd.f32 %v4735, %v4736
        %v4738 = vrot.slane %v4737, 2
        %v4739 = vadd.f32 %v4737, %v4738
        %v4740 = vrot.slane %v4739, 1
        %v4741 = vadd.f32 %v4739, %v4740
        %v4742 = vadd.f32 %v4330, %v4360
        %v4743 = vadd.f32 %v4742, %v4390
        %v4744 = vadd.f32 %v4743, %v4420
        %v4745 = vadd.f32 %v4744, %v4450
        %v4746 = vadd.f32 %v4745, %v4480
        %v4747 = vadd.f32 %v4746, %v4510
        %v4748 = vadd.f32 %v4747, %v4540
        %v4749 = vrot.slane %v4748, 4
        %v4750 = vadd.f32 %v4748, %v4749
        %v4751 = vrot.slane %v4750, 2
        %v4752 = vadd.f32 %v4750, %v4751
        %v4753 = vrot.slane %v4752, 1
        %v4754 = vadd.f32 %v4752, %v4753
        %v4755 = vadd.f32 %v4331, %v4361
        %v4756 = vadd.f32 %v4755, %v4391
        %v4757 = vadd.f32 %v4756, %v4421
        %v4758 = vadd.f32 %v4757, %v4451
        %v4759 = vadd.f32 %v4758, %v4481
        %v4760 = vadd.f32 %v4759, %v4511
        %v4761 = vadd.f32 %v4760, %v4541
        %v4762 = vrot.slane %v4761, 4
        %v4763 = vadd.f32 %v4761, %v4762
        %v4764 = vrot.slane %v4763, 2
        %v4765 = vadd.f32 %v4763, %v4764
        %v4766 = vrot.slane %v4765, 1
        %v4767 = vadd.f32 %v4765, %v4766
        %v4768 = vadd.f32 %v4332, %v4362
        %v4769 = vadd.f32 %v4768, %v4392
        %v4770 = vadd.f32 %v4769, %v4422
        %v4771 = vadd.f32 %v4770, %v4452
        %v4772 = vadd.f32 %v4771, %v4482
        %v4773 = vadd.f32 %v4772, %v4512
        %v4774 = vadd.f32 %v4773, %v4542
        %v4775 = vrot.slane %v4774, 4
        %v4776 = vadd.f32 %v4774, %v4775
        %v4777 = vrot.slane %v4776, 2
        %v4778 = vadd.f32 %v4776, %v4777
        %v4779 = vrot.slane %v4778, 1
        %v4780 = vadd.f32 %v4778, %v4779
        %v4781 = vadd.f32 %v4333, %v4363
        %v4782 = vadd.f32 %v4781, %v4393
        %v4783 = vadd.f32 %v4782, %v4423
        %v4784 = vadd.f32 %v4783, %v4453
        %v4785 = vadd.f32 %v4784, %v4483
        %v4786 = vadd.f32 %v4785, %v4513
        %v4787 = vadd.f32 %v4786, %v4543
        %v4788 = vrot.slane %v4787, 4
        %v4789 = vadd.f32 %v4787, %v4788
        %v4790 = vrot.slane %v4789, 2
        %v4791 = vadd.f32 %v4789, %v4790
        %v4792 = vrot.slane %v4791, 1
        %v4793 = vadd.f32 %v4791, %v4792
        %v4794 = vadd.f32 %v4334, %v4364
        %v4795 = vadd.f32 %v4794, %v4394
        %v4796 = vadd.f32 %v4795, %v4424
        %v4797 = vadd.f32 %v4796, %v4454
        %v4798 = vadd.f32 %v4797, %v4484
        %v4799 = vadd.f32 %v4798, %v4514
        %v4800 = vadd.f32 %v4799, %v4544
        %v4801 = vrot.slane %v4800, 4
        %v4802 = vadd.f32 %v4800, %v4801
        %v4803 = vrot.slane %v4802, 2
        %v4804 = vadd.f32 %v4802, %v4803
        %v4805 = vrot.slane %v4804, 1
        %v4806 = vadd.f32 %v4804, %v4805
        %v4807 = vadd.f32 %v4335, %v4365
        %v4808 = vadd.f32 %v4807, %v4395
        %v4809 = vadd.f32 %v4808, %v4425
        %v4810 = vadd.f32 %v4809, %v4455
        %v4811 = vadd.f32 %v4810, %v4485
        %v4812 = vadd.f32 %v4811, %v4515
        %v4813 = vadd.f32 %v4812, %v4545
        %v4814 = vrot.slane %v4813, 4
        %v4815 = vadd.f32 %v4813, %v4814
        %v4816 = vrot.slane %v4815, 2
        %v4817 = vadd.f32 %v4815, %v4816
        %v4818 = vrot.slane %v4817, 1
        %v4819 = vadd.f32 %v4817, %v4818
        %v4820 = vadd.f32 %v4336, %v4366
        %v4821 = vadd.f32 %v4820, %v4396
        %v4822 = vadd.f32 %v4821, %v4426
        %v4823 = vadd.f32 %v4822, %v4456
        %v4824 = vadd.f32 %v4823, %v4486
        %v4825 = vadd.f32 %v4824, %v4516
        %v4826 = vadd.f32 %v4825, %v4546
        %v4827 = vrot.slane %v4826, 4
        %v4828 = vadd.f32 %v4826, %v4827
        %v4829 = vrot.slane %v4828, 2
        %v4830 = vadd.f32 %v4828, %v4829
        %v4831 = vrot.slane %v4830, 1
        %v4832 = vadd.f32 %v4830, %v4831
        %v4833 = vadd.f32 %v4337, %v4367
        %v4834 = vadd.f32 %v4833, %v4397
        %v4835 = vadd.f32 %v4834, %v4427
        %v4836 = vadd.f32 %v4835, %v4457
        %v4837 = vadd.f32 %v4836, %v4487
        %v4838 = vadd.f32 %v4837, %v4517
        %v4839 = vadd.f32 %v4838, %v4547
        %v4840 = vrot.slane %v4839, 4
        %v4841 = vadd.f32 %v4839, %v4840
        %v4842 = vrot.slane %v4841, 2
        %v4843 = vadd.f32 %v4841, %v4842
        %v4844 = vrot.slane %v4843, 1
        %v4845 = vadd.f32 %v4843, %v4844
        %v4846 = vadd.f32 %v4338, %v4368
        %v4847 = vadd.f32 %v4846, %v4398
        %v4848 = vadd.f32 %v4847, %v4428
        %v4849 = vadd.f32 %v4848, %v4458
        %v4850 = vadd.f32 %v4849, %v4488
        %v4851 = vadd.f32 %v4850, %v4518
        %v4852 = vadd.f32 %v4851, %v4548
        %v4853 = vrot.slane %v4852, 4
        %v4854 = vadd.f32 %v4852, %v4853
        %v4855 = vrot.slane %v4854, 2
        %v4856 = vadd.f32 %v4854, %v4855
        %v4857 = vrot.slane %v4856, 1
        %v4858 = vadd.f32 %v4856, %v4857
        %v4859 = vadd.f32 %v4339, %v4369
        %v4860 = vadd.f32 %v4859, %v4399
        %v4861 = vadd.f32 %v4860, %v4429
        %v4862 = vadd.f32 %v4861, %v4459
        %v4863 = vadd.f32 %v4862, %v4489
        %v4864 = vadd.f32 %v4863, %v4519
        %v4865 = vadd.f32 %v4864, %v4549
        %v4866 = vrot.slane %v4865, 4
        %v4867 = vadd.f32 %v4865, %v4866
        %v4868 = vrot.slane %v4867, 2
        %v4869 = vadd.f32 %v4867, %v4868
        %v4870 = vrot.slane %v4869, 1
        %v4871 = vadd.f32 %v4869, %v4870
        %v4872 = vadd.f32 %v4340, %v4370
        %v4873 = vadd.f32 %v4872, %v4400
        %v4874 = vadd.f32 %v4873, %v4430
        %v4875 = vadd.f32 %v4874, %v4460
        %v4876 = vadd.f32 %v4875, %v4490
        %v4877 = vadd.f32 %v4876, %v4520
        %v4878 = vadd.f32 %v4877, %v4550
        %v4879 = vrot.slane %v4878, 4
        %v4880 = vadd.f32 %v4878, %v4879
        %v4881 = vrot.slane %v4880, 2
        %v4882 = vadd.f32 %v4880, %v4881
        %v4883 = vrot.slane %v4882, 1
        %v4884 = vadd.f32 %v4882, %v4883
        %v4885 = vadd.f32 %v4341, %v4371
        %v4886 = vadd.f32 %v4885, %v4401
        %v4887 = vadd.f32 %v4886, %v4431
        %v4888 = vadd.f32 %v4887, %v4461
        %v4889 = vadd.f32 %v4888, %v4491
        %v4890 = vadd.f32 %v4889, %v4521
        %v4891 = vadd.f32 %v4890, %v4551
        %v4892 = vrot.slane %v4891, 4
        %v4893 = vadd.f32 %v4891, %v4892
        %v4894 = vrot.slane %v4893, 2
        %v4895 = vadd.f32 %v4893, %v4894
        %v4896 = vrot.slane %v4895, 1
        %v4897 = vadd.f32 %v4895, %v4896
        %v4898 = vadd.f32 %v4342, %v4372
        %v4899 = vadd.f32 %v4898, %v4402
        %v4900 = vadd.f32 %v4899, %v4432
        %v4901 = vadd.f32 %v4900, %v4462
        %v4902 = vadd.f32 %v4901, %v4492
        %v4903 = vadd.f32 %v4902, %v4522
        %v4904 = vadd.f32 %v4903, %v4552
        %v4905 = vrot.slane %v4904, 4
        %v4906 = vadd.f32 %v4904, %v4905
        %v4907 = vrot.slane %v4906, 2
        %v4908 = vadd.f32 %v4906, %v4907
        %v4909 = vrot.slane %v4908, 1
        %v4910 = vadd.f32 %v4908, %v4909
        %v4911 = vadd.f32 %v4343, %v4373
        %v4912 = vadd.f32 %v4911, %v4403
        %v4913 = vadd.f32 %v4912, %v4433
        %v4914 = vadd.f32 %v4913, %v4463
        %v4915 = vadd.f32 %v4914, %v4493
        %v4916 = vadd.f32 %v4915, %v4523
        %v4917 = vadd.f32 %v4916, %v4553
        %v4918 = vrot.slane %v4917, 4
        %v4919 = vadd.f32 %v4917, %v4918
        %v4920 = vrot.slane %v4919, 2
        %v4921 = vadd.f32 %v4919, %v4920
        %v4922 = vrot.slane %v4921, 1
        %v4923 = vadd.f32 %v4921, %v4922
        %v4924 = vadd.f32 %v4344, %v4374
        %v4925 = vadd.f32 %v4924, %v4404
        %v4926 = vadd.f32 %v4925, %v4434
        %v4927 = vadd.f32 %v4926, %v4464
        %v4928 = vadd.f32 %v4927, %v4494
        %v4929 = vadd.f32 %v4928, %v4524
        %v4930 = vadd.f32 %v4929, %v4554
        %v4931 = vrot.slane %v4930, 4
        %v4932 = vadd.f32 %v4930, %v4931
        %v4933 = vrot.slane %v4932, 2
        %v4934 = vadd.f32 %v4932, %v4933
        %v4935 = vrot.slane %v4934, 1
        %v4936 = vadd.f32 %v4934, %v4935
        %v4937 = vadd.f32 %v4345, %v4375
        %v4938 = vadd.f32 %v4937, %v4405
        %v4939 = vadd.f32 %v4938, %v4435
        %v4940 = vadd.f32 %v4939, %v4465
        %v4941 = vadd.f32 %v4940, %v4495
        %v4942 = vadd.f32 %v4941, %v4525
        %v4943 = vadd.f32 %v4942, %v4555
        %v4944 = vrot.slane %v4943, 4
        %v4945 = vadd.f32 %v4943, %v4944
        %v4946 = vrot.slane %v4945, 2
        %v4947 = vadd.f32 %v4945, %v4946
        %v4948 = vrot.slane %v4947, 1
        %v4949 = vadd.f32 %v4947, %v4948
        %v4980 = vcombine.low %v4572, %v4585
        %v4981 = vcombine.low %v4598, %v4611
        %v4982 = vcombine.low %v4624, %v4637
        %v4983 = vcombine.low %v4650, %v4663
        %v4985 = vunpack.c.l.s4 1966171168
        %v4986 = vunpack.c.0.s8 %v4985
        %v4987 = vlaneseq
        %v4988 = vshrl.u32 %v4987, 7
        %v4989 = vsub.s32 %v4986, %v4988
        %v4990 = vrot.slane %v4980, %v4989
        %v4992 = vunpack.c.l.s4 1966171168
        %v4993 = vunpack.c.0.s8 %v4992
        %v4994 = vlaneseq
        %v4995 = vshrl.u32 %v4994, 7
        %v4996 = vsub.s32 %v4993, %v4995
        %v4997 = vrot.slane %v4981, %v4996
        %v4999 = vunpack.c.l.s4 1966171168
        %v5000 = vunpack.c.0.s8 %v4999
        %v5001 = vlaneseq
        %v5002 = vshrl.u32 %v5001, 7
        %v5003 = vsub.s32 %v5000, %v5002
        %v5004 = vrot.slane %v4982, %v5003
        %v5006 = vunpack.c.l.s4 1966171168
        %v5007 = vunpack.c.0.s8 %v5006
        %v5008 = vlaneseq
        %v5009 = vshrl.u32 %v5008, 7
        %v5010 = vsub.s32 %v5007, %v5009
        %v5011 = vrot.slane %v4983, %v5010
        %v5012 = vcombine.low %v4990, %v4997
        %v5013 = vcombine.low %v5004, %v5011
        %v5015 = vunpack.c.l.s4 1966171168
        %v5016 = vunpack.c.0.s8 %v5015
        %v5017 = vlaneseq
        %v5018 = vshrl.u32 %v5017, 7
        %v5019 = vsub.s32 %v5016, %v5018
        %v5020 = vrot.slane %v5012, %v5019
        %v5022 = vunpack.c.l.s4 1966171168
        %v5023 = vunpack.c.0.s8 %v5022
        %v5024 = vlaneseq
        %v5025 = vshrl.u32 %v5024, 7
        %v5026 = vsub.s32 %v5023, %v5025
        %v5027 = vrot.slane %v5013, %v5026
        %v5028 = vcombine.low %v5020, %v5027
        %v5029 = vcombine.low %v4676, %v4689
        %v5030 = vcombine.low %v4702, %v4715
        %v5031 = vcombine.low %v4728, %v4741
        %v5032 = vcombine.low %v4754, %v4767
        %v5034 = vunpack.c.l.s4 1966171168
        %v5035 = vunpack.c.0.s8 %v5034
        %v5036 = vlaneseq
        %v5037 = vshrl.u32 %v5036, 7
        %v5038 = vsub.s32 %v5035, %v5037
        %v5039 = vrot.slane %v5029, %v5038
        %v5041 = vunpack.c.l.s4 1966171168
        %v5042 = vunpack.c.0.s8 %v5041
        %v5043 = vlaneseq
        %v5044 = vshrl.u32 %v5043, 7
        %v5045 = vsub.s32 %v5042, %v5044
        %v5046 = vrot.slane %v5030, %v5045
        %v5048 = vunpack.c.l.s4 1966171168
        %v5049 = vunpack.c.0.s8 %v5048
        %v5050 = vlaneseq
        %v5051 = vshrl.u32 %v5050, 7
        %v5052 = vsub.s32 %v5049, %v5051
        %v5053 = vrot.slane %v5031, %v5052
        %v5055 = vunpack.c.l.s4 1966171168
        %v5056 = vunpack.c.0.s8 %v5055
        %v5057 = vlaneseq
        %v5058 = vshrl.u32 %v5057, 7
        %v5059 = vsub.s32 %v5056, %v5058
        %v5060 = vrot.slane %v5032, %v5059
        %v5061 = vcombine.low %v5039, %v5046
        %v5062 = vcombine.low %v5053, %v5060
        %v5064 = vunpack.c.l.s4 1966171168
        %v5065 = vunpack.c.0.s8 %v5064
        %v5066 = vlaneseq
        %v5067 = vshrl.u32 %v5066, 7
        %v5068 = vsub.s32 %v5065, %v5067
        %v5069 = vrot.slane %v5061, %v5068
        %v5071 = vunpack.c.l.s4 1966171168
        %v5072 = vunpack.c.0.s8 %v5071
        %v5073 = vlaneseq
        %v5074 = vshrl.u32 %v5073, 7
        %v5075 = vsub.s32 %v5072, %v5074
        %v5076 = vrot.slane %v5062, %v5075
        %v5077 = vcombine.low %v5069, %v5076
        %v5078 = vcombine.low %v4780, %v4793
        %v5079 = vcombine.low %v4806, %v4819
        %v5080 = vcombine.low %v4832, %v4845
        %v5081 = vcombine.low %v4858, %v4871
        %v5083 = vunpack.c.l.s4 1966171168
        %v5084 = vunpack.c.0.s8 %v5083
        %v5085 = vlaneseq
        %v5086 = vshrl.u32 %v5085, 7
        %v5087 = vsub.s32 %v5084, %v5086
        %v5088 = vrot.slane %v5078, %v5087
        %v5090 = vunpack.c.l.s4 1966171168
        %v5091 = vunpack.c.0.s8 %v5090
        %v5092 = vlaneseq
        %v5093 = vshrl.u32 %v5092, 7
        %v5094 = vsub.s32 %v5091, %v5093
        %v5095 = vrot.slane %v5079, %v5094
        %v5097 = vunpack.c.l.s4 1966171168
        %v5098 = vunpack.c.0.s8 %v5097
        %v5099 = vlaneseq
        %v5100 = vshrl.u32 %v5099, 7
        %v5101 = vsub.s32 %v5098, %v5100
        %v5102 = vrot.slane %v5080, %v5101
        %v5104 = vunpack.c.l.s4 1966171168
        %v5105 = vunpack.c.0.s8 %v5104
        %v5106 = vlaneseq
        %v5107 = vshrl.u32 %v5106, 7
        %v5108 = vsub.s32 %v5105, %v5107
        %v5109 = vrot.slane %v5081, %v5108
        %v5110 = vcombine.low %v5088, %v5095
        %v5111 = vcombine.low %v5102, %v5109
        %v5113 = vunpack.c.l.s4 1966171168
        %v5114 = vunpack.c.0.s8 %v5113
        %v5115 = vlaneseq
        %v5116 = vshrl.u32 %v5115, 7
        %v5117 = vsub.s32 %v5114, %v5116
        %v5118 = vrot.slane %v5110, %v5117
        %v5120 = vunpack.c.l.s4 1966171168
        %v5121 = vunpack.c.0.s8 %v5120
        %v5122 = vlaneseq
        %v5123 = vshrl.u32 %v5122, 7
        %v5124 = vsub.s32 %v5121, %v5123
        %v5125 = vrot.slane %v5111, %v5124
        %v5126 = vcombine.low %v5118, %v5125
        %v5127 = vcombine.low %v4884, %v4897
        %v5128 = vcombine.low %v4910, %v4923
        %v5129 = vcombine.low %v4936, %v4949
        %v5131 = vunpack.c.l.s4 1966171168
        %v5132 = vunpack.c.0.s8 %v5131
        %v5133 = vlaneseq
        %v5134 = vshrl.u32 %v5133, 7
        %v5135 = vsub.s32 %v5132, %v5134
        %v5136 = vrot.slane %v5127, %v5135
        %v5138 = vunpack.c.l.s4 1966171168
        %v5139 = vunpack.c.0.s8 %v5138
        %v5140 = vlaneseq
        %v5141 = vshrl.u32 %v5140, 7
        %v5142 = vsub.s32 %v5139, %v5141
        %v5143 = vrot.slane %v5128, %v5142
        %v5145 = vunpack.c.l.s4 1966171168
        %v5146 = vunpack.c.0.s8 %v5145
        %v5147 = vlaneseq
        %v5148 = vshrl.u32 %v5147, 7
        %v5149 = vsub.s32 %v5146, %v5148
        %v5150 = vrot.slane %v5129, %v5149
        %v5151 = vcombine.low %v5136, %v5143
        %v5153 = vunpack.c.l.s4 1966171168
        %v5154 = vunpack.c.0.s8 %v5153
        %v5155 = vlaneseq
        %v5156 = vshrl.u32 %v5155, 7
        %v5157 = vsub.s32 %v5154, %v5156
        %v5158 = vrot.slane %v5151, %v5157
        %v5160 = vunpack.c.l.s4 1966171168
        %v5161 = vunpack.c.0.s8 %v5160
        %v5162 = vlaneseq
        %v5163 = vshrl.u32 %v5162, 7
        %v5164 = vsub.s32 %v5161, %v5163
        %v5165 = vrot.slane %v5150, %v5164
        %v5166 = vcombine.low %v5158, %v5165
        %v5171 = vadd.f32 %v4556, %v5028
        %v5172 = vadd.f32 %v4557, %v5077
        %v5173 = vadd.f32 %v4558, %v5126
        %v5174 = vadd.f32 %v4559, %v5166
        %5175 = vst [vmem:[#allocation2] sm:$0xff] %v5171
        %5176 = vst [vmem:[#allocation2 + $0x8] sm:$0xff] %v5172
        %5177 = vst [vmem:[#allocation2 + $0x10] sm:$0xff] %v5173
        %v5178 = vlaneseq
        %vm5179 = vcmp.ge.s32.totalorder %v5178, 0
        %vm5180 = vcmp.lt.s32.totalorder %v5178, 768
        %vm5181 = vmand %vm5179, %vm5180
        %5182 = vst.msk [vmem:[#allocation2 + $0x18] sm:$0x3f] %vm5181, %v5174
        // Predicated region
        $region57: #{_lambda_.1} parent=47 // pred_check
          %p5183 = pneg %p321
        $region58: #{_lambda_.1} parent=47 // pred_check_branch
          %5185 = sbr.rel (%p5183) target = $region60
        $region59: #{_lambda_.1} parent=47 // pred_region
          %v5186 = vld [vmem:[#allocation2] sm:$0xff]
          %v5187 = vld [vmem:[#allocation2 + $0x8] sm:$0xff]
          %v5188 = vld [vmem:[#allocation2 + $0x10] sm:$0xff]
          %v5189 = vld [vmem:[#allocation2 + $0x18] sm:$0x3f]
          %v5190 = vmul.f32 %v5186, 0.015625
          %v5191 = vmul.f32 %v5187, 0.015625
          %v5192 = vmul.f32 %v5188, 0.015625
          %v5193 = vmul.f32 %v5189, 0.015625
          %v5196 = vlaneseq
          %v5197 = vshrl.u32 %v5196, 7
          %v5198 = vsub.s32 0, %v5197
          %v5199 = vrot.slane %v5190, %v5198
          %v5200 = vlaneseq
          %v5201 = vshrl.u32 %v5200, 7
          %v5202 = vsub.s32 1, %v5201
          %v5203 = vrot.slane %v5190, %v5202
          %v5204 = vlaneseq
          %v5205 = vshrl.u32 %v5204, 7
          %v5206 = vsub.s32 2, %v5205
          %v5207 = vrot.slane %v5190, %v5206
          %v5208 = vlaneseq
          %v5209 = vshrl.u32 %v5208, 7
          %v5210 = vsub.s32 3, %v5209
          %v5211 = vrot.slane %v5190, %v5210
          %v5212 = vlaneseq
          %v5213 = vshrl.u32 %v5212, 7
          %v5214 = vsub.s32 4, %v5213
          %v5215 = vrot.slane %v5190, %v5214
          %v5216 = vlaneseq
          %v5217 = vshrl.u32 %v5216, 7
          %v5218 = vsub.s32 5, %v5217
          %v5219 = vrot.slane %v5190, %v5218
          %v5220 = vlaneseq
          %v5221 = vshrl.u32 %v5220, 7
          %v5222 = vsub.s32 6, %v5221
          %v5223 = vrot.slane %v5190, %v5222
          %v5224 = vlaneseq
          %v5225 = vshrl.u32 %v5224, 7
          %v5226 = vsub.s32 7, %v5225
          %v5227 = vrot.slane %v5190, %v5226
          %v5228 = vlaneseq
          %v5229 = vshrl.u32 %v5228, 7
          %v5230 = vsub.s32 0, %v5229
          %v5231 = vrot.slane %v5191, %v5230
          %v5232 = vlaneseq
          %v5233 = vshrl.u32 %v5232, 7
          %v5234 = vsub.s32 1, %v5233
          %v5235 = vrot.slane %v5191, %v5234
          %v5246 = vpack.c.bf16 %v5199, %v5199
          %v5247 = vpack.c.bf16 %v5203, %v5203
          %v5248 = vpack.c.bf16 %v5207, %v5207
          %v5249 = vpack.c.bf16 %v5211, %v5211
          %v5250 = vpack.c.bf16 %v5215, %v5215
          %v5251 = vpack.c.bf16 %v5219, %v5219
          %v5252 = vpack.c.bf16 %v5223, %v5223
          %v5253 = vpack.c.bf16 %v5227, %v5227
          %v5254 = vpack.c.bf16 %v5231, %v5231
          %v5255 = vpack.c.bf16 %v5235, %v5235
          %v5256 = vld [vmem:[%s5] sm:$0xf]
          %v5257 = vld [vmem:[%s5 + $0x4] sm:$0xf]
          %v5258 = vld [vmem:[%s5 + $0x8] sm:$0xf]
          %v5259 = vld [vmem:[%s5 + $0xc] sm:$0xf]
          %v5260 = vld [vmem:[%s5 + $0x10] sm:$0xf]
          %v5261 = vld [vmem:[%s5 + $0x14] sm:$0xf]
          %v5262 = vld [vmem:[%s5 + $0x18] sm:$0xf]
          %v5263 = vld [vmem:[%s5 + $0x1c] sm:$0xf]
          %v5264 = vld [vmem:[%s5 + $0x20] sm:$0xf]
          %v5265 = vld [vmem:[%s5 + $0x24] sm:$0xf]
          %v5266 = vld [vmem:[%s5 + $0x28] sm:$0xf]
          %v5267 = vld [vmem:[%s5 + $0x2c] sm:$0xf]
          %v5268 = vld [vmem:[%s5 + $0x30] sm:$0xf]
          %v5269 = vld [vmem:[%s5 + $0x34] sm:$0xf]
          %v5270 = vld [vmem:[%s5 + $0x38] sm:$0xf]
          %v5271 = vld [vmem:[%s5 + $0x3c] sm:$0xf]
          %v5272 = vld [vmem:[%s5 + $0x40] sm:$0xf]
          %v5273 = vld [vmem:[%s5 + $0x44] sm:$0xf]
          %v5274 = vld [vmem:[%s5 + $0x48] sm:$0xf]
          %v5275 = vld [vmem:[%s5 + $0x4c] sm:$0xf]
          %v5276 = vld [vmem:[%s5 + $0x50] sm:$0xf]
          %v5277 = vld [vmem:[%s5 + $0x54] sm:$0xf]
          %v5278 = vld [vmem:[%s5 + $0x58] sm:$0xf]
          %v5279 = vld [vmem:[%s5 + $0x5c] sm:$0xf]
          %v5280 = vld [vmem:[%s5 + $0x60] sm:$0xf]
          %v5281 = vld [vmem:[%s5 + $0x64] sm:$0xf]
          %v5282 = vld [vmem:[%s5 + $0x68] sm:$0xf]
          %v5283 = vld [vmem:[%s5 + $0x6c] sm:$0xf]
          %v5284 = vld [vmem:[%s5 + $0x70] sm:$0xf]
          %v5285 = vld [vmem:[%s5 + $0x74] sm:$0xf]
          %v5286 = vld [vmem:[%s5 + $0x78] sm:$0xf]
          %v5287 = vld [vmem:[%s5 + $0x7c] sm:$0xf]
          %v5288 = vld [vmem:[%s5 + $0x80] sm:$0xf]
          %v5289 = vld [vmem:[%s5 + $0x84] sm:$0xf]
          %v5290 = vld [vmem:[%s5 + $0x88] sm:$0xf]
          %v5291 = vld [vmem:[%s5 + $0x8c] sm:$0xf]
          %v5292 = vld [vmem:[%s5 + $0x90] sm:$0xf]
          %v5293 = vld [vmem:[%s5 + $0x94] sm:$0xf]
          %v5294 = vld [vmem:[%s5 + $0x98] sm:$0xf]
          %v5295 = vld [vmem:[%s5 + $0x9c] sm:$0xf]
          %v5296 = vld [vmem:[%s5 + $0xa0] sm:$0xf]
          %v5297 = vld [vmem:[%s5 + $0xa4] sm:$0xf]
          %v5298 = vld [vmem:[%s5 + $0xa8] sm:$0xf]
          %v5299 = vld [vmem:[%s5 + $0xac] sm:$0xf]
          %v5300 = vld [vmem:[%s5 + $0xb0] sm:$0xf]
          %v5301 = vld [vmem:[%s5 + $0xb4] sm:$0xf]
          %v5302 = vld [vmem:[%s5 + $0xb8] sm:$0xf]
          %v5303 = vld [vmem:[%s5 + $0xbc] sm:$0xf]
          %v5304 = vld [vmem:[%s5 + $0xc0] sm:$0xf]
          %v5305 = vld [vmem:[%s5 + $0xc4] sm:$0xf]
          %v5306 = vld [vmem:[%s5 + $0xc8] sm:$0xf]
          %v5307 = vld [vmem:[%s5 + $0xcc] sm:$0xf]
          %v5308 = vld [vmem:[%s5 + $0xd0] sm:$0xf]
          %v5309 = vld [vmem:[%s5 + $0xd4] sm:$0xf]
          %v5310 = vld [vmem:[%s5 + $0xd8] sm:$0xf]
          %v5311 = vld [vmem:[%s5 + $0xdc] sm:$0xf]
          %v5312 = vld [vmem:[%s5 + $0xe0] sm:$0xf]
          %v5313 = vld [vmem:[%s5 + $0xe4] sm:$0xf]
          %v5314 = vld [vmem:[%s5 + $0xe8] sm:$0xf]
          %v5315 = vld [vmem:[%s5 + $0xec] sm:$0xf]
          %v5316 = vld [vmem:[%s5 + $0xf0] sm:$0xf]
          %v5317 = vld [vmem:[%s5 + $0xf4] sm:$0xf]
          %v5318 = vld [vmem:[%s5 + $0xf8] sm:$0xf]
          %v5319 = vld [vmem:[%s5 + $0xfc] sm:$0xf]
          %v5320 = vld [vmem:[%s5 + $0x100] sm:$0xf]
          %v5321 = vld [vmem:[%s5 + $0x104] sm:$0xf]
          %v5322 = vld [vmem:[%s5 + $0x108] sm:$0xf]
          %v5323 = vld [vmem:[%s5 + $0x10c] sm:$0xf]
          %v5324 = vld [vmem:[%s5 + $0x110] sm:$0xf]
          %v5325 = vld [vmem:[%s5 + $0x114] sm:$0xf]
          %v5326 = vld [vmem:[%s5 + $0x118] sm:$0xf]
          %v5327 = vld [vmem:[%s5 + $0x11c] sm:$0xf]
          %v5328 = vld [vmem:[%s5 + $0x120] sm:$0xf]
          %v5329 = vld [vmem:[%s5 + $0x124] sm:$0xf]
          %v5330 = vld [vmem:[%s5 + $0x128] sm:$0xf]
          %v5331 = vld [vmem:[%s5 + $0x12c] sm:$0xf]
          %v5332 = vld [vmem:[%s5 + $0x130] sm:$0xf]
          %v5333 = vld [vmem:[%s5 + $0x134] sm:$0xf]
          %v5334 = vld [vmem:[%s5 + $0x138] sm:$0xf]
          %v5335 = vld [vmem:[%s5 + $0x13c] sm:$0xf]
          %v5336 = vld [vmem:[%s5 + $0x140] sm:$0xf]
          %v5337 = vld [vmem:[%s5 + $0x144] sm:$0xf]
          %v5338 = vld [vmem:[%s5 + $0x148] sm:$0xf]
          %v5339 = vld [vmem:[%s5 + $0x14c] sm:$0xf]
          %v5340 = vld [vmem:[%s5 + $0x150] sm:$0xf]
          %v5341 = vld [vmem:[%s5 + $0x154] sm:$0xf]
          %v5342 = vld [vmem:[%s5 + $0x158] sm:$0xf]
          %v5343 = vld [vmem:[%s5 + $0x15c] sm:$0xf]
          %v5344 = vld [vmem:[%s5 + $0x160] sm:$0xf]
          %v5345 = vld [vmem:[%s5 + $0x164] sm:$0xf]
          %v5346 = vld [vmem:[%s5 + $0x168] sm:$0xf]
          %v5347 = vld [vmem:[%s5 + $0x16c] sm:$0xf]
          %v5348 = vld [vmem:[%s5 + $0x170] sm:$0xf]
          %v5349 = vld [vmem:[%s5 + $0x174] sm:$0xf]
          %v5350 = vld [vmem:[%s5 + $0x178] sm:$0xf]
          %v5351 = vld [vmem:[%s5 + $0x17c] sm:$0xf]
          %v5352 = vld [vmem:[%s5 + $0x180] sm:$0xf]
          %v5353 = vld [vmem:[%s5 + $0x184] sm:$0xf]
          %v5354 = vld [vmem:[%s5 + $0x188] sm:$0xf]
          %v5355 = vld [vmem:[%s5 + $0x18c] sm:$0xf]
          %v5356 = vld [vmem:[%s5 + $0x190] sm:$0xf]
          %v5357 = vld [vmem:[%s5 + $0x194] sm:$0xf]
          %v5358 = vld [vmem:[%s5 + $0x198] sm:$0xf]
          %v5359 = vld [vmem:[%s5 + $0x19c] sm:$0xf]
          %v5360 = vld [vmem:[%s5 + $0x1a0] sm:$0xf]
          %v5361 = vld [vmem:[%s5 + $0x1a4] sm:$0xf]
          %v5362 = vld [vmem:[%s5 + $0x1a8] sm:$0xf]
          %v5363 = vld [vmem:[%s5 + $0x1ac] sm:$0xf]
          %v5364 = vld [vmem:[%s5 + $0x1b0] sm:$0xf]
          %v5365 = vld [vmem:[%s5 + $0x1b4] sm:$0xf]
          %v5366 = vld [vmem:[%s5 + $0x1b8] sm:$0xf]
          %v5367 = vld [vmem:[%s5 + $0x1bc] sm:$0xf]
          %v5368 = vld [vmem:[%s5 + $0x1c0] sm:$0xf]
          %v5369 = vld [vmem:[%s5 + $0x1c4] sm:$0xf]
          %v5370 = vld [vmem:[%s5 + $0x1c8] sm:$0xf]
          %v5371 = vld [vmem:[%s5 + $0x1cc] sm:$0xf]
          %v5372 = vld [vmem:[%s5 + $0x1d0] sm:$0xf]
          %v5373 = vld [vmem:[%s5 + $0x1d4] sm:$0xf]
          %v5374 = vld [vmem:[%s5 + $0x1d8] sm:$0xf]
          %v5375 = vld [vmem:[%s5 + $0x1dc] sm:$0xf]
          %v5376 = vld [vmem:[%s5 + $0x1e0] sm:$0xf]
          %v5377 = vld [vmem:[%s5 + $0x1e4] sm:$0xf]
          %v5378 = vld [vmem:[%s5 + $0x1e8] sm:$0xf]
          %v5379 = vld [vmem:[%s5 + $0x1ec] sm:$0xf]
          %v5380 = vld [vmem:[%s5 + $0x1f0] sm:$0xf]
          %v5381 = vld [vmem:[%s5 + $0x1f4] sm:$0xf]
          %v5382 = vld [vmem:[%s5 + $0x1f8] sm:$0xf]
          %v5383 = vld [vmem:[%s5 + $0x1fc] sm:$0xf]
          %v5384 = vld [vmem:[%s5 + $0x200] sm:$0xf]
          %v5385 = vld [vmem:[%s5 + $0x204] sm:$0xf]
          %v5386 = vld [vmem:[%s5 + $0x208] sm:$0xf]
          %v5387 = vld [vmem:[%s5 + $0x20c] sm:$0xf]
          %v5388 = vld [vmem:[%s5 + $0x210] sm:$0xf]
          %v5389 = vld [vmem:[%s5 + $0x214] sm:$0xf]
          %v5390 = vld [vmem:[%s5 + $0x218] sm:$0xf]
          %v5391 = vld [vmem:[%s5 + $0x21c] sm:$0xf]
          %v5392 = vld [vmem:[%s5 + $0x220] sm:$0xf]
          %v5393 = vld [vmem:[%s5 + $0x224] sm:$0xf]
          %v5394 = vld [vmem:[%s5 + $0x228] sm:$0xf]
          %v5395 = vld [vmem:[%s5 + $0x22c] sm:$0xf]
          %v5396 = vld [vmem:[%s5 + $0x230] sm:$0xf]
          %v5397 = vld [vmem:[%s5 + $0x234] sm:$0xf]
          %v5398 = vld [vmem:[%s5 + $0x238] sm:$0xf]
          %v5399 = vld [vmem:[%s5 + $0x23c] sm:$0xf]
          %v5400 = vld [vmem:[%s5 + $0x240] sm:$0xf]
          %v5401 = vld [vmem:[%s5 + $0x244] sm:$0xf]
          %v5402 = vld [vmem:[%s5 + $0x248] sm:$0xf]
          %v5403 = vld [vmem:[%s5 + $0x24c] sm:$0xf]
          %v5404 = vld [vmem:[%s5 + $0x250] sm:$0xf]
          %v5405 = vld [vmem:[%s5 + $0x254] sm:$0xf]
          %v5406 = vld [vmem:[%s5 + $0x258] sm:$0xf]
          %v5407 = vld [vmem:[%s5 + $0x25c] sm:$0xf]
          %v5408 = vld [vmem:[%s5 + $0x260] sm:$0xf]
          %v5409 = vld [vmem:[%s5 + $0x264] sm:$0xf]
          %v5410 = vld [vmem:[%s5 + $0x268] sm:$0xf]
          %v5411 = vld [vmem:[%s5 + $0x26c] sm:$0xf]
          %v5412 = vld [vmem:[%s5 + $0x270] sm:$0xf]
          %v5413 = vld [vmem:[%s5 + $0x274] sm:$0xf]
          %v5414 = vld [vmem:[%s5 + $0x278] sm:$0xf]
          %v5415 = vld [vmem:[%s5 + $0x27c] sm:$0xf]
          %v5416 = vld [vmem:[%s6] sm:$0x1]
          %v5577 = vunpack.c.l.b16 %v5256
          %v5578 = vunpack.c.l.b16 %v5257
          %v5579 = vunpack.c.l.b16 %v5258
          %v5580 = vunpack.c.l.b16 %v5259
          %v5581 = vunpack.c.l.b16 %v5260
          %v5582 = vunpack.c.l.b16 %v5261
          %v5583 = vunpack.c.l.b16 %v5262
          %v5584 = vunpack.c.l.b16 %v5263
          %v5585 = vunpack.c.l.b16 %v5264
          %v5586 = vunpack.c.l.b16 %v5265
          %v5587 = vunpack.c.l.b16 %v5266
          %v5588 = vunpack.c.l.b16 %v5267
          %v5589 = vunpack.c.l.b16 %v5268
          %v5590 = vunpack.c.l.b16 %v5269
          %v5591 = vunpack.c.l.b16 %v5270
          %v5592 = vunpack.c.l.b16 %v5271
          %v5593 = vunpack.c.l.b16 %v5272
          %v5594 = vunpack.c.l.b16 %v5273
          %v5595 = vunpack.c.l.b16 %v5274
          %v5596 = vunpack.c.l.b16 %v5275
          %v5597 = vunpack.c.l.b16 %v5276
          %v5598 = vunpack.c.l.b16 %v5277
          %v5599 = vunpack.c.l.b16 %v5278
          %v5600 = vunpack.c.l.b16 %v5279
          %v5601 = vunpack.c.l.b16 %v5280
          %v5602 = vunpack.c.l.b16 %v5281
          %v5603 = vunpack.c.l.b16 %v5282
          %v5604 = vunpack.c.l.b16 %v5283
          %v5605 = vunpack.c.l.b16 %v5284
          %v5606 = vunpack.c.l.b16 %v5285
          %v5607 = vunpack.c.l.b16 %v5286
          %v5608 = vunpack.c.l.b16 %v5287
          %v5609 = vunpack.c.l.b16 %v5288
          %v5610 = vunpack.c.l.b16 %v5289
          %v5611 = vunpack.c.l.b16 %v5290
          %v5612 = vunpack.c.l.b16 %v5291
          %v5613 = vunpack.c.l.b16 %v5292
          %v5614 = vunpack.c.l.b16 %v5293
          %v5615 = vunpack.c.l.b16 %v5294
          %v5616 = vunpack.c.l.b16 %v5295
          %v5617 = vunpack.c.l.b16 %v5296
          %v5618 = vunpack.c.l.b16 %v5297
          %v5619 = vunpack.c.l.b16 %v5298
          %v5620 = vunpack.c.l.b16 %v5299
          %v5621 = vunpack.c.l.b16 %v5300
          %v5622 = vunpack.c.l.b16 %v5301
          %v5623 = vunpack.c.l.b16 %v5302
          %v5624 = vunpack.c.l.b16 %v5303
          %v5625 = vunpack.c.l.b16 %v5304
          %v5626 = vunpack.c.l.b16 %v5305
          %v5627 = vunpack.c.l.b16 %v5306
          %v5628 = vunpack.c.l.b16 %v5307
          %v5629 = vunpack.c.l.b16 %v5308
          %v5630 = vunpack.c.l.b16 %v5309
          %v5631 = vunpack.c.l.b16 %v5310
          %v5632 = vunpack.c.l.b16 %v5311
          %v5633 = vunpack.c.l.b16 %v5312
          %v5634 = vunpack.c.l.b16 %v5313
          %v5635 = vunpack.c.l.b16 %v5314
          %v5636 = vunpack.c.l.b16 %v5315
          %v5637 = vunpack.c.l.b16 %v5316
          %v5638 = vunpack.c.l.b16 %v5317
          %v5639 = vunpack.c.l.b16 %v5318
          %v5640 = vunpack.c.l.b16 %v5319
          %v5641 = vunpack.c.l.b16 %v5320
          %v5642 = vunpack.c.l.b16 %v5321
          %v5643 = vunpack.c.l.b16 %v5322
          %v5644 = vunpack.c.l.b16 %v5323
          %v5645 = vunpack.c.l.b16 %v5324
          %v5646 = vunpack.c.l.b16 %v5325
          %v5647 = vunpack.c.l.b16 %v5326
          %v5648 = vunpack.c.l.b16 %v5327
          %v5649 = vunpack.c.l.b16 %v5328
          %v5650 = vunpack.c.l.b16 %v5329
          %v5651 = vunpack.c.l.b16 %v5330
          %v5652 = vunpack.c.l.b16 %v5331
          %v5653 = vunpack.c.l.b16 %v5332
          %v5654 = vunpack.c.l.b16 %v5333
          %v5655 = vunpack.c.l.b16 %v5334
          %v5656 = vunpack.c.l.b16 %v5335
          %v5657 = vunpack.c.l.b16 %v5336
          %v5658 = vunpack.c.l.b16 %v5337
          %v5659 = vunpack.c.l.b16 %v5338
          %v5660 = vunpack.c.l.b16 %v5339
          %v5661 = vunpack.c.l.b16 %v5340
          %v5662 = vunpack.c.l.b16 %v5341
          %v5663 = vunpack.c.l.b16 %v5342
          %v5664 = vunpack.c.l.b16 %v5343
          %v5665 = vunpack.c.l.b16 %v5344
          %v5666 = vunpack.c.l.b16 %v5345
          %v5667 = vunpack.c.l.b16 %v5346
          %v5668 = vunpack.c.l.b16 %v5347
          %v5669 = vunpack.c.l.b16 %v5348
          %v5670 = vunpack.c.l.b16 %v5349
          %v5671 = vunpack.c.l.b16 %v5350
          %v5672 = vunpack.c.l.b16 %v5351
          %v5673 = vunpack.c.l.b16 %v5352
          %v5674 = vunpack.c.l.b16 %v5353
          %v5675 = vunpack.c.l.b16 %v5354
          %v5676 = vunpack.c.l.b16 %v5355
          %v5677 = vunpack.c.l.b16 %v5356
          %v5678 = vunpack.c.l.b16 %v5357
          %v5679 = vunpack.c.l.b16 %v5358
          %v5680 = vunpack.c.l.b16 %v5359
          %v5681 = vunpack.c.l.b16 %v5360
          %v5682 = vunpack.c.l.b16 %v5361
          %v5683 = vunpack.c.l.b16 %v5362
          %v5684 = vunpack.c.l.b16 %v5363
          %v5685 = vunpack.c.l.b16 %v5364
          %v5686 = vunpack.c.l.b16 %v5365
          %v5687 = vunpack.c.l.b16 %v5366
          %v5688 = vunpack.c.l.b16 %v5367
          %v5689 = vunpack.c.l.b16 %v5368
          %v5690 = vunpack.c.l.b16 %v5369
          %v5691 = vunpack.c.l.b16 %v5370
          %v5692 = vunpack.c.l.b16 %v5371
          %v5693 = vunpack.c.l.b16 %v5372
          %v5694 = vunpack.c.l.b16 %v5373
          %v5695 = vunpack.c.l.b16 %v5374
          %v5696 = vunpack.c.l.b16 %v5375
          %v5697 = vunpack.c.l.b16 %v5376
          %v5698 = vunpack.c.l.b16 %v5377
          %v5699 = vunpack.c.l.b16 %v5378
          %v5700 = vunpack.c.l.b16 %v5379
          %v5701 = vunpack.c.l.b16 %v5380
          %v5702 = vunpack.c.l.b16 %v5381
          %v5703 = vunpack.c.l.b16 %v5382
          %v5704 = vunpack.c.l.b16 %v5383
          %v5705 = vunpack.c.l.b16 %v5384
          %v5706 = vunpack.c.l.b16 %v5385
          %v5707 = vunpack.c.l.b16 %v5386
          %v5708 = vunpack.c.l.b16 %v5387
          %v5709 = vunpack.c.l.b16 %v5388
          %v5710 = vunpack.c.l.b16 %v5389
          %v5711 = vunpack.c.l.b16 %v5390
          %v5712 = vunpack.c.l.b16 %v5391
          %v5713 = vunpack.c.l.b16 %v5392
          %v5714 = vunpack.c.l.b16 %v5393
          %v5715 = vunpack.c.l.b16 %v5394
          %v5716 = vunpack.c.l.b16 %v5395
          %v5717 = vunpack.c.l.b16 %v5396
          %v5718 = vunpack.c.l.b16 %v5397
          %v5719 = vunpack.c.l.b16 %v5398
          %v5720 = vunpack.c.l.b16 %v5399
          %v5721 = vunpack.c.l.b16 %v5400
          %v5722 = vunpack.c.l.b16 %v5401
          %v5723 = vunpack.c.l.b16 %v5402
          %v5724 = vunpack.c.l.b16 %v5403
          %v5725 = vunpack.c.l.b16 %v5404
          %v5726 = vunpack.c.l.b16 %v5405
          %v5727 = vunpack.c.l.b16 %v5406
          %v5728 = vunpack.c.l.b16 %v5407
          %v5729 = vunpack.c.l.b16 %v5408
          %v5730 = vunpack.c.l.b16 %v5409
          %v5731 = vunpack.c.l.b16 %v5410
          %v5732 = vunpack.c.l.b16 %v5411
          %v5733 = vunpack.c.l.b16 %v5412
          %v5734 = vunpack.c.l.b16 %v5413
          %v5735 = vunpack.c.l.b16 %v5414
          %v5736 = vunpack.c.l.b16 %v5415
          %v5737 = vpack.c.b16 %v5578, %v5577
          %v5738 = vpack.c.b16 %v5580, %v5579
          %v5739 = vpack.c.b16 %v5582, %v5581
          %v5740 = vpack.c.b16 %v5584, %v5583
          %v5741 = vpack.c.b16 %v5586, %v5585
          %v5742 = vpack.c.b16 %v5588, %v5587
          %v5743 = vpack.c.b16 %v5590, %v5589
          %v5744 = vpack.c.b16 %v5592, %v5591
          %v5745 = vpack.c.b16 %v5594, %v5593
          %v5746 = vpack.c.b16 %v5596, %v5595
          %v5747 = vpack.c.b16 %v5598, %v5597
          %v5748 = vpack.c.b16 %v5600, %v5599
          %v5749 = vpack.c.b16 %v5602, %v5601
          %v5750 = vpack.c.b16 %v5604, %v5603
          %v5751 = vpack.c.b16 %v5606, %v5605
          %v5752 = vpack.c.b16 %v5608, %v5607
          %v5753 = vpack.c.b16 %v5610, %v5609
          %v5754 = vpack.c.b16 %v5612, %v5611
          %v5755 = vpack.c.b16 %v5614, %v5613
          %v5756 = vpack.c.b16 %v5616, %v5615
          %v5757 = vpack.c.b16 %v5618, %v5617
          %v5758 = vpack.c.b16 %v5620, %v5619
          %v5759 = vpack.c.b16 %v5622, %v5621
          %v5760 = vpack.c.b16 %v5624, %v5623
          %v5761 = vpack.c.b16 %v5626, %v5625
          %v5762 = vpack.c.b16 %v5628, %v5627
          %v5763 = vpack.c.b16 %v5630, %v5629
          %v5764 = vpack.c.b16 %v5632, %v5631
          %v5765 = vpack.c.b16 %v5634, %v5633
          %v5766 = vpack.c.b16 %v5636, %v5635
          %v5767 = vpack.c.b16 %v5638, %v5637
          %v5768 = vpack.c.b16 %v5640, %v5639
          %v5769 = vpack.c.b16 %v5642, %v5641
          %v5770 = vpack.c.b16 %v5644, %v5643
          %v5771 = vpack.c.b16 %v5646, %v5645
          %v5772 = vpack.c.b16 %v5648, %v5647
          %v5773 = vpack.c.b16 %v5650, %v5649
          %v5774 = vpack.c.b16 %v5652, %v5651
          %v5775 = vpack.c.b16 %v5654, %v5653
          %v5776 = vpack.c.b16 %v5656, %v5655
          %v5777 = vpack.c.b16 %v5658, %v5657
          %v5778 = vpack.c.b16 %v5660, %v5659
          %v5779 = vpack.c.b16 %v5662, %v5661
          %v5780 = vpack.c.b16 %v5664, %v5663
          %v5781 = vpack.c.b16 %v5666, %v5665
          %v5782 = vpack.c.b16 %v5668, %v5667
          %v5783 = vpack.c.b16 %v5670, %v5669
          %v5784 = vpack.c.b16 %v5672, %v5671
          %v5785 = vpack.c.b16 %v5674, %v5673
          %v5786 = vpack.c.b16 %v5676, %v5675
          %v5787 = vpack.c.b16 %v5678, %v5677
          %v5788 = vpack.c.b16 %v5680, %v5679
          %v5789 = vpack.c.b16 %v5682, %v5681
          %v5790 = vpack.c.b16 %v5684, %v5683
          %v5791 = vpack.c.b16 %v5686, %v5685
          %v5792 = vpack.c.b16 %v5688, %v5687
          %v5793 = vpack.c.b16 %v5690, %v5689
          %v5794 = vpack.c.b16 %v5692, %v5691
          %v5795 = vpack.c.b16 %v5694, %v5693
          %v5796 = vpack.c.b16 %v5696, %v5695
          %v5797 = vpack.c.b16 %v5698, %v5697
          %v5798 = vpack.c.b16 %v5700, %v5699
          %v5799 = vpack.c.b16 %v5702, %v5701
          %v5800 = vpack.c.b16 %v5704, %v5703
          %v5801 = vpack.c.b16 %v5706, %v5705
          %v5802 = vpack.c.b16 %v5708, %v5707
          %v5803 = vpack.c.b16 %v5710, %v5709
          %v5804 = vpack.c.b16 %v5712, %v5711
          %v5805 = vpack.c.b16 %v5714, %v5713
          %v5806 = vpack.c.b16 %v5716, %v5715
          %v5807 = vpack.c.b16 %v5718, %v5717
          %v5808 = vpack.c.b16 %v5720, %v5719
          %v5809 = vpack.c.b16 %v5722, %v5721
          %v5810 = vpack.c.b16 %v5724, %v5723
          %v5811 = vpack.c.b16 %v5726, %v5725
          %v5812 = vpack.c.b16 %v5728, %v5727
          %v5813 = vpack.c.b16 %v5730, %v5729
          %v5814 = vpack.c.b16 %v5732, %v5731
          %v5815 = vpack.c.b16 %v5734, %v5733
          %v5816 = vpack.c.b16 %v5736, %v5735
          %5897 = vmatprep.subr.bf16.mxu0 0
          %5898 = vmatpush1.bf16.msra.mxu0 %v5744
          %5899 = vmatprep.subr.bf16.mxu0 0
          %5900 = vmatpush1.bf16.msra.mxu0 %v5743
          %5901 = vmatprep.subr.bf16.mxu0 0
          %5902 = vmatpush1.bf16.msra.mxu0 %v5742
          %5903 = vmatprep.subr.bf16.mxu0 0
          %5904 = vmatpush1.bf16.msra.mxu0 %v5741
          %5905 = vmatprep.subr.bf16.mxu0 0
          %5906 = vmatpush1.bf16.msra.mxu0 %v5740
          %5907 = vmatprep.subr.bf16.mxu0 0
          %5908 = vmatpush1.bf16.msra.mxu0 %v5739
          %5909 = vmatprep.subr.bf16.mxu0 0
          %5910 = vmatpush1.bf16.msra.mxu0 %v5738
          %5911 = vmatprep.subr.bf16.mxu0 0
          %5912 = vmatpush1.bf16.msra.mxu0 %v5737
          %5913 = vmatprep.subr.bf16.mxu0 0
          %5914 = vmatpush2.bf16.msra.mxu0 %v5752
          %5915 = vmatprep.subr.bf16.mxu0 0
          %5916 = vmatpush2.bf16.msra.mxu0 %v5751
          %5917 = vmatprep.subr.bf16.mxu0 0
          %5918 = vmatpush2.bf16.msra.mxu0 %v5750
          %5919 = vmatprep.subr.bf16.mxu0 0
          %5920 = vmatpush2.bf16.msra.mxu0 %v5749
          %5921 = vmatprep.subr.bf16.mxu0 0
          %5922 = vmatpush2.bf16.msra.mxu0 %v5748
          %5923 = vmatprep.subr.bf16.mxu0 0
          %5924 = vmatpush2.bf16.msra.mxu0 %v5747
          %5925 = vmatprep.subr.bf16.mxu0 0
          %5926 = vmatpush2.bf16.msra.mxu0 %v5746
          %5927 = vmatprep.subr.bf16.mxu0 0
          %5928 = vmatpush2.bf16.msra.mxu0 %v5745
          %5929 = vmatprep.mubr.bf16.mxu0 %v5247
          %5930 = vmatmul.mubr.bf16.gmra.mxu0 %v5246
          %v5931 = vpop.f32.mrf.mxu0
          %v5932 = vadd.f32 %v5416, %v5931
          %v5933 = vpop.f32.mrf.mxu0
          %v5934 = vpop.f32.mrf.mxu0
          %v5935 = vpop.f32.mrf.mxu0
          %5936 = vdwg.mxu0
          %5937 = vmatprep.subr.bf16.mxu0 0
          %5938 = vmatpush1.bf16.msra.mxu0 %v5760
          %5939 = vmatprep.subr.bf16.mxu0 0
          %5940 = vmatpush1.bf16.msra.mxu0 %v5759
          %5941 = vmatprep.subr.bf16.mxu0 0
          %5942 = vmatpush1.bf16.msra.mxu0 %v5758
          %5943 = vmatprep.subr.bf16.mxu0 0
          %5944 = vmatpush1.bf16.msra.mxu0 %v5757
          %5945 = vmatprep.subr.bf16.mxu0 0
          %5946 = vmatpush1.bf16.msra.mxu0 %v5756
          %5947 = vmatprep.subr.bf16.mxu0 0
          %5948 = vmatpush1.bf16.msra.mxu0 %v5755
          %5949 = vmatprep.subr.bf16.mxu0 0
          %5950 = vmatpush1.bf16.msra.mxu0 %v5754
          %5951 = vmatprep.subr.bf16.mxu0 0
          %5952 = vmatpush1.bf16.msra.mxu0 %v5753
          %5953 = vmatprep.subr.bf16.mxu0 0
          %5954 = vmatpush2.bf16.msra.mxu0 %v5768
          %5955 = vmatprep.subr.bf16.mxu0 0
          %5956 = vmatpush2.bf16.msra.mxu0 %v5767
          %5957 = vmatprep.subr.bf16.mxu0 0
          %5958 = vmatpush2.bf16.msra.mxu0 %v5766
          %5959 = vmatprep.subr.bf16.mxu0 0
          %5960 = vmatpush2.bf16.msra.mxu0 %v5765
          %5961 = vmatprep.subr.bf16.mxu0 0
          %5962 = vmatpush2.bf16.msra.mxu0 %v5764
          %5963 = vmatprep.subr.bf16.mxu0 0
          %5964 = vmatpush2.bf16.msra.mxu0 %v5763
          %5965 = vmatprep.subr.bf16.mxu0 0
          %5966 = vmatpush2.bf16.msra.mxu0 %v5762
          %5967 = vmatprep.subr.bf16.mxu0 0
          %5968 = vmatpush2.bf16.msra.mxu0 %v5761
          %5969 = vmatprep.mubr.bf16.mxu0 %v5249
          %5970 = vmatmul.mubr.bf16.gmra.mxu0 %v5248
          %v5971 = vpop.f32.mrf.mxu0
          %v5972 = vadd.f32 %v5932, %v5971
          %v5973 = vpop.f32.mrf.mxu0
          %v5974 = vpop.f32.mrf.mxu0
          %v5975 = vpop.f32.mrf.mxu0
          %5976 = vdwg.mxu0
          %5977 = vmatprep.subr.bf16.mxu0 0
          %5978 = vmatpush1.bf16.msra.mxu0 %v5776
          %5979 = vmatprep.subr.bf16.mxu0 0
          %5980 = vmatpush1.bf16.msra.mxu0 %v5775
          %5981 = vmatprep.subr.bf16.mxu0 0
          %5982 = vmatpush1.bf16.msra.mxu0 %v5774
          %5983 = vmatprep.subr.bf16.mxu0 0
          %5984 = vmatpush1.bf16.msra.mxu0 %v5773
          %5985 = vmatprep.subr.bf16.mxu0 0
          %5986 = vmatpush1.bf16.msra.mxu0 %v5772
          %5987 = vmatprep.subr.bf16.mxu0 0
          %5988 = vmatpush1.bf16.msra.mxu0 %v5771
          %5989 = vmatprep.subr.bf16.mxu0 0
          %5990 = vmatpush1.bf16.msra.mxu0 %v5770
          %5991 = vmatprep.subr.bf16.mxu0 0
          %5992 = vmatpush1.bf16.msra.mxu0 %v5769
          %5993 = vmatprep.subr.bf16.mxu0 0
          %5994 = vmatpush2.bf16.msra.mxu0 %v5784
          %5995 = vmatprep.subr.bf16.mxu0 0
          %5996 = vmatpush2.bf16.msra.mxu0 %v5783
          %5997 = vmatprep.subr.bf16.mxu0 0
          %5998 = vmatpush2.bf16.msra.mxu0 %v5782
          %5999 = vmatprep.subr.bf16.mxu0 0
          %6000 = vmatpush2.bf16.msra.mxu0 %v5781
          %6001 = vmatprep.subr.bf16.mxu0 0
          %6002 = vmatpush2.bf16.msra.mxu0 %v5780
          %6003 = vmatprep.subr.bf16.mxu0 0
          %6004 = vmatpush2.bf16.msra.mxu0 %v5779
          %6005 = vmatprep.subr.bf16.mxu0 0
          %6006 = vmatpush2.bf16.msra.mxu0 %v5778
          %6007 = vmatprep.subr.bf16.mxu0 0
          %6008 = vmatpush2.bf16.msra.mxu0 %v5777
          %6009 = vmatprep.mubr.bf16.mxu0 %v5251
          %6010 = vmatmul.mubr.bf16.gmra.mxu0 %v5250
          %v6011 = vpop.f32.mrf.mxu0
          %v6012 = vadd.f32 %v5972, %v6011
          %v6013 = vpop.f32.mrf.mxu0
          %v6014 = vpop.f32.mrf.mxu0
          %v6015 = vpop.f32.mrf.mxu0
          %6016 = vdwg.mxu0
          %6017 = vmatprep.subr.bf16.mxu0 0
          %6018 = vmatpush1.bf16.msra.mxu0 %v5792
          %6019 = vmatprep.subr.bf16.mxu0 0
          %6020 = vmatpush1.bf16.msra.mxu0 %v5791
          %6021 = vmatprep.subr.bf16.mxu0 0
          %6022 = vmatpush1.bf16.msra.mxu0 %v5790
          %6023 = vmatprep.subr.bf16.mxu0 0
          %6024 = vmatpush1.bf16.msra.mxu0 %v5789
          %6025 = vmatprep.subr.bf16.mxu0 0
          %6026 = vmatpush1.bf16.msra.mxu0 %v5788
          %6027 = vmatprep.subr.bf16.mxu0 0
          %6028 = vmatpush1.bf16.msra.mxu0 %v5787
          %6029 = vmatprep.subr.bf16.mxu0 0
          %6030 = vmatpush1.bf16.msra.mxu0 %v5786
          %6031 = vmatprep.subr.bf16.mxu0 0
          %6032 = vmatpush1.bf16.msra.mxu0 %v5785
          %6033 = vmatprep.subr.bf16.mxu0 0
          %6034 = vmatpush2.bf16.msra.mxu0 %v5800
          %6035 = vmatprep.subr.bf16.mxu0 0
          %6036 = vmatpush2.bf16.msra.mxu0 %v5799
          %6037 = vmatprep.subr.bf16.mxu0 0
          %6038 = vmatpush2.bf16.msra.mxu0 %v5798
          %6039 = vmatprep.subr.bf16.mxu0 0
          %6040 = vmatpush2.bf16.msra.mxu0 %v5797
          %6041 = vmatprep.subr.bf16.mxu0 0
          %6042 = vmatpush2.bf16.msra.mxu0 %v5796
          %6043 = vmatprep.subr.bf16.mxu0 0
          %6044 = vmatpush2.bf16.msra.mxu0 %v5795
          %6045 = vmatprep.subr.bf16.mxu0 0
          %6046 = vmatpush2.bf16.msra.mxu0 %v5794
          %6047 = vmatprep.subr.bf16.mxu0 0
          %6048 = vmatpush2.bf16.msra.mxu0 %v5793
          %6049 = vmatprep.mubr.bf16.mxu0 %v5253
          %6050 = vmatmul.mubr.bf16.gmra.mxu0 %v5252
          %v6051 = vpop.f32.mrf.mxu0
          %v6052 = vadd.f32 %v6012, %v6051
          %v6053 = vpop.f32.mrf.mxu0
          %v6054 = vpop.f32.mrf.mxu0
          %v6055 = vpop.f32.mrf.mxu0
          %6056 = vdwg.mxu0
          %6057 = vmatprep.subr.bf16.mxu0 0
          %6058 = vmatpush1.bf16.msra.mxu0 %v5808
          %6059 = vmatprep.subr.bf16.mxu0 0
          %6060 = vmatpush1.bf16.msra.mxu0 %v5807
          %6061 = vmatprep.subr.bf16.mxu0 0
          %6062 = vmatpush1.bf16.msra.mxu0 %v5806
          %6063 = vmatprep.subr.bf16.mxu0 0
          %6064 = vmatpush1.bf16.msra.mxu0 %v5805
          %6065 = vmatprep.subr.bf16.mxu0 0
          %6066 = vmatpush1.bf16.msra.mxu0 %v5804
          %6067 = vmatprep.subr.bf16.mxu0 0
          %6068 = vmatpush1.bf16.msra.mxu0 %v5803
          %6069 = vmatprep.subr.bf16.mxu0 0
          %6070 = vmatpush1.bf16.msra.mxu0 %v5802
          %6071 = vmatprep.subr.bf16.mxu0 0
          %6072 = vmatpush1.bf16.msra.mxu0 %v5801
          %6073 = vmatprep.subr.bf16.mxu0 0
          %6074 = vmatpush2.bf16.msra.mxu0 %v5816
          %6075 = vmatprep.subr.bf16.mxu0 0
          %6076 = vmatpush2.bf16.msra.mxu0 %v5815
          %6077 = vmatprep.subr.bf16.mxu0 0
          %6078 = vmatpush2.bf16.msra.mxu0 %v5814
          %6079 = vmatprep.subr.bf16.mxu0 0
          %6080 = vmatpush2.bf16.msra.mxu0 %v5813
          %6081 = vmatprep.subr.bf16.mxu0 0
          %6082 = vmatpush2.bf16.msra.mxu0 %v5812
          %6083 = vmatprep.subr.bf16.mxu0 0
          %6084 = vmatpush2.bf16.msra.mxu0 %v5811
          %6085 = vmatprep.subr.bf16.mxu0 0
          %6086 = vmatpush2.bf16.msra.mxu0 %v5810
          %6087 = vmatprep.subr.bf16.mxu0 0
          %6088 = vmatpush2.bf16.msra.mxu0 %v5809
          %6089 = vmatprep.mubr.bf16.mxu0 %v5255
          %6090 = vmatmul.mubr.bf16.gmra.mxu0 %v5254
          %v6091 = vpop.f32.mrf.mxu0
          %v6092 = vadd.f32 %v6052, %v6091
          %v6093 = vpop.f32.mrf.mxu0
          %v6094 = vpop.f32.mrf.mxu0
          %v6095 = vpop.f32.mrf.mxu0
          %6096 = vdwg.mxu0
          %v6098 = vlaneseq
          %v6099 = vshrl.u32 %v6098, 7
          %v6100 = vsub.s32 2, %v6099
          %v6101 = vrot.slane %v5191, %v6100
          %v6102 = vlaneseq
          %v6103 = vshrl.u32 %v6102, 7
          %v6104 = vsub.s32 3, %v6103
          %v6105 = vrot.slane %v5191, %v6104
          %v6106 = vlaneseq
          %v6107 = vshrl.u32 %v6106, 7
          %v6108 = vsub.s32 4, %v6107
          %v6109 = vrot.slane %v5191, %v6108
          %v6110 = vlaneseq
          %v6111 = vshrl.u32 %v6110, 7
          %v6112 = vsub.s32 5, %v6111
          %v6113 = vrot.slane %v5191, %v6112
          %v6114 = vlaneseq
          %v6115 = vshrl.u32 %v6114, 7
          %v6116 = vsub.s32 6, %v6115
          %v6117 = vrot.slane %v5191, %v6116
          %v6118 = vlaneseq
          %v6119 = vshrl.u32 %v6118, 7
          %v6120 = vsub.s32 7, %v6119
          %v6121 = vrot.slane %v5191, %v6120
          %v6122 = vlaneseq
          %v6123 = vshrl.u32 %v6122, 7
          %v6124 = vsub.s32 0, %v6123
          %v6125 = vrot.slane %v5192, %v6124
          %v6126 = vlaneseq
          %v6127 = vshrl.u32 %v6126, 7
          %v6128 = vsub.s32 1, %v6127
          %v6129 = vrot.slane %v5192, %v6128
          %v6130 = vlaneseq
          %v6131 = vshrl.u32 %v6130, 7
          %v6132 = vsub.s32 2, %v6131
          %v6133 = vrot.slane %v5192, %v6132
          %v6134 = vlaneseq
          %v6135 = vshrl.u32 %v6134, 7
          %v6136 = vsub.s32 3, %v6135
          %v6137 = vrot.slane %v5192, %v6136
          %v6148 = vpack.c.bf16 %v6101, %v6101
          %v6149 = vpack.c.bf16 %v6105, %v6105
          %v6150 = vpack.c.bf16 %v6109, %v6109
          %v6151 = vpack.c.bf16 %v6113, %v6113
          %v6152 = vpack.c.bf16 %v6117, %v6117
          %v6153 = vpack.c.bf16 %v6121, %v6121
          %v6154 = vpack.c.bf16 %v6125, %v6125
          %v6155 = vpack.c.bf16 %v6129, %v6129
          %v6156 = vpack.c.bf16 %v6133, %v6133
          %v6157 = vpack.c.bf16 %v6137, %v6137
          %s6158 = scalar_lea.vmem %s5, 640
          %v6159 = vld [vmem:[%s6158] sm:$0xf]
          %v6160 = vld [vmem:[%s6158 + $0x4] sm:$0xf]
          %v6161 = vld [vmem:[%s6158 + $0x8] sm:$0xf]
          %v6162 = vld [vmem:[%s6158 + $0xc] sm:$0xf]
          %v6163 = vld [vmem:[%s6158 + $0x10] sm:$0xf]
          %v6164 = vld [vmem:[%s6158 + $0x14] sm:$0xf]
          %v6165 = vld [vmem:[%s6158 + $0x18] sm:$0xf]
          %v6166 = vld [vmem:[%s6158 + $0x1c] sm:$0xf]
          %v6167 = vld [vmem:[%s6158 + $0x20] sm:$0xf]
          %v6168 = vld [vmem:[%s6158 + $0x24] sm:$0xf]
          %v6169 = vld [vmem:[%s6158 + $0x28] sm:$0xf]
          %v6170 = vld [vmem:[%s6158 + $0x2c] sm:$0xf]
          %v6171 = vld [vmem:[%s6158 + $0x30] sm:$0xf]
          %v6172 = vld [vmem:[%s6158 + $0x34] sm:$0xf]
          %v6173 = vld [vmem:[%s6158 + $0x38] sm:$0xf]
          %v6174 = vld [vmem:[%s6158 + $0x3c] sm:$0xf]
          %v6175 = vld [vmem:[%s6158 + $0x40] sm:$0xf]
          %v6176 = vld [vmem:[%s6158 + $0x44] sm:$0xf]
          %v6177 = vld [vmem:[%s6158 + $0x48] sm:$0xf]
          %v6178 = vld [vmem:[%s6158 + $0x4c] sm:$0xf]
          %v6179 = vld [vmem:[%s6158 + $0x50] sm:$0xf]
          %v6180 = vld [vmem:[%s6158 + $0x54] sm:$0xf]
          %v6181 = vld [vmem:[%s6158 + $0x58] sm:$0xf]
          %v6182 = vld [vmem:[%s6158 + $0x5c] sm:$0xf]
          %v6183 = vld [vmem:[%s6158 + $0x60] sm:$0xf]
          %v6184 = vld [vmem:[%s6158 + $0x64] sm:$0xf]
          %v6185 = vld [vmem:[%s6158 + $0x68] sm:$0xf]
          %v6186 = vld [vmem:[%s6158 + $0x6c] sm:$0xf]
          %v6187 = vld [vmem:[%s6158 + $0x70] sm:$0xf]
          %v6188 = vld [vmem:[%s6158 + $0x74] sm:$0xf]
          %v6189 = vld [vmem:[%s6158 + $0x78] sm:$0xf]
          %v6190 = vld [vmem:[%s6158 + $0x7c] sm:$0xf]
          %v6191 = vld [vmem:[%s6158 + $0x80] sm:$0xf]
          %v6192 = vld [vmem:[%s6158 + $0x84] sm:$0xf]
          %v6193 = vld [vmem:[%s6158 + $0x88] sm:$0xf]
          %v6194 = vld [vmem:[%s6158 + $0x8c] sm:$0xf]
          %v6195 = vld [vmem:[%s6158 + $0x90] sm:$0xf]
          %v6196 = vld [vmem:[%s6158 + $0x94] sm:$0xf]
          %v6197 = vld [vmem:[%s6158 + $0x98] sm:$0xf]
          %v6198 = vld [vmem:[%s6158 + $0x9c] sm:$0xf]
          %v6199 = vld [vmem:[%s6158 + $0xa0] sm:$0xf]
          %v6200 = vld [vmem:[%s6158 + $0xa4] sm:$0xf]
          %v6201 = vld [vmem:[%s6158 + $0xa8] sm:$0xf]
          %v6202 = vld [vmem:[%s6158 + $0xac] sm:$0xf]
          %v6203 = vld [vmem:[%s6158 + $0xb0] sm:$0xf]
          %v6204 = vld [vmem:[%s6158 + $0xb4] sm:$0xf]
          %v6205 = vld [vmem:[%s6158 + $0xb8] sm:$0xf]
          %v6206 = vld [vmem:[%s6158 + $0xbc] sm:$0xf]
          %v6207 = vld [vmem:[%s6158 + $0xc0] sm:$0xf]
          %v6208 = vld [vmem:[%s6158 + $0xc4] sm:$0xf]
          %v6209 = vld [vmem:[%s6158 + $0xc8] sm:$0xf]
          %v6210 = vld [vmem:[%s6158 + $0xcc] sm:$0xf]
          %v6211 = vld [vmem:[%s6158 + $0xd0] sm:$0xf]
          %v6212 = vld [vmem:[%s6158 + $0xd4] sm:$0xf]
          %v6213 = vld [vmem:[%s6158 + $0xd8] sm:$0xf]
          %v6214 = vld [vmem:[%s6158 + $0xdc] sm:$0xf]
          %v6215 = vld [vmem:[%s6158 + $0xe0] sm:$0xf]
          %v6216 = vld [vmem:[%s6158 + $0xe4] sm:$0xf]
          %v6217 = vld [vmem:[%s6158 + $0xe8] sm:$0xf]
          %v6218 = vld [vmem:[%s6158 + $0xec] sm:$0xf]
          %v6219 = vld [vmem:[%s6158 + $0xf0] sm:$0xf]
          %v6220 = vld [vmem:[%s6158 + $0xf4] sm:$0xf]
          %v6221 = vld [vmem:[%s6158 + $0xf8] sm:$0xf]
          %v6222 = vld [vmem:[%s6158 + $0xfc] sm:$0xf]
          %v6223 = vld [vmem:[%s6158 + $0x100] sm:$0xf]
          %v6224 = vld [vmem:[%s6158 + $0x104] sm:$0xf]
          %v6225 = vld [vmem:[%s6158 + $0x108] sm:$0xf]
          %v6226 = vld [vmem:[%s6158 + $0x10c] sm:$0xf]
          %v6227 = vld [vmem:[%s6158 + $0x110] sm:$0xf]
          %v6228 = vld [vmem:[%s6158 + $0x114] sm:$0xf]
          %v6229 = vld [vmem:[%s6158 + $0x118] sm:$0xf]
          %v6230 = vld [vmem:[%s6158 + $0x11c] sm:$0xf]
          %v6231 = vld [vmem:[%s6158 + $0x120] sm:$0xf]
          %v6232 = vld [vmem:[%s6158 + $0x124] sm:$0xf]
          %v6233 = vld [vmem:[%s6158 + $0x128] sm:$0xf]
          %v6234 = vld [vmem:[%s6158 + $0x12c] sm:$0xf]
          %v6235 = vld [vmem:[%s6158 + $0x130] sm:$0xf]
          %v6236 = vld [vmem:[%s6158 + $0x134] sm:$0xf]
          %v6237 = vld [vmem:[%s6158 + $0x138] sm:$0xf]
          %v6238 = vld [vmem:[%s6158 + $0x13c] sm:$0xf]
          %v6239 = vld [vmem:[%s6158 + $0x140] sm:$0xf]
          %v6240 = vld [vmem:[%s6158 + $0x144] sm:$0xf]
          %v6241 = vld [vmem:[%s6158 + $0x148] sm:$0xf]
          %v6242 = vld [vmem:[%s6158 + $0x14c] sm:$0xf]
          %v6243 = vld [vmem:[%s6158 + $0x150] sm:$0xf]
          %v6244 = vld [vmem:[%s6158 + $0x154] sm:$0xf]
          %v6245 = vld [vmem:[%s6158 + $0x158] sm:$0xf]
          %v6246 = vld [vmem:[%s6158 + $0x15c] sm:$0xf]
          %v6247 = vld [vmem:[%s6158 + $0x160] sm:$0xf]
          %v6248 = vld [vmem:[%s6158 + $0x164] sm:$0xf]
          %v6249 = vld [vmem:[%s6158 + $0x168] sm:$0xf]
          %v6250 = vld [vmem:[%s6158 + $0x16c] sm:$0xf]
          %v6251 = vld [vmem:[%s6158 + $0x170] sm:$0xf]
          %v6252 = vld [vmem:[%s6158 + $0x174] sm:$0xf]
          %v6253 = vld [vmem:[%s6158 + $0x178] sm:$0xf]
          %v6254 = vld [vmem:[%s6158 + $0x17c] sm:$0xf]
          %v6255 = vld [vmem:[%s6158 + $0x180] sm:$0xf]
          %v6256 = vld [vmem:[%s6158 + $0x184] sm:$0xf]
          %v6257 = vld [vmem:[%s6158 + $0x188] sm:$0xf]
          %v6258 = vld [vmem:[%s6158 + $0x18c] sm:$0xf]
          %v6259 = vld [vmem:[%s6158 + $0x190] sm:$0xf]
          %v6260 = vld [vmem:[%s6158 + $0x194] sm:$0xf]
          %v6261 = vld [vmem:[%s6158 + $0x198] sm:$0xf]
          %v6262 = vld [vmem:[%s6158 + $0x19c] sm:$0xf]
          %v6263 = vld [vmem:[%s6158 + $0x1a0] sm:$0xf]
          %v6264 = vld [vmem:[%s6158 + $0x1a4] sm:$0xf]
          %v6265 = vld [vmem:[%s6158 + $0x1a8] sm:$0xf]
          %v6266 = vld [vmem:[%s6158 + $0x1ac] sm:$0xf]
          %v6267 = vld [vmem:[%s6158 + $0x1b0] sm:$0xf]
          %v6268 = vld [vmem:[%s6158 + $0x1b4] sm:$0xf]
          %v6269 = vld [vmem:[%s6158 + $0x1b8] sm:$0xf]
          %v6270 = vld [vmem:[%s6158 + $0x1bc] sm:$0xf]
          %v6271 = vld [vmem:[%s6158 + $0x1c0] sm:$0xf]
          %v6272 = vld [vmem:[%s6158 + $0x1c4] sm:$0xf]
          %v6273 = vld [vmem:[%s6158 + $0x1c8] sm:$0xf]
          %v6274 = vld [vmem:[%s6158 + $0x1cc] sm:$0xf]
          %v6275 = vld [vmem:[%s6158 + $0x1d0] sm:$0xf]
          %v6276 = vld [vmem:[%s6158 + $0x1d4] sm:$0xf]
          %v6277 = vld [vmem:[%s6158 + $0x1d8] sm:$0xf]
          %v6278 = vld [vmem:[%s6158 + $0x1dc] sm:$0xf]
          %v6279 = vld [vmem:[%s6158 + $0x1e0] sm:$0xf]
          %v6280 = vld [vmem:[%s6158 + $0x1e4] sm:$0xf]
          %v6281 = vld [vmem:[%s6158 + $0x1e8] sm:$0xf]
          %v6282 = vld [vmem:[%s6158 + $0x1ec] sm:$0xf]
          %v6283 = vld [vmem:[%s6158 + $0x1f0] sm:$0xf]
          %v6284 = vld [vmem:[%s6158 + $0x1f4] sm:$0xf]
          %v6285 = vld [vmem:[%s6158 + $0x1f8] sm:$0xf]
          %v6286 = vld [vmem:[%s6158 + $0x1fc] sm:$0xf]
          %v6287 = vld [vmem:[%s6158 + $0x200] sm:$0xf]
          %v6288 = vld [vmem:[%s6158 + $0x204] sm:$0xf]
          %v6289 = vld [vmem:[%s6158 + $0x208] sm:$0xf]
          %v6290 = vld [vmem:[%s6158 + $0x20c] sm:$0xf]
          %v6291 = vld [vmem:[%s6158 + $0x210] sm:$0xf]
          %v6292 = vld [vmem:[%s6158 + $0x214] sm:$0xf]
          %v6293 = vld [vmem:[%s6158 + $0x218] sm:$0xf]
          %v6294 = vld [vmem:[%s6158 + $0x21c] sm:$0xf]
          %v6295 = vld [vmem:[%s6158 + $0x220] sm:$0xf]
          %v6296 = vld [vmem:[%s6158 + $0x224] sm:$0xf]
          %v6297 = vld [vmem:[%s6158 + $0x228] sm:$0xf]
          %v6298 = vld [vmem:[%s6158 + $0x22c] sm:$0xf]
          %v6299 = vld [vmem:[%s6158 + $0x230] sm:$0xf]
          %v6300 = vld [vmem:[%s6158 + $0x234] sm:$0xf]
          %v6301 = vld [vmem:[%s6158 + $0x238] sm:$0xf]
          %v6302 = vld [vmem:[%s6158 + $0x23c] sm:$0xf]
          %v6303 = vld [vmem:[%s6158 + $0x240] sm:$0xf]
          %v6304 = vld [vmem:[%s6158 + $0x244] sm:$0xf]
          %v6305 = vld [vmem:[%s6158 + $0x248] sm:$0xf]
          %v6306 = vld [vmem:[%s6158 + $0x24c] sm:$0xf]
          %v6307 = vld [vmem:[%s6158 + $0x250] sm:$0xf]
          %v6308 = vld [vmem:[%s6158 + $0x254] sm:$0xf]
          %v6309 = vld [vmem:[%s6158 + $0x258] sm:$0xf]
          %v6310 = vld [vmem:[%s6158 + $0x25c] sm:$0xf]
          %v6311 = vld [vmem:[%s6158 + $0x260] sm:$0xf]
          %v6312 = vld [vmem:[%s6158 + $0x264] sm:$0xf]
          %v6313 = vld [vmem:[%s6158 + $0x268] sm:$0xf]
          %v6314 = vld [vmem:[%s6158 + $0x26c] sm:$0xf]
          %v6315 = vld [vmem:[%s6158 + $0x270] sm:$0xf]
          %v6316 = vld [vmem:[%s6158 + $0x274] sm:$0xf]
          %v6317 = vld [vmem:[%s6158 + $0x278] sm:$0xf]
          %v6318 = vld [vmem:[%s6158 + $0x27c] sm:$0xf]
          %s6319 = scalar_lea.vmem %s6, 1
          %v6320 = vld [vmem:[%s6319] sm:$0x1]
          %v6481 = vunpack.c.l.b16 %v6159
          %v6482 = vunpack.c.l.b16 %v6160
          %v6483 = vunpack.c.l.b16 %v6161
          %v6484 = vunpack.c.l.b16 %v6162
          %v6485 = vunpack.c.l.b16 %v6163
          %v6486 = vunpack.c.l.b16 %v6164
          %v6487 = vunpack.c.l.b16 %v6165
          %v6488 = vunpack.c.l.b16 %v6166
          %v6489 = vunpack.c.l.b16 %v6167
          %v6490 = vunpack.c.l.b16 %v6168
          %v6491 = vunpack.c.l.b16 %v6169
          %v6492 = vunpack.c.l.b16 %v6170
          %v6493 = vunpack.c.l.b16 %v6171
          %v6494 = vunpack.c.l.b16 %v6172
          %v6495 = vunpack.c.l.b16 %v6173
          %v6496 = vunpack.c.l.b16 %v6174
          %v6497 = vunpack.c.l.b16 %v6175
          %v6498 = vunpack.c.l.b16 %v6176
          %v6499 = vunpack.c.l.b16 %v6177
          %v6500 = vunpack.c.l.b16 %v6178
          %v6501 = vunpack.c.l.b16 %v6179
          %v6502 = vunpack.c.l.b16 %v6180
          %v6503 = vunpack.c.l.b16 %v6181
          %v6504 = vunpack.c.l.b16 %v6182
          %v6505 = vunpack.c.l.b16 %v6183
          %v6506 = vunpack.c.l.b16 %v6184
          %v6507 = vunpack.c.l.b16 %v6185
          %v6508 = vunpack.c.l.b16 %v6186
          %v6509 = vunpack.c.l.b16 %v6187
          %v6510 = vunpack.c.l.b16 %v6188
          %v6511 = vunpack.c.l.b16 %v6189
          %v6512 = vunpack.c.l.b16 %v6190
          %v6513 = vunpack.c.l.b16 %v6191
          %v6514 = vunpack.c.l.b16 %v6192
          %v6515 = vunpack.c.l.b16 %v6193
          %v6516 = vunpack.c.l.b16 %v6194
          %v6517 = vunpack.c.l.b16 %v6195
          %v6518 = vunpack.c.l.b16 %v6196
          %v6519 = vunpack.c.l.b16 %v6197
          %v6520 = vunpack.c.l.b16 %v6198
          %v6521 = vunpack.c.l.b16 %v6199
          %v6522 = vunpack.c.l.b16 %v6200
          %v6523 = vunpack.c.l.b16 %v6201
          %v6524 = vunpack.c.l.b16 %v6202
          %v6525 = vunpack.c.l.b16 %v6203
          %v6526 = vunpack.c.l.b16 %v6204
          %v6527 = vunpack.c.l.b16 %v6205
          %v6528 = vunpack.c.l.b16 %v6206
          %v6529 = vunpack.c.l.b16 %v6207
          %v6530 = vunpack.c.l.b16 %v6208
          %v6531 = vunpack.c.l.b16 %v6209
          %v6532 = vunpack.c.l.b16 %v6210
          %v6533 = vunpack.c.l.b16 %v6211
          %v6534 = vunpack.c.l.b16 %v6212
          %v6535 = vunpack.c.l.b16 %v6213
          %v6536 = vunpack.c.l.b16 %v6214
          %v6537 = vunpack.c.l.b16 %v6215
          %v6538 = vunpack.c.l.b16 %v6216
          %v6539 = vunpack.c.l.b16 %v6217
          %v6540 = vunpack.c.l.b16 %v6218
          %v6541 = vunpack.c.l.b16 %v6219
          %v6542 = vunpack.c.l.b16 %v6220
          %v6543 = vunpack.c.l.b16 %v6221
          %v6544 = vunpack.c.l.b16 %v6222
          %v6545 = vunpack.c.l.b16 %v6223
          %v6546 = vunpack.c.l.b16 %v6224
          %v6547 = vunpack.c.l.b16 %v6225
          %v6548 = vunpack.c.l.b16 %v6226
          %v6549 = vunpack.c.l.b16 %v6227
          %v6550 = vunpack.c.l.b16 %v6228
          %v6551 = vunpack.c.l.b16 %v6229
          %v6552 = vunpack.c.l.b16 %v6230
          %v6553 = vunpack.c.l.b16 %v6231
          %v6554 = vunpack.c.l.b16 %v6232
          %v6555 = vunpack.c.l.b16 %v6233
          %v6556 = vunpack.c.l.b16 %v6234
          %v6557 = vunpack.c.l.b16 %v6235
          %v6558 = vunpack.c.l.b16 %v6236
          %v6559 = vunpack.c.l.b16 %v6237
          %v6560 = vunpack.c.l.b16 %v6238
          %v6561 = vunpack.c.l.b16 %v6239
          %v6562 = vunpack.c.l.b16 %v6240
          %v6563 = vunpack.c.l.b16 %v6241
          %v6564 = vunpack.c.l.b16 %v6242
          %v6565 = vunpack.c.l.b16 %v6243
          %v6566 = vunpack.c.l.b16 %v6244
          %v6567 = vunpack.c.l.b16 %v6245
          %v6568 = vunpack.c.l.b16 %v6246
          %v6569 = vunpack.c.l.b16 %v6247
          %v6570 = vunpack.c.l.b16 %v6248
          %v6571 = vunpack.c.l.b16 %v6249
          %v6572 = vunpack.c.l.b16 %v6250
          %v6573 = vunpack.c.l.b16 %v6251
          %v6574 = vunpack.c.l.b16 %v6252
          %v6575 = vunpack.c.l.b16 %v6253
          %v6576 = vunpack.c.l.b16 %v6254
          %v6577 = vunpack.c.l.b16 %v6255
          %v6578 = vunpack.c.l.b16 %v6256
          %v6579 = vunpack.c.l.b16 %v6257
          %v6580 = vunpack.c.l.b16 %v6258
          %v6581 = vunpack.c.l.b16 %v6259
          %v6582 = vunpack.c.l.b16 %v6260
          %v6583 = vunpack.c.l.b16 %v6261
          %v6584 = vunpack.c.l.b16 %v6262
          %v6585 = vunpack.c.l.b16 %v6263
          %v6586 = vunpack.c.l.b16 %v6264
          %v6587 = vunpack.c.l.b16 %v6265
          %v6588 = vunpack.c.l.b16 %v6266
          %v6589 = vunpack.c.l.b16 %v6267
          %v6590 = vunpack.c.l.b16 %v6268
          %v6591 = vunpack.c.l.b16 %v6269
          %v6592 = vunpack.c.l.b16 %v6270
          %v6593 = vunpack.c.l.b16 %v6271
          %v6594 = vunpack.c.l.b16 %v6272
          %v6595 = vunpack.c.l.b16 %v6273
          %v6596 = vunpack.c.l.b16 %v6274
          %v6597 = vunpack.c.l.b16 %v6275
          %v6598 = vunpack.c.l.b16 %v6276
          %v6599 = vunpack.c.l.b16 %v6277
          %v6600 = vunpack.c.l.b16 %v6278
          %v6601 = vunpack.c.l.b16 %v6279
          %v6602 = vunpack.c.l.b16 %v6280
          %v6603 = vunpack.c.l.b16 %v6281
          %v6604 = vunpack.c.l.b16 %v6282
          %v6605 = vunpack.c.l.b16 %v6283
          %v6606 = vunpack.c.l.b16 %v6284
          %v6607 = vunpack.c.l.b16 %v6285
          %v6608 = vunpack.c.l.b16 %v6286
          %v6609 = vunpack.c.l.b16 %v6287
          %v6610 = vunpack.c.l.b16 %v6288
          %v6611 = vunpack.c.l.b16 %v6289
          %v6612 = vunpack.c.l.b16 %v6290
          %v6613 = vunpack.c.l.b16 %v6291
          %v6614 = vunpack.c.l.b16 %v6292
          %v6615 = vunpack.c.l.b16 %v6293
          %v6616 = vunpack.c.l.b16 %v6294
          %v6617 = vunpack.c.l.b16 %v6295
          %v6618 = vunpack.c.l.b16 %v6296
          %v6619 = vunpack.c.l.b16 %v6297
          %v6620 = vunpack.c.l.b16 %v6298
          %v6621 = vunpack.c.l.b16 %v6299
          %v6622 = vunpack.c.l.b16 %v6300
          %v6623 = vunpack.c.l.b16 %v6301
          %v6624 = vunpack.c.l.b16 %v6302
          %v6625 = vunpack.c.l.b16 %v6303
          %v6626 = vunpack.c.l.b16 %v6304
          %v6627 = vunpack.c.l.b16 %v6305
          %v6628 = vunpack.c.l.b16 %v6306
          %v6629 = vunpack.c.l.b16 %v6307
          %v6630 = vunpack.c.l.b16 %v6308
          %v6631 = vunpack.c.l.b16 %v6309
          %v6632 = vunpack.c.l.b16 %v6310
          %v6633 = vunpack.c.l.b16 %v6311
          %v6634 = vunpack.c.l.b16 %v6312
          %v6635 = vunpack.c.l.b16 %v6313
          %v6636 = vunpack.c.l.b16 %v6314
          %v6637 = vunpack.c.l.b16 %v6315
          %v6638 = vunpack.c.l.b16 %v6316
          %v6639 = vunpack.c.l.b16 %v6317
          %v6640 = vunpack.c.l.b16 %v6318
          %v6641 = vpack.c.b16 %v6482, %v6481
          %v6642 = vpack.c.b16 %v6484, %v6483
          %v6643 = vpack.c.b16 %v6486, %v6485
          %v6644 = vpack.c.b16 %v6488, %v6487
          %v6645 = vpack.c.b16 %v6490, %v6489
          %v6646 = vpack.c.b16 %v6492, %v6491
          %v6647 = vpack.c.b16 %v6494, %v6493
          %v6648 = vpack.c.b16 %v6496, %v6495
          %v6649 = vpack.c.b16 %v6498, %v6497
          %v6650 = vpack.c.b16 %v6500, %v6499
          %v6651 = vpack.c.b16 %v6502, %v6501
          %v6652 = vpack.c.b16 %v6504, %v6503
          %v6653 = vpack.c.b16 %v6506, %v6505
          %v6654 = vpack.c.b16 %v6508, %v6507
          %v6655 = vpack.c.b16 %v6510, %v6509
          %v6656 = vpack.c.b16 %v6512, %v6511
          %v6657 = vpack.c.b16 %v6514, %v6513
          %v6658 = vpack.c.b16 %v6516, %v6515
          %v6659 = vpack.c.b16 %v6518, %v6517
          %v6660 = vpack.c.b16 %v6520, %v6519
          %v6661 = vpack.c.b16 %v6522, %v6521
          %v6662 = vpack.c.b16 %v6524, %v6523
          %v6663 = vpack.c.b16 %v6526, %v6525
          %v6664 = vpack.c.b16 %v6528, %v6527
          %v6665 = vpack.c.b16 %v6530, %v6529
          %v6666 = vpack.c.b16 %v6532, %v6531
          %v6667 = vpack.c.b16 %v6534, %v6533
          %v6668 = vpack.c.b16 %v6536, %v6535
          %v6669 = vpack.c.b16 %v6538, %v6537
          %v6670 = vpack.c.b16 %v6540, %v6539
          %v6671 = vpack.c.b16 %v6542, %v6541
          %v6672 = vpack.c.b16 %v6544, %v6543
          %v6673 = vpack.c.b16 %v6546, %v6545
          %v6674 = vpack.c.b16 %v6548, %v6547
          %v6675 = vpack.c.b16 %v6550, %v6549
          %v6676 = vpack.c.b16 %v6552, %v6551
          %v6677 = vpack.c.b16 %v6554, %v6553
          %v6678 = vpack.c.b16 %v6556, %v6555
          %v6679 = vpack.c.b16 %v6558, %v6557
          %v6680 = vpack.c.b16 %v6560, %v6559
          %v6681 = vpack.c.b16 %v6562, %v6561
          %v6682 = vpack.c.b16 %v6564, %v6563
          %v6683 = vpack.c.b16 %v6566, %v6565
          %v6684 = vpack.c.b16 %v6568, %v6567
          %v6685 = vpack.c.b16 %v6570, %v6569
          %v6686 = vpack.c.b16 %v6572, %v6571
          %v6687 = vpack.c.b16 %v6574, %v6573
          %v6688 = vpack.c.b16 %v6576, %v6575
          %v6689 = vpack.c.b16 %v6578, %v6577
          %v6690 = vpack.c.b16 %v6580, %v6579
          %v6691 = vpack.c.b16 %v6582, %v6581
          %v6692 = vpack.c.b16 %v6584, %v6583
          %v6693 = vpack.c.b16 %v6586, %v6585
          %v6694 = vpack.c.b16 %v6588, %v6587
          %v6695 = vpack.c.b16 %v6590, %v6589
          %v6696 = vpack.c.b16 %v6592, %v6591
          %v6697 = vpack.c.b16 %v6594, %v6593
          %v6698 = vpack.c.b16 %v6596, %v6595
          %v6699 = vpack.c.b16 %v6598, %v6597
          %v6700 = vpack.c.b16 %v6600, %v6599
          %v6701 = vpack.c.b16 %v6602, %v6601
          %v6702 = vpack.c.b16 %v6604, %v6603
          %v6703 = vpack.c.b16 %v6606, %v6605
          %v6704 = vpack.c.b16 %v6608, %v6607
          %v6705 = vpack.c.b16 %v6610, %v6609
          %v6706 = vpack.c.b16 %v6612, %v6611
          %v6707 = vpack.c.b16 %v6614, %v6613
          %v6708 = vpack.c.b16 %v6616, %v6615
          %v6709 = vpack.c.b16 %v6618, %v6617
          %v6710 = vpack.c.b16 %v6620, %v6619
          %v6711 = vpack.c.b16 %v6622, %v6621
          %v6712 = vpack.c.b16 %v6624, %v6623
          %v6713 = vpack.c.b16 %v6626, %v6625
          %v6714 = vpack.c.b16 %v6628, %v6627
          %v6715 = vpack.c.b16 %v6630, %v6629
          %v6716 = vpack.c.b16 %v6632, %v6631
          %v6717 = vpack.c.b16 %v6634, %v6633
          %v6718 = vpack.c.b16 %v6636, %v6635
          %v6719 = vpack.c.b16 %v6638, %v6637
          %v6720 = vpack.c.b16 %v6640, %v6639
          %6801 = vmatprep.subr.bf16.mxu0 0
          %6802 = vmatpush1.bf16.msra.mxu0 %v6648
          %6803 = vmatprep.subr.bf16.mxu0 0
          %6804 = vmatpush1.bf16.msra.mxu0 %v6647
          %6805 = vmatprep.subr.bf16.mxu0 0
          %6806 = vmatpush1.bf16.msra.mxu0 %v6646
          %6807 = vmatprep.subr.bf16.mxu0 0
          %6808 = vmatpush1.bf16.msra.mxu0 %v6645
          %6809 = vmatprep.subr.bf16.mxu0 0
          %6810 = vmatpush1.bf16.msra.mxu0 %v6644
          %6811 = vmatprep.subr.bf16.mxu0 0
          %6812 = vmatpush1.bf16.msra.mxu0 %v6643
          %6813 = vmatprep.subr.bf16.mxu0 0
          %6814 = vmatpush1.bf16.msra.mxu0 %v6642
          %6815 = vmatprep.subr.bf16.mxu0 0
          %6816 = vmatpush1.bf16.msra.mxu0 %v6641
          %6817 = vmatprep.subr.bf16.mxu0 0
          %6818 = vmatpush2.bf16.msra.mxu0 %v6656
          %6819 = vmatprep.subr.bf16.mxu0 0
          %6820 = vmatpush2.bf16.msra.mxu0 %v6655
          %6821 = vmatprep.subr.bf16.mxu0 0
          %6822 = vmatpush2.bf16.msra.mxu0 %v6654
          %6823 = vmatprep.subr.bf16.mxu0 0
          %6824 = vmatpush2.bf16.msra.mxu0 %v6653
          %6825 = vmatprep.subr.bf16.mxu0 0
          %6826 = vmatpush2.bf16.msra.mxu0 %v6652
          %6827 = vmatprep.subr.bf16.mxu0 0
          %6828 = vmatpush2.bf16.msra.mxu0 %v6651
          %6829 = vmatprep.subr.bf16.mxu0 0
          %6830 = vmatpush2.bf16.msra.mxu0 %v6650
          %6831 = vmatprep.subr.bf16.mxu0 0
          %6832 = vmatpush2.bf16.msra.mxu0 %v6649
          %6833 = vmatprep.mubr.bf16.mxu0 %v6149
          %6834 = vmatmul.mubr.bf16.gmra.mxu0 %v6148
          %v6835 = vpop.f32.mrf.mxu0
          %v6836 = vadd.f32 %v6320, %v6835
          %v6837 = vpop.f32.mrf.mxu0
          %v6838 = vpop.f32.mrf.mxu0
          %v6839 = vpop.f32.mrf.mxu0
          %6840 = vdwg.mxu0
          %6841 = vmatprep.subr.bf16.mxu0 0
          %6842 = vmatpush1.bf16.msra.mxu0 %v6664
          %6843 = vmatprep.subr.bf16.mxu0 0
          %6844 = vmatpush1.bf16.msra.mxu0 %v6663
          %6845 = vmatprep.subr.bf16.mxu0 0
          %6846 = vmatpush1.bf16.msra.mxu0 %v6662
          %6847 = vmatprep.subr.bf16.mxu0 0
          %6848 = vmatpush1.bf16.msra.mxu0 %v6661
          %6849 = vmatprep.subr.bf16.mxu0 0
          %6850 = vmatpush1.bf16.msra.mxu0 %v6660
          %6851 = vmatprep.subr.bf16.mxu0 0
          %6852 = vmatpush1.bf16.msra.mxu0 %v6659
          %6853 = vmatprep.subr.bf16.mxu0 0
          %6854 = vmatpush1.bf16.msra.mxu0 %v6658
          %6855 = vmatprep.subr.bf16.mxu0 0
          %6856 = vmatpush1.bf16.msra.mxu0 %v6657
          %6857 = vmatprep.subr.bf16.mxu0 0
          %6858 = vmatpush2.bf16.msra.mxu0 %v6672
          %6859 = vmatprep.subr.bf16.mxu0 0
          %6860 = vmatpush2.bf16.msra.mxu0 %v6671
          %6861 = vmatprep.subr.bf16.mxu0 0
          %6862 = vmatpush2.bf16.msra.mxu0 %v6670
          %6863 = vmatprep.subr.bf16.mxu0 0
          %6864 = vmatpush2.bf16.msra.mxu0 %v6669
          %6865 = vmatprep.subr.bf16.mxu0 0
          %6866 = vmatpush2.bf16.msra.mxu0 %v6668
          %6867 = vmatprep.subr.bf16.mxu0 0
          %6868 = vmatpush2.bf16.msra.mxu0 %v6667
          %6869 = vmatprep.subr.bf16.mxu0 0
          %6870 = vmatpush2.bf16.msra.mxu0 %v6666
          %6871 = vmatprep.subr.bf16.mxu0 0
          %6872 = vmatpush2.bf16.msra.mxu0 %v6665
          %6873 = vmatprep.mubr.bf16.mxu0 %v6151
          %6874 = vmatmul.mubr.bf16.gmra.mxu0 %v6150
          %v6875 = vpop.f32.mrf.mxu0
          %v6876 = vadd.f32 %v6836, %v6875
          %v6877 = vpop.f32.mrf.mxu0
          %v6878 = vpop.f32.mrf.mxu0
          %v6879 = vpop.f32.mrf.mxu0
          %6880 = vdwg.mxu0
          %6881 = vmatprep.subr.bf16.mxu0 0
          %6882 = vmatpush1.bf16.msra.mxu0 %v6680
          %6883 = vmatprep.subr.bf16.mxu0 0
          %6884 = vmatpush1.bf16.msra.mxu0 %v6679
          %6885 = vmatprep.subr.bf16.mxu0 0
          %6886 = vmatpush1.bf16.msra.mxu0 %v6678
          %6887 = vmatprep.subr.bf16.mxu0 0
          %6888 = vmatpush1.bf16.msra.mxu0 %v6677
          %6889 = vmatprep.subr.bf16.mxu0 0
          %6890 = vmatpush1.bf16.msra.mxu0 %v6676
          %6891 = vmatprep.subr.bf16.mxu0 0
          %6892 = vmatpush1.bf16.msra.mxu0 %v6675
          %6893 = vmatprep.subr.bf16.mxu0 0
          %6894 = vmatpush1.bf16.msra.mxu0 %v6674
          %6895 = vmatprep.subr.bf16.mxu0 0
          %6896 = vmatpush1.bf16.msra.mxu0 %v6673
          %6897 = vmatprep.subr.bf16.mxu0 0
          %6898 = vmatpush2.bf16.msra.mxu0 %v6688
          %6899 = vmatprep.subr.bf16.mxu0 0
          %6900 = vmatpush2.bf16.msra.mxu0 %v6687
          %6901 = vmatprep.subr.bf16.mxu0 0
          %6902 = vmatpush2.bf16.msra.mxu0 %v6686
          %6903 = vmatprep.subr.bf16.mxu0 0
          %6904 = vmatpush2.bf16.msra.mxu0 %v6685
          %6905 = vmatprep.subr.bf16.mxu0 0
          %6906 = vmatpush2.bf16.msra.mxu0 %v6684
          %6907 = vmatprep.subr.bf16.mxu0 0
          %6908 = vmatpush2.bf16.msra.mxu0 %v6683
          %6909 = vmatprep.subr.bf16.mxu0 0
          %6910 = vmatpush2.bf16.msra.mxu0 %v6682
          %6911 = vmatprep.subr.bf16.mxu0 0
          %6912 = vmatpush2.bf16.msra.mxu0 %v6681
          %6913 = vmatprep.mubr.bf16.mxu0 %v6153
          %6914 = vmatmul.mubr.bf16.gmra.mxu0 %v6152
          %v6915 = vpop.f32.mrf.mxu0
          %v6916 = vadd.f32 %v6876, %v6915
          %v6917 = vpop.f32.mrf.mxu0
          %v6918 = vpop.f32.mrf.mxu0
          %v6919 = vpop.f32.mrf.mxu0
          %6920 = vdwg.mxu0
          %6921 = vmatprep.subr.bf16.mxu0 0
          %6922 = vmatpush1.bf16.msra.mxu0 %v6696
          %6923 = vmatprep.subr.bf16.mxu0 0
          %6924 = vmatpush1.bf16.msra.mxu0 %v6695
          %6925 = vmatprep.subr.bf16.mxu0 0
          %6926 = vmatpush1.bf16.msra.mxu0 %v6694
          %6927 = vmatprep.subr.bf16.mxu0 0
          %6928 = vmatpush1.bf16.msra.mxu0 %v6693
          %6929 = vmatprep.subr.bf16.mxu0 0
          %6930 = vmatpush1.bf16.msra.mxu0 %v6692
          %6931 = vmatprep.subr.bf16.mxu0 0
          %6932 = vmatpush1.bf16.msra.mxu0 %v6691
          %6933 = vmatprep.subr.bf16.mxu0 0
          %6934 = vmatpush1.bf16.msra.mxu0 %v6690
          %6935 = vmatprep.subr.bf16.mxu0 0
          %6936 = vmatpush1.bf16.msra.mxu0 %v6689
          %6937 = vmatprep.subr.bf16.mxu0 0
          %6938 = vmatpush2.bf16.msra.mxu0 %v6704
          %6939 = vmatprep.subr.bf16.mxu0 0
          %6940 = vmatpush2.bf16.msra.mxu0 %v6703
          %6941 = vmatprep.subr.bf16.mxu0 0
          %6942 = vmatpush2.bf16.msra.mxu0 %v6702
          %6943 = vmatprep.subr.bf16.mxu0 0
          %6944 = vmatpush2.bf16.msra.mxu0 %v6701
          %6945 = vmatprep.subr.bf16.mxu0 0
          %6946 = vmatpush2.bf16.msra.mxu0 %v6700
          %6947 = vmatprep.subr.bf16.mxu0 0
          %6948 = vmatpush2.bf16.msra.mxu0 %v6699
          %6949 = vmatprep.subr.bf16.mxu0 0
          %6950 = vmatpush2.bf16.msra.mxu0 %v6698
          %6951 = vmatprep.subr.bf16.mxu0 0
          %6952 = vmatpush2.bf16.msra.mxu0 %v6697
          %6953 = vmatprep.mubr.bf16.mxu0 %v6155
          %6954 = vmatmul.mubr.bf16.gmra.mxu0 %v6154
          %v6955 = vpop.f32.mrf.mxu0
          %v6956 = vadd.f32 %v6916, %v6955
          %v6957 = vpop.f32.mrf.mxu0
          %v6958 = vpop.f32.mrf.mxu0
          %v6959 = vpop.f32.mrf.mxu0
          %6960 = vdwg.mxu0
          %6961 = vmatprep.subr.bf16.mxu0 0
          %6962 = vmatpush1.bf16.msra.mxu0 %v6712
          %6963 = vmatprep.subr.bf16.mxu0 0
          %6964 = vmatpush1.bf16.msra.mxu0 %v6711
          %6965 = vmatprep.subr.bf16.mxu0 0
          %6966 = vmatpush1.bf16.msra.mxu0 %v6710
          %6967 = vmatprep.subr.bf16.mxu0 0
          %6968 = vmatpush1.bf16.msra.mxu0 %v6709
          %6969 = vmatprep.subr.bf16.mxu0 0
          %6970 = vmatpush1.bf16.msra.mxu0 %v6708
          %6971 = vmatprep.subr.bf16.mxu0 0
          %6972 = vmatpush1.bf16.msra.mxu0 %v6707
          %6973 = vmatprep.subr.bf16.mxu0 0
          %6974 = vmatpush1.bf16.msra.mxu0 %v6706
          %6975 = vmatprep.subr.bf16.mxu0 0
          %6976 = vmatpush1.bf16.msra.mxu0 %v6705
          %6977 = vmatprep.subr.bf16.mxu0 0
          %6978 = vmatpush2.bf16.msra.mxu0 %v6720
          %6979 = vmatprep.subr.bf16.mxu0 0
          %6980 = vmatpush2.bf16.msra.mxu0 %v6719
          %6981 = vmatprep.subr.bf16.mxu0 0
          %6982 = vmatpush2.bf16.msra.mxu0 %v6718
          %6983 = vmatprep.subr.bf16.mxu0 0
          %6984 = vmatpush2.bf16.msra.mxu0 %v6717
          %6985 = vmatprep.subr.bf16.mxu0 0
          %6986 = vmatpush2.bf16.msra.mxu0 %v6716
          %6987 = vmatprep.subr.bf16.mxu0 0
          %6988 = vmatpush2.bf16.msra.mxu0 %v6715
          %6989 = vmatprep.subr.bf16.mxu0 0
          %6990 = vmatpush2.bf16.msra.mxu0 %v6714
          %6991 = vmatprep.subr.bf16.mxu0 0
          %6992 = vmatpush2.bf16.msra.mxu0 %v6713
          %6993 = vmatprep.mubr.bf16.mxu0 %v6157
          %6994 = vmatmul.mubr.bf16.gmra.mxu0 %v6156
          %v6995 = vpop.f32.mrf.mxu0
          %v6996 = vadd.f32 %v6956, %v6995
          %v6997 = vpop.f32.mrf.mxu0
          %v6998 = vpop.f32.mrf.mxu0
          %v6999 = vpop.f32.mrf.mxu0
          %7000 = vdwg.mxu0
          %v7002 = vlaneseq
          %v7003 = vshrl.u32 %v7002, 7
          %v7004 = vsub.s32 4, %v7003
          %v7005 = vrot.slane %v5192, %v7004
          %v7006 = vlaneseq
          %v7007 = vshrl.u32 %v7006, 7
          %v7008 = vsub.s32 5, %v7007
          %v7009 = vrot.slane %v5192, %v7008
          %v7010 = vlaneseq
          %v7011 = vshrl.u32 %v7010, 7
          %v7012 = vsub.s32 6, %v7011
          %v7013 = vrot.slane %v5192, %v7012
          %v7014 = vlaneseq
          %v7015 = vshrl.u32 %v7014, 7
          %v7016 = vsub.s32 7, %v7015
          %v7017 = vrot.slane %v5192, %v7016
          %v7018 = vlaneseq
          %v7019 = vshrl.u32 %v7018, 7
          %v7020 = vsub.s32 0, %v7019
          %v7021 = vrot.slane %v5193, %v7020
          %v7022 = vlaneseq
          %v7023 = vshrl.u32 %v7022, 7
          %v7024 = vsub.s32 1, %v7023
          %v7025 = vrot.slane %v5193, %v7024
          %v7026 = vlaneseq
          %v7027 = vshrl.u32 %v7026, 7
          %v7028 = vsub.s32 2, %v7027
          %v7029 = vrot.slane %v5193, %v7028
          %v7030 = vlaneseq
          %v7031 = vshrl.u32 %v7030, 7
          %v7032 = vsub.s32 3, %v7031
          %v7033 = vrot.slane %v5193, %v7032
          %v7034 = vlaneseq
          %v7035 = vshrl.u32 %v7034, 7
          %v7036 = vsub.s32 4, %v7035
          %v7037 = vrot.slane %v5193, %v7036
          %v7038 = vlaneseq
          %v7039 = vshrl.u32 %v7038, 7
          %v7040 = vsub.s32 5, %v7039
          %v7041 = vrot.slane %v5193, %v7040
          %v7052 = vpack.c.bf16 %v7005, %v7005
          %v7053 = vpack.c.bf16 %v7009, %v7009
          %v7054 = vpack.c.bf16 %v7013, %v7013
          %v7055 = vpack.c.bf16 %v7017, %v7017
          %v7056 = vpack.c.bf16 %v7021, %v7021
          %v7057 = vpack.c.bf16 %v7025, %v7025
          %v7058 = vpack.c.bf16 %v7029, %v7029
          %v7059 = vpack.c.bf16 %v7033, %v7033
          %v7060 = vpack.c.bf16 %v7037, %v7037
          %v7061 = vpack.c.bf16 %v7041, %v7041
          %s7062 = scalar_lea.vmem %s5, 1280
          %v7063 = vld [vmem:[%s7062] sm:$0xf]
          %v7064 = vld [vmem:[%s7062 + $0x4] sm:$0xf]
          %v7065 = vld [vmem:[%s7062 + $0x8] sm:$0xf]
          %v7066 = vld [vmem:[%s7062 + $0xc] sm:$0xf]
          %v7067 = vld [vmem:[%s7062 + $0x10] sm:$0xf]
          %v7068 = vld [vmem:[%s7062 + $0x14] sm:$0xf]
          %v7069 = vld [vmem:[%s7062 + $0x18] sm:$0xf]
          %v7070 = vld [vmem:[%s7062 + $0x1c] sm:$0xf]
          %v7071 = vld [vmem:[%s7062 + $0x20] sm:$0xf]
          %v7072 = vld [vmem:[%s7062 + $0x24] sm:$0xf]
          %v7073 = vld [vmem:[%s7062 + $0x28] sm:$0xf]
          %v7074 = vld [vmem:[%s7062 + $0x2c] sm:$0xf]
          %v7075 = vld [vmem:[%s7062 + $0x30] sm:$0xf]
          %v7076 = vld [vmem:[%s7062 + $0x34] sm:$0xf]
          %v7077 = vld [vmem:[%s7062 + $0x38] sm:$0xf]
          %v7078 = vld [vmem:[%s7062 + $0x3c] sm:$0xf]
          %v7079 = vld [vmem:[%s7062 + $0x40] sm:$0xf]
          %v7080 = vld [vmem:[%s7062 + $0x44] sm:$0xf]
          %v7081 = vld [vmem:[%s7062 + $0x48] sm:$0xf]
          %v7082 = vld [vmem:[%s7062 + $0x4c] sm:$0xf]
          %v7083 = vld [vmem:[%s7062 + $0x50] sm:$0xf]
          %v7084 = vld [vmem:[%s7062 + $0x54] sm:$0xf]
          %v7085 = vld [vmem:[%s7062 + $0x58] sm:$0xf]
          %v7086 = vld [vmem:[%s7062 + $0x5c] sm:$0xf]
          %v7087 = vld [vmem:[%s7062 + $0x60] sm:$0xf]
          %v7088 = vld [vmem:[%s7062 + $0x64] sm:$0xf]
          %v7089 = vld [vmem:[%s7062 + $0x68] sm:$0xf]
          %v7090 = vld [vmem:[%s7062 + $0x6c] sm:$0xf]
          %v7091 = vld [vmem:[%s7062 + $0x70] sm:$0xf]
          %v7092 = vld [vmem:[%s7062 + $0x74] sm:$0xf]
          %v7093 = vld [vmem:[%s7062 + $0x78] sm:$0xf]
          %v7094 = vld [vmem:[%s7062 + $0x7c] sm:$0xf]
          %v7095 = vld [vmem:[%s7062 + $0x80] sm:$0xf]
          %v7096 = vld [vmem:[%s7062 + $0x84] sm:$0xf]
          %v7097 = vld [vmem:[%s7062 + $0x88] sm:$0xf]
          %v7098 = vld [vmem:[%s7062 + $0x8c] sm:$0xf]
          %v7099 = vld [vmem:[%s7062 + $0x90] sm:$0xf]
          %v7100 = vld [vmem:[%s7062 + $0x94] sm:$0xf]
          %v7101 = vld [vmem:[%s7062 + $0x98] sm:$0xf]
          %v7102 = vld [vmem:[%s7062 + $0x9c] sm:$0xf]
          %v7103 = vld [vmem:[%s7062 + $0xa0] sm:$0xf]
          %v7104 = vld [vmem:[%s7062 + $0xa4] sm:$0xf]
          %v7105 = vld [vmem:[%s7062 + $0xa8] sm:$0xf]
          %v7106 = vld [vmem:[%s7062 + $0xac] sm:$0xf]
          %v7107 = vld [vmem:[%s7062 + $0xb0] sm:$0xf]
          %v7108 = vld [vmem:[%s7062 + $0xb4] sm:$0xf]
          %v7109 = vld [vmem:[%s7062 + $0xb8] sm:$0xf]
          %v7110 = vld [vmem:[%s7062 + $0xbc] sm:$0xf]
          %v7111 = vld [vmem:[%s7062 + $0xc0] sm:$0xf]
          %v7112 = vld [vmem:[%s7062 + $0xc4] sm:$0xf]
          %v7113 = vld [vmem:[%s7062 + $0xc8] sm:$0xf]
          %v7114 = vld [vmem:[%s7062 + $0xcc] sm:$0xf]
          %v7115 = vld [vmem:[%s7062 + $0xd0] sm:$0xf]
          %v7116 = vld [vmem:[%s7062 + $0xd4] sm:$0xf]
          %v7117 = vld [vmem:[%s7062 + $0xd8] sm:$0xf]
          %v7118 = vld [vmem:[%s7062 + $0xdc] sm:$0xf]
          %v7119 = vld [vmem:[%s7062 + $0xe0] sm:$0xf]
          %v7120 = vld [vmem:[%s7062 + $0xe4] sm:$0xf]
          %v7121 = vld [vmem:[%s7062 + $0xe8] sm:$0xf]
          %v7122 = vld [vmem:[%s7062 + $0xec] sm:$0xf]
          %v7123 = vld [vmem:[%s7062 + $0xf0] sm:$0xf]
          %v7124 = vld [vmem:[%s7062 + $0xf4] sm:$0xf]
          %v7125 = vld [vmem:[%s7062 + $0xf8] sm:$0xf]
          %v7126 = vld [vmem:[%s7062 + $0xfc] sm:$0xf]
          %v7127 = vld [vmem:[%s7062 + $0x100] sm:$0xf]
          %v7128 = vld [vmem:[%s7062 + $0x104] sm:$0xf]
          %v7129 = vld [vmem:[%s7062 + $0x108] sm:$0xf]
          %v7130 = vld [vmem:[%s7062 + $0x10c] sm:$0xf]
          %v7131 = vld [vmem:[%s7062 + $0x110] sm:$0xf]
          %v7132 = vld [vmem:[%s7062 + $0x114] sm:$0xf]
          %v7133 = vld [vmem:[%s7062 + $0x118] sm:$0xf]
          %v7134 = vld [vmem:[%s7062 + $0x11c] sm:$0xf]
          %v7135 = vld [vmem:[%s7062 + $0x120] sm:$0xf]
          %v7136 = vld [vmem:[%s7062 + $0x124] sm:$0xf]
          %v7137 = vld [vmem:[%s7062 + $0x128] sm:$0xf]
          %v7138 = vld [vmem:[%s7062 + $0x12c] sm:$0xf]
          %v7139 = vld [vmem:[%s7062 + $0x130] sm:$0xf]
          %v7140 = vld [vmem:[%s7062 + $0x134] sm:$0xf]
          %v7141 = vld [vmem:[%s7062 + $0x138] sm:$0xf]
          %v7142 = vld [vmem:[%s7062 + $0x13c] sm:$0xf]
          %v7143 = vld [vmem:[%s7062 + $0x140] sm:$0xf]
          %v7144 = vld [vmem:[%s7062 + $0x144] sm:$0xf]
          %v7145 = vld [vmem:[%s7062 + $0x148] sm:$0xf]
          %v7146 = vld [vmem:[%s7062 + $0x14c] sm:$0xf]
          %v7147 = vld [vmem:[%s7062 + $0x150] sm:$0xf]
          %v7148 = vld [vmem:[%s7062 + $0x154] sm:$0xf]
          %v7149 = vld [vmem:[%s7062 + $0x158] sm:$0xf]
          %v7150 = vld [vmem:[%s7062 + $0x15c] sm:$0xf]
          %v7151 = vld [vmem:[%s7062 + $0x160] sm:$0xf]
          %v7152 = vld [vmem:[%s7062 + $0x164] sm:$0xf]
          %v7153 = vld [vmem:[%s7062 + $0x168] sm:$0xf]
          %v7154 = vld [vmem:[%s7062 + $0x16c] sm:$0xf]
          %v7155 = vld [vmem:[%s7062 + $0x170] sm:$0xf]
          %v7156 = vld [vmem:[%s7062 + $0x174] sm:$0xf]
          %v7157 = vld [vmem:[%s7062 + $0x178] sm:$0xf]
          %v7158 = vld [vmem:[%s7062 + $0x17c] sm:$0xf]
          %v7159 = vld [vmem:[%s7062 + $0x180] sm:$0xf]
          %v7160 = vld [vmem:[%s7062 + $0x184] sm:$0xf]
          %v7161 = vld [vmem:[%s7062 + $0x188] sm:$0xf]
          %v7162 = vld [vmem:[%s7062 + $0x18c] sm:$0xf]
          %v7163 = vld [vmem:[%s7062 + $0x190] sm:$0xf]
          %v7164 = vld [vmem:[%s7062 + $0x194] sm:$0xf]
          %v7165 = vld [vmem:[%s7062 + $0x198] sm:$0xf]
          %v7166 = vld [vmem:[%s7062 + $0x19c] sm:$0xf]
          %v7167 = vld [vmem:[%s7062 + $0x1a0] sm:$0xf]
          %v7168 = vld [vmem:[%s7062 + $0x1a4] sm:$0xf]
          %v7169 = vld [vmem:[%s7062 + $0x1a8] sm:$0xf]
          %v7170 = vld [vmem:[%s7062 + $0x1ac] sm:$0xf]
          %v7171 = vld [vmem:[%s7062 + $0x1b0] sm:$0xf]
          %v7172 = vld [vmem:[%s7062 + $0x1b4] sm:$0xf]
          %v7173 = vld [vmem:[%s7062 + $0x1b8] sm:$0xf]
          %v7174 = vld [vmem:[%s7062 + $0x1bc] sm:$0xf]
          %v7175 = vld [vmem:[%s7062 + $0x1c0] sm:$0xf]
          %v7176 = vld [vmem:[%s7062 + $0x1c4] sm:$0xf]
          %v7177 = vld [vmem:[%s7062 + $0x1c8] sm:$0xf]
          %v7178 = vld [vmem:[%s7062 + $0x1cc] sm:$0xf]
          %v7179 = vld [vmem:[%s7062 + $0x1d0] sm:$0xf]
          %v7180 = vld [vmem:[%s7062 + $0x1d4] sm:$0xf]
          %v7181 = vld [vmem:[%s7062 + $0x1d8] sm:$0xf]
          %v7182 = vld [vmem:[%s7062 + $0x1dc] sm:$0xf]
          %v7183 = vld [vmem:[%s7062 + $0x1e0] sm:$0xf]
          %v7184 = vld [vmem:[%s7062 + $0x1e4] sm:$0xf]
          %v7185 = vld [vmem:[%s7062 + $0x1e8] sm:$0xf]
          %v7186 = vld [vmem:[%s7062 + $0x1ec] sm:$0xf]
          %v7187 = vld [vmem:[%s7062 + $0x1f0] sm:$0xf]
          %v7188 = vld [vmem:[%s7062 + $0x1f4] sm:$0xf]
          %v7189 = vld [vmem:[%s7062 + $0x1f8] sm:$0xf]
          %v7190 = vld [vmem:[%s7062 + $0x1fc] sm:$0xf]
          %v7191 = vld [vmem:[%s7062 + $0x200] sm:$0xf]
          %v7192 = vld [vmem:[%s7062 + $0x204] sm:$0xf]
          %v7193 = vld [vmem:[%s7062 + $0x208] sm:$0xf]
          %v7194 = vld [vmem:[%s7062 + $0x20c] sm:$0xf]
          %v7195 = vld [vmem:[%s7062 + $0x210] sm:$0xf]
          %v7196 = vld [vmem:[%s7062 + $0x214] sm:$0xf]
          %v7197 = vld [vmem:[%s7062 + $0x218] sm:$0xf]
          %v7198 = vld [vmem:[%s7062 + $0x21c] sm:$0xf]
          %v7199 = vld [vmem:[%s7062 + $0x220] sm:$0xf]
          %v7200 = vld [vmem:[%s7062 + $0x224] sm:$0xf]
          %v7201 = vld [vmem:[%s7062 + $0x228] sm:$0xf]
          %v7202 = vld [vmem:[%s7062 + $0x22c] sm:$0xf]
          %v7203 = vld [vmem:[%s7062 + $0x230] sm:$0xf]
          %v7204 = vld [vmem:[%s7062 + $0x234] sm:$0xf]
          %v7205 = vld [vmem:[%s7062 + $0x238] sm:$0xf]
          %v7206 = vld [vmem:[%s7062 + $0x23c] sm:$0xf]
          %v7207 = vld [vmem:[%s7062 + $0x240] sm:$0xf]
          %v7208 = vld [vmem:[%s7062 + $0x244] sm:$0xf]
          %v7209 = vld [vmem:[%s7062 + $0x248] sm:$0xf]
          %v7210 = vld [vmem:[%s7062 + $0x24c] sm:$0xf]
          %v7211 = vld [vmem:[%s7062 + $0x250] sm:$0xf]
          %v7212 = vld [vmem:[%s7062 + $0x254] sm:$0xf]
          %v7213 = vld [vmem:[%s7062 + $0x258] sm:$0xf]
          %v7214 = vld [vmem:[%s7062 + $0x25c] sm:$0xf]
          %v7215 = vld [vmem:[%s7062 + $0x260] sm:$0xf]
          %v7216 = vld [vmem:[%s7062 + $0x264] sm:$0xf]
          %v7217 = vld [vmem:[%s7062 + $0x268] sm:$0xf]
          %v7218 = vld [vmem:[%s7062 + $0x26c] sm:$0xf]
          %v7219 = vld [vmem:[%s7062 + $0x270] sm:$0xf]
          %v7220 = vld [vmem:[%s7062 + $0x274] sm:$0xf]
          %v7221 = vld [vmem:[%s7062 + $0x278] sm:$0xf]
          %v7222 = vld [vmem:[%s7062 + $0x27c] sm:$0xf]
          %s7223 = scalar_lea.vmem %s6, 2
          %v7224 = vld [vmem:[%s7223] sm:$0x1]
          %v7385 = vunpack.c.l.b16 %v7063
          %v7386 = vunpack.c.l.b16 %v7064
          %v7387 = vunpack.c.l.b16 %v7065
          %v7388 = vunpack.c.l.b16 %v7066
          %v7389 = vunpack.c.l.b16 %v7067
          %v7390 = vunpack.c.l.b16 %v7068
          %v7391 = vunpack.c.l.b16 %v7069
          %v7392 = vunpack.c.l.b16 %v7070
          %v7393 = vunpack.c.l.b16 %v7071
          %v7394 = vunpack.c.l.b16 %v7072
          %v7395 = vunpack.c.l.b16 %v7073
          %v7396 = vunpack.c.l.b16 %v7074
          %v7397 = vunpack.c.l.b16 %v7075
          %v7398 = vunpack.c.l.b16 %v7076
          %v7399 = vunpack.c.l.b16 %v7077
          %v7400 = vunpack.c.l.b16 %v7078
          %v7401 = vunpack.c.l.b16 %v7079
          %v7402 = vunpack.c.l.b16 %v7080
          %v7403 = vunpack.c.l.b16 %v7081
          %v7404 = vunpack.c.l.b16 %v7082
          %v7405 = vunpack.c.l.b16 %v7083
          %v7406 = vunpack.c.l.b16 %v7084
          %v7407 = vunpack.c.l.b16 %v7085
          %v7408 = vunpack.c.l.b16 %v7086
          %v7409 = vunpack.c.l.b16 %v7087
          %v7410 = vunpack.c.l.b16 %v7088
          %v7411 = vunpack.c.l.b16 %v7089
          %v7412 = vunpack.c.l.b16 %v7090
          %v7413 = vunpack.c.l.b16 %v7091
          %v7414 = vunpack.c.l.b16 %v7092
          %v7415 = vunpack.c.l.b16 %v7093
          %v7416 = vunpack.c.l.b16 %v7094
          %v7417 = vunpack.c.l.b16 %v7095
          %v7418 = vunpack.c.l.b16 %v7096
          %v7419 = vunpack.c.l.b16 %v7097
          %v7420 = vunpack.c.l.b16 %v7098
          %v7421 = vunpack.c.l.b16 %v7099
          %v7422 = vunpack.c.l.b16 %v7100
          %v7423 = vunpack.c.l.b16 %v7101
          %v7424 = vunpack.c.l.b16 %v7102
          %v7425 = vunpack.c.l.b16 %v7103
          %v7426 = vunpack.c.l.b16 %v7104
          %v7427 = vunpack.c.l.b16 %v7105
          %v7428 = vunpack.c.l.b16 %v7106
          %v7429 = vunpack.c.l.b16 %v7107
          %v7430 = vunpack.c.l.b16 %v7108
          %v7431 = vunpack.c.l.b16 %v7109
          %v7432 = vunpack.c.l.b16 %v7110
          %v7433 = vunpack.c.l.b16 %v7111
          %v7434 = vunpack.c.l.b16 %v7112
          %v7435 = vunpack.c.l.b16 %v7113
          %v7436 = vunpack.c.l.b16 %v7114
          %v7437 = vunpack.c.l.b16 %v7115
          %v7438 = vunpack.c.l.b16 %v7116
          %v7439 = vunpack.c.l.b16 %v7117
          %v7440 = vunpack.c.l.b16 %v7118
          %v7441 = vunpack.c.l.b16 %v7119
          %v7442 = vunpack.c.l.b16 %v7120
          %v7443 = vunpack.c.l.b16 %v7121
          %v7444 = vunpack.c.l.b16 %v7122
          %v7445 = vunpack.c.l.b16 %v7123
          %v7446 = vunpack.c.l.b16 %v7124
          %v7447 = vunpack.c.l.b16 %v7125
          %v7448 = vunpack.c.l.b16 %v7126
          %v7449 = vunpack.c.l.b16 %v7127
          %v7450 = vunpack.c.l.b16 %v7128
          %v7451 = vunpack.c.l.b16 %v7129
          %v7452 = vunpack.c.l.b16 %v7130
          %v7453 = vunpack.c.l.b16 %v7131
          %v7454 = vunpack.c.l.b16 %v7132
          %v7455 = vunpack.c.l.b16 %v7133
          %v7456 = vunpack.c.l.b16 %v7134
          %v7457 = vunpack.c.l.b16 %v7135
          %v7458 = vunpack.c.l.b16 %v7136
          %v7459 = vunpack.c.l.b16 %v7137
          %v7460 = vunpack.c.l.b16 %v7138
          %v7461 = vunpack.c.l.b16 %v7139
          %v7462 = vunpack.c.l.b16 %v7140
          %v7463 = vunpack.c.l.b16 %v7141
          %v7464 = vunpack.c.l.b16 %v7142
          %v7465 = vunpack.c.l.b16 %v7143
          %v7466 = vunpack.c.l.b16 %v7144
          %v7467 = vunpack.c.l.b16 %v7145
          %v7468 = vunpack.c.l.b16 %v7146
          %v7469 = vunpack.c.l.b16 %v7147
          %v7470 = vunpack.c.l.b16 %v7148
          %v7471 = vunpack.c.l.b16 %v7149
          %v7472 = vunpack.c.l.b16 %v7150
          %v7473 = vunpack.c.l.b16 %v7151
          %v7474 = vunpack.c.l.b16 %v7152
          %v7475 = vunpack.c.l.b16 %v7153
          %v7476 = vunpack.c.l.b16 %v7154
          %v7477 = vunpack.c.l.b16 %v7155
          %v7478 = vunpack.c.l.b16 %v7156
          %v7479 = vunpack.c.l.b16 %v7157
          %v7480 = vunpack.c.l.b16 %v7158
          %v7481 = vunpack.c.l.b16 %v7159
          %v7482 = vunpack.c.l.b16 %v7160
          %v7483 = vunpack.c.l.b16 %v7161
          %v7484 = vunpack.c.l.b16 %v7162
          %v7485 = vunpack.c.l.b16 %v7163
          %v7486 = vunpack.c.l.b16 %v7164
          %v7487 = vunpack.c.l.b16 %v7165
          %v7488 = vunpack.c.l.b16 %v7166
          %v7489 = vunpack.c.l.b16 %v7167
          %v7490 = vunpack.c.l.b16 %v7168
          %v7491 = vunpack.c.l.b16 %v7169
          %v7492 = vunpack.c.l.b16 %v7170
          %v7493 = vunpack.c.l.b16 %v7171
          %v7494 = vunpack.c.l.b16 %v7172
          %v7495 = vunpack.c.l.b16 %v7173
          %v7496 = vunpack.c.l.b16 %v7174
          %v7497 = vunpack.c.l.b16 %v7175
          %v7498 = vunpack.c.l.b16 %v7176
          %v7499 = vunpack.c.l.b16 %v7177
          %v7500 = vunpack.c.l.b16 %v7178
          %v7501 = vunpack.c.l.b16 %v7179
          %v7502 = vunpack.c.l.b16 %v7180
          %v7503 = vunpack.c.l.b16 %v7181
          %v7504 = vunpack.c.l.b16 %v7182
          %v7505 = vunpack.c.l.b16 %v7183
          %v7506 = vunpack.c.l.b16 %v7184
          %v7507 = vunpack.c.l.b16 %v7185
          %v7508 = vunpack.c.l.b16 %v7186
          %v7509 = vunpack.c.l.b16 %v7187
          %v7510 = vunpack.c.l.b16 %v7188
          %v7511 = vunpack.c.l.b16 %v7189
          %v7512 = vunpack.c.l.b16 %v7190
          %v7513 = vunpack.c.l.b16 %v7191
          %v7514 = vunpack.c.l.b16 %v7192
          %v7515 = vunpack.c.l.b16 %v7193
          %v7516 = vunpack.c.l.b16 %v7194
          %v7517 = vunpack.c.l.b16 %v7195
          %v7518 = vunpack.c.l.b16 %v7196
          %v7519 = vunpack.c.l.b16 %v7197
          %v7520 = vunpack.c.l.b16 %v7198
          %v7521 = vunpack.c.l.b16 %v7199
          %v7522 = vunpack.c.l.b16 %v7200
          %v7523 = vunpack.c.l.b16 %v7201
          %v7524 = vunpack.c.l.b16 %v7202
          %v7525 = vunpack.c.l.b16 %v7203
          %v7526 = vunpack.c.l.b16 %v7204
          %v7527 = vunpack.c.l.b16 %v7205
          %v7528 = vunpack.c.l.b16 %v7206
          %v7529 = vunpack.c.l.b16 %v7207
          %v7530 = vunpack.c.l.b16 %v7208
          %v7531 = vunpack.c.l.b16 %v7209
          %v7532 = vunpack.c.l.b16 %v7210
          %v7533 = vunpack.c.l.b16 %v7211
          %v7534 = vunpack.c.l.b16 %v7212
          %v7535 = vunpack.c.l.b16 %v7213
          %v7536 = vunpack.c.l.b16 %v7214
          %v7537 = vunpack.c.l.b16 %v7215
          %v7538 = vunpack.c.l.b16 %v7216
          %v7539 = vunpack.c.l.b16 %v7217
          %v7540 = vunpack.c.l.b16 %v7218
          %v7541 = vunpack.c.l.b16 %v7219
          %v7542 = vunpack.c.l.b16 %v7220
          %v7543 = vunpack.c.l.b16 %v7221
          %v7544 = vunpack.c.l.b16 %v7222
          %v7545 = vpack.c.b16 %v7386, %v7385
          %v7546 = vpack.c.b16 %v7388, %v7387
          %v7547 = vpack.c.b16 %v7390, %v7389
          %v7548 = vpack.c.b16 %v7392, %v7391
          %v7549 = vpack.c.b16 %v7394, %v7393
          %v7550 = vpack.c.b16 %v7396, %v7395
          %v7551 = vpack.c.b16 %v7398, %v7397
          %v7552 = vpack.c.b16 %v7400, %v7399
          %v7553 = vpack.c.b16 %v7402, %v7401
          %v7554 = vpack.c.b16 %v7404, %v7403
          %v7555 = vpack.c.b16 %v7406, %v7405
          %v7556 = vpack.c.b16 %v7408, %v7407
          %v7557 = vpack.c.b16 %v7410, %v7409
          %v7558 = vpack.c.b16 %v7412, %v7411
          %v7559 = vpack.c.b16 %v7414, %v7413
          %v7560 = vpack.c.b16 %v7416, %v7415
          %v7561 = vpack.c.b16 %v7418, %v7417
          %v7562 = vpack.c.b16 %v7420, %v7419
          %v7563 = vpack.c.b16 %v7422, %v7421
          %v7564 = vpack.c.b16 %v7424, %v7423
          %v7565 = vpack.c.b16 %v7426, %v7425
          %v7566 = vpack.c.b16 %v7428, %v7427
          %v7567 = vpack.c.b16 %v7430, %v7429
          %v7568 = vpack.c.b16 %v7432, %v7431
          %v7569 = vpack.c.b16 %v7434, %v7433
          %v7570 = vpack.c.b16 %v7436, %v7435
          %v7571 = vpack.c.b16 %v7438, %v7437
          %v7572 = vpack.c.b16 %v7440, %v7439
          %v7573 = vpack.c.b16 %v7442, %v7441
          %v7574 = vpack.c.b16 %v7444, %v7443
          %v7575 = vpack.c.b16 %v7446, %v7445
          %v7576 = vpack.c.b16 %v7448, %v7447
          %v7577 = vpack.c.b16 %v7450, %v7449
          %v7578 = vpack.c.b16 %v7452, %v7451
          %v7579 = vpack.c.b16 %v7454, %v7453
          %v7580 = vpack.c.b16 %v7456, %v7455
          %v7581 = vpack.c.b16 %v7458, %v7457
          %v7582 = vpack.c.b16 %v7460, %v7459
          %v7583 = vpack.c.b16 %v7462, %v7461
          %v7584 = vpack.c.b16 %v7464, %v7463
          %v7585 = vpack.c.b16 %v7466, %v7465
          %v7586 = vpack.c.b16 %v7468, %v7467
          %v7587 = vpack.c.b16 %v7470, %v7469
          %v7588 = vpack.c.b16 %v7472, %v7471
          %v7589 = vpack.c.b16 %v7474, %v7473
          %v7590 = vpack.c.b16 %v7476, %v7475
          %v7591 = vpack.c.b16 %v7478, %v7477
          %v7592 = vpack.c.b16 %v7480, %v7479
          %v7593 = vpack.c.b16 %v7482, %v7481
          %v7594 = vpack.c.b16 %v7484, %v7483
          %v7595 = vpack.c.b16 %v7486, %v7485
          %v7596 = vpack.c.b16 %v7488, %v7487
          %v7597 = vpack.c.b16 %v7490, %v7489
          %v7598 = vpack.c.b16 %v7492, %v7491
          %v7599 = vpack.c.b16 %v7494, %v7493
          %v7600 = vpack.c.b16 %v7496, %v7495
          %v7601 = vpack.c.b16 %v7498, %v7497
          %v7602 = vpack.c.b16 %v7500, %v7499
          %v7603 = vpack.c.b16 %v7502, %v7501
          %v7604 = vpack.c.b16 %v7504, %v7503
          %v7605 = vpack.c.b16 %v7506, %v7505
          %v7606 = vpack.c.b16 %v7508, %v7507
          %v7607 = vpack.c.b16 %v7510, %v7509
          %v7608 = vpack.c.b16 %v7512, %v7511
          %v7609 = vpack.c.b16 %v7514, %v7513
          %v7610 = vpack.c.b16 %v7516, %v7515
          %v7611 = vpack.c.b16 %v7518, %v7517
          %v7612 = vpack.c.b16 %v7520, %v7519
          %v7613 = vpack.c.b16 %v7522, %v7521
          %v7614 = vpack.c.b16 %v7524, %v7523
          %v7615 = vpack.c.b16 %v7526, %v7525
          %v7616 = vpack.c.b16 %v7528, %v7527
          %v7617 = vpack.c.b16 %v7530, %v7529
          %v7618 = vpack.c.b16 %v7532, %v7531
          %v7619 = vpack.c.b16 %v7534, %v7533
          %v7620 = vpack.c.b16 %v7536, %v7535
          %v7621 = vpack.c.b16 %v7538, %v7537
          %v7622 = vpack.c.b16 %v7540, %v7539
          %v7623 = vpack.c.b16 %v7542, %v7541
          %v7624 = vpack.c.b16 %v7544, %v7543
          %7705 = vmatprep.subr.bf16.mxu0 0
          %7706 = vmatpush1.bf16.msra.mxu0 %v7552
          %7707 = vmatprep.subr.bf16.mxu0 0
          %7708 = vmatpush1.bf16.msra.mxu0 %v7551
          %7709 = vmatprep.subr.bf16.mxu0 0
          %7710 = vmatpush1.bf16.msra.mxu0 %v7550
          %7711 = vmatprep.subr.bf16.mxu0 0
          %7712 = vmatpush1.bf16.msra.mxu0 %v7549
          %7713 = vmatprep.subr.bf16.mxu0 0
          %7714 = vmatpush1.bf16.msra.mxu0 %v7548
          %7715 = vmatprep.subr.bf16.mxu0 0
          %7716 = vmatpush1.bf16.msra.mxu0 %v7547
          %7717 = vmatprep.subr.bf16.mxu0 0
          %7718 = vmatpush1.bf16.msra.mxu0 %v7546
          %7719 = vmatprep.subr.bf16.mxu0 0
          %7720 = vmatpush1.bf16.msra.mxu0 %v7545
          %7721 = vmatprep.subr.bf16.mxu0 0
          %7722 = vmatpush2.bf16.msra.mxu0 %v7560
          %7723 = vmatprep.subr.bf16.mxu0 0
          %7724 = vmatpush2.bf16.msra.mxu0 %v7559
          %7725 = vmatprep.subr.bf16.mxu0 0
          %7726 = vmatpush2.bf16.msra.mxu0 %v7558
          %7727 = vmatprep.subr.bf16.mxu0 0
          %7728 = vmatpush2.bf16.msra.mxu0 %v7557
          %7729 = vmatprep.subr.bf16.mxu0 0
          %7730 = vmatpush2.bf16.msra.mxu0 %v7556
          %7731 = vmatprep.subr.bf16.mxu0 0
          %7732 = vmatpush2.bf16.msra.mxu0 %v7555
          %7733 = vmatprep.subr.bf16.mxu0 0
          %7734 = vmatpush2.bf16.msra.mxu0 %v7554
          %7735 = vmatprep.subr.bf16.mxu0 0
          %7736 = vmatpush2.bf16.msra.mxu0 %v7553
          %7737 = vmatprep.mubr.bf16.mxu0 %v7053
          %7738 = vmatmul.mubr.bf16.gmra.mxu0 %v7052
          %v7739 = vpop.f32.mrf.mxu0
          %v7740 = vadd.f32 %v7224, %v7739
          %v7741 = vpop.f32.mrf.mxu0
          %v7742 = vpop.f32.mrf.mxu0
          %v7743 = vpop.f32.mrf.mxu0
          %7744 = vdwg.mxu0
          %7745 = vmatprep.subr.bf16.mxu0 0
          %7746 = vmatpush1.bf16.msra.mxu0 %v7568
          %7747 = vmatprep.subr.bf16.mxu0 0
          %7748 = vmatpush1.bf16.msra.mxu0 %v7567
          %7749 = vmatprep.subr.bf16.mxu0 0
          %7750 = vmatpush1.bf16.msra.mxu0 %v7566
          %7751 = vmatprep.subr.bf16.mxu0 0
          %7752 = vmatpush1.bf16.msra.mxu0 %v7565
          %7753 = vmatprep.subr.bf16.mxu0 0
          %7754 = vmatpush1.bf16.msra.mxu0 %v7564
          %7755 = vmatprep.subr.bf16.mxu0 0
          %7756 = vmatpush1.bf16.msra.mxu0 %v7563
          %7757 = vmatprep.subr.bf16.mxu0 0
          %7758 = vmatpush1.bf16.msra.mxu0 %v7562
          %7759 = vmatprep.subr.bf16.mxu0 0
          %7760 = vmatpush1.bf16.msra.mxu0 %v7561
          %7761 = vmatprep.subr.bf16.mxu0 0
          %7762 = vmatpush2.bf16.msra.mxu0 %v7576
          %7763 = vmatprep.subr.bf16.mxu0 0
          %7764 = vmatpush2.bf16.msra.mxu0 %v7575
          %7765 = vmatprep.subr.bf16.mxu0 0
          %7766 = vmatpush2.bf16.msra.mxu0 %v7574
          %7767 = vmatprep.subr.bf16.mxu0 0
          %7768 = vmatpush2.bf16.msra.mxu0 %v7573
          %7769 = vmatprep.subr.bf16.mxu0 0
          %7770 = vmatpush2.bf16.msra.mxu0 %v7572
          %7771 = vmatprep.subr.bf16.mxu0 0
          %7772 = vmatpush2.bf16.msra.mxu0 %v7571
          %7773 = vmatprep.subr.bf16.mxu0 0
          %7774 = vmatpush2.bf16.msra.mxu0 %v7570
          %7775 = vmatprep.subr.bf16.mxu0 0
          %7776 = vmatpush2.bf16.msra.mxu0 %v7569
          %7777 = vmatprep.mubr.bf16.mxu0 %v7055
          %7778 = vmatmul.mubr.bf16.gmra.mxu0 %v7054
          %v7779 = vpop.f32.mrf.mxu0
          %v7780 = vadd.f32 %v7740, %v7779
          %v7781 = vpop.f32.mrf.mxu0
          %v7782 = vpop.f32.mrf.mxu0
          %v7783 = vpop.f32.mrf.mxu0
          %7784 = vdwg.mxu0
          %7785 = vmatprep.subr.bf16.mxu0 0
          %7786 = vmatpush1.bf16.msra.mxu0 %v7584
          %7787 = vmatprep.subr.bf16.mxu0 0
          %7788 = vmatpush1.bf16.msra.mxu0 %v7583
          %7789 = vmatprep.subr.bf16.mxu0 0
          %7790 = vmatpush1.bf16.msra.mxu0 %v7582
          %7791 = vmatprep.subr.bf16.mxu0 0
          %7792 = vmatpush1.bf16.msra.mxu0 %v7581
          %7793 = vmatprep.subr.bf16.mxu0 0
          %7794 = vmatpush1.bf16.msra.mxu0 %v7580
          %7795 = vmatprep.subr.bf16.mxu0 0
          %7796 = vmatpush1.bf16.msra.mxu0 %v7579
          %7797 = vmatprep.subr.bf16.mxu0 0
          %7798 = vmatpush1.bf16.msra.mxu0 %v7578
          %7799 = vmatprep.subr.bf16.mxu0 0
          %7800 = vmatpush1.bf16.msra.mxu0 %v7577
          %7801 = vmatprep.subr.bf16.mxu0 0
          %7802 = vmatpush2.bf16.msra.mxu0 %v7592
          %7803 = vmatprep.subr.bf16.mxu0 0
          %7804 = vmatpush2.bf16.msra.mxu0 %v7591
          %7805 = vmatprep.subr.bf16.mxu0 0
          %7806 = vmatpush2.bf16.msra.mxu0 %v7590
          %7807 = vmatprep.subr.bf16.mxu0 0
          %7808 = vmatpush2.bf16.msra.mxu0 %v7589
          %7809 = vmatprep.subr.bf16.mxu0 0
          %7810 = vmatpush2.bf16.msra.mxu0 %v7588
          %7811 = vmatprep.subr.bf16.mxu0 0
          %7812 = vmatpush2.bf16.msra.mxu0 %v7587
          %7813 = vmatprep.subr.bf16.mxu0 0
          %7814 = vmatpush2.bf16.msra.mxu0 %v7586
          %7815 = vmatprep.subr.bf16.mxu0 0
          %7816 = vmatpush2.bf16.msra.mxu0 %v7585
          %7817 = vmatprep.mubr.bf16.mxu0 %v7057
          %7818 = vmatmul.mubr.bf16.gmra.mxu0 %v7056
          %v7819 = vpop.f32.mrf.mxu0
          %v7820 = vadd.f32 %v7780, %v7819
          %v7821 = vpop.f32.mrf.mxu0
          %v7822 = vpop.f32.mrf.mxu0
          %v7823 = vpop.f32.mrf.mxu0
          %7824 = vdwg.mxu0
          %7825 = vmatprep.subr.bf16.mxu0 0
          %7826 = vmatpush1.bf16.msra.mxu0 %v7600
          %7827 = vmatprep.subr.bf16.mxu0 0
          %7828 = vmatpush1.bf16.msra.mxu0 %v7599
          %7829 = vmatprep.subr.bf16.mxu0 0
          %7830 = vmatpush1.bf16.msra.mxu0 %v7598
          %7831 = vmatprep.subr.bf16.mxu0 0
          %7832 = vmatpush1.bf16.msra.mxu0 %v7597
          %7833 = vmatprep.subr.bf16.mxu0 0
          %7834 = vmatpush1.bf16.msra.mxu0 %v7596
          %7835 = vmatprep.subr.bf16.mxu0 0
          %7836 = vmatpush1.bf16.msra.mxu0 %v7595
          %7837 = vmatprep.subr.bf16.mxu0 0
          %7838 = vmatpush1.bf16.msra.mxu0 %v7594
          %7839 = vmatprep.subr.bf16.mxu0 0
          %7840 = vmatpush1.bf16.msra.mxu0 %v7593
          %7841 = vmatprep.subr.bf16.mxu0 0
          %7842 = vmatpush2.bf16.msra.mxu0 %v7608
          %7843 = vmatprep.subr.bf16.mxu0 0
          %7844 = vmatpush2.bf16.msra.mxu0 %v7607
          %7845 = vmatprep.subr.bf16.mxu0 0
          %7846 = vmatpush2.bf16.msra.mxu0 %v7606
          %7847 = vmatprep.subr.bf16.mxu0 0
          %7848 = vmatpush2.bf16.msra.mxu0 %v7605
          %7849 = vmatprep.subr.bf16.mxu0 0
          %7850 = vmatpush2.bf16.msra.mxu0 %v7604
          %7851 = vmatprep.subr.bf16.mxu0 0
          %7852 = vmatpush2.bf16.msra.mxu0 %v7603
          %7853 = vmatprep.subr.bf16.mxu0 0
          %7854 = vmatpush2.bf16.msra.mxu0 %v7602
          %7855 = vmatprep.subr.bf16.mxu0 0
          %7856 = vmatpush2.bf16.msra.mxu0 %v7601
          %7857 = vmatprep.mubr.bf16.mxu0 %v7059
          %7858 = vmatmul.mubr.bf16.gmra.mxu0 %v7058
          %v7859 = vpop.f32.mrf.mxu0
          %v7860 = vadd.f32 %v7820, %v7859
          %v7861 = vpop.f32.mrf.mxu0
          %v7862 = vpop.f32.mrf.mxu0
          %v7863 = vpop.f32.mrf.mxu0
          %7864 = vdwg.mxu0
          %7865 = vmatprep.subr.bf16.mxu0 0
          %7866 = vmatpush1.bf16.msra.mxu0 %v7616
          %7867 = vmatprep.subr.bf16.mxu0 0
          %7868 = vmatpush1.bf16.msra.mxu0 %v7615
          %7869 = vmatprep.subr.bf16.mxu0 0
          %7870 = vmatpush1.bf16.msra.mxu0 %v7614
          %7871 = vmatprep.subr.bf16.mxu0 0
          %7872 = vmatpush1.bf16.msra.mxu0 %v7613
          %7873 = vmatprep.subr.bf16.mxu0 0
          %7874 = vmatpush1.bf16.msra.mxu0 %v7612
          %7875 = vmatprep.subr.bf16.mxu0 0
          %7876 = vmatpush1.bf16.msra.mxu0 %v7611
          %7877 = vmatprep.subr.bf16.mxu0 0
          %7878 = vmatpush1.bf16.msra.mxu0 %v7610
          %7879 = vmatprep.subr.bf16.mxu0 0
          %7880 = vmatpush1.bf16.msra.mxu0 %v7609
          %7881 = vmatprep.subr.bf16.mxu0 0
          %7882 = vmatpush2.bf16.msra.mxu0 %v7624
          %7883 = vmatprep.subr.bf16.mxu0 0
          %7884 = vmatpush2.bf16.msra.mxu0 %v7623
          %7885 = vmatprep.subr.bf16.mxu0 0
          %7886 = vmatpush2.bf16.msra.mxu0 %v7622
          %7887 = vmatprep.subr.bf16.mxu0 0
          %7888 = vmatpush2.bf16.msra.mxu0 %v7621
          %7889 = vmatprep.subr.bf16.mxu0 0
          %7890 = vmatpush2.bf16.msra.mxu0 %v7620
          %7891 = vmatprep.subr.bf16.mxu0 0
          %7892 = vmatpush2.bf16.msra.mxu0 %v7619
          %7893 = vmatprep.subr.bf16.mxu0 0
          %7894 = vmatpush2.bf16.msra.mxu0 %v7618
          %7895 = vmatprep.subr.bf16.mxu0 0
          %7896 = vmatpush2.bf16.msra.mxu0 %v7617
          %7897 = vmatprep.mubr.bf16.mxu0 %v7061
          %7898 = vmatmul.mubr.bf16.gmra.mxu0 %v7060
          %v7899 = vpop.f32.mrf.mxu0
          %v7900 = vadd.f32 %v7860, %v7899
          %v7901 = vpop.f32.mrf.mxu0
          %v7902 = vpop.f32.mrf.mxu0
          %v7903 = vpop.f32.mrf.mxu0
          %7904 = vdwg.mxu0
          %v7906 = vrot.slane %v6996, 7
          %v7909 = vrot.slane %v7900, 6
          %vm7911 = vcmask 1040384
          %v7912 = vsel %vm7911, %v6092, %v7906
          %vm7913 = vcmask 1041408
          %v7914 = vsel %vm7913, %v7912, %v7909
          %vm7915 = vcmask 1042432
          %v7916 = vsel %vm7915, %v7914, -inf
          %v7917 = vrot.slane %v7916, 4
          %v7918 = vmax.f32 %v7916, %v7917
          %v7919 = vrot.slane %v7918, 2
          %v7920 = vmax.f32 %v7918, %v7919
          %v7921 = vrot.slane %v7920, 1
          %v7922 = vmax.f32 %v7920, %v7921
          %v7923 = vsub.f32 %v7914, %v7922
          %v7924 = vmul.f32 %v7923, 1.442695
          %v7925 = vpow.pop %v7924
          %v7926 = vsel %vm7915, %v7925, 0.0
          %v7927 = vrot.slane %v7926, 4
          %v7928 = vadd.f32 %v7926, %v7927
          %v7929 = vrot.slane %v7928, 2
          %v7930 = vadd.f32 %v7928, %v7929
          %v7931 = vrot.slane %v7930, 1
          %v7932 = vadd.f32 %v7930, %v7931
          %v7933 = vrcp.pop %v7932
          %v7934 = vmul.f32 %v7925, %v7933
          %v7935 = vlaneseq
          %v7936 = vand.u32 %v7935, 127
          %vm7937 = vcmp.lt.s32.totalorder %v7936, 100
          %v7938 = vsel %vm7937, %v7934, %v7914
          %7939 = vst [vmem:[%s319] sm:$0x7] %v7938
        $region60: #{_lambda_.1} parent=47 // pred_fallthru
          _
        %p7940 = scmp.lt.s32.totalorder %s23, 1
        %s7941 = scalar_select %p7940, %s23, 1
        %s7942 = smul.addr %s7941, 4
        %s7943 = scalar_lea.vmem %s7, %s7942
        // Predicated region
        $region61: #{_lambda_.1} parent=47 // pred_check
          %p7944 = pneg %p203
        $region62: #{_lambda_.1} parent=47 // pred_check_branch
          %7946 = sbr.rel (%p7944) target = $region64
        $region63: #{_lambda_.1} parent=47 // pred_region
          _
        $region64: #{_lambda_.1} parent=47 // pred_fallthru
          _
      $region48: #{_lambda_.1} parent=5 // pred_fallthru
        _
      %p7947 = scmp.le.s32.totalorder 2, %s14
      // Predicated region
      $region65: #{_lambda_.1} parent=5 // pred_check
        %p7948 = pneg %p7947
      $region66: #{_lambda_.1} parent=5 // pred_check_branch
        %7950 = sbr.rel (%p7948) target = $region68
      $region67: #{_lambda_.1} parent=5 // pred_region
        %s7951 = ssub.s32 %s14, 2
        // Predicated region
        $region69: #{_lambda_.1} parent=67 // pred_check
          %p7952 = pneg %p209
        $region70: #{_lambda_.1} parent=67 // pred_check_branch
          %7954 = sbr.rel (%p7952) target = $region72
        $region71: #{_lambda_.1} parent=67 // pred_region
          %p7955 = scmp.lt.s32.totalorder %s25, 1
          %s7956 = scalar_select %p7955, %s25, 1
          %s7957 = smul.addr %s7956, 4
          %s7958 = scalar_lea.vmem %s7, %s7957
        $region72: #{_lambda_.1} parent=67 // pred_fallthru
          _
      $region68: #{_lambda_.1} parent=5 // pred_fallthru
        _
    $region6: #{_lambda_.1} parent=1 // loop_footer
      %s18 = sadd.s32 1, %s14
    $region7: #{_lambda_.1} parent=1 // loop_footer_branch
      %13 = sbr.rel target = $region3
    $region8: #{_lambda_.1} parent=1 // loop_exit
      _
    %7959 = vsyncpa [#allocation4], 1
    %s7960 = scalar_lea.sflag [#allocation4], 1
    %7961 = vsyncpa %s7960, 1

</llo_original>
